<compile_context>
chip_gen: v5e
topology: v5e:2x2
jax: 0.10.0
libtpu: 0.0.40
codegen_flags: <defaults>
</compile_context>

<pallas_src>
import functools

import jax
import jax.numpy as jnp
import numpy as np
from jax.experimental import pallas as pl
from jax.experimental.pallas import tpu as pltpu


# ----------------------------- Pallas kernel ---------------------------------


def _resblock_kernel(x_ref, w_ref, b_ref, out_ref, slab_ref, *, W, C):
    """One (Nb, H, W, C) block: out = x + conv2(relu(conv1(x))), 3x3 'same' convs."""
    Nb, H = x_ref.shape[0], x_ref.shape[1]
    M = Nb * H * W
    cd = slab_ref.dtype                               # compute dtype (matmul operands)

    x = x_ref[...]                                    # (Nb, H, W, C) float32

    # Zero the slab halo every grid step (top/bottom rows and the dx edge columns).
    # Doing it per step (not only on step 0) keeps the kernel correct when the "parallel"
    # grid axis is sharded across TensorCores (each core owns its own scratch).  The
    # interior is fully overwritten by the stores below, so nothing else needs zeroing.
    z_row = jnp.zeros((Nb, 1, W, 3 * C), cd)
    slab_ref[:, 0:1, :, :] = z_row
    slab_ref[:, H + 1:H + 2, :, :] = z_row
    z_col = jnp.zeros((Nb, H, 1, C), cd)
    slab_ref[:, 1:H + 1, 0:1, 0:C] = z_col                      # col 0 of the dx=0 tap
    slab_ref[:, 1:H + 1, W - 1:W, 2 * C:3 * C] = z_col          # col W-1 of the dx=2 tap

    def conv3x3(act, conv_idx):
        """act: (Nb, H, W, C) in compute dtype -> (M, C) float32 with bias added."""
        # Three dx-shifted interior stores into the reused zero-bordered slab:
        #   lanes [0:C)   <- input column w-1  (weight dx = 0)
        #   lanes [C:2C)  <- input column w    (weight dx = 1)
        #   lanes [2C:3C) <- input column w+1  (weight dx = 2)
        slab_ref[:, 1:H + 1, :, C:2 * C] = act
        slab_ref[:, 1:H + 1, 1:W, 0:C] = act[:, :, 0:W - 1, :]
        slab_ref[:, 1:H + 1, 0:W - 1, 2 * C:3 * C] = act[:, :, 1:W, :]
        # Three dy taps = contiguous row windows of the slab; 3 MXU matmuls, f32 accumulate.
        acc = None
        for dy in range(3):
            tap = slab_ref[:, dy:dy + H, :, :].reshape(M, 3 * C)
            part = jnp.dot(tap, w_ref[conv_idx, dy],
                           preferred_element_type=jnp.float32)
            acc = part if acc is None else acc + part
        return acc + b_ref[conv_idx]                            # (M, C) float32

    h = conv3x3(x.astype(cd), 0)                                # conv1 + bias
    h = jnp.maximum(h, 0.0)                                     # ReLU (f32)
    y = conv3x3(h.reshape(Nb, H, W, C).astype(cd), 1)           # conv2 + bias

    out = x.reshape(M, C) + y                                   # residual add in f32
    out_ref[...] = out.reshape(Nb, H, W, C).astype(out_ref.dtype)


# ----------------------------- host-side helpers ------------------------------


def _vmem_capacity_bytes(default=64 << 20):
    """Physical VMEM per core; conservative v7x default if the query is unavailable."""
    try:
        return int(pltpu.get_tpu_info().vmem_capacity_bytes)
    except Exception:  # pragma: no cover
        return default


def _choose_batch_tile(n, rows_per_image, per_image_bytes, fixed_bytes, budget_bytes,
                       target_rows=512):
    """Images per grid step: target ~`target_rows` matmul rows, fit the VMEM budget,
    and keep >= 2 grid steps when the batch allows (both v7x TensorCores get work)."""
    nb = max(1, target_rows // max(1, rows_per_image))
    nb = min(nb, max(1, (budget_bytes - fixed_bytes) // max(1, per_image_bytes)))
    nb = min(nb, n)
    if n >= 2:
        nb = min(nb, n // 2)
    nb = max(nb, 1)
    while n % nb:
        nb -= 1
    return nb


def prep_resblock_params(w1_oihw, b1, w2_oihw, b2, *, compute_dtype=jnp.bfloat16):
    """Hoist the per-network weight relayout out of the per-block hot path.

    Returns (w_stacked, b_stacked):
      w_stacked: (2, 3, 3*C, C), w_stacked[i, dy, dx*C + ci, co] == Wi_oihw[co, ci, dy, dx]
      b_stacked: (2, 1, C) float32
    Use compute_dtype=float32 on v5e (no bf16 VPU path) or when tight tolerance is needed.
    """
    C = w1_oihw.shape[0]

    def prep(w):
        return jnp.transpose(w, (2, 3, 1, 0)).reshape(3, 3 * C, C)

    w_stacked = jnp.stack([prep(w1_oihw), prep(w2_oihw)]).astype(compute_dtype)
    b_stacked = jnp.stack([b1, b2]).reshape(2, 1, C).astype(jnp.float32)
    return w_stacked, b_stacked


def residual_block_basic_nhwc(content_nhwc, cond, params):
    """ResidualBlock_basic.forward((content, cond)) with NHWC activations (hot path)."""
    w_stacked, b_stacked = params
    N, H, W, C = content_nhwc.shape
    cd = w_stacked.dtype
    cd_bytes = jnp.dtype(cd).itemsize

    # Generation-aware block sizing / scoped-VMEM budget.
    budget = _vmem_capacity_bytes() // 2       # ~32 MiB scoped on v7x, ~64 MiB on v5e/v6e
    act_f32 = H * W * C * 4
    act_cd = H * W * C * cd_bytes
    slab_bytes = (H + 2) * W * 3 * C * cd_bytes
    lane_pad = max(1, 128 // min(128, C))      # (W, C<128) tiles are lane-padded in VMEM
    per_image = 4 * act_f32 * lane_pad + 8 * act_f32 + 4 * act_cd + slab_bytes
    fixed = 2 * (w_stacked.size * cd_bytes + b_stacked.size * 4)   # double-buffered weights
    nbk = _choose_batch_tile(N, H * W, per_image, fixed, budget)
    vmem_limit = int(min(budget, max(16 << 20, fixed + nbk * per_image + (4 << 20))))

    kernel = functools.partial(_resblock_kernel, W=W, C=C)
    out = pl.pallas_call(
        kernel,
        out_shape=jax.ShapeDtypeStruct((N, H, W, C), content_nhwc.dtype),
        grid_spec=pltpu.PrefetchScalarGridSpec(
            num_scalar_prefetch=0,
            grid=(N // nbk,),
            in_specs=[
                pl.BlockSpec((nbk, H, W, C), lambda g: (g, 0, 0, 0)),
                pl.BlockSpec((2, 3, 3 * C, C), lambda g: (0, 0, 0, 0)),
                pl.BlockSpec((2, 1, C), lambda g: (0, 0, 0)),
            ],
            out_specs=pl.BlockSpec((nbk, H, W, C), lambda g: (g, 0, 0, 0)),
            scratch_shapes=[pltpu.VMEM((nbk, H + 2, W, 3 * C), cd)],
        ),
        compiler_params=pltpu.CompilerParams(
            dimension_semantics=("parallel",),
            vmem_limit_bytes=vmem_limit),
    )(content_nhwc, w_stacked, b_stacked)

    return out, cond


def residual_block_basic_nchw(content_nchw, cond, params):
    """PyTorch-layout convenience wrapper.  Inside a BasicBlock keep activations NHWC and
    call residual_block_basic_nhwc directly (one layout change at the stack boundary)."""
    x = jnp.transpose(content_nchw, (0, 2, 3, 1))
    y, cond = residual_block_basic_nhwc(x, cond, params)
    return jnp.transpose(y, (0, 3, 1, 2)), cond


# ----------------------------- reference + test --------------------------------


def _reference_resblock_nchw(x, w1, b1, w2, b2, compute_dtype):
    dn = ("NCHW", "OIHW", "NCHW")

    def conv(v, w):
        return jax.lax.conv_general_dilated(
            v.astype(compute_dtype), w.astype(compute_dtype), (1, 1),
            ((1, 1), (1, 1)), dimension_numbers=dn,
            precision=jax.lax.Precision.HIGHEST,
            preferred_element_type=jnp.float32)

    y = jax.nn.relu(conv(x, w1) + b1[None, :, None, None])
    y = conv(y, w2) + b2[None, :, None, None]
    return x + y


if __name__ == "__main__":
    # ResidualBlock_basic default nf=64; ISTA-Net's BasicBlock stacks two of these.
    nf, N, H, W = 64, 4, 16, 16

    key = jax.random.PRNGKey(0)
    ks = jax.random.split(key, 10)
    content = jax.random.normal(ks[0], (N, nf, H, W), jnp.float32)
    cond = jax.random.normal(ks[1], (N, nf, H, W), jnp.float32)

    std = (2.0 / (nf * 9)) ** 0.5
    w1a = jax.random.normal(ks[2], (nf, nf, 3, 3), jnp.float32) * std
    b1a = jax.random.normal(ks[3], (nf,), jnp.float32) * 0.01
    w2a = jax.random.normal(ks[4], (nf, nf, 3, 3), jnp.float32) * std
    b2a = jax.random.normal(ks[5], (nf,), jnp.float32) * 0.01
    w1b = jax.random.normal(ks[6], (nf, nf, 3, 3), jnp.float32) * std
    b1b = jax.random.normal(ks[7], (nf,), jnp.float32) * 0.01
    w2b = jax.random.normal(ks[8], (nf, nf, 3, 3), jnp.float32) * std
    b2b = jax.random.normal(ks[9], (nf,), jnp.float32) * 0.01

    def run_stack(compute_dtype):
        # Weight prep hoisted (once per network); activations stay NHWC across both blocks.
        pa = prep_resblock_params(w1a, b1a, w2a, b2a, compute_dtype=compute_dtype)
        pb = prep_resblock_params(w1b, b1b, w2b, b2b, compute_dtype=compute_dtype)
        x = jnp.transpose(content, (0, 2, 3, 1))
        x, c = residual_block_basic_nhwc(x, cond, pa)
        x, c = residual_block_basic_nhwc(x, c, pb)
        return jnp.transpose(x, (0, 3, 1, 2)), c

    def run_ref(compute_dtype):
        y = _reference_resblock_nchw(content, w1a, b1a, w2a, b2a, compute_dtype)
        return _reference_resblock_nchw(y, w1b, b1b, w2b, b2b, compute_dtype)

    # float32 matmul operands: tight tolerance.
    out_f32, cond_out = jax.block_until_ready(run_stack(jnp.float32))
    np.testing.assert_allclose(np.asarray(out_f32), np.asarray(run_ref(jnp.float32)),
                               rtol=5e-4, atol=5e-4)
    np.testing.assert_allclose(np.asarray(cond_out), np.asarray(cond), rtol=0, atol=0)

    # bfloat16 matmul operands (the default), f32 accumulation/bias/residual,
    # compared against a bf16-operand reference.
    out_bf16, _ = jax.block_until_ready(run_stack(jnp.bfloat16))
    np.testing.assert_allclose(np.asarray(out_bf16), np.asarray(run_ref(jnp.bfloat16)),
                               rtol=1e-2, atol=1e-2)

    print("KERNEL_OK")
</pallas_src>

<mosaic_0001>
module attributes {stable_mosaic.version = 11 : i64} {
  func.func @_resblock_kernel(%arg0: i32, %arg1: memref<2x16x16x64xf32, #tpu.memory_space<vmem>>, %arg2: memref<2x3x192x64xf32, #tpu.memory_space<vmem>>, %arg3: memref<2x1x64xf32, #tpu.memory_space<vmem>>, %arg4: memref<2x16x16x64xf32, #tpu.memory_space<vmem>>, %arg5: memref<2x18x16x192xf32, #tpu.memory_space<vmem>>) attributes {dimension_semantics = [#tpu.dimension_semantics<parallel>], iteration_bounds = array<i64: 2>, scalar_prefetch = 0 : i64, scratch_operands = 1 : i64, tpu.core_type = #tpu.core_type<tc>, window_params = [{transform_indices = @transform_0, window_bounds = array<i64: 2, 16, 16, 64>}, {pipeline_mode = #tpu.pipeline_mode<synchronous>, transform_indices = @transform_1, window_bounds = array<i64: 2, 3, 192, 64>}, {pipeline_mode = #tpu.pipeline_mode<synchronous>, transform_indices = @transform_2, window_bounds = array<i64: 2, 1, 64>}, {transform_indices = @transform_3, window_bounds = array<i64: 2, 16, 16, 64>}]} {
    %c0 = arith.constant 0 : index
    %c0_0 = arith.constant 0 : index
    %c0_1 = arith.constant 0 : index
    %c0_2 = arith.constant 0 : index
    %0 = vector.load %arg1[%c0, %c0_0, %c0_1, %c0_2] : memref<2x16x16x64xf32, #tpu.memory_space<vmem>>, vector<2x16x16x64xf32>
    %cst = arith.constant 0.000000e+00 : f32
    %1 = vector.broadcast %cst : f32 to vector<2x1x16x192xf32>
    %c0_3 = arith.constant 0 : index
    %c0_4 = arith.constant 0 : index
    %c0_5 = arith.constant 0 : index
    %c0_6 = arith.constant 0 : index
    %2 = vector.load %arg5[%c0_3, %c0_4, %c0_5, %c0_6] : memref<2x18x16x192xf32, #tpu.memory_space<vmem>>, vector<2x1x16x192xf32>
    tpu.vector_store %arg5[%c0_3, %c0_4, %c0_5, %c0_6], %1 {strides = array<i32>} : memref<2x18x16x192xf32, #tpu.memory_space<vmem>>, vector<2x1x16x192xf32>,
    %c0_7 = arith.constant 0 : index
    %c17 = arith.constant 17 : index
    %c0_8 = arith.constant 0 : index
    %c0_9 = arith.constant 0 : index
    %3 = vector.load %arg5[%c0_7, %c17, %c0_8, %c0_9] : memref<2x18x16x192xf32, #tpu.memory_space<vmem>>, vector<2x1x16x192xf32>
    tpu.vector_store %arg5[%c0_7, %c17, %c0_8, %c0_9], %1 {strides = array<i32>} : memref<2x18x16x192xf32, #tpu.memory_space<vmem>>, vector<2x1x16x192xf32>,
    %cst_10 = arith.constant 0.000000e+00 : f32
    %4 = vector.broadcast %cst_10 : f32 to vector<2x16x1x64xf32>
    %c0_11 = arith.constant 0 : index
    %c1 = arith.constant 1 : index
    %c0_12 = arith.constant 0 : index
    %c0_13 = arith.constant 0 : index
    %5 = vector.load %arg5[%c0_11, %c1, %c0_12, %c0_13] : memref<2x18x16x192xf32, #tpu.memory_space<vmem>>, vector<2x16x1x64xf32>
    tpu.vector_store %arg5[%c0_11, %c1, %c0_12, %c0_13], %4 {strides = array<i32>} : memref<2x18x16x192xf32, #tpu.memory_space<vmem>>, vector<2x16x1x64xf32>,
    %c0_14 = arith.constant 0 : index
    %c1_15 = arith.constant 1 : index
    %c15 = arith.constant 15 : index
    %c128 = arith.constant 128 : index
    %6 = vector.load %arg5[%c0_14, %c1_15, %c15, %c128] : memref<2x18x16x192xf32, #tpu.memory_space<vmem>>, vector<2x16x1x64xf32>
    tpu.vector_store %arg5[%c0_14, %c1_15, %c15, %c128], %4 {strides = array<i32>} : memref<2x18x16x192xf32, #tpu.memory_space<vmem>>, vector<2x16x1x64xf32>,
    %c0_16 = arith.constant 0 : index
    %c1_17 = arith.constant 1 : index
    %c0_18 = arith.constant 0 : index
    %c64 = arith.constant 64 : index
    %7 = vector.load %arg5[%c0_16, %c1_17, %c0_18, %c64] : memref<2x18x16x192xf32, #tpu.memory_space<vmem>>, vector<2x16x16x64xf32>
    tpu.vector_store %arg5[%c0_16, %c1_17, %c0_18, %c64], %0 {strides = array<i32>} : memref<2x18x16x192xf32, #tpu.memory_space<vmem>>, vector<2x16x16x64xf32>,
    %8 = vector.extract_strided_slice %0 {offsets = [0, 0, 0, 0], sizes = [2, 16, 15, 64], strides = [1, 1, 1, 1]} : vector<2x16x16x64xf32> to vector<2x16x15x64xf32>
    %c0_19 = arith.constant 0 : index
    %c1_20 = arith.constant 1 : index
    %c1_21 = arith.constant 1 : index
    %c0_22 = arith.constant 0 : index
    %9 = vector.load %arg5[%c0_19, %c1_20, %c1_21, %c0_22] : memref<2x18x16x192xf32, #tpu.memory_space<vmem>>, vector<2x16x15x64xf32>
    tpu.vector_store %arg5[%c0_19, %c1_20, %c1_21, %c0_22], %8 {strides = array<i32>} : memref<2x18x16x192xf32, #tpu.memory_space<vmem>>, vector<2x16x15x64xf32>,
    %10 = vector.extract_strided_slice %0 {offsets = [0, 0, 1, 0], sizes = [2, 16, 15, 64], strides = [1, 1, 1, 1]} : vector<2x16x16x64xf32> to vector<2x16x15x64xf32>
    %c0_23 = arith.constant 0 : index
    %c1_24 = arith.constant 1 : index
    %c0_25 = arith.constant 0 : index
    %c128_26 = arith.constant 128 : index
    %11 = vector.load %arg5[%c0_23, %c1_24, %c0_25, %c128_26] : memref<2x18x16x192xf32, #tpu.memory_space<vmem>>, vector<2x16x15x64xf32>
    tpu.vector_store %arg5[%c0_23, %c1_24, %c0_25, %c128_26], %10 {strides = array<i32>} : memref<2x18x16x192xf32, #tpu.memory_space<vmem>>, vector<2x16x15x64xf32>,
    %c0_27 = arith.constant 0 : index
    %c0_28 = arith.constant 0 : index
    %c0_29 = arith.constant 0 : index
    %c0_30 = arith.constant 0 : index
    %12 = vector.load %arg5[%c0_27, %c0_28, %c0_29, %c0_30] : memref<2x18x16x192xf32, #tpu.memory_space<vmem>>, vector<2x16x16x192xf32>
    %13 = vector.shape_cast %12 : vector<2x16x16x192xf32> to vector<512x192xf32>
    %c0_31 = arith.constant 0 : index
    %c0_32 = arith.constant 0 : index
    %c0_33 = arith.constant 0 : index
    %c0_34 = arith.constant 0 : index
    %14 = vector.load %arg2[%c0_31, %c0_32, %c0_33, %c0_34] : memref<2x3x192x64xf32, #tpu.memory_space<vmem>>, vector<1x1x192x64xf32>
    %15 = vector.shape_cast %14 : vector<1x1x192x64xf32> to vector<192x64xf32>
    %cst_35 = arith.constant dense<0.000000e+00> : vector<512x64xf32>
    %16 = tpu.matmul %13, %15, %cst_35 {dimension_numbers = #tpu.dot_dimension_numbers<[1], [0], [0], [1], [0, 0, 1, 1], [], []>} : vector<512x192xf32>, vector<192x64xf32>, vector<512x64xf32> -> vector<512x64xf32>
    %c0_36 = arith.constant 0 : index
    %c1_37 = arith.constant 1 : index
    %c0_38 = arith.constant 0 : index
    %c0_39 = arith.constant 0 : index
    %17 = vector.load %arg5[%c0_36, %c1_37, %c0_38, %c0_39] : memref<2x18x16x192xf32, #tpu.memory_space<vmem>>, vector<2x16x16x192xf32>
    %18 = vector.shape_cast %17 : vector<2x16x16x192xf32> to vector<512x192xf32>
    %c0_40 = arith.constant 0 : index
    %c1_41 = arith.constant 1 : index
    %c0_42 = arith.constant 0 : index
    %c0_43 = arith.constant 0 : index
    %19 = vector.load %arg2[%c0_40, %c1_41, %c0_42, %c0_43] : memref<2x3x192x64xf32, #tpu.memory_space<vmem>>, vector<1x1x192x64xf32>
    %20 = vector.shape_cast %19 : vector<1x1x192x64xf32> to vector<192x64xf32>
    %cst_44 = arith.constant dense<0.000000e+00> : vector<512x64xf32>
    %21 = tpu.matmul %18, %20, %cst_44 {dimension_numbers = #tpu.dot_dimension_numbers<[1], [0], [0], [1], [0, 0, 1, 1], [], []>} : vector<512x192xf32>, vector<192x64xf32>, vector<512x64xf32> -> vector<512x64xf32>
    %22 = arith.addf %16, %21 : vector<512x64xf32>
    %c0_45 = arith.constant 0 : index
    %c2 = arith.constant 2 : index
    %c0_46 = arith.constant 0 : index
    %c0_47 = arith.constant 0 : index
    %23 = vector.load %arg5[%c0_45, %c2, %c0_46, %c0_47] : memref<2x18x16x192xf32, #tpu.memory_space<vmem>>, vector<2x16x16x192xf32>
    %24 = vector.shape_cast %23 : vector<2x16x16x192xf32> to vector<512x192xf32>
    %c0_48 = arith.constant 0 : index
    %c2_49 = arith.constant 2 : index
    %c0_50 = arith.constant 0 : index
    %c0_51 = arith.constant 0 : index
    %25 = vector.load %arg2[%c0_48, %c2_49, %c0_50, %c0_51] : memref<2x3x192x64xf32, #tpu.memory_space<vmem>>, vector<1x1x192x64xf32>
    %26 = vector.shape_cast %25 : vector<1x1x192x64xf32> to vector<192x64xf32>
    %cst_52 = arith.constant dense<0.000000e+00> : vector<512x64xf32>
    %27 = tpu.matmul %24, %26, %cst_52 {dimension_numbers = #tpu.dot_dimension_numbers<[1], [0], [0], [1], [0, 0, 1, 1], [], []>} : vector<512x192xf32>, vector<192x64xf32>, vector<512x64xf32> -> vector<512x64xf32>
    %28 = arith.addf %22, %27 : vector<512x64xf32>
    %c0_53 = arith.constant 0 : index
    %c0_54 = arith.constant 0 : index
    %c0_55 = arith.constant 0 : index
    %29 = vector.load %arg3[%c0_53, %c0_54, %c0_55] : memref<2x1x64xf32, #tpu.memory_space<vmem>>, vector<1x1x64xf32>
    %30 = vector.shape_cast %29 : vector<1x1x64xf32> to vector<1x64xf32>
    %31 = vector.broadcast %30 : vector<1x64xf32> to vector<512x64xf32>
    %32 = arith.addf %28, %31 : vector<512x64xf32>
    %cst_56 = arith.constant 0.000000e+00 : f32
    %33 = vector.broadcast %cst_56 : f32 to vector<512x64xf32>
    %34 = arith.maximumf %32, %33 : vector<512x64xf32>
    %35 = vector.shape_cast %34 : vector<512x64xf32> to vector<2x16x16x64xf32>
    %c0_57 = arith.constant 0 : index
    %c1_58 = arith.constant 1 : index
    %c0_59 = arith.constant 0 : index
    %c64_60 = arith.constant 64 : index
    %36 = vector.load %arg5[%c0_57, %c1_58, %c0_59, %c64_60] : memref<2x18x16x192xf32, #tpu.memory_space<vmem>>, vector<2x16x16x64xf32>
    tpu.vector_store %arg5[%c0_57, %c1_58, %c0_59, %c64_60], %35 {strides = array<i32>} : memref<2x18x16x192xf32, #tpu.memory_space<vmem>>, vector<2x16x16x64xf32>,
    %37 = vector.extract_strided_slice %35 {offsets = [0, 0, 0, 0], sizes = [2, 16, 15, 64], strides = [1, 1, 1, 1]} : vector<2x16x16x64xf32> to vector<2x16x15x64xf32>
    %c0_61 = arith.constant 0 : index
    %c1_62 = arith.constant 1 : index
    %c1_63 = arith.constant 1 : index
    %c0_64 = arith.constant 0 : index
    %38 = vector.load %arg5[%c0_61, %c1_62, %c1_63, %c0_64] : memref<2x18x16x192xf32, #tpu.memory_space<vmem>>, vector<2x16x15x64xf32>
    tpu.vector_store %arg5[%c0_61, %c1_62, %c1_63, %c0_64], %37 {strides = array<i32>} : memref<2x18x16x192xf32, #tpu.memory_space<vmem>>, vector<2x16x15x64xf32>,
    %39 = vector.extract_strided_slice %35 {offsets = [0, 0, 1, 0], sizes = [2, 16, 15, 64], strides = [1, 1, 1, 1]} : vector<2x16x16x64xf32> to vector<2x16x15x64xf32>
    %c0_65 = arith.constant 0 : index
    %c1_66 = arith.constant 1 : index
    %c0_67 = arith.constant 0 : index
    %c128_68 = arith.constant 128 : index
    %40 = vector.load %arg5[%c0_65, %c1_66, %c0_67, %c128_68] : memref<2x18x16x192xf32, #tpu.memory_space<vmem>>, vector<2x16x15x64xf32>
    tpu.vector_store %arg5[%c0_65, %c1_66, %c0_67, %c128_68], %39 {strides = array<i32>} : memref<2x18x16x192xf32, #tpu.memory_space<vmem>>, vector<2x16x15x64xf32>,
    %c0_69 = arith.constant 0 : index
    %c0_70 = arith.constant 0 : index
    %c0_71 = arith.constant 0 : index
    %c0_72 = arith.constant 0 : index
    %41 = vector.load %arg5[%c0_69, %c0_70, %c0_71, %c0_72] : memref<2x18x16x192xf32, #tpu.memory_space<vmem>>, vector<2x16x16x192xf32>
    %42 = vector.shape_cast %41 : vector<2x16x16x192xf32> to vector<512x192xf32>
    %c1_73 = arith.constant 1 : index
    %c0_74 = arith.constant 0 : index
    %c0_75 = arith.constant 0 : index
    %c0_76 = arith.constant 0 : index
    %43 = vector.load %arg2[%c1_73, %c0_74, %c0_75, %c0_76] : memref<2x3x192x64xf32, #tpu.memory_space<vmem>>, vector<1x1x192x64xf32>
    %44 = vector.shape_cast %43 : vector<1x1x192x64xf32> to vector<192x64xf32>
    %cst_77 = arith.constant dense<0.000000e+00> : vector<512x64xf32>
    %45 = tpu.matmul %42, %44, %cst_77 {dimension_numbers = #tpu.dot_dimension_numbers<[1], [0], [0], [1], [0, 0, 1, 1], [], []>} : vector<512x192xf32>, vector<192x64xf32>, vector<512x64xf32> -> vector<512x64xf32>
    %c0_78 = arith.constant 0 : index
    %c1_79 = arith.constant 1 : index
    %c0_80 = arith.constant 0 : index
    %c0_81 = arith.constant 0 : index
    %46 = vector.load %arg5[%c0_78, %c1_79, %c0_80, %c0_81] : memref<2x18x16x192xf32, #tpu.memory_space<vmem>>, vector<2x16x16x192xf32>
    %47 = vector.shape_cast %46 : vector<2x16x16x192xf32> to vector<512x192xf32>
    %c1_82 = arith.constant 1 : index
    %c1_83 = arith.constant 1 : index
    %c0_84 = arith.constant 0 : index
    %c0_85 = arith.constant 0 : index
    %48 = vector.load %arg2[%c1_82, %c1_83, %c0_84, %c0_85] : memref<2x3x192x64xf32, #tpu.memory_space<vmem>>, vector<1x1x192x64xf32>
    %49 = vector.shape_cast %48 : vector<1x1x192x64xf32> to vector<192x64xf32>
    %cst_86 = arith.constant dense<0.000000e+00> : vector<512x64xf32>
    %50 = tpu.matmul %47, %49, %cst_86 {dimension_numbers = #tpu.dot_dimension_numbers<[1], [0], [0], [1], [0, 0, 1, 1], [], []>} : vector<512x192xf32>, vector<192x64xf32>, vector<512x64xf32> -> vector<512x64xf32>
    %51 = arith.addf %45, %50 : vector<512x64xf32>
    %c0_87 = arith.constant 0 : index
    %c2_88 = arith.constant 2 : index
    %c0_89 = arith.constant 0 : index
    %c0_90 = arith.constant 0 : index
    %52 = vector.load %arg5[%c0_87, %c2_88, %c0_89, %c0_90] : memref<2x18x16x192xf32, #tpu.memory_space<vmem>>, vector<2x16x16x192xf32>
    %53 = vector.shape_cast %52 : vector<2x16x16x192xf32> to vector<512x192xf32>
    %c1_91 = arith.constant 1 : index
    %c2_92 = arith.constant 2 : index
    %c0_93 = arith.constant 0 : index
    %c0_94 = arith.constant 0 : index
    %54 = vector.load %arg2[%c1_91, %c2_92, %c0_93, %c0_94] : memref<2x3x192x64xf32, #tpu.memory_space<vmem>>, vector<1x1x192x64xf32>
    %55 = vector.shape_cast %54 : vector<1x1x192x64xf32> to vector<192x64xf32>
    %cst_95 = arith.constant dense<0.000000e+00> : vector<512x64xf32>
    %56 = tpu.matmul %53, %55, %cst_95 {dimension_numbers = #tpu.dot_dimension_numbers<[1], [0], [0], [1], [0, 0, 1, 1], [], []>} : vector<512x192xf32>, vector<192x64xf32>, vector<512x64xf32> -> vector<512x64xf32>
    %57 = arith.addf %51, %56 : vector<512x64xf32>
    %c1_96 = arith.constant 1 : index
    %c0_97 = arith.constant 0 : index
    %c0_98 = arith.constant 0 : index
    %58 = vector.load %arg3[%c1_96, %c0_97, %c0_98] : memref<2x1x64xf32, #tpu.memory_space<vmem>>, vector<1x1x64xf32>
    %59 = vector.shape_cast %58 : vector<1x1x64xf32> to vector<1x64xf32>
    %60 = vector.broadcast %59 : vector<1x64xf32> to vector<512x64xf32>
    %61 = arith.addf %57, %60 : vector<512x64xf32>
    %62 = vector.shape_cast %0 : vector<2x16x16x64xf32> to vector<512x64xf32>
    %63 = arith.addf %62, %61 : vector<512x64xf32>
    %64 = vector.shape_cast %63 : vector<512x64xf32> to vector<2x16x16x64xf32>
    %c0_99 = arith.constant 0 : index
    %c0_100 = arith.constant 0 : index
    %c0_101 = arith.constant 0 : index
    %c0_102 = arith.constant 0 : index
    %65 = vector.load %arg4[%c0_99, %c0_100, %c0_101, %c0_102] : memref<2x16x16x64xf32, #tpu.memory_space<vmem>>, vector<2x16x16x64xf32>
    tpu.vector_store %arg4[%c0_99, %c0_100, %c0_101, %c0_102], %64 {strides = array<i32>} : memref<2x16x16x64xf32, #tpu.memory_space<vmem>>, vector<2x16x16x64xf32>,
    return
  }
  func.func @transform_0(%arg0: i32) -> (i32, i32, i32, i32) {
    %c0_i32 = arith.constant 0 : i32
    %c0_i32_0 = arith.constant 0 : i32
    %c0_i32_1 = arith.constant 0 : i32
    %c0_i32_2 = arith.constant 0 : i32
    return %arg0, %c0_i32, %c0_i32_0, %c0_i32_1 : i32, i32, i32, i32
  }
  func.func @transform_1(%arg0: i32) -> (i32, i32, i32, i32) {
    %c0_i32 = arith.constant 0 : i32
    %c0_i32_0 = arith.constant 0 : i32
    %c0_i32_1 = arith.constant 0 : i32
    %c0_i32_2 = arith.constant 0 : i32
    %c0_i32_3 = arith.constant 0 : i32
    return %c0_i32, %c0_i32_0, %c0_i32_1, %c0_i32_2 : i32, i32, i32, i32
  }
  func.func @transform_2(%arg0: i32) -> (i32, i32, i32) {
    %c0_i32 = arith.constant 0 : i32
    %c0_i32_0 = arith.constant 0 : i32
    %c0_i32_1 = arith.constant 0 : i32
    %c0_i32_2 = arith.constant 0 : i32
    return %c0_i32, %c0_i32_0, %c0_i32_1 : i32, i32, i32
  }
  func.func @transform_3(%arg0: i32) -> (i32, i32, i32, i32) {
    %c0_i32 = arith.constant 0 : i32
    %c0_i32_0 = arith.constant 0 : i32
    %c0_i32_1 = arith.constant 0 : i32
    %c0_i32_2 = arith.constant 0 : i32
    return %arg0, %c0_i32, %c0_i32_0, %c0_i32_1 : i32, i32, i32, i32
  }
}

</mosaic_0001>

<llo_original>
// kernel: tpu_custom_call.1
$region0: #{tpu_custom_call.1}
  #allocation0 [shape = 'u32[]', space=smem, size = 0x4, offset = 0x4, fixed_abs, tag = 'smem constant byte address 0x4 - core index']
  #allocation1 [shape = 'u32[72,128]{1,0:T(1,128)}', space=vmem, size = 0x9000, scoped, tag = 'internal scratch']
  #allocation2 [shape = 'f32[2,18,16,192]{3,2,1,0:T(8,128)}', space=vmem, size = 0x90000, scoped, tag = 'scratch operand']
  %s0 = inlined_call_operand.vmem [shape: f32[4,16,16,64], index: 0, kind: input, shape index: {}]
  %s1 = inlined_call_operand.vmem [shape: f32[2,3,192,64], index: 1, kind: input, shape index: {}]
  %s2 = inlined_call_operand.vmem [shape: f32[2,1,64], index: 2, kind: input, shape index: {}]
  %s3 = inlined_call_operand.hbm [shape: f32[4,16,16,64], index: 3, kind: output, shape index: {}]
  %s4 = sld [smem:[#allocation0]]
  $region45: #{tpu_custom_call.1} parent=0
    _
  %s6 = ssub.s32 1, %s4
  %s7 = scalar_select 0, %s6, %s4
  $region1: #{tpu_custom_call.1} parent=0
    #allocation3 [shape = 'u8[524288]{0}', space=vmem, size = 0x80000, scoped, tag = 'output window, operand 0']
    #allocation4 [shape = 's32[2]{0}', space=sflag, size = 0x8, scoped, tag = 'scoped memory for tpu_custom_call.1']
    %8 = vsyncpa [#allocation4], 0
    %s9 = scalar_lea.sflag [#allocation4], 1
    %10 = vsyncpa %s9, 0
    loop: start=0, step=1, limit=4
    $region2: #{tpu_custom_call.1} parent=1 // loop_pre_header
      _
    $region3: #{tpu_custom_call.1} parent=1 // loop_header
      %s12 = sphi 0, %s16
      %p13 = scmp.ge.s32.totalorder %s12, 4
      %s22 = sphi 0, %s24
      %s25 = sphi 0, %s22
      %s26 = sphi 0, %s25
      %s42 = sphi 0, %s26
      %s46 = sphi 0, %s46
      %s48 = sphi 0, %s46
      %s49 = sphi 0, %s48
      %s63 = sphi 0, %s49
      %s67 = sphi 0, %s67
      %s69 = sphi 0, %s67
      %s70 = sphi 0, %s69
      %s84 = sphi 0, %s70
      %s90 = sphi 0, %s92
      %s93 = sphi 0, %s90
      %s94 = sphi 0, %s93
      %s110 = sphi 0, %s94
    $region4: #{tpu_custom_call.1} parent=1 // loop_header_branch
      %15 = sbr.rel (%p13) target = $region8
    $region5: #{tpu_custom_call.1} parent=1 // loop_body
      %s17 = ssub.s32 %s12, 1
      %s18 = ssub.s32 %s12, 2
      %s19 = sadd.s32 %s12, 1
      %s20 = ssub.s32 %s12, %s19
      %p21 = scmp.eq.s32.totalorder %s20, 0
      %s23 = sadd.s32 %s22, 1
      %s24 = scalar_select %p21, %s22, %s23
      %p27 = pneg %p21
      %p28 = scmp.eq.s32.totalorder %s12, 1
      %p29 = por %p27, %p28
      %p30 = scmp.ne.s32.totalorder %s22, %s25
      %p31 = scmp.eq.s32.totalorder %s12, 0
      %p32 = por %p30, %p31
      %p33 = scmp.ne.s32.totalorder %s22, %s25
      %p34 = scmp.eq.s32.totalorder %s17, 1
      %p35 = por %p33, %p34
      %p36 = scmp.ne.s32.totalorder %s25, %s26
      %p37 = scmp.eq.s32.totalorder %s17, 0
      %p38 = por %p36, %p37
      %p39 = scmp.ne.s32.totalorder %s25, %s26
      %p40 = scmp.eq.s32.totalorder %s18, 1
      %p41 = por %p39, %p40
      %p43 = scmp.ne.s32.totalorder %s26, %s42
      %p44 = scmp.eq.s32.totalorder %s18, 0
      %p45 = por %p43, %p44
      %s47 = sadd.s32 %s46, 1
      %p50 = scmp.eq.s32.totalorder %s12, 1
      %p51 = scmp.ne.s32.totalorder %s46, %s48
      %p52 = scmp.eq.s32.totalorder %s12, 0
      %p53 = por %p51, %p52
      %p54 = scmp.ne.s32.totalorder %s46, %s48
      %p55 = scmp.eq.s32.totalorder %s17, 1
      %p56 = por %p54, %p55
      %p57 = scmp.ne.s32.totalorder %s48, %s49
      %p58 = scmp.eq.s32.totalorder %s17, 0
      %p59 = por %p57, %p58
      %p60 = scmp.ne.s32.totalorder %s48, %s49
      %p61 = scmp.eq.s32.totalorder %s18, 1
      %p62 = por %p60, %p61
      %p64 = scmp.ne.s32.totalorder %s49, %s63
      %p65 = scmp.eq.s32.totalorder %s18, 0
      %p66 = por %p64, %p65
      %s68 = sadd.s32 %s67, 1
      %p71 = scmp.eq.s32.totalorder %s12, 1
      %p72 = scmp.ne.s32.totalorder %s67, %s69
      %p73 = scmp.eq.s32.totalorder %s12, 0
      %p74 = por %p72, %p73
      %p75 = scmp.ne.s32.totalorder %s67, %s69
      %p76 = scmp.eq.s32.totalorder %s17, 1
      %p77 = por %p75, %p76
      %p78 = scmp.ne.s32.totalorder %s69, %s70
      %p79 = scmp.eq.s32.totalorder %s17, 0
      %p80 = por %p78, %p79
      %p81 = scmp.ne.s32.totalorder %s69, %s70
      %p82 = scmp.eq.s32.totalorder %s18, 1
      %p83 = por %p81, %p82
      %p85 = scmp.ne.s32.totalorder %s70, %s84
      %p86 = scmp.eq.s32.totalorder %s18, 0
      %p87 = por %p85, %p86
      %s88 = ssub.s32 %s12, %s19
      %p89 = scmp.eq.s32.totalorder %s88, 0
      %s91 = sadd.s32 %s90, 1
      %s92 = scalar_select %p89, %s90, %s91
      %p95 = pneg %p89
      %p96 = scmp.eq.s32.totalorder %s12, 1
      %p97 = por %p95, %p96
      %p98 = scmp.ne.s32.totalorder %s90, %s93
      %p99 = scmp.eq.s32.totalorder %s12, 0
      %p100 = por %p98, %p99
      %p101 = scmp.ne.s32.totalorder %s90, %s93
      %p102 = scmp.eq.s32.totalorder %s17, 1
      %p103 = por %p101, %p102
      %p104 = scmp.ne.s32.totalorder %s93, %s94
      %p105 = scmp.eq.s32.totalorder %s17, 0
      %p106 = por %p104, %p105
      %p107 = scmp.ne.s32.totalorder %s93, %s94
      %p108 = scmp.eq.s32.totalorder %s18, 1
      %p109 = por %p107, %p108
      %p111 = scmp.ne.s32.totalorder %s94, %s110
      %p112 = scmp.eq.s32.totalorder %s18, 0
      %p113 = por %p111, %p112
      %p114 = scmp.le.s32.totalorder 1, %s12
      %p115 = scmp.lt.s32.totalorder %s12, 3
      %p116 = pnand %p114, %p115
      %p117 = pneg %p116
      // Predicated region
      $region9: #{tpu_custom_call.1} parent=5 // pred_check
        _
      $region10: #{tpu_custom_call.1} parent=5 // pred_check_branch
        %119 = sbr.rel (%p116) target = $region12
      $region11: #{tpu_custom_call.1} parent=5 // pred_region
        %s120 = ssub.s32 %s12, 1
        // Predicated region
        $region13: #{tpu_custom_call.1} parent=11 // pred_check
          %p121 = pneg %p59
        $region14: #{tpu_custom_call.1} parent=11 // pred_check_branch
          %123 = sbr.rel (%p121) target = $region16
        $region15: #{tpu_custom_call.1} parent=11 // pred_region
          _
        $region16: #{tpu_custom_call.1} parent=11 // pred_fallthru
          _
        // Predicated region
        $region17: #{tpu_custom_call.1} parent=11 // pred_check
          %p124 = pneg %p80
        $region18: #{tpu_custom_call.1} parent=11 // pred_check_branch
          %126 = sbr.rel (%p124) target = $region20
        $region19: #{tpu_custom_call.1} parent=11 // pred_region
          _
        $region20: #{tpu_custom_call.1} parent=11 // pred_fallthru
          _
      $region12: #{tpu_custom_call.1} parent=5 // pred_fallthru
        _
      %p127 = scmp.lt.s32.totalorder %s12, 2
      // Predicated region
      $region21: #{tpu_custom_call.1} parent=5 // pred_check
        %p128 = pneg %p127
      $region22: #{tpu_custom_call.1} parent=5 // pred_check_branch
        %130 = sbr.rel (%p128) target = $region24
      $region23: #{tpu_custom_call.1} parent=5 // pred_region
        // Predicated region
        $region25: #{tpu_custom_call.1} parent=23 // pred_check
          %p131 = pneg %p32
        $region26: #{tpu_custom_call.1} parent=23 // pred_check_branch
          %133 = sbr.rel (%p131) target = $region28
        $region27: #{tpu_custom_call.1} parent=23 // pred_region
          %s134 = smul.u32 2, %s12
          %p135 = scmp.lt.s32.totalorder %s134, 3
          %s136 = scalar_select %p135, %s134, 3
          %s137 = smul.addr %s136, 32
          %s138 = smul.addr %s137, 8
          %s139 = scalar_lea.vmem %s0, %s138
          %s140 = smul.u32 2, %s12
        $region28: #{tpu_custom_call.1} parent=23 // pred_fallthru
          _
      $region24: #{tpu_custom_call.1} parent=5 // pred_fallthru
        _
      %p141 = scmp.le.s32.totalorder 1, %s12
      %p142 = scmp.lt.s32.totalorder %s12, 3
      %p143 = pnand %p141, %p142
      %p144 = pneg %p143
      // Predicated region
      $region29: #{tpu_custom_call.1} parent=5 // pred_check
        _
      $region30: #{tpu_custom_call.1} parent=5 // pred_check_branch
        %146 = sbr.rel (%p143) target = $region32
      $region31: #{tpu_custom_call.1} parent=5 // pred_region
        %s147 = ssub.s32 %s12, 1
        %s148 = smul.u32 2, %s17
        %p149 = scmp.lt.s32.totalorder %s148, 3
        %s150 = scalar_select %p149, %s148, 3
        %s151 = smul.addr %s150, 32
        %s152 = smul.addr %s151, 8
        %s153 = scalar_lea.vmem %s0, %s152
        %p154 = pneg %p38
        %p155 = pneg %p35
        %p156 = pneg %p59
        %p157 = pneg %p56
        %p158 = pneg %p80
        %p159 = pneg %p77
        %p160 = pneg %p106
        %p161 = pneg %p103
        %s162 = sand.u32 %s93, 1
        %s163 = scalar_lea.sflag [#allocation4], %s162
        %s164 = sand.u32 %s93, 1
        %s165 = smul.addr %s164, 512
        %s166 = scalar_lea.vmem [#allocation3], %s165
        %s167 = smul.u32 2, %s17
        %p168 = scmp.lt.s32.totalorder %s167, 3
        %s169 = scalar_select %p168, %s167, 3
        %s170 = smul.addr %s169, 32
        %s171 = smul.addr %s170, 8
        %s172 = scalar_lea.vmem %s0, %s171
        %s173 = smul.u32 2, %s17
        %s174 = smul.u32 2, %s17
        %v175 = vld [vmem:[%s172] sm:$0xff]
        %v176 = vld [vmem:[%s172 + $0x8] sm:$0xff]
        %v177 = vld [vmem:[%s172 + $0x10] sm:$0xff]
        %v178 = vld [vmem:[%s172 + $0x18] sm:$0xff]
        %v179 = vld [vmem:[%s172 + $0x20] sm:$0xff]
        %v180 = vld [vmem:[%s172 + $0x28] sm:$0xff]
        %v181 = vld [vmem:[%s172 + $0x30] sm:$0xff]
        %v182 = vld [vmem:[%s172 + $0x38] sm:$0xff]
        %v183 = vld [vmem:[%s172 + $0x40] sm:$0xff]
        %v184 = vld [vmem:[%s172 + $0x48] sm:$0xff]
        %v185 = vld [vmem:[%s172 + $0x50] sm:$0xff]
        %v186 = vld [vmem:[%s172 + $0x58] sm:$0xff]
        %v187 = vld [vmem:[%s172 + $0x60] sm:$0xff]
        %v188 = vld [vmem:[%s172 + $0x68] sm:$0xff]
        %v189 = vld [vmem:[%s172 + $0x70] sm:$0xff]
        %v190 = vld [vmem:[%s172 + $0x78] sm:$0xff]
        %v191 = vld [vmem:[%s172 + $0x80] sm:$0xff]
        %v192 = vld [vmem:[%s172 + $0x88] sm:$0xff]
        %v193 = vld [vmem:[%s172 + $0x90] sm:$0xff]
        %v194 = vld [vmem:[%s172 + $0x98] sm:$0xff]
        %v195 = vld [vmem:[%s172 + $0xa0] sm:$0xff]
        %v196 = vld [vmem:[%s172 + $0xa8] sm:$0xff]
        %v197 = vld [vmem:[%s172 + $0xb0] sm:$0xff]
        %v198 = vld [vmem:[%s172 + $0xb8] sm:$0xff]
        %v199 = vld [vmem:[%s172 + $0xc0] sm:$0xff]
        %v200 = vld [vmem:[%s172 + $0xc8] sm:$0xff]
        %v201 = vld [vmem:[%s172 + $0xd0] sm:$0xff]
        %v202 = vld [vmem:[%s172 + $0xd8] sm:$0xff]
        %v203 = vld [vmem:[%s172 + $0xe0] sm:$0xff]
        %v204 = vld [vmem:[%s172 + $0xe8] sm:$0xff]
        %v205 = vld [vmem:[%s172 + $0xf0] sm:$0xff]
        %v206 = vld [vmem:[%s172 + $0xf8] sm:$0xff]
        %v207 = vld [vmem:[%s172 + $0x100] sm:$0xff]
        %v208 = vld [vmem:[%s172 + $0x108] sm:$0xff]
        %v209 = vld [vmem:[%s172 + $0x110] sm:$0xff]
        %v210 = vld [vmem:[%s172 + $0x118] sm:$0xff]
        %v211 = vld [vmem:[%s172 + $0x120] sm:$0xff]
        %v212 = vld [vmem:[%s172 + $0x128] sm:$0xff]
        %v213 = vld [vmem:[%s172 + $0x130] sm:$0xff]
        %v214 = vld [vmem:[%s172 + $0x138] sm:$0xff]
        %v215 = vld [vmem:[%s172 + $0x140] sm:$0xff]
        %v216 = vld [vmem:[%s172 + $0x148] sm:$0xff]
        %v217 = vld [vmem:[%s172 + $0x150] sm:$0xff]
        %v218 = vld [vmem:[%s172 + $0x158] sm:$0xff]
        %v219 = vld [vmem:[%s172 + $0x160] sm:$0xff]
        %v220 = vld [vmem:[%s172 + $0x168] sm:$0xff]
        %v221 = vld [vmem:[%s172 + $0x170] sm:$0xff]
        %v222 = vld [vmem:[%s172 + $0x178] sm:$0xff]
        %v223 = vld [vmem:[%s172 + $0x180] sm:$0xff]
        %v224 = vld [vmem:[%s172 + $0x188] sm:$0xff]
        %v225 = vld [vmem:[%s172 + $0x190] sm:$0xff]
        %v226 = vld [vmem:[%s172 + $0x198] sm:$0xff]
        %v227 = vld [vmem:[%s172 + $0x1a0] sm:$0xff]
        %v228 = vld [vmem:[%s172 + $0x1a8] sm:$0xff]
        %v229 = vld [vmem:[%s172 + $0x1b0] sm:$0xff]
        %v230 = vld [vmem:[%s172 + $0x1b8] sm:$0xff]
        %v231 = vld [vmem:[%s172 + $0x1c0] sm:$0xff]
        %v232 = vld [vmem:[%s172 + $0x1c8] sm:$0xff]
        %v233 = vld [vmem:[%s172 + $0x1d0] sm:$0xff]
        %v234 = vld [vmem:[%s172 + $0x1d8] sm:$0xff]
        %v235 = vld [vmem:[%s172 + $0x1e0] sm:$0xff]
        %v236 = vld [vmem:[%s172 + $0x1e8] sm:$0xff]
        %v237 = vld [vmem:[%s172 + $0x1f0] sm:$0xff]
        %v238 = vld [vmem:[%s172 + $0x1f8] sm:$0xff]
        %239 = vst [vmem:[#allocation2] sm:$0xff] 0.0
        %vm240 = vcmask 523264
        %241 = vst.msk [vmem:[#allocation2 + $0x8] sm:$0xff] %vm240, 0.0
        %242 = vst [vmem:[#allocation2 + $0x10] sm:$0xff] 0.0
        %243 = vst.msk [vmem:[#allocation2 + $0x18] sm:$0xff] %vm240, 0.0
        %244 = vst [vmem:[#allocation2 + $0x240] sm:$0xff] 0.0
        %245 = vst.msk [vmem:[#allocation2 + $0x248] sm:$0xff] %vm240, 0.0
        %246 = vst [vmem:[#allocation2 + $0x250] sm:$0xff] 0.0
        %247 = vst.msk [vmem:[#allocation2 + $0x258] sm:$0xff] %vm240, 0.0
        %s248 = scalar_lea.vmem [#allocation2], 544
        %249 = vst [vmem:[%s248] sm:$0xff] 0.0
        %250 = vst.msk [vmem:[%s248 + $0x8] sm:$0xff] %vm240, 0.0
        %251 = vst [vmem:[%s248 + $0x10] sm:$0xff] 0.0
        %252 = vst.msk [vmem:[%s248 + $0x18] sm:$0xff] %vm240, 0.0
        %253 = vst [vmem:[%s248 + $0x240] sm:$0xff] 0.0
        %254 = vst.msk [vmem:[%s248 + $0x248] sm:$0xff] %vm240, 0.0
        %255 = vst [vmem:[%s248 + $0x250] sm:$0xff] 0.0
        %256 = vst.msk [vmem:[%s248 + $0x258] sm:$0xff] %vm240, 0.0
        %s257 = scalar_lea.vmem [#allocation2], 32
        %vm258 = vcmask 516096
        %259 = vst.msk [vmem:[%s257] sm:$0x1] %vm258, 0.0
        %260 = vst.msk [vmem:[%s257 + $0x20] sm:$0x1] %vm258, 0.0
        %261 = vst.msk [vmem:[%s257 + $0x40] sm:$0x1] %vm258, 0.0
        %262 = vst.msk [vmem:[%s257 + $0x60] sm:$0x1] %vm258, 0.0
        %263 = vst.msk [vmem:[%s257 + $0x80] sm:$0x1] %vm258, 0.0
        %264 = vst.msk [vmem:[%s257 + $0xa0] sm:$0x1] %vm258, 0.0
        %265 = vst.msk [vmem:[%s257 + $0xc0] sm:$0x1] %vm258, 0.0
        %266 = vst.msk [vmem:[%s257 + $0xe0] sm:$0x1] %vm258, 0.0
        %267 = vst.msk [vmem:[%s257 + $0x100] sm:$0x1] %vm258, 0.0
        %268 = vst.msk [vmem:[%s257 + $0x120] sm:$0x1] %vm258, 0.0
        %269 = vst.msk [vmem:[%s257 + $0x140] sm:$0x1] %vm258, 0.0
        %270 = vst.msk [vmem:[%s257 + $0x160] sm:$0x1] %vm258, 0.0
        %271 = vst.msk [vmem:[%s257 + $0x180] sm:$0x1] %vm258, 0.0
        %272 = vst.msk [vmem:[%s257 + $0x1a0] sm:$0x1] %vm258, 0.0
        %273 = vst.msk [vmem:[%s257 + $0x1c0] sm:$0x1] %vm258, 0.0
        %274 = vst.msk [vmem:[%s257 + $0x1e0] sm:$0x1] %vm258, 0.0
        %275 = vst.msk [vmem:[%s257 + $0x240] sm:$0x1] %vm258, 0.0
        %276 = vst.msk [vmem:[%s257 + $0x260] sm:$0x1] %vm258, 0.0
        %277 = vst.msk [vmem:[%s257 + $0x280] sm:$0x1] %vm258, 0.0
        %278 = vst.msk [vmem:[%s257 + $0x2a0] sm:$0x1] %vm258, 0.0
        %279 = vst.msk [vmem:[%s257 + $0x2c0] sm:$0x1] %vm258, 0.0
        %280 = vst.msk [vmem:[%s257 + $0x2e0] sm:$0x1] %vm258, 0.0
        %281 = vst.msk [vmem:[%s257 + $0x300] sm:$0x1] %vm258, 0.0
        %282 = vst.msk [vmem:[%s257 + $0x320] sm:$0x1] %vm258, 0.0
        %283 = vst.msk [vmem:[%s257 + $0x340] sm:$0x1] %vm258, 0.0
        %284 = vst.msk [vmem:[%s257 + $0x360] sm:$0x1] %vm258, 0.0
        %285 = vst.msk [vmem:[%s257 + $0x380] sm:$0x1] %vm258, 0.0
        %286 = vst.msk [vmem:[%s257 + $0x3a0] sm:$0x1] %vm258, 0.0
        %287 = vst.msk [vmem:[%s257 + $0x3c0] sm:$0x1] %vm258, 0.0
        %288 = vst.msk [vmem:[%s257 + $0x3e0] sm:$0x1] %vm258, 0.0
        %289 = vst.msk [vmem:[%s257 + $0x400] sm:$0x1] %vm258, 0.0
        %290 = vst.msk [vmem:[%s257 + $0x420] sm:$0x1] %vm258, 0.0
        %291 = vst.msk [vmem:[%s257 + $0x1f] sm:$0x1] %vm258, 0.0
        %292 = vst.msk [vmem:[%s257 + $0x3f] sm:$0x1] %vm258, 0.0
        %293 = vst.msk [vmem:[%s257 + $0x5f] sm:$0x1] %vm258, 0.0
        %294 = vst.msk [vmem:[%s257 + $0x7f] sm:$0x1] %vm258, 0.0
        %295 = vst.msk [vmem:[%s257 + $0x9f] sm:$0x1] %vm258, 0.0
        %296 = vst.msk [vmem:[%s257 + $0xbf] sm:$0x1] %vm258, 0.0
        %297 = vst.msk [vmem:[%s257 + $0xdf] sm:$0x1] %vm258, 0.0
        %298 = vst.msk [vmem:[%s257 + $0xff] sm:$0x1] %vm258, 0.0
        %299 = vst.msk [vmem:[%s257 + $0x11f] sm:$0x1] %vm258, 0.0
        %300 = vst.msk [vmem:[%s257 + $0x13f] sm:$0x1] %vm258, 0.0
        %301 = vst.msk [vmem:[%s257 + $0x15f] sm:$0x1] %vm258, 0.0
        %302 = vst.msk [vmem:[%s257 + $0x17f] sm:$0x1] %vm258, 0.0
        %303 = vst.msk [vmem:[%s257 + $0x19f] sm:$0x1] %vm258, 0.0
        %304 = vst.msk [vmem:[%s257 + $0x1bf] sm:$0x1] %vm258, 0.0
        %305 = vst.msk [vmem:[%s257 + $0x1df] sm:$0x1] %vm258, 0.0
        %306 = vst.msk [vmem:[%s257 + $0x1ff] sm:$0x1] %vm258, 0.0
        %307 = vst.msk [vmem:[%s257 + $0x25f] sm:$0x1] %vm258, 0.0
        %308 = vst.msk [vmem:[%s257 + $0x27f] sm:$0x1] %vm258, 0.0
        %309 = vst.msk [vmem:[%s257 + $0x29f] sm:$0x1] %vm258, 0.0
        %310 = vst.msk [vmem:[%s257 + $0x2bf] sm:$0x1] %vm258, 0.0
        %311 = vst.msk [vmem:[%s257 + $0x2df] sm:$0x1] %vm258, 0.0
        %312 = vst.msk [vmem:[%s257 + $0x2ff] sm:$0x1] %vm258, 0.0
        %313 = vst.msk [vmem:[%s257 + $0x31f] sm:$0x1] %vm258, 0.0
        %314 = vst.msk [vmem:[%s257 + $0x33f] sm:$0x1] %vm258, 0.0
        %315 = vst.msk [vmem:[%s257 + $0x35f] sm:$0x1] %vm258, 0.0
        %316 = vst.msk [vmem:[%s257 + $0x37f] sm:$0x1] %vm258, 0.0
        %317 = vst.msk [vmem:[%s257 + $0x39f] sm:$0x1] %vm258, 0.0
        %318 = vst.msk [vmem:[%s257 + $0x3bf] sm:$0x1] %vm258, 0.0
        %319 = vst.msk [vmem:[%s257 + $0x3df] sm:$0x1] %vm258, 0.0
        %320 = vst.msk [vmem:[%s257 + $0x3ff] sm:$0x1] %vm258, 0.0
        %321 = vst.msk [vmem:[%s257 + $0x41f] sm:$0x1] %vm258, 0.0
        %322 = vst.msk [vmem:[%s257 + $0x43f] sm:$0x1] %vm258, 0.0
        %387 = vrot.lane.b32.xlu0 %v175, 64
        %v388 = vpop.permute.xlu0 %387
        %389 = vrot.lane.b32.xlu0 %v176, 64
        %v390 = vpop.permute.xlu0 %389
        %391 = vrot.lane.b32.xlu0 %v177, 64
        %v392 = vpop.permute.xlu0 %391
        %393 = vrot.lane.b32.xlu0 %v178, 64
        %v394 = vpop.permute.xlu0 %393
        %395 = vrot.lane.b32.xlu0 %v179, 64
        %v396 = vpop.permute.xlu0 %395
        %397 = vrot.lane.b32.xlu0 %v180, 64
        %v398 = vpop.permute.xlu0 %397
        %399 = vrot.lane.b32.xlu0 %v181, 64
        %v400 = vpop.permute.xlu0 %399
        %401 = vrot.lane.b32.xlu0 %v182, 64
        %v402 = vpop.permute.xlu0 %401
        %403 = vrot.lane.b32.xlu0 %v183, 64
        %v404 = vpop.permute.xlu0 %403
        %405 = vrot.lane.b32.xlu0 %v184, 64
        %v406 = vpop.permute.xlu0 %405
        %407 = vrot.lane.b32.xlu0 %v185, 64
        %v408 = vpop.permute.xlu0 %407
        %409 = vrot.lane.b32.xlu0 %v186, 64
        %v410 = vpop.permute.xlu0 %409
        %411 = vrot.lane.b32.xlu0 %v187, 64
        %v412 = vpop.permute.xlu0 %411
        %413 = vrot.lane.b32.xlu0 %v188, 64
        %v414 = vpop.permute.xlu0 %413
        %415 = vrot.lane.b32.xlu0 %v189, 64
        %v416 = vpop.permute.xlu0 %415
        %417 = vrot.lane.b32.xlu0 %v190, 64
        %v418 = vpop.permute.xlu0 %417
        %419 = vrot.lane.b32.xlu0 %v191, 64
        %v420 = vpop.permute.xlu0 %419
        %421 = vrot.lane.b32.xlu0 %v192, 64
        %v422 = vpop.permute.xlu0 %421
        %423 = vrot.lane.b32.xlu0 %v193, 64
        %v424 = vpop.permute.xlu0 %423
        %425 = vrot.lane.b32.xlu0 %v194, 64
        %v426 = vpop.permute.xlu0 %425
        %427 = vrot.lane.b32.xlu0 %v195, 64
        %v428 = vpop.permute.xlu0 %427
        %429 = vrot.lane.b32.xlu0 %v196, 64
        %v430 = vpop.permute.xlu0 %429
        %431 = vrot.lane.b32.xlu0 %v197, 64
        %v432 = vpop.permute.xlu0 %431
        %433 = vrot.lane.b32.xlu0 %v198, 64
        %v434 = vpop.permute.xlu0 %433
        %435 = vrot.lane.b32.xlu0 %v199, 64
        %v436 = vpop.permute.xlu0 %435
        %437 = vrot.lane.b32.xlu0 %v200, 64
        %v438 = vpop.permute.xlu0 %437
        %439 = vrot.lane.b32.xlu0 %v201, 64
        %v440 = vpop.permute.xlu0 %439
        %441 = vrot.lane.b32.xlu0 %v202, 64
        %v442 = vpop.permute.xlu0 %441
        %443 = vrot.lane.b32.xlu0 %v203, 64
        %v444 = vpop.permute.xlu0 %443
        %445 = vrot.lane.b32.xlu0 %v204, 64
        %v446 = vpop.permute.xlu0 %445
        %447 = vrot.lane.b32.xlu0 %v205, 64
        %v448 = vpop.permute.xlu0 %447
        %449 = vrot.lane.b32.xlu0 %v206, 64
        %v450 = vpop.permute.xlu0 %449
        %451 = vrot.lane.b32.xlu0 %v207, 64
        %v452 = vpop.permute.xlu0 %451
        %453 = vrot.lane.b32.xlu0 %v208, 64
        %v454 = vpop.permute.xlu0 %453
        %455 = vrot.lane.b32.xlu0 %v209, 64
        %v456 = vpop.permute.xlu0 %455
        %457 = vrot.lane.b32.xlu0 %v210, 64
        %v458 = vpop.permute.xlu0 %457
        %459 = vrot.lane.b32.xlu0 %v211, 64
        %v460 = vpop.permute.xlu0 %459
        %461 = vrot.lane.b32.xlu0 %v212, 64
        %v462 = vpop.permute.xlu0 %461
        %463 = vrot.lane.b32.xlu0 %v213, 64
        %v464 = vpop.permute.xlu0 %463
        %465 = vrot.lane.b32.xlu0 %v214, 64
        %v466 = vpop.permute.xlu0 %465
        %467 = vrot.lane.b32.xlu0 %v215, 64
        %v468 = vpop.permute.xlu0 %467
        %469 = vrot.lane.b32.xlu0 %v216, 64
        %v470 = vpop.permute.xlu0 %469
        %471 = vrot.lane.b32.xlu0 %v217, 64
        %v472 = vpop.permute.xlu0 %471
        %473 = vrot.lane.b32.xlu0 %v218, 64
        %v474 = vpop.permute.xlu0 %473
        %475 = vrot.lane.b32.xlu0 %v219, 64
        %v476 = vpop.permute.xlu0 %475
        %477 = vrot.lane.b32.xlu0 %v220, 64
        %v478 = vpop.permute.xlu0 %477
        %479 = vrot.lane.b32.xlu0 %v221, 64
        %v480 = vpop.permute.xlu0 %479
        %481 = vrot.lane.b32.xlu0 %v222, 64
        %v482 = vpop.permute.xlu0 %481
        %483 = vrot.lane.b32.xlu0 %v223, 64
        %v484 = vpop.permute.xlu0 %483
        %485 = vrot.lane.b32.xlu0 %v224, 64
        %v486 = vpop.permute.xlu0 %485
        %487 = vrot.lane.b32.xlu0 %v225, 64
        %v488 = vpop.permute.xlu0 %487
        %489 = vrot.lane.b32.xlu0 %v226, 64
        %v490 = vpop.permute.xlu0 %489
        %491 = vrot.lane.b32.xlu0 %v227, 64
        %v492 = vpop.permute.xlu0 %491
        %493 = vrot.lane.b32.xlu0 %v228, 64
        %v494 = vpop.permute.xlu0 %493
        %495 = vrot.lane.b32.xlu0 %v229, 64
        %v496 = vpop.permute.xlu0 %495
        %497 = vrot.lane.b32.xlu0 %v230, 64
        %v498 = vpop.permute.xlu0 %497
        %499 = vrot.lane.b32.xlu0 %v231, 64
        %v500 = vpop.permute.xlu0 %499
        %501 = vrot.lane.b32.xlu0 %v232, 64
        %v502 = vpop.permute.xlu0 %501
        %503 = vrot.lane.b32.xlu0 %v233, 64
        %v504 = vpop.permute.xlu0 %503
        %505 = vrot.lane.b32.xlu0 %v234, 64
        %v506 = vpop.permute.xlu0 %505
        %507 = vrot.lane.b32.xlu0 %v235, 64
        %v508 = vpop.permute.xlu0 %507
        %509 = vrot.lane.b32.xlu0 %v236, 64
        %v510 = vpop.permute.xlu0 %509
        %511 = vrot.lane.b32.xlu0 %v237, 64
        %v512 = vpop.permute.xlu0 %511
        %513 = vrot.lane.b32.xlu0 %v238, 64
        %v514 = vpop.permute.xlu0 %513
        %vm579 = vcmask 1048064
        %580 = vst.msk [vmem:[%s257] sm:$0xff] %vm579, %v388
        %581 = vst.msk [vmem:[%s257 + $0x10] sm:$0xff] %vm579, %v390
        %582 = vst.msk [vmem:[%s257 + $0x20] sm:$0xff] %vm579, %v392
        %583 = vst.msk [vmem:[%s257 + $0x30] sm:$0xff] %vm579, %v394
        %584 = vst.msk [vmem:[%s257 + $0x40] sm:$0xff] %vm579, %v396
        %585 = vst.msk [vmem:[%s257 + $0x50] sm:$0xff] %vm579, %v398
        %586 = vst.msk [vmem:[%s257 + $0x60] sm:$0xff] %vm579, %v400
        %587 = vst.msk [vmem:[%s257 + $0x70] sm:$0xff] %vm579, %v402
        %588 = vst.msk [vmem:[%s257 + $0x80] sm:$0xff] %vm579, %v404
        %589 = vst.msk [vmem:[%s257 + $0x90] sm:$0xff] %vm579, %v406
        %590 = vst.msk [vmem:[%s257 + $0xa0] sm:$0xff] %vm579, %v408
        %591 = vst.msk [vmem:[%s257 + $0xb0] sm:$0xff] %vm579, %v410
        %592 = vst.msk [vmem:[%s257 + $0xc0] sm:$0xff] %vm579, %v412
        %593 = vst.msk [vmem:[%s257 + $0xd0] sm:$0xff] %vm579, %v414
        %594 = vst.msk [vmem:[%s257 + $0xe0] sm:$0xff] %vm579, %v416
        %595 = vst.msk [vmem:[%s257 + $0xf0] sm:$0xff] %vm579, %v418
        %596 = vst.msk [vmem:[%s257 + $0x100] sm:$0xff] %vm579, %v420
        %597 = vst.msk [vmem:[%s257 + $0x110] sm:$0xff] %vm579, %v422
        %598 = vst.msk [vmem:[%s257 + $0x120] sm:$0xff] %vm579, %v424
        %599 = vst.msk [vmem:[%s257 + $0x130] sm:$0xff] %vm579, %v426
        %600 = vst.msk [vmem:[%s257 + $0x140] sm:$0xff] %vm579, %v428
        %601 = vst.msk [vmem:[%s257 + $0x150] sm:$0xff] %vm579, %v430
        %602 = vst.msk [vmem:[%s257 + $0x160] sm:$0xff] %vm579, %v432
        %603 = vst.msk [vmem:[%s257 + $0x170] sm:$0xff] %vm579, %v434
        %604 = vst.msk [vmem:[%s257 + $0x180] sm:$0xff] %vm579, %v436
        %605 = vst.msk [vmem:[%s257 + $0x190] sm:$0xff] %vm579, %v438
        %606 = vst.msk [vmem:[%s257 + $0x1a0] sm:$0xff] %vm579, %v440
        %607 = vst.msk [vmem:[%s257 + $0x1b0] sm:$0xff] %vm579, %v442
        %608 = vst.msk [vmem:[%s257 + $0x1c0] sm:$0xff] %vm579, %v444
        %609 = vst.msk [vmem:[%s257 + $0x1d0] sm:$0xff] %vm579, %v446
        %610 = vst.msk [vmem:[%s257 + $0x1e0] sm:$0xff] %vm579, %v448
        %611 = vst.msk [vmem:[%s257 + $0x1f0] sm:$0xff] %vm579, %v450
        %612 = vst.msk [vmem:[%s257 + $0x240] sm:$0xff] %vm579, %v452
        %613 = vst.msk [vmem:[%s257 + $0x250] sm:$0xff] %vm579, %v454
        %614 = vst.msk [vmem:[%s257 + $0x260] sm:$0xff] %vm579, %v456
        %615 = vst.msk [vmem:[%s257 + $0x270] sm:$0xff] %vm579, %v458
        %616 = vst.msk [vmem:[%s257 + $0x280] sm:$0xff] %vm579, %v460
        %617 = vst.msk [vmem:[%s257 + $0x290] sm:$0xff] %vm579, %v462
        %618 = vst.msk [vmem:[%s257 + $0x2a0] sm:$0xff] %vm579, %v464
        %619 = vst.msk [vmem:[%s257 + $0x2b0] sm:$0xff] %vm579, %v466
        %620 = vst.msk [vmem:[%s257 + $0x2c0] sm:$0xff] %vm579, %v468
        %621 = vst.msk [vmem:[%s257 + $0x2d0] sm:$0xff] %vm579, %v470
        %622 = vst.msk [vmem:[%s257 + $0x2e0] sm:$0xff] %vm579, %v472
        %623 = vst.msk [vmem:[%s257 + $0x2f0] sm:$0xff] %vm579, %v474
        %624 = vst.msk [vmem:[%s257 + $0x300] sm:$0xff] %vm579, %v476
        %625 = vst.msk [vmem:[%s257 + $0x310] sm:$0xff] %vm579, %v478
        %626 = vst.msk [vmem:[%s257 + $0x320] sm:$0xff] %vm579, %v480
        %627 = vst.msk [vmem:[%s257 + $0x330] sm:$0xff] %vm579, %v482
        %628 = vst.msk [vmem:[%s257 + $0x340] sm:$0xff] %vm579, %v484
        %629 = vst.msk [vmem:[%s257 + $0x350] sm:$0xff] %vm579, %v486
        %630 = vst.msk [vmem:[%s257 + $0x360] sm:$0xff] %vm579, %v488
        %631 = vst.msk [vmem:[%s257 + $0x370] sm:$0xff] %vm579, %v490
        %632 = vst.msk [vmem:[%s257 + $0x380] sm:$0xff] %vm579, %v492
        %633 = vst.msk [vmem:[%s257 + $0x390] sm:$0xff] %vm579, %v494
        %634 = vst.msk [vmem:[%s257 + $0x3a0] sm:$0xff] %vm579, %v496
        %635 = vst.msk [vmem:[%s257 + $0x3b0] sm:$0xff] %vm579, %v498
        %636 = vst.msk [vmem:[%s257 + $0x3c0] sm:$0xff] %vm579, %v500
        %637 = vst.msk [vmem:[%s257 + $0x3d0] sm:$0xff] %vm579, %v502
        %638 = vst.msk [vmem:[%s257 + $0x3e0] sm:$0xff] %vm579, %v504
        %639 = vst.msk [vmem:[%s257 + $0x3f0] sm:$0xff] %vm579, %v506
        %640 = vst.msk [vmem:[%s257 + $0x400] sm:$0xff] %vm579, %v508
        %641 = vst.msk [vmem:[%s257 + $0x410] sm:$0xff] %vm579, %v510
        %642 = vst.msk [vmem:[%s257 + $0x420] sm:$0xff] %vm579, %v512
        %643 = vst.msk [vmem:[%s257 + $0x430] sm:$0xff] %vm579, %v514
        %vm644 = vcmask 1040384
        %v645 = vrot.slane %v175, 7
        %v646 = vrot.slane %v176, 7
        %v647 = vsel %vm644, %v645, %v646
        %v648 = vrot.slane %v177, 7
        %v649 = vrot.slane %v178, 7
        %v650 = vsel %vm644, %v648, %v649
        %v651 = vrot.slane %v179, 7
        %v652 = vrot.slane %v180, 7
        %v653 = vsel %vm644, %v651, %v652
        %v654 = vrot.slane %v181, 7
        %v655 = vrot.slane %v182, 7
        %v656 = vsel %vm644, %v654, %v655
        %v657 = vrot.slane %v183, 7
        %v658 = vrot.slane %v184, 7
        %v659 = vsel %vm644, %v657, %v658
        %v660 = vrot.slane %v185, 7
        %v661 = vrot.slane %v186, 7
        %v662 = vsel %vm644, %v660, %v661
        %v663 = vrot.slane %v187, 7
        %v664 = vrot.slane %v188, 7
        %v665 = vsel %vm644, %v663, %v664
        %v666 = vrot.slane %v189, 7
        %v667 = vrot.slane %v190, 7
        %v668 = vsel %vm644, %v666, %v667
        %v669 = vrot.slane %v191, 7
        %v670 = vrot.slane %v192, 7
        %v671 = vsel %vm644, %v669, %v670
        %v672 = vrot.slane %v193, 7
        %v673 = vrot.slane %v194, 7
        %v674 = vsel %vm644, %v672, %v673
        %v675 = vrot.slane %v195, 7
        %v676 = vrot.slane %v196, 7
        %v677 = vsel %vm644, %v675, %v676
        %v678 = vrot.slane %v197, 7
        %v679 = vrot.slane %v198, 7
        %v680 = vsel %vm644, %v678, %v679
        %v681 = vrot.slane %v199, 7
        %v682 = vrot.slane %v200, 7
        %v683 = vsel %vm644, %v681, %v682
        %v684 = vrot.slane %v201, 7
        %v685 = vrot.slane %v202, 7
        %v686 = vsel %vm644, %v684, %v685
        %v687 = vrot.slane %v203, 7
        %v688 = vrot.slane %v204, 7
        %v689 = vsel %vm644, %v687, %v688
        %v690 = vrot.slane %v205, 7
        %v691 = vrot.slane %v206, 7
        %v692 = vsel %vm644, %v690, %v691
        %v693 = vrot.slane %v207, 7
        %v694 = vrot.slane %v208, 7
        %v695 = vsel %vm644, %v693, %v694
        %v696 = vrot.slane %v209, 7
        %v697 = vrot.slane %v210, 7
        %v698 = vsel %vm644, %v696, %v697
        %v699 = vrot.slane %v211, 7
        %v700 = vrot.slane %v212, 7
        %v701 = vsel %vm644, %v699, %v700
        %v702 = vrot.slane %v213, 7
        %v703 = vrot.slane %v214, 7
        %v704 = vsel %vm644, %v702, %v703
        %v705 = vrot.slane %v215, 7
        %v706 = vrot.slane %v216, 7
        %v707 = vsel %vm644, %v705, %v706
        %v708 = vrot.slane %v217, 7
        %v709 = vrot.slane %v218, 7
        %v710 = vsel %vm644, %v708, %v709
        %v711 = vrot.slane %v219, 7
        %v712 = vrot.slane %v220, 7
        %v713 = vsel %vm644, %v711, %v712
        %v714 = vrot.slane %v221, 7
        %v715 = vrot.slane %v222, 7
        %v716 = vsel %vm644, %v714, %v715
        %v717 = vrot.slane %v223, 7
        %v718 = vrot.slane %v224, 7
        %v719 = vsel %vm644, %v717, %v718
        %v720 = vrot.slane %v225, 7
        %v721 = vrot.slane %v226, 7
        %v722 = vsel %vm644, %v720, %v721
        %v723 = vrot.slane %v227, 7
        %v724 = vrot.slane %v228, 7
        %v725 = vsel %vm644, %v723, %v724
        %v726 = vrot.slane %v229, 7
        %v727 = vrot.slane %v230, 7
        %v728 = vsel %vm644, %v726, %v727
        %v729 = vrot.slane %v231, 7
        %v730 = vrot.slane %v232, 7
        %v731 = vsel %vm644, %v729, %v730
        %v732 = vrot.slane %v233, 7
        %v733 = vrot.slane %v234, 7
        %v734 = vsel %vm644, %v732, %v733
        %v735 = vrot.slane %v235, 7
        %v736 = vrot.slane %v236, 7
        %v737 = vsel %vm644, %v735, %v736
        %v738 = vrot.slane %v237, 7
        %v739 = vrot.slane %v238, 7
        %v740 = vsel %vm644, %v738, %v739
        %vm805 = vcmask 523265
        %806 = vst.msk [vmem:[%s257] sm:$0xfe] %vm805, %v645
        %807 = vst.msk [vmem:[%s257 + $0x10] sm:$0xff] %vm240, %v647
        %808 = vst.msk [vmem:[%s257 + $0x20] sm:$0xfe] %vm805, %v648
        %809 = vst.msk [vmem:[%s257 + $0x30] sm:$0xff] %vm240, %v650
        %810 = vst.msk [vmem:[%s257 + $0x40] sm:$0xfe] %vm805, %v651
        %811 = vst.msk [vmem:[%s257 + $0x50] sm:$0xff] %vm240, %v653
        %812 = vst.msk [vmem:[%s257 + $0x60] sm:$0xfe] %vm805, %v654
        %813 = vst.msk [vmem:[%s257 + $0x70] sm:$0xff] %vm240, %v656
        %814 = vst.msk [vmem:[%s257 + $0x80] sm:$0xfe] %vm805, %v657
        %815 = vst.msk [vmem:[%s257 + $0x90] sm:$0xff] %vm240, %v659
        %816 = vst.msk [vmem:[%s257 + $0xa0] sm:$0xfe] %vm805, %v660
        %817 = vst.msk [vmem:[%s257 + $0xb0] sm:$0xff] %vm240, %v662
        %818 = vst.msk [vmem:[%s257 + $0xc0] sm:$0xfe] %vm805, %v663
        %819 = vst.msk [vmem:[%s257 + $0xd0] sm:$0xff] %vm240, %v665
        %820 = vst.msk [vmem:[%s257 + $0xe0] sm:$0xfe] %vm805, %v666
        %821 = vst.msk [vmem:[%s257 + $0xf0] sm:$0xff] %vm240, %v668
        %822 = vst.msk [vmem:[%s257 + $0x100] sm:$0xfe] %vm805, %v669
        %823 = vst.msk [vmem:[%s257 + $0x110] sm:$0xff] %vm240, %v671
        %824 = vst.msk [vmem:[%s257 + $0x120] sm:$0xfe] %vm805, %v672
        %825 = vst.msk [vmem:[%s257 + $0x130] sm:$0xff] %vm240, %v674
        %826 = vst.msk [vmem:[%s257 + $0x140] sm:$0xfe] %vm805, %v675
        %827 = vst.msk [vmem:[%s257 + $0x150] sm:$0xff] %vm240, %v677
        %828 = vst.msk [vmem:[%s257 + $0x160] sm:$0xfe] %vm805, %v678
        %829 = vst.msk [vmem:[%s257 + $0x170] sm:$0xff] %vm240, %v680
        %830 = vst.msk [vmem:[%s257 + $0x180] sm:$0xfe] %vm805, %v681
        %831 = vst.msk [vmem:[%s257 + $0x190] sm:$0xff] %vm240, %v683
        %832 = vst.msk [vmem:[%s257 + $0x1a0] sm:$0xfe] %vm805, %v684
        %833 = vst.msk [vmem:[%s257 + $0x1b0] sm:$0xff] %vm240, %v686
        %834 = vst.msk [vmem:[%s257 + $0x1c0] sm:$0xfe] %vm805, %v687
        %835 = vst.msk [vmem:[%s257 + $0x1d0] sm:$0xff] %vm240, %v689
        %836 = vst.msk [vmem:[%s257 + $0x1e0] sm:$0xfe] %vm805, %v690
        %837 = vst.msk [vmem:[%s257 + $0x1f0] sm:$0xff] %vm240, %v692
        %838 = vst.msk [vmem:[%s257 + $0x240] sm:$0xfe] %vm805, %v693
        %839 = vst.msk [vmem:[%s257 + $0x250] sm:$0xff] %vm240, %v695
        %840 = vst.msk [vmem:[%s257 + $0x260] sm:$0xfe] %vm805, %v696
        %841 = vst.msk [vmem:[%s257 + $0x270] sm:$0xff] %vm240, %v698
        %842 = vst.msk [vmem:[%s257 + $0x280] sm:$0xfe] %vm805, %v699
        %843 = vst.msk [vmem:[%s257 + $0x290] sm:$0xff] %vm240, %v701
        %844 = vst.msk [vmem:[%s257 + $0x2a0] sm:$0xfe] %vm805, %v702
        %845 = vst.msk [vmem:[%s257 + $0x2b0] sm:$0xff] %vm240, %v704
        %846 = vst.msk [vmem:[%s257 + $0x2c0] sm:$0xfe] %vm805, %v705
        %847 = vst.msk [vmem:[%s257 + $0x2d0] sm:$0xff] %vm240, %v707
        %848 = vst.msk [vmem:[%s257 + $0x2e0] sm:$0xfe] %vm805, %v708
        %849 = vst.msk [vmem:[%s257 + $0x2f0] sm:$0xff] %vm240, %v710
        %850 = vst.msk [vmem:[%s257 + $0x300] sm:$0xfe] %vm805, %v711
        %851 = vst.msk [vmem:[%s257 + $0x310] sm:$0xff] %vm240, %v713
        %852 = vst.msk [vmem:[%s257 + $0x320] sm:$0xfe] %vm805, %v714
        %853 = vst.msk [vmem:[%s257 + $0x330] sm:$0xff] %vm240, %v716
        %854 = vst.msk [vmem:[%s257 + $0x340] sm:$0xfe] %vm805, %v717
        %855 = vst.msk [vmem:[%s257 + $0x350] sm:$0xff] %vm240, %v719
        %856 = vst.msk [vmem:[%s257 + $0x360] sm:$0xfe] %vm805, %v720
        %857 = vst.msk [vmem:[%s257 + $0x370] sm:$0xff] %vm240, %v722
        %858 = vst.msk [vmem:[%s257 + $0x380] sm:$0xfe] %vm805, %v723
        %859 = vst.msk [vmem:[%s257 + $0x390] sm:$0xff] %vm240, %v725
        %860 = vst.msk [vmem:[%s257 + $0x3a0] sm:$0xfe] %vm805, %v726
        %861 = vst.msk [vmem:[%s257 + $0x3b0] sm:$0xff] %vm240, %v728
        %862 = vst.msk [vmem:[%s257 + $0x3c0] sm:$0xfe] %vm805, %v729
        %863 = vst.msk [vmem:[%s257 + $0x3d0] sm:$0xff] %vm240, %v731
        %864 = vst.msk [vmem:[%s257 + $0x3e0] sm:$0xfe] %vm805, %v732
        %865 = vst.msk [vmem:[%s257 + $0x3f0] sm:$0xff] %vm240, %v734
        %866 = vst.msk [vmem:[%s257 + $0x400] sm:$0xfe] %vm805, %v735
        %867 = vst.msk [vmem:[%s257 + $0x410] sm:$0xff] %vm240, %v737
        %868 = vst.msk [vmem:[%s257 + $0x420] sm:$0xfe] %vm805, %v738
        %869 = vst.msk [vmem:[%s257 + $0x430] sm:$0xff] %vm240, %v740
        %vm870 = vcmask 1046528
        %v871 = vrot.slane %v175, 1
        %v872 = vrot.slane %v176, 1
        %v873 = vsel %vm870, %v871, %v872
        %v874 = vrot.slane %v177, 1
        %v875 = vrot.slane %v178, 1
        %v876 = vsel %vm870, %v874, %v875
        %v877 = vrot.slane %v179, 1
        %v878 = vrot.slane %v180, 1
        %v879 = vsel %vm870, %v877, %v878
        %v880 = vrot.slane %v181, 1
        %v881 = vrot.slane %v182, 1
        %v882 = vsel %vm870, %v880, %v881
        %v883 = vrot.slane %v183, 1
        %v884 = vrot.slane %v184, 1
        %v885 = vsel %vm870, %v883, %v884
        %v886 = vrot.slane %v185, 1
        %v887 = vrot.slane %v186, 1
        %v888 = vsel %vm870, %v886, %v887
        %v889 = vrot.slane %v187, 1
        %v890 = vrot.slane %v188, 1
        %v891 = vsel %vm870, %v889, %v890
        %v892 = vrot.slane %v189, 1
        %v893 = vrot.slane %v190, 1
        %v894 = vsel %vm870, %v892, %v893
        %v895 = vrot.slane %v191, 1
        %v896 = vrot.slane %v192, 1
        %v897 = vsel %vm870, %v895, %v896
        %v898 = vrot.slane %v193, 1
        %v899 = vrot.slane %v194, 1
        %v900 = vsel %vm870, %v898, %v899
        %v901 = vrot.slane %v195, 1
        %v902 = vrot.slane %v196, 1
        %v903 = vsel %vm870, %v901, %v902
        %v904 = vrot.slane %v197, 1
        %v905 = vrot.slane %v198, 1
        %v906 = vsel %vm870, %v904, %v905
        %v907 = vrot.slane %v199, 1
        %v908 = vrot.slane %v200, 1
        %v909 = vsel %vm870, %v907, %v908
        %v910 = vrot.slane %v201, 1
        %v911 = vrot.slane %v202, 1
        %v912 = vsel %vm870, %v910, %v911
        %v913 = vrot.slane %v203, 1
        %v914 = vrot.slane %v204, 1
        %v915 = vsel %vm870, %v913, %v914
        %v916 = vrot.slane %v205, 1
        %v917 = vrot.slane %v206, 1
        %v918 = vsel %vm870, %v916, %v917
        %v919 = vrot.slane %v207, 1
        %v920 = vrot.slane %v208, 1
        %v921 = vsel %vm870, %v919, %v920
        %v922 = vrot.slane %v209, 1
        %v923 = vrot.slane %v210, 1
        %v924 = vsel %vm870, %v922, %v923
        %v925 = vrot.slane %v211, 1
        %v926 = vrot.slane %v212, 1
        %v927 = vsel %vm870, %v925, %v926
        %v928 = vrot.slane %v213, 1
        %v929 = vrot.slane %v214, 1
        %v930 = vsel %vm870, %v928, %v929
        %v931 = vrot.slane %v215, 1
        %v932 = vrot.slane %v216, 1
        %v933 = vsel %vm870, %v931, %v932
        %v934 = vrot.slane %v217, 1
        %v935 = vrot.slane %v218, 1
        %v936 = vsel %vm870, %v934, %v935
        %v937 = vrot.slane %v219, 1
        %v938 = vrot.slane %v220, 1
        %v939 = vsel %vm870, %v937, %v938
        %v940 = vrot.slane %v221, 1
        %v941 = vrot.slane %v222, 1
        %v942 = vsel %vm870, %v940, %v941
        %v943 = vrot.slane %v223, 1
        %v944 = vrot.slane %v224, 1
        %v945 = vsel %vm870, %v943, %v944
        %v946 = vrot.slane %v225, 1
        %v947 = vrot.slane %v226, 1
        %v948 = vsel %vm870, %v946, %v947
        %v949 = vrot.slane %v227, 1
        %v950 = vrot.slane %v228, 1
        %v951 = vsel %vm870, %v949, %v950
        %v952 = vrot.slane %v229, 1
        %v953 = vrot.slane %v230, 1
        %v954 = vsel %vm870, %v952, %v953
        %v955 = vrot.slane %v231, 1
        %v956 = vrot.slane %v232, 1
        %v957 = vsel %vm870, %v955, %v956
        %v958 = vrot.slane %v233, 1
        %v959 = vrot.slane %v234, 1
        %v960 = vsel %vm870, %v958, %v959
        %v961 = vrot.slane %v235, 1
        %v962 = vrot.slane %v236, 1
        %v963 = vsel %vm870, %v961, %v962
        %v964 = vrot.slane %v237, 1
        %v965 = vrot.slane %v238, 1
        %v966 = vsel %vm870, %v964, %v965
        %1031 = vst.msk [vmem:[%s257 + $0x8] sm:$0xff] %vm240, %v873
        %vm1032 = vcmask 522240
        %1033 = vst.msk [vmem:[%s257 + $0x18] sm:$0x7f] %vm1032, %v872
        %1034 = vst.msk [vmem:[%s257 + $0x28] sm:$0xff] %vm240, %v876
        %1035 = vst.msk [vmem:[%s257 + $0x38] sm:$0x7f] %vm1032, %v875
        %1036 = vst.msk [vmem:[%s257 + $0x48] sm:$0xff] %vm240, %v879
        %1037 = vst.msk [vmem:[%s257 + $0x58] sm:$0x7f] %vm1032, %v878
        %1038 = vst.msk [vmem:[%s257 + $0x68] sm:$0xff] %vm240, %v882
        %1039 = vst.msk [vmem:[%s257 + $0x78] sm:$0x7f] %vm1032, %v881
        %1040 = vst.msk [vmem:[%s257 + $0x88] sm:$0xff] %vm240, %v885
        %1041 = vst.msk [vmem:[%s257 + $0x98] sm:$0x7f] %vm1032, %v884
        %1042 = vst.msk [vmem:[%s257 + $0xa8] sm:$0xff] %vm240, %v888
        %1043 = vst.msk [vmem:[%s257 + $0xb8] sm:$0x7f] %vm1032, %v887
        %1044 = vst.msk [vmem:[%s257 + $0xc8] sm:$0xff] %vm240, %v891
        %1045 = vst.msk [vmem:[%s257 + $0xd8] sm:$0x7f] %vm1032, %v890
        %1046 = vst.msk [vmem:[%s257 + $0xe8] sm:$0xff] %vm240, %v894
        %1047 = vst.msk [vmem:[%s257 + $0xf8] sm:$0x7f] %vm1032, %v893
        %1048 = vst.msk [vmem:[%s257 + $0x108] sm:$0xff] %vm240, %v897
        %1049 = vst.msk [vmem:[%s257 + $0x118] sm:$0x7f] %vm1032, %v896
        %1050 = vst.msk [vmem:[%s257 + $0x128] sm:$0xff] %vm240, %v900
        %1051 = vst.msk [vmem:[%s257 + $0x138] sm:$0x7f] %vm1032, %v899
        %1052 = vst.msk [vmem:[%s257 + $0x148] sm:$0xff] %vm240, %v903
        %1053 = vst.msk [vmem:[%s257 + $0x158] sm:$0x7f] %vm1032, %v902
        %1054 = vst.msk [vmem:[%s257 + $0x168] sm:$0xff] %vm240, %v906
        %1055 = vst.msk [vmem:[%s257 + $0x178] sm:$0x7f] %vm1032, %v905
        %1056 = vst.msk [vmem:[%s257 + $0x188] sm:$0xff] %vm240, %v909
        %1057 = vst.msk [vmem:[%s257 + $0x198] sm:$0x7f] %vm1032, %v908
        %1058 = vst.msk [vmem:[%s257 + $0x1a8] sm:$0xff] %vm240, %v912
        %1059 = vst.msk [vmem:[%s257 + $0x1b8] sm:$0x7f] %vm1032, %v911
        %1060 = vst.msk [vmem:[%s257 + $0x1c8] sm:$0xff] %vm240, %v915
        %1061 = vst.msk [vmem:[%s257 + $0x1d8] sm:$0x7f] %vm1032, %v914
        %1062 = vst.msk [vmem:[%s257 + $0x1e8] sm:$0xff] %vm240, %v918
        %1063 = vst.msk [vmem:[%s257 + $0x1f8] sm:$0x7f] %vm1032, %v917
        %1064 = vst.msk [vmem:[%s257 + $0x248] sm:$0xff] %vm240, %v921
        %1065 = vst.msk [vmem:[%s257 + $0x258] sm:$0x7f] %vm1032, %v920
        %1066 = vst.msk [vmem:[%s257 + $0x268] sm:$0xff] %vm240, %v924
        %1067 = vst.msk [vmem:[%s257 + $0x278] sm:$0x7f] %vm1032, %v923
        %1068 = vst.msk [vmem:[%s257 + $0x288] sm:$0xff] %vm240, %v927
        %1069 = vst.msk [vmem:[%s257 + $0x298] sm:$0x7f] %vm1032, %v926
        %1070 = vst.msk [vmem:[%s257 + $0x2a8] sm:$0xff] %vm240, %v930
        %1071 = vst.msk [vmem:[%s257 + $0x2b8] sm:$0x7f] %vm1032, %v929
        %1072 = vst.msk [vmem:[%s257 + $0x2c8] sm:$0xff] %vm240, %v933
        %1073 = vst.msk [vmem:[%s257 + $0x2d8] sm:$0x7f] %vm1032, %v932
        %1074 = vst.msk [vmem:[%s257 + $0x2e8] sm:$0xff] %vm240, %v936
        %1075 = vst.msk [vmem:[%s257 + $0x2f8] sm:$0x7f] %vm1032, %v935
        %1076 = vst.msk [vmem:[%s257 + $0x308] sm:$0xff] %vm240, %v939
        %1077 = vst.msk [vmem:[%s257 + $0x318] sm:$0x7f] %vm1032, %v938
        %1078 = vst.msk [vmem:[%s257 + $0x328] sm:$0xff] %vm240, %v942
        %1079 = vst.msk [vmem:[%s257 + $0x338] sm:$0x7f] %vm1032, %v941
        %1080 = vst.msk [vmem:[%s257 + $0x348] sm:$0xff] %vm240, %v945
        %1081 = vst.msk [vmem:[%s257 + $0x358] sm:$0x7f] %vm1032, %v944
        %1082 = vst.msk [vmem:[%s257 + $0x368] sm:$0xff] %vm240, %v948
        %1083 = vst.msk [vmem:[%s257 + $0x378] sm:$0x7f] %vm1032, %v947
        %1084 = vst.msk [vmem:[%s257 + $0x388] sm:$0xff] %vm240, %v951
        %1085 = vst.msk [vmem:[%s257 + $0x398] sm:$0x7f] %vm1032, %v950
        %1086 = vst.msk [vmem:[%s257 + $0x3a8] sm:$0xff] %vm240, %v954
        %1087 = vst.msk [vmem:[%s257 + $0x3b8] sm:$0x7f] %vm1032, %v953
        %1088 = vst.msk [vmem:[%s257 + $0x3c8] sm:$0xff] %vm240, %v957
        %1089 = vst.msk [vmem:[%s257 + $0x3d8] sm:$0x7f] %vm1032, %v956
        %1090 = vst.msk [vmem:[%s257 + $0x3e8] sm:$0xff] %vm240, %v960
        %1091 = vst.msk [vmem:[%s257 + $0x3f8] sm:$0x7f] %vm1032, %v959
        %1092 = vst.msk [vmem:[%s257 + $0x408] sm:$0xff] %vm240, %v963
        %1093 = vst.msk [vmem:[%s257 + $0x418] sm:$0x7f] %vm1032, %v962
        %1094 = vst.msk [vmem:[%s257 + $0x428] sm:$0xff] %vm240, %v966
        %1095 = vst.msk [vmem:[%s257 + $0x438] sm:$0x7f] %vm1032, %v965
        %v1096 = vld [vmem:[#allocation2] sm:$0xff]
        %v1097 = vld [vmem:[#allocation2 + $0x8] sm:$0xff]
        %v1098 = vld [vmem:[#allocation2 + $0x10] sm:$0xff]
        %v1099 = vld [vmem:[#allocation2 + $0x18] sm:$0xff]
        %v1100 = vld [vmem:[#allocation2 + $0x20] sm:$0xff]
        %v1101 = vld [vmem:[#allocation2 + $0x28] sm:$0xff]
        %v1102 = vld [vmem:[#allocation2 + $0x30] sm:$0xff]
        %v1103 = vld [vmem:[#allocation2 + $0x38] sm:$0xff]
        %v1104 = vld [vmem:[#allocation2 + $0x40] sm:$0xff]
        %v1105 = vld [vmem:[#allocation2 + $0x48] sm:$0xff]
        %v1106 = vld [vmem:[#allocation2 + $0x50] sm:$0xff]
        %v1107 = vld [vmem:[#allocation2 + $0x58] sm:$0xff]
        %v1108 = vld [vmem:[#allocation2 + $0x60] sm:$0xff]
        %v1109 = vld [vmem:[#allocation2 + $0x68] sm:$0xff]
        %v1110 = vld [vmem:[#allocation2 + $0x70] sm:$0xff]
        %v1111 = vld [vmem:[#allocation2 + $0x78] sm:$0xff]
        %v1112 = vld [vmem:[#allocation2 + $0x80] sm:$0xff]
        %v1113 = vld [vmem:[#allocation2 + $0x88] sm:$0xff]
        %v1114 = vld [vmem:[#allocation2 + $0x90] sm:$0xff]
        %v1115 = vld [vmem:[#allocation2 + $0x98] sm:$0xff]
        %v1116 = vld [vmem:[#allocation2 + $0xa0] sm:$0xff]
        %v1117 = vld [vmem:[#allocation2 + $0xa8] sm:$0xff]
        %v1118 = vld [vmem:[#allocation2 + $0xb0] sm:$0xff]
        %v1119 = vld [vmem:[#allocation2 + $0xb8] sm:$0xff]
        %v1120 = vld [vmem:[#allocation2 + $0xc0] sm:$0xff]
        %v1121 = vld [vmem:[#allocation2 + $0xc8] sm:$0xff]
        %v1122 = vld [vmem:[#allocation2 + $0xd0] sm:$0xff]
        %v1123 = vld [vmem:[#allocation2 + $0xd8] sm:$0xff]
        %v1124 = vld [vmem:[#allocation2 + $0xe0] sm:$0xff]
        %v1125 = vld [vmem:[#allocation2 + $0xe8] sm:$0xff]
        %v1126 = vld [vmem:[#allocation2 + $0xf0] sm:$0xff]
        %v1127 = vld [vmem:[#allocation2 + $0xf8] sm:$0xff]
        %v1128 = vld [vmem:[#allocation2 + $0x100] sm:$0xff]
        %v1129 = vld [vmem:[#allocation2 + $0x108] sm:$0xff]
        %v1130 = vld [vmem:[#allocation2 + $0x110] sm:$0xff]
        %v1131 = vld [vmem:[#allocation2 + $0x118] sm:$0xff]
        %v1132 = vld [vmem:[#allocation2 + $0x120] sm:$0xff]
        %v1133 = vld [vmem:[#allocation2 + $0x128] sm:$0xff]
        %v1134 = vld [vmem:[#allocation2 + $0x130] sm:$0xff]
        %v1135 = vld [vmem:[#allocation2 + $0x138] sm:$0xff]
        %v1136 = vld [vmem:[#allocation2 + $0x140] sm:$0xff]
        %v1137 = vld [vmem:[#allocation2 + $0x148] sm:$0xff]
        %v1138 = vld [vmem:[#allocation2 + $0x150] sm:$0xff]
        %v1139 = vld [vmem:[#allocation2 + $0x158] sm:$0xff]
        %v1140 = vld [vmem:[#allocation2 + $0x160] sm:$0xff]
        %v1141 = vld [vmem:[#allocation2 + $0x168] sm:$0xff]
        %v1142 = vld [vmem:[#allocation2 + $0x170] sm:$0xff]
        %v1143 = vld [vmem:[#allocation2 + $0x178] sm:$0xff]
        %v1144 = vld [vmem:[#allocation2 + $0x180] sm:$0xff]
        %v1145 = vld [vmem:[#allocation2 + $0x188] sm:$0xff]
        %v1146 = vld [vmem:[#allocation2 + $0x190] sm:$0xff]
        %v1147 = vld [vmem:[#allocation2 + $0x198] sm:$0xff]
        %v1148 = vld [vmem:[#allocation2 + $0x1a0] sm:$0xff]
        %v1149 = vld [vmem:[#allocation2 + $0x1a8] sm:$0xff]
        %v1150 = vld [vmem:[#allocation2 + $0x1b0] sm:$0xff]
        %v1151 = vld [vmem:[#allocation2 + $0x1b8] sm:$0xff]
        %v1152 = vld [vmem:[#allocation2 + $0x1c0] sm:$0xff]
        %v1153 = vld [vmem:[#allocation2 + $0x1c8] sm:$0xff]
        %v1154 = vld [vmem:[#allocation2 + $0x1d0] sm:$0xff]
        %v1155 = vld [vmem:[#allocation2 + $0x1d8] sm:$0xff]
        %v1156 = vld [vmem:[#allocation2 + $0x1e0] sm:$0xff]
        %v1157 = vld [vmem:[#allocation2 + $0x1e8] sm:$0xff]
        %v1158 = vld [vmem:[#allocation2 + $0x1f0] sm:$0xff]
        %v1159 = vld [vmem:[#allocation2 + $0x1f8] sm:$0xff]
        %v1160 = vld [vmem:[#allocation2 + $0x240] sm:$0xff]
        %v1161 = vld [vmem:[#allocation2 + $0x248] sm:$0xff]
        %v1162 = vld [vmem:[#allocation2 + $0x250] sm:$0xff]
        %v1163 = vld [vmem:[#allocation2 + $0x258] sm:$0xff]
        %v1164 = vld [vmem:[#allocation2 + $0x260] sm:$0xff]
        %v1165 = vld [vmem:[#allocation2 + $0x268] sm:$0xff]
        %v1166 = vld [vmem:[#allocation2 + $0x270] sm:$0xff]
        %v1167 = vld [vmem:[#allocation2 + $0x278] sm:$0xff]
        %v1168 = vld [vmem:[#allocation2 + $0x280] sm:$0xff]
        %v1169 = vld [vmem:[#allocation2 + $0x288] sm:$0xff]
        %v1170 = vld [vmem:[#allocation2 + $0x290] sm:$0xff]
        %v1171 = vld [vmem:[#allocation2 + $0x298] sm:$0xff]
        %v1172 = vld [vmem:[#allocation2 + $0x2a0] sm:$0xff]
        %v1173 = vld [vmem:[#allocation2 + $0x2a8] sm:$0xff]
        %v1174 = vld [vmem:[#allocation2 + $0x2b0] sm:$0xff]
        %v1175 = vld [vmem:[#allocation2 + $0x2b8] sm:$0xff]
        %v1176 = vld [vmem:[#allocation2 + $0x2c0] sm:$0xff]
        %v1177 = vld [vmem:[#allocation2 + $0x2c8] sm:$0xff]
        %v1178 = vld [vmem:[#allocation2 + $0x2d0] sm:$0xff]
        %v1179 = vld [vmem:[#allocation2 + $0x2d8] sm:$0xff]
        %v1180 = vld [vmem:[#allocation2 + $0x2e0] sm:$0xff]
        %v1181 = vld [vmem:[#allocation2 + $0x2e8] sm:$0xff]
        %v1182 = vld [vmem:[#allocation2 + $0x2f0] sm:$0xff]
        %v1183 = vld [vmem:[#allocation2 + $0x2f8] sm:$0xff]
        %v1184 = vld [vmem:[#allocation2 + $0x300] sm:$0xff]
        %v1185 = vld [vmem:[#allocation2 + $0x308] sm:$0xff]
        %v1186 = vld [vmem:[#allocation2 + $0x310] sm:$0xff]
        %v1187 = vld [vmem:[#allocation2 + $0x318] sm:$0xff]
        %v1188 = vld [vmem:[#allocation2 + $0x320] sm:$0xff]
        %v1189 = vld [vmem:[#allocation2 + $0x328] sm:$0xff]
        %v1190 = vld [vmem:[#allocation2 + $0x330] sm:$0xff]
        %v1191 = vld [vmem:[#allocation2 + $0x338] sm:$0xff]
        %v1192 = vld [vmem:[#allocation2 + $0x340] sm:$0xff]
        %v1193 = vld [vmem:[#allocation2 + $0x348] sm:$0xff]
        %v1194 = vld [vmem:[#allocation2 + $0x350] sm:$0xff]
        %v1195 = vld [vmem:[#allocation2 + $0x358] sm:$0xff]
        %v1196 = vld [vmem:[#allocation2 + $0x360] sm:$0xff]
        %v1197 = vld [vmem:[#allocation2 + $0x368] sm:$0xff]
        %v1198 = vld [vmem:[#allocation2 + $0x370] sm:$0xff]
        %v1199 = vld [vmem:[#allocation2 + $0x378] sm:$0xff]
        %v1200 = vld [vmem:[#allocation2 + $0x380] sm:$0xff]
        %v1201 = vld [vmem:[#allocation2 + $0x388] sm:$0xff]
        %v1202 = vld [vmem:[#allocation2 + $0x390] sm:$0xff]
        %v1203 = vld [vmem:[#allocation2 + $0x398] sm:$0xff]
        %v1204 = vld [vmem:[#allocation2 + $0x3a0] sm:$0xff]
        %v1205 = vld [vmem:[#allocation2 + $0x3a8] sm:$0xff]
        %v1206 = vld [vmem:[#allocation2 + $0x3b0] sm:$0xff]
        %v1207 = vld [vmem:[#allocation2 + $0x3b8] sm:$0xff]
        %v1208 = vld [vmem:[#allocation2 + $0x3c0] sm:$0xff]
        %v1209 = vld [vmem:[#allocation2 + $0x3c8] sm:$0xff]
        %v1210 = vld [vmem:[#allocation2 + $0x3d0] sm:$0xff]
        %v1211 = vld [vmem:[#allocation2 + $0x3d8] sm:$0xff]
        %v1212 = vld [vmem:[#allocation2 + $0x3e0] sm:$0xff]
        %v1213 = vld [vmem:[#allocation2 + $0x3e8] sm:$0xff]
        %v1214 = vld [vmem:[#allocation2 + $0x3f0] sm:$0xff]
        %v1215 = vld [vmem:[#allocation2 + $0x3f8] sm:$0xff]
        %v1216 = vld [vmem:[#allocation2 + $0x400] sm:$0xff]
        %v1217 = vld [vmem:[#allocation2 + $0x408] sm:$0xff]
        %v1218 = vld [vmem:[#allocation2 + $0x410] sm:$0xff]
        %v1219 = vld [vmem:[#allocation2 + $0x418] sm:$0xff]
        %v1220 = vld [vmem:[#allocation2 + $0x420] sm:$0xff]
        %v1221 = vld [vmem:[#allocation2 + $0x428] sm:$0xff]
        %v1222 = vld [vmem:[#allocation2 + $0x430] sm:$0xff]
        %v1223 = vld [vmem:[#allocation2 + $0x438] sm:$0xff]
        %v1224 = vld [vmem:[%s1] sm:$0xff]
        %v1225 = vld [vmem:[%s1 + $0x8] sm:$0xff]
        %v1226 = vld [vmem:[%s1 + $0x10] sm:$0xff]
        %v1227 = vld [vmem:[%s1 + $0x18] sm:$0xff]
        %v1228 = vld [vmem:[%s1 + $0x20] sm:$0xff]
        %v1229 = vld [vmem:[%s1 + $0x28] sm:$0xff]
        %v1230 = vld [vmem:[%s1 + $0x30] sm:$0xff]
        %v1231 = vld [vmem:[%s1 + $0x38] sm:$0xff]
        %v1232 = vld [vmem:[%s1 + $0x40] sm:$0xff]
        %v1233 = vld [vmem:[%s1 + $0x48] sm:$0xff]
        %v1234 = vld [vmem:[%s1 + $0x50] sm:$0xff]
        %v1235 = vld [vmem:[%s1 + $0x58] sm:$0xff]
        %v1236 = vld [vmem:[%s1 + $0x60] sm:$0xff]
        %v1237 = vld [vmem:[%s1 + $0x68] sm:$0xff]
        %v1238 = vld [vmem:[%s1 + $0x70] sm:$0xff]
        %v1239 = vld [vmem:[%s1 + $0x78] sm:$0xff]
        %v1240 = vld [vmem:[%s1 + $0x80] sm:$0xff]
        %v1241 = vld [vmem:[%s1 + $0x88] sm:$0xff]
        %v1242 = vld [vmem:[%s1 + $0x90] sm:$0xff]
        %v1243 = vld [vmem:[%s1 + $0x98] sm:$0xff]
        %v1244 = vld [vmem:[%s1 + $0xa0] sm:$0xff]
        %v1245 = vld [vmem:[%s1 + $0xa8] sm:$0xff]
        %v1246 = vld [vmem:[%s1 + $0xb0] sm:$0xff]
        %v1247 = vld [vmem:[%s1 + $0xb8] sm:$0xff]
        %v1248 = vld [vmem:[%s257] sm:$0xff]
        %v1249 = vld [vmem:[%s257 + $0x8] sm:$0xff]
        %v1250 = vld [vmem:[%s257 + $0x10] sm:$0xff]
        %v1251 = vld [vmem:[%s257 + $0x18] sm:$0xff]
        %v1252 = vld [vmem:[%s257 + $0x20] sm:$0xff]
        %v1253 = vld [vmem:[%s257 + $0x28] sm:$0xff]
        %v1254 = vld [vmem:[%s257 + $0x30] sm:$0xff]
        %v1255 = vld [vmem:[%s257 + $0x38] sm:$0xff]
        %v1256 = vld [vmem:[%s257 + $0x40] sm:$0xff]
        %v1257 = vld [vmem:[%s257 + $0x48] sm:$0xff]
        %v1258 = vld [vmem:[%s257 + $0x50] sm:$0xff]
        %v1259 = vld [vmem:[%s257 + $0x58] sm:$0xff]
        %v1260 = vld [vmem:[%s257 + $0x60] sm:$0xff]
        %v1261 = vld [vmem:[%s257 + $0x68] sm:$0xff]
        %v1262 = vld [vmem:[%s257 + $0x70] sm:$0xff]
        %v1263 = vld [vmem:[%s257 + $0x78] sm:$0xff]
        %v1264 = vld [vmem:[%s257 + $0x80] sm:$0xff]
        %v1265 = vld [vmem:[%s257 + $0x88] sm:$0xff]
        %v1266 = vld [vmem:[%s257 + $0x90] sm:$0xff]
        %v1267 = vld [vmem:[%s257 + $0x98] sm:$0xff]
        %v1268 = vld [vmem:[%s257 + $0xa0] sm:$0xff]
        %v1269 = vld [vmem:[%s257 + $0xa8] sm:$0xff]
        %v1270 = vld [vmem:[%s257 + $0xb0] sm:$0xff]
        %v1271 = vld [vmem:[%s257 + $0xb8] sm:$0xff]
        %v1272 = vld [vmem:[%s257 + $0xc0] sm:$0xff]
        %v1273 = vld [vmem:[%s257 + $0xc8] sm:$0xff]
        %v1274 = vld [vmem:[%s257 + $0xd0] sm:$0xff]
        %v1275 = vld [vmem:[%s257 + $0xd8] sm:$0xff]
        %v1276 = vld [vmem:[%s257 + $0xe0] sm:$0xff]
        %v1277 = vld [vmem:[%s257 + $0xe8] sm:$0xff]
        %v1278 = vld [vmem:[%s257 + $0xf0] sm:$0xff]
        %v1279 = vld [vmem:[%s257 + $0xf8] sm:$0xff]
        %v1280 = vld [vmem:[%s257 + $0x100] sm:$0xff]
        %v1281 = vld [vmem:[%s257 + $0x108] sm:$0xff]
        %v1282 = vld [vmem:[%s257 + $0x110] sm:$0xff]
        %v1283 = vld [vmem:[%s257 + $0x118] sm:$0xff]
        %v1284 = vld [vmem:[%s257 + $0x120] sm:$0xff]
        %v1285 = vld [vmem:[%s257 + $0x128] sm:$0xff]
        %v1286 = vld [vmem:[%s257 + $0x130] sm:$0xff]
        %v1287 = vld [vmem:[%s257 + $0x138] sm:$0xff]
        %v1288 = vld [vmem:[%s257 + $0x140] sm:$0xff]
        %v1289 = vld [vmem:[%s257 + $0x148] sm:$0xff]
        %v1290 = vld [vmem:[%s257 + $0x150] sm:$0xff]
        %v1291 = vld [vmem:[%s257 + $0x158] sm:$0xff]
        %v1292 = vld [vmem:[%s257 + $0x160] sm:$0xff]
        %v1293 = vld [vmem:[%s257 + $0x168] sm:$0xff]
        %v1294 = vld [vmem:[%s257 + $0x170] sm:$0xff]
        %v1295 = vld [vmem:[%s257 + $0x178] sm:$0xff]
        %v1296 = vld [vmem:[%s257 + $0x180] sm:$0xff]
        %v1297 = vld [vmem:[%s257 + $0x188] sm:$0xff]
        %v1298 = vld [vmem:[%s257 + $0x190] sm:$0xff]
        %v1299 = vld [vmem:[%s257 + $0x198] sm:$0xff]
        %v1300 = vld [vmem:[%s257 + $0x1a0] sm:$0xff]
        %v1301 = vld [vmem:[%s257 + $0x1a8] sm:$0xff]
        %v1302 = vld [vmem:[%s257 + $0x1b0] sm:$0xff]
        %v1303 = vld [vmem:[%s257 + $0x1b8] sm:$0xff]
        %v1304 = vld [vmem:[%s257 + $0x1c0] sm:$0xff]
        %v1305 = vld [vmem:[%s257 + $0x1c8] sm:$0xff]
        %v1306 = vld [vmem:[%s257 + $0x1d0] sm:$0xff]
        %v1307 = vld [vmem:[%s257 + $0x1d8] sm:$0xff]
        %v1308 = vld [vmem:[%s257 + $0x1e0] sm:$0xff]
        %v1309 = vld [vmem:[%s257 + $0x1e8] sm:$0xff]
        %v1310 = vld [vmem:[%s257 + $0x1f0] sm:$0xff]
        %v1311 = vld [vmem:[%s257 + $0x1f8] sm:$0xff]
        %v1312 = vld [vmem:[%s257 + $0x240] sm:$0xff]
        %v1313 = vld [vmem:[%s257 + $0x248] sm:$0xff]
        %v1314 = vld [vmem:[%s257 + $0x250] sm:$0xff]
        %v1315 = vld [vmem:[%s257 + $0x258] sm:$0xff]
        %v1316 = vld [vmem:[%s257 + $0x260] sm:$0xff]
        %v1317 = vld [vmem:[%s257 + $0x268] sm:$0xff]
        %v1318 = vld [vmem:[%s257 + $0x270] sm:$0xff]
        %v1319 = vld [vmem:[%s257 + $0x278] sm:$0xff]
        %v1320 = vld [vmem:[%s257 + $0x280] sm:$0xff]
        %v1321 = vld [vmem:[%s257 + $0x288] sm:$0xff]
        %v1322 = vld [vmem:[%s257 + $0x290] sm:$0xff]
        %v1323 = vld [vmem:[%s257 + $0x298] sm:$0xff]
        %v1324 = vld [vmem:[%s257 + $0x2a0] sm:$0xff]
        %v1325 = vld [vmem:[%s257 + $0x2a8] sm:$0xff]
        %v1326 = vld [vmem:[%s257 + $0x2b0] sm:$0xff]
        %v1327 = vld [vmem:[%s257 + $0x2b8] sm:$0xff]
        %v1328 = vld [vmem:[%s257 + $0x2c0] sm:$0xff]
        %v1329 = vld [vmem:[%s257 + $0x2c8] sm:$0xff]
        %v1330 = vld [vmem:[%s257 + $0x2d0] sm:$0xff]
        %v1331 = vld [vmem:[%s257 + $0x2d8] sm:$0xff]
        %v1332 = vld [vmem:[%s257 + $0x2e0] sm:$0xff]
        %v1333 = vld [vmem:[%s257 + $0x2e8] sm:$0xff]
        %v1334 = vld [vmem:[%s257 + $0x2f0] sm:$0xff]
        %v1335 = vld [vmem:[%s257 + $0x2f8] sm:$0xff]
        %v1336 = vld [vmem:[%s257 + $0x300] sm:$0xff]
        %v1337 = vld [vmem:[%s257 + $0x308] sm:$0xff]
        %v1338 = vld [vmem:[%s257 + $0x310] sm:$0xff]
        %v1339 = vld [vmem:[%s257 + $0x318] sm:$0xff]
        %v1340 = vld [vmem:[%s257 + $0x320] sm:$0xff]
        %v1341 = vld [vmem:[%s257 + $0x328] sm:$0xff]
        %v1342 = vld [vmem:[%s257 + $0x330] sm:$0xff]
        %v1343 = vld [vmem:[%s257 + $0x338] sm:$0xff]
        %v1344 = vld [vmem:[%s257 + $0x340] sm:$0xff]
        %v1345 = vld [vmem:[%s257 + $0x348] sm:$0xff]
        %v1346 = vld [vmem:[%s257 + $0x350] sm:$0xff]
        %v1347 = vld [vmem:[%s257 + $0x358] sm:$0xff]
        %v1348 = vld [vmem:[%s257 + $0x360] sm:$0xff]
        %v1349 = vld [vmem:[%s257 + $0x368] sm:$0xff]
        %v1350 = vld [vmem:[%s257 + $0x370] sm:$0xff]
        %v1351 = vld [vmem:[%s257 + $0x378] sm:$0xff]
        %v1352 = vld [vmem:[%s257 + $0x380] sm:$0xff]
        %v1353 = vld [vmem:[%s257 + $0x388] sm:$0xff]
        %v1354 = vld [vmem:[%s257 + $0x390] sm:$0xff]
        %v1355 = vld [vmem:[%s257 + $0x398] sm:$0xff]
        %v1356 = vld [vmem:[%s257 + $0x3a0] sm:$0xff]
        %v1357 = vld [vmem:[%s257 + $0x3a8] sm:$0xff]
        %v1358 = vld [vmem:[%s257 + $0x3b0] sm:$0xff]
        %v1359 = vld [vmem:[%s257 + $0x3b8] sm:$0xff]
        %v1360 = vld [vmem:[%s257 + $0x3c0] sm:$0xff]
        %v1361 = vld [vmem:[%s257 + $0x3c8] sm:$0xff]
        %v1362 = vld [vmem:[%s257 + $0x3d0] sm:$0xff]
        %v1363 = vld [vmem:[%s257 + $0x3d8] sm:$0xff]
        %v1364 = vld [vmem:[%s257 + $0x3e0] sm:$0xff]
        %v1365 = vld [vmem:[%s257 + $0x3e8] sm:$0xff]
        %v1366 = vld [vmem:[%s257 + $0x3f0] sm:$0xff]
        %v1367 = vld [vmem:[%s257 + $0x3f8] sm:$0xff]
        %v1368 = vld [vmem:[%s257 + $0x400] sm:$0xff]
        %v1369 = vld [vmem:[%s257 + $0x408] sm:$0xff]
        %v1370 = vld [vmem:[%s257 + $0x410] sm:$0xff]
        %v1371 = vld [vmem:[%s257 + $0x418] sm:$0xff]
        %v1372 = vld [vmem:[%s257 + $0x420] sm:$0xff]
        %v1373 = vld [vmem:[%s257 + $0x428] sm:$0xff]
        %v1374 = vld [vmem:[%s257 + $0x430] sm:$0xff]
        %v1375 = vld [vmem:[%s257 + $0x438] sm:$0xff]
        %s1376 = scalar_lea.vmem %s1, 192
        %v1377 = vld [vmem:[%s1376] sm:$0xff]
        %v1378 = vld [vmem:[%s1376 + $0x8] sm:$0xff]
        %v1379 = vld [vmem:[%s1376 + $0x10] sm:$0xff]
        %v1380 = vld [vmem:[%s1376 + $0x18] sm:$0xff]
        %v1381 = vld [vmem:[%s1376 + $0x20] sm:$0xff]
        %v1382 = vld [vmem:[%s1376 + $0x28] sm:$0xff]
        %v1383 = vld [vmem:[%s1376 + $0x30] sm:$0xff]
        %v1384 = vld [vmem:[%s1376 + $0x38] sm:$0xff]
        %v1385 = vld [vmem:[%s1376 + $0x40] sm:$0xff]
        %v1386 = vld [vmem:[%s1376 + $0x48] sm:$0xff]
        %v1387 = vld [vmem:[%s1376 + $0x50] sm:$0xff]
        %v1388 = vld [vmem:[%s1376 + $0x58] sm:$0xff]
        %v1389 = vld [vmem:[%s1376 + $0x60] sm:$0xff]
        %v1390 = vld [vmem:[%s1376 + $0x68] sm:$0xff]
        %v1391 = vld [vmem:[%s1376 + $0x70] sm:$0xff]
        %v1392 = vld [vmem:[%s1376 + $0x78] sm:$0xff]
        %v1393 = vld [vmem:[%s1376 + $0x80] sm:$0xff]
        %v1394 = vld [vmem:[%s1376 + $0x88] sm:$0xff]
        %v1395 = vld [vmem:[%s1376 + $0x90] sm:$0xff]
        %v1396 = vld [vmem:[%s1376 + $0x98] sm:$0xff]
        %v1397 = vld [vmem:[%s1376 + $0xa0] sm:$0xff]
        %v1398 = vld [vmem:[%s1376 + $0xa8] sm:$0xff]
        %v1399 = vld [vmem:[%s1376 + $0xb0] sm:$0xff]
        %v1400 = vld [vmem:[%s1376 + $0xb8] sm:$0xff]
        %v1402 = vsel %vm240, %v1249, 0
        %v1405 = vsel %vm240, %v1251, 0
        %v1408 = vsel %vm240, %v1253, 0
        %v1411 = vsel %vm240, %v1255, 0
        %v1414 = vsel %vm240, %v1257, 0
        %v1417 = vsel %vm240, %v1259, 0
        %v1420 = vsel %vm240, %v1261, 0
        %v1423 = vsel %vm240, %v1263, 0
        %v1426 = vsel %vm240, %v1265, 0
        %v1429 = vsel %vm240, %v1267, 0
        %v1432 = vsel %vm240, %v1269, 0
        %v1435 = vsel %vm240, %v1271, 0
        %v1438 = vsel %vm240, %v1273, 0
        %v1441 = vsel %vm240, %v1275, 0
        %v1444 = vsel %vm240, %v1277, 0
        %v1447 = vsel %vm240, %v1279, 0
        %v1450 = vsel %vm240, %v1281, 0
        %v1453 = vsel %vm240, %v1283, 0
        %v1456 = vsel %vm240, %v1285, 0
        %v1459 = vsel %vm240, %v1287, 0
        %v1462 = vsel %vm240, %v1289, 0
        %v1465 = vsel %vm240, %v1291, 0
        %v1468 = vsel %vm240, %v1293, 0
        %v1471 = vsel %vm240, %v1295, 0
        %v1474 = vsel %vm240, %v1297, 0
        %v1477 = vsel %vm240, %v1299, 0
        %v1480 = vsel %vm240, %v1301, 0
        %v1483 = vsel %vm240, %v1303, 0
        %v1486 = vsel %vm240, %v1305, 0
        %v1489 = vsel %vm240, %v1307, 0
        %v1492 = vsel %vm240, %v1309, 0
        %v1495 = vsel %vm240, %v1311, 0
        %v1498 = vsel %vm240, %v1313, 0
        %v1501 = vsel %vm240, %v1315, 0
        %v1504 = vsel %vm240, %v1317, 0
        %v1507 = vsel %vm240, %v1319, 0
        %v1510 = vsel %vm240, %v1321, 0
        %v1513 = vsel %vm240, %v1323, 0
        %v1516 = vsel %vm240, %v1325, 0
        %v1519 = vsel %vm240, %v1327, 0
        %v1522 = vsel %vm240, %v1329, 0
        %v1525 = vsel %vm240, %v1331, 0
        %v1528 = vsel %vm240, %v1333, 0
        %v1531 = vsel %vm240, %v1335, 0
        %v1534 = vsel %vm240, %v1337, 0
        %v1537 = vsel %vm240, %v1339, 0
        %v1540 = vsel %vm240, %v1341, 0
        %v1543 = vsel %vm240, %v1343, 0
        %v1546 = vsel %vm240, %v1345, 0
        %v1549 = vsel %vm240, %v1347, 0
        %v1552 = vsel %vm240, %v1349, 0
        %v1555 = vsel %vm240, %v1351, 0
        %v1558 = vsel %vm240, %v1353, 0
        %v1561 = vsel %vm240, %v1355, 0
        %v1564 = vsel %vm240, %v1357, 0
        %v1567 = vsel %vm240, %v1359, 0
        %v1570 = vsel %vm240, %v1361, 0
        %v1573 = vsel %vm240, %v1363, 0
        %v1576 = vsel %vm240, %v1365, 0
        %v1579 = vsel %vm240, %v1367, 0
        %v1582 = vsel %vm240, %v1369, 0
        %v1585 = vsel %vm240, %v1371, 0
        %v1588 = vsel %vm240, %v1373, 0
        %v1591 = vsel %vm240, %v1375, 0
        %1593 = vmatpush.msra.mxu0 %v1392
        %1594 = vmatpush.msra.mxu0 %v1391
        %1595 = vmatpush.msra.mxu0 %v1390
        %1596 = vmatpush.msra.mxu0 %v1389
        %1597 = vmatpush.msra.mxu0 %v1388
        %1598 = vmatpush.msra.mxu0 %v1387
        %1599 = vmatpush.msra.mxu0 %v1386
        %1600 = vmatpush.msra.mxu0 %v1385
        %1601 = vmatpush.msra.mxu0 %v1384
        %1602 = vmatpush.msra.mxu0 %v1383
        %1603 = vmatpush.msra.mxu0 %v1382
        %1604 = vmatpush.msra.mxu0 %v1381
        %1605 = vmatpush.msra.mxu0 %v1380
        %1606 = vmatpush.msra.mxu0 %v1379
        %1607 = vmatpush.msra.mxu0 %v1378
        %1608 = vmatpush.msra.mxu0 %v1377
        %1609 = vmatmul.f32.gmra.mxu0 %v1248
        %v1610 = vpop.f32.mrf.mxu0
        %v1611 = vadd.f32 0.0, %v1610
        %1612 = vmatmul.f32.gmra.mxu0 %v1250
        %v1613 = vpop.f32.mrf.mxu0
        %v1614 = vadd.f32 0.0, %v1613
        %1615 = vmatmul.f32.gmra.mxu0 %v1252
        %v1616 = vpop.f32.mrf.mxu0
        %v1617 = vadd.f32 0.0, %v1616
        %1618 = vmatmul.f32.gmra.mxu0 %v1254
        %v1619 = vpop.f32.mrf.mxu0
        %v1620 = vadd.f32 0.0, %v1619
        %1621 = vmatmul.f32.gmra.mxu0 %v1256
        %v1622 = vpop.f32.mrf.mxu0
        %v1623 = vadd.f32 0.0, %v1622
        %1624 = vmatmul.f32.gmra.mxu0 %v1258
        %v1625 = vpop.f32.mrf.mxu0
        %v1626 = vadd.f32 0.0, %v1625
        %1627 = vmatmul.f32.gmra.mxu0 %v1260
        %v1628 = vpop.f32.mrf.mxu0
        %v1629 = vadd.f32 0.0, %v1628
        %1630 = vmatmul.f32.gmra.mxu0 %v1262
        %v1631 = vpop.f32.mrf.mxu0
        %v1632 = vadd.f32 0.0, %v1631
        %1633 = vmatmul.f32.gmra.mxu0 %v1264
        %v1634 = vpop.f32.mrf.mxu0
        %v1635 = vadd.f32 0.0, %v1634
        %1636 = vmatmul.f32.gmra.mxu0 %v1266
        %v1637 = vpop.f32.mrf.mxu0
        %v1638 = vadd.f32 0.0, %v1637
        %1639 = vmatmul.f32.gmra.mxu0 %v1268
        %v1640 = vpop.f32.mrf.mxu0
        %v1641 = vadd.f32 0.0, %v1640
        %1642 = vmatmul.f32.gmra.mxu0 %v1270
        %v1643 = vpop.f32.mrf.mxu0
        %v1644 = vadd.f32 0.0, %v1643
        %1645 = vmatmul.f32.gmra.mxu0 %v1272
        %v1646 = vpop.f32.mrf.mxu0
        %v1647 = vadd.f32 0.0, %v1646
        %1648 = vmatmul.f32.gmra.mxu0 %v1274
        %v1649 = vpop.f32.mrf.mxu0
        %v1650 = vadd.f32 0.0, %v1649
        %1651 = vmatmul.f32.gmra.mxu0 %v1276
        %v1652 = vpop.f32.mrf.mxu0
        %v1653 = vadd.f32 0.0, %v1652
        %1654 = vmatmul.f32.gmra.mxu0 %v1278
        %v1655 = vpop.f32.mrf.mxu0
        %v1656 = vadd.f32 0.0, %v1655
        %1657 = vmatmul.f32.gmra.mxu0 %v1280
        %v1658 = vpop.f32.mrf.mxu0
        %v1659 = vadd.f32 0.0, %v1658
        %1660 = vmatmul.f32.gmra.mxu0 %v1282
        %v1661 = vpop.f32.mrf.mxu0
        %v1662 = vadd.f32 0.0, %v1661
        %1663 = vmatmul.f32.gmra.mxu0 %v1284
        %v1664 = vpop.f32.mrf.mxu0
        %v1665 = vadd.f32 0.0, %v1664
        %1666 = vmatmul.f32.gmra.mxu0 %v1286
        %v1667 = vpop.f32.mrf.mxu0
        %v1668 = vadd.f32 0.0, %v1667
        %1669 = vmatmul.f32.gmra.mxu0 %v1288
        %v1670 = vpop.f32.mrf.mxu0
        %v1671 = vadd.f32 0.0, %v1670
        %1672 = vmatmul.f32.gmra.mxu0 %v1290
        %v1673 = vpop.f32.mrf.mxu0
        %v1674 = vadd.f32 0.0, %v1673
        %1675 = vmatmul.f32.gmra.mxu0 %v1292
        %v1676 = vpop.f32.mrf.mxu0
        %v1677 = vadd.f32 0.0, %v1676
        %1678 = vmatmul.f32.gmra.mxu0 %v1294
        %v1679 = vpop.f32.mrf.mxu0
        %v1680 = vadd.f32 0.0, %v1679
        %1681 = vmatmul.f32.gmra.mxu0 %v1296
        %v1682 = vpop.f32.mrf.mxu0
        %v1683 = vadd.f32 0.0, %v1682
        %1684 = vmatmul.f32.gmra.mxu0 %v1298
        %v1685 = vpop.f32.mrf.mxu0
        %v1686 = vadd.f32 0.0, %v1685
        %1687 = vmatmul.f32.gmra.mxu0 %v1300
        %v1688 = vpop.f32.mrf.mxu0
        %v1689 = vadd.f32 0.0, %v1688
        %1690 = vmatmul.f32.gmra.mxu0 %v1302
        %v1691 = vpop.f32.mrf.mxu0
        %v1692 = vadd.f32 0.0, %v1691
        %1693 = vmatmul.f32.gmra.mxu0 %v1304
        %v1694 = vpop.f32.mrf.mxu0
        %v1695 = vadd.f32 0.0, %v1694
        %1696 = vmatmul.f32.gmra.mxu0 %v1306
        %v1697 = vpop.f32.mrf.mxu0
        %v1698 = vadd.f32 0.0, %v1697
        %1699 = vmatmul.f32.gmra.mxu0 %v1308
        %v1700 = vpop.f32.mrf.mxu0
        %v1701 = vadd.f32 0.0, %v1700
        %1702 = vmatmul.f32.gmra.mxu0 %v1310
        %v1703 = vpop.f32.mrf.mxu0
        %v1704 = vadd.f32 0.0, %v1703
        %1705 = vmatmul.f32.gmra.mxu0 %v1312
        %v1706 = vpop.f32.mrf.mxu0
        %v1707 = vadd.f32 0.0, %v1706
        %1708 = vmatmul.f32.gmra.mxu0 %v1314
        %v1709 = vpop.f32.mrf.mxu0
        %v1710 = vadd.f32 0.0, %v1709
        %1711 = vmatmul.f32.gmra.mxu0 %v1316
        %v1712 = vpop.f32.mrf.mxu0
        %v1713 = vadd.f32 0.0, %v1712
        %1714 = vmatmul.f32.gmra.mxu0 %v1318
        %v1715 = vpop.f32.mrf.mxu0
        %v1716 = vadd.f32 0.0, %v1715
        %1717 = vmatmul.f32.gmra.mxu0 %v1320
        %v1718 = vpop.f32.mrf.mxu0
        %v1719 = vadd.f32 0.0, %v1718
        %1720 = vmatmul.f32.gmra.mxu0 %v1322
        %v1721 = vpop.f32.mrf.mxu0
        %v1722 = vadd.f32 0.0, %v1721
        %1723 = vmatmul.f32.gmra.mxu0 %v1324
        %v1724 = vpop.f32.mrf.mxu0
        %v1725 = vadd.f32 0.0, %v1724
        %1726 = vmatmul.f32.gmra.mxu0 %v1326
        %v1727 = vpop.f32.mrf.mxu0
        %v1728 = vadd.f32 0.0, %v1727
        %1729 = vmatmul.f32.gmra.mxu0 %v1328
        %v1730 = vpop.f32.mrf.mxu0
        %v1731 = vadd.f32 0.0, %v1730
        %1732 = vmatmul.f32.gmra.mxu0 %v1330
        %v1733 = vpop.f32.mrf.mxu0
        %v1734 = vadd.f32 0.0, %v1733
        %1735 = vmatmul.f32.gmra.mxu0 %v1332
        %v1736 = vpop.f32.mrf.mxu0
        %v1737 = vadd.f32 0.0, %v1736
        %1738 = vmatmul.f32.gmra.mxu0 %v1334
        %v1739 = vpop.f32.mrf.mxu0
        %v1740 = vadd.f32 0.0, %v1739
        %1741 = vmatmul.f32.gmra.mxu0 %v1336
        %v1742 = vpop.f32.mrf.mxu0
        %v1743 = vadd.f32 0.0, %v1742
        %1744 = vmatmul.f32.gmra.mxu0 %v1338
        %v1745 = vpop.f32.mrf.mxu0
        %v1746 = vadd.f32 0.0, %v1745
        %1747 = vmatmul.f32.gmra.mxu0 %v1340
        %v1748 = vpop.f32.mrf.mxu0
        %v1749 = vadd.f32 0.0, %v1748
        %1750 = vmatmul.f32.gmra.mxu0 %v1342
        %v1751 = vpop.f32.mrf.mxu0
        %v1752 = vadd.f32 0.0, %v1751
        %1753 = vmatmul.f32.gmra.mxu0 %v1344
        %v1754 = vpop.f32.mrf.mxu0
        %v1755 = vadd.f32 0.0, %v1754
        %1756 = vmatmul.f32.gmra.mxu0 %v1346
        %v1757 = vpop.f32.mrf.mxu0
        %v1758 = vadd.f32 0.0, %v1757
        %1759 = vmatmul.f32.gmra.mxu0 %v1348
        %v1760 = vpop.f32.mrf.mxu0
        %v1761 = vadd.f32 0.0, %v1760
        %1762 = vmatmul.f32.gmra.mxu0 %v1350
        %v1763 = vpop.f32.mrf.mxu0
        %v1764 = vadd.f32 0.0, %v1763
        %1765 = vmatmul.f32.gmra.mxu0 %v1352
        %v1766 = vpop.f32.mrf.mxu0
        %v1767 = vadd.f32 0.0, %v1766
        %1768 = vmatmul.f32.gmra.mxu0 %v1354
        %v1769 = vpop.f32.mrf.mxu0
        %v1770 = vadd.f32 0.0, %v1769
        %1771 = vmatmul.f32.gmra.mxu0 %v1356
        %v1772 = vpop.f32.mrf.mxu0
        %v1773 = vadd.f32 0.0, %v1772
        %1774 = vmatmul.f32.gmra.mxu0 %v1358
        %v1775 = vpop.f32.mrf.mxu0
        %v1776 = vadd.f32 0.0, %v1775
        %1777 = vmatmul.f32.gmra.mxu0 %v1360
        %v1778 = vpop.f32.mrf.mxu0
        %v1779 = vadd.f32 0.0, %v1778
        %1780 = vmatmul.f32.gmra.mxu0 %v1362
        %v1781 = vpop.f32.mrf.mxu0
        %v1782 = vadd.f32 0.0, %v1781
        %1783 = vmatmul.f32.gmra.mxu0 %v1364
        %v1784 = vpop.f32.mrf.mxu0
        %v1785 = vadd.f32 0.0, %v1784
        %1786 = vmatmul.f32.gmra.mxu0 %v1366
        %v1787 = vpop.f32.mrf.mxu0
        %v1788 = vadd.f32 0.0, %v1787
        %1789 = vmatmul.f32.gmra.mxu0 %v1368
        %v1790 = vpop.f32.mrf.mxu0
        %v1791 = vadd.f32 0.0, %v1790
        %1792 = vmatmul.f32.gmra.mxu0 %v1370
        %v1793 = vpop.f32.mrf.mxu0
        %v1794 = vadd.f32 0.0, %v1793
        %1795 = vmatmul.f32.gmra.mxu0 %v1372
        %v1796 = vpop.f32.mrf.mxu0
        %v1797 = vadd.f32 0.0, %v1796
        %1798 = vmatmul.f32.gmra.mxu0 %v1374
        %v1799 = vpop.f32.mrf.mxu0
        %v1800 = vadd.f32 0.0, %v1799
        %1801 = vdwg.mxu0
        %1802 = vmatpush.msra.mxu0 0.0
        %1803 = vmatpush.msra.mxu0 0.0
        %1804 = vmatpush.msra.mxu0 0.0
        %1805 = vmatpush.msra.mxu0 0.0
        %1806 = vmatpush.msra.mxu0 0.0
        %1807 = vmatpush.msra.mxu0 0.0
        %1808 = vmatpush.msra.mxu0 0.0
        %1809 = vmatpush.msra.mxu0 0.0
        %1810 = vmatpush.msra.mxu0 %v1400
        %1811 = vmatpush.msra.mxu0 %v1399
        %1812 = vmatpush.msra.mxu0 %v1398
        %1813 = vmatpush.msra.mxu0 %v1397
        %1814 = vmatpush.msra.mxu0 %v1396
        %1815 = vmatpush.msra.mxu0 %v1395
        %1816 = vmatpush.msra.mxu0 %v1394
        %1817 = vmatpush.msra.mxu0 %v1393
        %1818 = vmatmul.f32.gmra.mxu0 %v1402
        %v1819 = vpop.f32.mrf.mxu0
        %v1820 = vadd.f32 %v1611, %v1819
        %1821 = vmatmul.f32.gmra.mxu0 %v1405
        %v1822 = vpop.f32.mrf.mxu0
        %v1823 = vadd.f32 %v1614, %v1822
        %1824 = vmatmul.f32.gmra.mxu0 %v1408
        %v1825 = vpop.f32.mrf.mxu0
        %v1826 = vadd.f32 %v1617, %v1825
        %1827 = vmatmul.f32.gmra.mxu0 %v1411
        %v1828 = vpop.f32.mrf.mxu0
        %v1829 = vadd.f32 %v1620, %v1828
        %1830 = vmatmul.f32.gmra.mxu0 %v1414
        %v1831 = vpop.f32.mrf.mxu0
        %v1832 = vadd.f32 %v1623, %v1831
        %1833 = vmatmul.f32.gmra.mxu0 %v1417
        %v1834 = vpop.f32.mrf.mxu0
        %v1835 = vadd.f32 %v1626, %v1834
        %1836 = vmatmul.f32.gmra.mxu0 %v1420
        %v1837 = vpop.f32.mrf.mxu0
        %v1838 = vadd.f32 %v1629, %v1837
        %1839 = vmatmul.f32.gmra.mxu0 %v1423
        %v1840 = vpop.f32.mrf.mxu0
        %v1841 = vadd.f32 %v1632, %v1840
        %1842 = vmatmul.f32.gmra.mxu0 %v1426
        %v1843 = vpop.f32.mrf.mxu0
        %v1844 = vadd.f32 %v1635, %v1843
        %1845 = vmatmul.f32.gmra.mxu0 %v1429
        %v1846 = vpop.f32.mrf.mxu0
        %v1847 = vadd.f32 %v1638, %v1846
        %1848 = vmatmul.f32.gmra.mxu0 %v1432
        %v1849 = vpop.f32.mrf.mxu0
        %v1850 = vadd.f32 %v1641, %v1849
        %1851 = vmatmul.f32.gmra.mxu0 %v1435
        %v1852 = vpop.f32.mrf.mxu0
        %v1853 = vadd.f32 %v1644, %v1852
        %1854 = vmatmul.f32.gmra.mxu0 %v1438
        %v1855 = vpop.f32.mrf.mxu0
        %v1856 = vadd.f32 %v1647, %v1855
        %1857 = vmatmul.f32.gmra.mxu0 %v1441
        %v1858 = vpop.f32.mrf.mxu0
        %v1859 = vadd.f32 %v1650, %v1858
        %1860 = vmatmul.f32.gmra.mxu0 %v1444
        %v1861 = vpop.f32.mrf.mxu0
        %v1862 = vadd.f32 %v1653, %v1861
        %1863 = vmatmul.f32.gmra.mxu0 %v1447
        %v1864 = vpop.f32.mrf.mxu0
        %v1865 = vadd.f32 %v1656, %v1864
        %1866 = vmatmul.f32.gmra.mxu0 %v1450
        %v1867 = vpop.f32.mrf.mxu0
        %v1868 = vadd.f32 %v1659, %v1867
        %1869 = vmatmul.f32.gmra.mxu0 %v1453
        %v1870 = vpop.f32.mrf.mxu0
        %v1871 = vadd.f32 %v1662, %v1870
        %1872 = vmatmul.f32.gmra.mxu0 %v1456
        %v1873 = vpop.f32.mrf.mxu0
        %v1874 = vadd.f32 %v1665, %v1873
        %1875 = vmatmul.f32.gmra.mxu0 %v1459
        %v1876 = vpop.f32.mrf.mxu0
        %v1877 = vadd.f32 %v1668, %v1876
        %1878 = vmatmul.f32.gmra.mxu0 %v1462
        %v1879 = vpop.f32.mrf.mxu0
        %v1880 = vadd.f32 %v1671, %v1879
        %1881 = vmatmul.f32.gmra.mxu0 %v1465
        %v1882 = vpop.f32.mrf.mxu0
        %v1883 = vadd.f32 %v1674, %v1882
        %1884 = vmatmul.f32.gmra.mxu0 %v1468
        %v1885 = vpop.f32.mrf.mxu0
        %v1886 = vadd.f32 %v1677, %v1885
        %1887 = vmatmul.f32.gmra.mxu0 %v1471
        %v1888 = vpop.f32.mrf.mxu0
        %v1889 = vadd.f32 %v1680, %v1888
        %1890 = vmatmul.f32.gmra.mxu0 %v1474
        %v1891 = vpop.f32.mrf.mxu0
        %v1892 = vadd.f32 %v1683, %v1891
        %1893 = vmatmul.f32.gmra.mxu0 %v1477
        %v1894 = vpop.f32.mrf.mxu0
        %v1895 = vadd.f32 %v1686, %v1894
        %1896 = vmatmul.f32.gmra.mxu0 %v1480
        %v1897 = vpop.f32.mrf.mxu0
        %v1898 = vadd.f32 %v1689, %v1897
        %1899 = vmatmul.f32.gmra.mxu0 %v1483
        %v1900 = vpop.f32.mrf.mxu0
        %v1901 = vadd.f32 %v1692, %v1900
        %1902 = vmatmul.f32.gmra.mxu0 %v1486
        %v1903 = vpop.f32.mrf.mxu0
        %v1904 = vadd.f32 %v1695, %v1903
        %1905 = vmatmul.f32.gmra.mxu0 %v1489
        %v1906 = vpop.f32.mrf.mxu0
        %v1907 = vadd.f32 %v1698, %v1906
        %1908 = vmatmul.f32.gmra.mxu0 %v1492
        %v1909 = vpop.f32.mrf.mxu0
        %v1910 = vadd.f32 %v1701, %v1909
        %1911 = vmatmul.f32.gmra.mxu0 %v1495
        %v1912 = vpop.f32.mrf.mxu0
        %v1913 = vadd.f32 %v1704, %v1912
        %1914 = vmatmul.f32.gmra.mxu0 %v1498
        %v1915 = vpop.f32.mrf.mxu0
        %v1916 = vadd.f32 %v1707, %v1915
        %1917 = vmatmul.f32.gmra.mxu0 %v1501
        %v1918 = vpop.f32.mrf.mxu0
        %v1919 = vadd.f32 %v1710, %v1918
        %1920 = vmatmul.f32.gmra.mxu0 %v1504
        %v1921 = vpop.f32.mrf.mxu0
        %v1922 = vadd.f32 %v1713, %v1921
        %1923 = vmatmul.f32.gmra.mxu0 %v1507
        %v1924 = vpop.f32.mrf.mxu0
        %v1925 = vadd.f32 %v1716, %v1924
        %1926 = vmatmul.f32.gmra.mxu0 %v1510
        %v1927 = vpop.f32.mrf.mxu0
        %v1928 = vadd.f32 %v1719, %v1927
        %1929 = vmatmul.f32.gmra.mxu0 %v1513
        %v1930 = vpop.f32.mrf.mxu0
        %v1931 = vadd.f32 %v1722, %v1930
        %1932 = vmatmul.f32.gmra.mxu0 %v1516
        %v1933 = vpop.f32.mrf.mxu0
        %v1934 = vadd.f32 %v1725, %v1933
        %1935 = vmatmul.f32.gmra.mxu0 %v1519
        %v1936 = vpop.f32.mrf.mxu0
        %v1937 = vadd.f32 %v1728, %v1936
        %1938 = vmatmul.f32.gmra.mxu0 %v1522
        %v1939 = vpop.f32.mrf.mxu0
        %v1940 = vadd.f32 %v1731, %v1939
        %1941 = vmatmul.f32.gmra.mxu0 %v1525
        %v1942 = vpop.f32.mrf.mxu0
        %v1943 = vadd.f32 %v1734, %v1942
        %1944 = vmatmul.f32.gmra.mxu0 %v1528
        %v1945 = vpop.f32.mrf.mxu0
        %v1946 = vadd.f32 %v1737, %v1945
        %1947 = vmatmul.f32.gmra.mxu0 %v1531
        %v1948 = vpop.f32.mrf.mxu0
        %v1949 = vadd.f32 %v1740, %v1948
        %1950 = vmatmul.f32.gmra.mxu0 %v1534
        %v1951 = vpop.f32.mrf.mxu0
        %v1952 = vadd.f32 %v1743, %v1951
        %1953 = vmatmul.f32.gmra.mxu0 %v1537
        %v1954 = vpop.f32.mrf.mxu0
        %v1955 = vadd.f32 %v1746, %v1954
        %1956 = vmatmul.f32.gmra.mxu0 %v1540
        %v1957 = vpop.f32.mrf.mxu0
        %v1958 = vadd.f32 %v1749, %v1957
        %1959 = vmatmul.f32.gmra.mxu0 %v1543
        %v1960 = vpop.f32.mrf.mxu0
        %v1961 = vadd.f32 %v1752, %v1960
        %1962 = vmatmul.f32.gmra.mxu0 %v1546
        %v1963 = vpop.f32.mrf.mxu0
        %v1964 = vadd.f32 %v1755, %v1963
        %1965 = vmatmul.f32.gmra.mxu0 %v1549
        %v1966 = vpop.f32.mrf.mxu0
        %v1967 = vadd.f32 %v1758, %v1966
        %1968 = vmatmul.f32.gmra.mxu0 %v1552
        %v1969 = vpop.f32.mrf.mxu0
        %v1970 = vadd.f32 %v1761, %v1969
        %1971 = vmatmul.f32.gmra.mxu0 %v1555
        %v1972 = vpop.f32.mrf.mxu0
        %v1973 = vadd.f32 %v1764, %v1972
        %1974 = vmatmul.f32.gmra.mxu0 %v1558
        %v1975 = vpop.f32.mrf.mxu0
        %v1976 = vadd.f32 %v1767, %v1975
        %1977 = vmatmul.f32.gmra.mxu0 %v1561
        %v1978 = vpop.f32.mrf.mxu0
        %v1979 = vadd.f32 %v1770, %v1978
        %1980 = vmatmul.f32.gmra.mxu0 %v1564
        %v1981 = vpop.f32.mrf.mxu0
        %v1982 = vadd.f32 %v1773, %v1981
        %1983 = vmatmul.f32.gmra.mxu0 %v1567
        %v1984 = vpop.f32.mrf.mxu0
        %v1985 = vadd.f32 %v1776, %v1984
        %1986 = vmatmul.f32.gmra.mxu0 %v1570
        %v1987 = vpop.f32.mrf.mxu0
        %v1988 = vadd.f32 %v1779, %v1987
        %1989 = vmatmul.f32.gmra.mxu0 %v1573
        %v1990 = vpop.f32.mrf.mxu0
        %v1991 = vadd.f32 %v1782, %v1990
        %1992 = vmatmul.f32.gmra.mxu0 %v1576
        %v1993 = vpop.f32.mrf.mxu0
        %v1994 = vadd.f32 %v1785, %v1993
        %1995 = vmatmul.f32.gmra.mxu0 %v1579
        %v1996 = vpop.f32.mrf.mxu0
        %v1997 = vadd.f32 %v1788, %v1996
        %1998 = vmatmul.f32.gmra.mxu0 %v1582
        %v1999 = vpop.f32.mrf.mxu0
        %v2000 = vadd.f32 %v1791, %v1999
        %2001 = vmatmul.f32.gmra.mxu0 %v1585
        %v2002 = vpop.f32.mrf.mxu0
        %v2003 = vadd.f32 %v1794, %v2002
        %2004 = vmatmul.f32.gmra.mxu0 %v1588
        %v2005 = vpop.f32.mrf.mxu0
        %v2006 = vadd.f32 %v1797, %v2005
        %2007 = vmatmul.f32.gmra.mxu0 %v1591
        %v2008 = vpop.f32.mrf.mxu0
        %v2009 = vadd.f32 %v1800, %v2008
        %2010 = vdwg.mxu0
        %v2012 = vsel %vm240, %v1097, 0
        %v2015 = vsel %vm240, %v1099, 0
        %v2018 = vsel %vm240, %v1101, 0
        %v2021 = vsel %vm240, %v1103, 0
        %v2024 = vsel %vm240, %v1105, 0
        %v2027 = vsel %vm240, %v1107, 0
        %v2030 = vsel %vm240, %v1109, 0
        %v2033 = vsel %vm240, %v1111, 0
        %v2036 = vsel %vm240, %v1113, 0
        %v2039 = vsel %vm240, %v1115, 0
        %v2042 = vsel %vm240, %v1117, 0
        %v2045 = vsel %vm240, %v1119, 0
        %v2048 = vsel %vm240, %v1121, 0
        %v2051 = vsel %vm240, %v1123, 0
        %v2054 = vsel %vm240, %v1125, 0
        %v2057 = vsel %vm240, %v1127, 0
        %v2060 = vsel %vm240, %v1129, 0
        %v2063 = vsel %vm240, %v1131, 0
        %v2066 = vsel %vm240, %v1133, 0
        %v2069 = vsel %vm240, %v1135, 0
        %v2072 = vsel %vm240, %v1137, 0
        %v2075 = vsel %vm240, %v1139, 0
        %v2078 = vsel %vm240, %v1141, 0
        %v2081 = vsel %vm240, %v1143, 0
        %v2084 = vsel %vm240, %v1145, 0
        %v2087 = vsel %vm240, %v1147, 0
        %v2090 = vsel %vm240, %v1149, 0
        %v2093 = vsel %vm240, %v1151, 0
        %v2096 = vsel %vm240, %v1153, 0
        %v2099 = vsel %vm240, %v1155, 0
        %v2102 = vsel %vm240, %v1157, 0
        %v2105 = vsel %vm240, %v1159, 0
        %v2108 = vsel %vm240, %v1161, 0
        %v2111 = vsel %vm240, %v1163, 0
        %v2114 = vsel %vm240, %v1165, 0
        %v2117 = vsel %vm240, %v1167, 0
        %v2120 = vsel %vm240, %v1169, 0
        %v2123 = vsel %vm240, %v1171, 0
        %v2126 = vsel %vm240, %v1173, 0
        %v2129 = vsel %vm240, %v1175, 0
        %v2132 = vsel %vm240, %v1177, 0
        %v2135 = vsel %vm240, %v1179, 0
        %v2138 = vsel %vm240, %v1181, 0
        %v2141 = vsel %vm240, %v1183, 0
        %v2144 = vsel %vm240, %v1185, 0
        %v2147 = vsel %vm240, %v1187, 0
        %v2150 = vsel %vm240, %v1189, 0
        %v2153 = vsel %vm240, %v1191, 0
        %v2156 = vsel %vm240, %v1193, 0
        %v2159 = vsel %vm240, %v1195, 0
        %v2162 = vsel %vm240, %v1197, 0
        %v2165 = vsel %vm240, %v1199, 0
        %v2168 = vsel %vm240, %v1201, 0
        %v2171 = vsel %vm240, %v1203, 0
        %v2174 = vsel %vm240, %v1205, 0
        %v2177 = vsel %vm240, %v1207, 0
        %v2180 = vsel %vm240, %v1209, 0
        %v2183 = vsel %vm240, %v1211, 0
        %v2186 = vsel %vm240, %v1213, 0
        %v2189 = vsel %vm240, %v1215, 0
        %v2192 = vsel %vm240, %v1217, 0
        %v2195 = vsel %vm240, %v1219, 0
        %v2198 = vsel %vm240, %v1221, 0
        %v2201 = vsel %vm240, %v1223, 0
        %2203 = vmatpush.msra.mxu0 %v1239
        %2204 = vmatpush.msra.mxu0 %v1238
        %2205 = vmatpush.msra.mxu0 %v1237
        %2206 = vmatpush.msra.mxu0 %v1236
        %2207 = vmatpush.msra.mxu0 %v1235
        %2208 = vmatpush.msra.mxu0 %v1234
        %2209 = vmatpush.msra.mxu0 %v1233
        %2210 = vmatpush.msra.mxu0 %v1232
        %2211 = vmatpush.msra.mxu0 %v1231
        %2212 = vmatpush.msra.mxu0 %v1230
        %2213 = vmatpush.msra.mxu0 %v1229
        %2214 = vmatpush.msra.mxu0 %v1228
        %2215 = vmatpush.msra.mxu0 %v1227
        %2216 = vmatpush.msra.mxu0 %v1226
        %2217 = vmatpush.msra.mxu0 %v1225
        %2218 = vmatpush.msra.mxu0 %v1224
        %2219 = vmatmul.f32.gmra.mxu0 %v1096
        %v2220 = vpop.f32.mrf.mxu0
        %v2221 = vadd.f32 %v1820, %v2220
        %2222 = vmatmul.f32.gmra.mxu0 %v1098
        %v2223 = vpop.f32.mrf.mxu0
        %v2224 = vadd.f32 %v1823, %v2223
        %2225 = vmatmul.f32.gmra.mxu0 %v1100
        %v2226 = vpop.f32.mrf.mxu0
        %v2227 = vadd.f32 %v1826, %v2226
        %2228 = vmatmul.f32.gmra.mxu0 %v1102
        %v2229 = vpop.f32.mrf.mxu0
        %v2230 = vadd.f32 %v1829, %v2229
        %2231 = vmatmul.f32.gmra.mxu0 %v1104
        %v2232 = vpop.f32.mrf.mxu0
        %v2233 = vadd.f32 %v1832, %v2232
        %2234 = vmatmul.f32.gmra.mxu0 %v1106
        %v2235 = vpop.f32.mrf.mxu0
        %v2236 = vadd.f32 %v1835, %v2235
        %2237 = vmatmul.f32.gmra.mxu0 %v1108
        %v2238 = vpop.f32.mrf.mxu0
        %v2239 = vadd.f32 %v1838, %v2238
        %2240 = vmatmul.f32.gmra.mxu0 %v1110
        %v2241 = vpop.f32.mrf.mxu0
        %v2242 = vadd.f32 %v1841, %v2241
        %2243 = vmatmul.f32.gmra.mxu0 %v1112
        %v2244 = vpop.f32.mrf.mxu0
        %v2245 = vadd.f32 %v1844, %v2244
        %2246 = vmatmul.f32.gmra.mxu0 %v1114
        %v2247 = vpop.f32.mrf.mxu0
        %v2248 = vadd.f32 %v1847, %v2247
        %2249 = vmatmul.f32.gmra.mxu0 %v1116
        %v2250 = vpop.f32.mrf.mxu0
        %v2251 = vadd.f32 %v1850, %v2250
        %2252 = vmatmul.f32.gmra.mxu0 %v1118
        %v2253 = vpop.f32.mrf.mxu0
        %v2254 = vadd.f32 %v1853, %v2253
        %2255 = vmatmul.f32.gmra.mxu0 %v1120
        %v2256 = vpop.f32.mrf.mxu0
        %v2257 = vadd.f32 %v1856, %v2256
        %2258 = vmatmul.f32.gmra.mxu0 %v1122
        %v2259 = vpop.f32.mrf.mxu0
        %v2260 = vadd.f32 %v1859, %v2259
        %2261 = vmatmul.f32.gmra.mxu0 %v1124
        %v2262 = vpop.f32.mrf.mxu0
        %v2263 = vadd.f32 %v1862, %v2262
        %2264 = vmatmul.f32.gmra.mxu0 %v1126
        %v2265 = vpop.f32.mrf.mxu0
        %v2266 = vadd.f32 %v1865, %v2265
        %2267 = vmatmul.f32.gmra.mxu0 %v1128
        %v2268 = vpop.f32.mrf.mxu0
        %v2269 = vadd.f32 %v1868, %v2268
        %2270 = vmatmul.f32.gmra.mxu0 %v1130
        %v2271 = vpop.f32.mrf.mxu0
        %v2272 = vadd.f32 %v1871, %v2271
        %2273 = vmatmul.f32.gmra.mxu0 %v1132
        %v2274 = vpop.f32.mrf.mxu0
        %v2275 = vadd.f32 %v1874, %v2274
        %2276 = vmatmul.f32.gmra.mxu0 %v1134
        %v2277 = vpop.f32.mrf.mxu0
        %v2278 = vadd.f32 %v1877, %v2277
        %2279 = vmatmul.f32.gmra.mxu0 %v1136
        %v2280 = vpop.f32.mrf.mxu0
        %v2281 = vadd.f32 %v1880, %v2280
        %2282 = vmatmul.f32.gmra.mxu0 %v1138
        %v2283 = vpop.f32.mrf.mxu0
        %v2284 = vadd.f32 %v1883, %v2283
        %2285 = vmatmul.f32.gmra.mxu0 %v1140
        %v2286 = vpop.f32.mrf.mxu0
        %v2287 = vadd.f32 %v1886, %v2286
        %2288 = vmatmul.f32.gmra.mxu0 %v1142
        %v2289 = vpop.f32.mrf.mxu0
        %v2290 = vadd.f32 %v1889, %v2289
        %2291 = vmatmul.f32.gmra.mxu0 %v1144
        %v2292 = vpop.f32.mrf.mxu0
        %v2293 = vadd.f32 %v1892, %v2292
        %2294 = vmatmul.f32.gmra.mxu0 %v1146
        %v2295 = vpop.f32.mrf.mxu0
        %v2296 = vadd.f32 %v1895, %v2295
        %2297 = vmatmul.f32.gmra.mxu0 %v1148
        %v2298 = vpop.f32.mrf.mxu0
        %v2299 = vadd.f32 %v1898, %v2298
        %2300 = vmatmul.f32.gmra.mxu0 %v1150
        %v2301 = vpop.f32.mrf.mxu0
        %v2302 = vadd.f32 %v1901, %v2301
        %2303 = vmatmul.f32.gmra.mxu0 %v1152
        %v2304 = vpop.f32.mrf.mxu0
        %v2305 = vadd.f32 %v1904, %v2304
        %2306 = vmatmul.f32.gmra.mxu0 %v1154
        %v2307 = vpop.f32.mrf.mxu0
        %v2308 = vadd.f32 %v1907, %v2307
        %2309 = vmatmul.f32.gmra.mxu0 %v1156
        %v2310 = vpop.f32.mrf.mxu0
        %v2311 = vadd.f32 %v1910, %v2310
        %2312 = vmatmul.f32.gmra.mxu0 %v1158
        %v2313 = vpop.f32.mrf.mxu0
        %v2314 = vadd.f32 %v1913, %v2313
        %2315 = vmatmul.f32.gmra.mxu0 %v1160
        %v2316 = vpop.f32.mrf.mxu0
        %v2317 = vadd.f32 %v1916, %v2316
        %2318 = vmatmul.f32.gmra.mxu0 %v1162
        %v2319 = vpop.f32.mrf.mxu0
        %v2320 = vadd.f32 %v1919, %v2319
        %2321 = vmatmul.f32.gmra.mxu0 %v1164
        %v2322 = vpop.f32.mrf.mxu0
        %v2323 = vadd.f32 %v1922, %v2322
        %2324 = vmatmul.f32.gmra.mxu0 %v1166
        %v2325 = vpop.f32.mrf.mxu0
        %v2326 = vadd.f32 %v1925, %v2325
        %2327 = vmatmul.f32.gmra.mxu0 %v1168
        %v2328 = vpop.f32.mrf.mxu0
        %v2329 = vadd.f32 %v1928, %v2328
        %2330 = vmatmul.f32.gmra.mxu0 %v1170
        %v2331 = vpop.f32.mrf.mxu0
        %v2332 = vadd.f32 %v1931, %v2331
        %2333 = vmatmul.f32.gmra.mxu0 %v1172
        %v2334 = vpop.f32.mrf.mxu0
        %v2335 = vadd.f32 %v1934, %v2334
        %2336 = vmatmul.f32.gmra.mxu0 %v1174
        %v2337 = vpop.f32.mrf.mxu0
        %v2338 = vadd.f32 %v1937, %v2337
        %2339 = vmatmul.f32.gmra.mxu0 %v1176
        %v2340 = vpop.f32.mrf.mxu0
        %v2341 = vadd.f32 %v1940, %v2340
        %2342 = vmatmul.f32.gmra.mxu0 %v1178
        %v2343 = vpop.f32.mrf.mxu0
        %v2344 = vadd.f32 %v1943, %v2343
        %2345 = vmatmul.f32.gmra.mxu0 %v1180
        %v2346 = vpop.f32.mrf.mxu0
        %v2347 = vadd.f32 %v1946, %v2346
        %2348 = vmatmul.f32.gmra.mxu0 %v1182
        %v2349 = vpop.f32.mrf.mxu0
        %v2350 = vadd.f32 %v1949, %v2349
        %2351 = vmatmul.f32.gmra.mxu0 %v1184
        %v2352 = vpop.f32.mrf.mxu0
        %v2353 = vadd.f32 %v1952, %v2352
        %2354 = vmatmul.f32.gmra.mxu0 %v1186
        %v2355 = vpop.f32.mrf.mxu0
        %v2356 = vadd.f32 %v1955, %v2355
        %2357 = vmatmul.f32.gmra.mxu0 %v1188
        %v2358 = vpop.f32.mrf.mxu0
        %v2359 = vadd.f32 %v1958, %v2358
        %2360 = vmatmul.f32.gmra.mxu0 %v1190
        %v2361 = vpop.f32.mrf.mxu0
        %v2362 = vadd.f32 %v1961, %v2361
        %2363 = vmatmul.f32.gmra.mxu0 %v1192
        %v2364 = vpop.f32.mrf.mxu0
        %v2365 = vadd.f32 %v1964, %v2364
        %2366 = vmatmul.f32.gmra.mxu0 %v1194
        %v2367 = vpop.f32.mrf.mxu0
        %v2368 = vadd.f32 %v1967, %v2367
        %2369 = vmatmul.f32.gmra.mxu0 %v1196
        %v2370 = vpop.f32.mrf.mxu0
        %v2371 = vadd.f32 %v1970, %v2370
        %2372 = vmatmul.f32.gmra.mxu0 %v1198
        %v2373 = vpop.f32.mrf.mxu0
        %v2374 = vadd.f32 %v1973, %v2373
        %2375 = vmatmul.f32.gmra.mxu0 %v1200
        %v2376 = vpop.f32.mrf.mxu0
        %v2377 = vadd.f32 %v1976, %v2376
        %2378 = vmatmul.f32.gmra.mxu0 %v1202
        %v2379 = vpop.f32.mrf.mxu0
        %v2380 = vadd.f32 %v1979, %v2379
        %2381 = vmatmul.f32.gmra.mxu0 %v1204
        %v2382 = vpop.f32.mrf.mxu0
        %v2383 = vadd.f32 %v1982, %v2382
        %2384 = vmatmul.f32.gmra.mxu0 %v1206
        %v2385 = vpop.f32.mrf.mxu0
        %v2386 = vadd.f32 %v1985, %v2385
        %2387 = vmatmul.f32.gmra.mxu0 %v1208
        %v2388 = vpop.f32.mrf.mxu0
        %v2389 = vadd.f32 %v1988, %v2388
        %2390 = vmatmul.f32.gmra.mxu0 %v1210
        %v2391 = vpop.f32.mrf.mxu0
        %v2392 = vadd.f32 %v1991, %v2391
        %2393 = vmatmul.f32.gmra.mxu0 %v1212
        %v2394 = vpop.f32.mrf.mxu0
        %v2395 = vadd.f32 %v1994, %v2394
        %2396 = vmatmul.f32.gmra.mxu0 %v1214
        %v2397 = vpop.f32.mrf.mxu0
        %v2398 = vadd.f32 %v1997, %v2397
        %2399 = vmatmul.f32.gmra.mxu0 %v1216
        %v2400 = vpop.f32.mrf.mxu0
        %v2401 = vadd.f32 %v2000, %v2400
        %2402 = vmatmul.f32.gmra.mxu0 %v1218
        %v2403 = vpop.f32.mrf.mxu0
        %v2404 = vadd.f32 %v2003, %v2403
        %2405 = vmatmul.f32.gmra.mxu0 %v1220
        %v2406 = vpop.f32.mrf.mxu0
        %v2407 = vadd.f32 %v2006, %v2406
        %2408 = vmatmul.f32.gmra.mxu0 %v1222
        %v2409 = vpop.f32.mrf.mxu0
        %v2410 = vadd.f32 %v2009, %v2409
        %2411 = vdwg.mxu0
        %2412 = vmatpush.msra.mxu0 0.0
        %2413 = vmatpush.msra.mxu0 0.0
        %2414 = vmatpush.msra.mxu0 0.0
        %2415 = vmatpush.msra.mxu0 0.0
        %2416 = vmatpush.msra.mxu0 0.0
        %2417 = vmatpush.msra.mxu0 0.0
        %2418 = vmatpush.msra.mxu0 0.0
        %2419 = vmatpush.msra.mxu0 0.0
        %2420 = vmatpush.msra.mxu0 %v1247
        %2421 = vmatpush.msra.mxu0 %v1246
        %2422 = vmatpush.msra.mxu0 %v1245
        %2423 = vmatpush.msra.mxu0 %v1244
        %2424 = vmatpush.msra.mxu0 %v1243
        %2425 = vmatpush.msra.mxu0 %v1242
        %2426 = vmatpush.msra.mxu0 %v1241
        %2427 = vmatpush.msra.mxu0 %v1240
        %2428 = vmatmul.f32.gmra.mxu0 %v2012
        %v2429 = vpop.f32.mrf.mxu0
        %v2430 = vadd.f32 %v2221, %v2429
        %2431 = vmatmul.f32.gmra.mxu0 %v2015
        %v2432 = vpop.f32.mrf.mxu0
        %v2433 = vadd.f32 %v2224, %v2432
        %2434 = vmatmul.f32.gmra.mxu0 %v2018
        %v2435 = vpop.f32.mrf.mxu0
        %v2436 = vadd.f32 %v2227, %v2435
        %2437 = vmatmul.f32.gmra.mxu0 %v2021
        %v2438 = vpop.f32.mrf.mxu0
        %v2439 = vadd.f32 %v2230, %v2438
        %2440 = vmatmul.f32.gmra.mxu0 %v2024
        %v2441 = vpop.f32.mrf.mxu0
        %v2442 = vadd.f32 %v2233, %v2441
        %2443 = vmatmul.f32.gmra.mxu0 %v2027
        %v2444 = vpop.f32.mrf.mxu0
        %v2445 = vadd.f32 %v2236, %v2444
        %2446 = vmatmul.f32.gmra.mxu0 %v2030
        %v2447 = vpop.f32.mrf.mxu0
        %v2448 = vadd.f32 %v2239, %v2447
        %2449 = vmatmul.f32.gmra.mxu0 %v2033
        %v2450 = vpop.f32.mrf.mxu0
        %v2451 = vadd.f32 %v2242, %v2450
        %2452 = vmatmul.f32.gmra.mxu0 %v2036
        %v2453 = vpop.f32.mrf.mxu0
        %v2454 = vadd.f32 %v2245, %v2453
        %2455 = vmatmul.f32.gmra.mxu0 %v2039
        %v2456 = vpop.f32.mrf.mxu0
        %v2457 = vadd.f32 %v2248, %v2456
        %2458 = vmatmul.f32.gmra.mxu0 %v2042
        %v2459 = vpop.f32.mrf.mxu0
        %v2460 = vadd.f32 %v2251, %v2459
        %2461 = vmatmul.f32.gmra.mxu0 %v2045
        %v2462 = vpop.f32.mrf.mxu0
        %v2463 = vadd.f32 %v2254, %v2462
        %2464 = vmatmul.f32.gmra.mxu0 %v2048
        %v2465 = vpop.f32.mrf.mxu0
        %v2466 = vadd.f32 %v2257, %v2465
        %2467 = vmatmul.f32.gmra.mxu0 %v2051
        %v2468 = vpop.f32.mrf.mxu0
        %v2469 = vadd.f32 %v2260, %v2468
        %2470 = vmatmul.f32.gmra.mxu0 %v2054
        %v2471 = vpop.f32.mrf.mxu0
        %v2472 = vadd.f32 %v2263, %v2471
        %2473 = vmatmul.f32.gmra.mxu0 %v2057
        %v2474 = vpop.f32.mrf.mxu0
        %v2475 = vadd.f32 %v2266, %v2474
        %2476 = vmatmul.f32.gmra.mxu0 %v2060
        %v2477 = vpop.f32.mrf.mxu0
        %v2478 = vadd.f32 %v2269, %v2477
        %2479 = vmatmul.f32.gmra.mxu0 %v2063
        %v2480 = vpop.f32.mrf.mxu0
        %v2481 = vadd.f32 %v2272, %v2480
        %2482 = vmatmul.f32.gmra.mxu0 %v2066
        %v2483 = vpop.f32.mrf.mxu0
        %v2484 = vadd.f32 %v2275, %v2483
        %2485 = vmatmul.f32.gmra.mxu0 %v2069
        %v2486 = vpop.f32.mrf.mxu0
        %v2487 = vadd.f32 %v2278, %v2486
        %2488 = vmatmul.f32.gmra.mxu0 %v2072
        %v2489 = vpop.f32.mrf.mxu0
        %v2490 = vadd.f32 %v2281, %v2489
        %2491 = vmatmul.f32.gmra.mxu0 %v2075
        %v2492 = vpop.f32.mrf.mxu0
        %v2493 = vadd.f32 %v2284, %v2492
        %2494 = vmatmul.f32.gmra.mxu0 %v2078
        %v2495 = vpop.f32.mrf.mxu0
        %v2496 = vadd.f32 %v2287, %v2495
        %2497 = vmatmul.f32.gmra.mxu0 %v2081
        %v2498 = vpop.f32.mrf.mxu0
        %v2499 = vadd.f32 %v2290, %v2498
        %2500 = vmatmul.f32.gmra.mxu0 %v2084
        %v2501 = vpop.f32.mrf.mxu0
        %v2502 = vadd.f32 %v2293, %v2501
        %2503 = vmatmul.f32.gmra.mxu0 %v2087
        %v2504 = vpop.f32.mrf.mxu0
        %v2505 = vadd.f32 %v2296, %v2504
        %2506 = vmatmul.f32.gmra.mxu0 %v2090
        %v2507 = vpop.f32.mrf.mxu0
        %v2508 = vadd.f32 %v2299, %v2507
        %2509 = vmatmul.f32.gmra.mxu0 %v2093
        %v2510 = vpop.f32.mrf.mxu0
        %v2511 = vadd.f32 %v2302, %v2510
        %2512 = vmatmul.f32.gmra.mxu0 %v2096
        %v2513 = vpop.f32.mrf.mxu0
        %v2514 = vadd.f32 %v2305, %v2513
        %2515 = vmatmul.f32.gmra.mxu0 %v2099
        %v2516 = vpop.f32.mrf.mxu0
        %v2517 = vadd.f32 %v2308, %v2516
        %2518 = vmatmul.f32.gmra.mxu0 %v2102
        %v2519 = vpop.f32.mrf.mxu0
        %v2520 = vadd.f32 %v2311, %v2519
        %2521 = vmatmul.f32.gmra.mxu0 %v2105
        %v2522 = vpop.f32.mrf.mxu0
        %v2523 = vadd.f32 %v2314, %v2522
        %2524 = vmatmul.f32.gmra.mxu0 %v2108
        %v2525 = vpop.f32.mrf.mxu0
        %v2526 = vadd.f32 %v2317, %v2525
        %2527 = vmatmul.f32.gmra.mxu0 %v2111
        %v2528 = vpop.f32.mrf.mxu0
        %v2529 = vadd.f32 %v2320, %v2528
        %2530 = vmatmul.f32.gmra.mxu0 %v2114
        %v2531 = vpop.f32.mrf.mxu0
        %v2532 = vadd.f32 %v2323, %v2531
        %2533 = vmatmul.f32.gmra.mxu0 %v2117
        %v2534 = vpop.f32.mrf.mxu0
        %v2535 = vadd.f32 %v2326, %v2534
        %2536 = vmatmul.f32.gmra.mxu0 %v2120
        %v2537 = vpop.f32.mrf.mxu0
        %v2538 = vadd.f32 %v2329, %v2537
        %2539 = vmatmul.f32.gmra.mxu0 %v2123
        %v2540 = vpop.f32.mrf.mxu0
        %v2541 = vadd.f32 %v2332, %v2540
        %2542 = vmatmul.f32.gmra.mxu0 %v2126
        %v2543 = vpop.f32.mrf.mxu0
        %v2544 = vadd.f32 %v2335, %v2543
        %2545 = vmatmul.f32.gmra.mxu0 %v2129
        %v2546 = vpop.f32.mrf.mxu0
        %v2547 = vadd.f32 %v2338, %v2546
        %2548 = vmatmul.f32.gmra.mxu0 %v2132
        %v2549 = vpop.f32.mrf.mxu0
        %v2550 = vadd.f32 %v2341, %v2549
        %2551 = vmatmul.f32.gmra.mxu0 %v2135
        %v2552 = vpop.f32.mrf.mxu0
        %v2553 = vadd.f32 %v2344, %v2552
        %2554 = vmatmul.f32.gmra.mxu0 %v2138
        %v2555 = vpop.f32.mrf.mxu0
        %v2556 = vadd.f32 %v2347, %v2555
        %2557 = vmatmul.f32.gmra.mxu0 %v2141
        %v2558 = vpop.f32.mrf.mxu0
        %v2559 = vadd.f32 %v2350, %v2558
        %2560 = vmatmul.f32.gmra.mxu0 %v2144
        %v2561 = vpop.f32.mrf.mxu0
        %v2562 = vadd.f32 %v2353, %v2561
        %2563 = vmatmul.f32.gmra.mxu0 %v2147
        %v2564 = vpop.f32.mrf.mxu0
        %v2565 = vadd.f32 %v2356, %v2564
        %2566 = vmatmul.f32.gmra.mxu0 %v2150
        %v2567 = vpop.f32.mrf.mxu0
        %v2568 = vadd.f32 %v2359, %v2567
        %2569 = vmatmul.f32.gmra.mxu0 %v2153
        %v2570 = vpop.f32.mrf.mxu0
        %v2571 = vadd.f32 %v2362, %v2570
        %2572 = vmatmul.f32.gmra.mxu0 %v2156
        %v2573 = vpop.f32.mrf.mxu0
        %v2574 = vadd.f32 %v2365, %v2573
        %2575 = vmatmul.f32.gmra.mxu0 %v2159
        %v2576 = vpop.f32.mrf.mxu0
        %v2577 = vadd.f32 %v2368, %v2576
        %2578 = vmatmul.f32.gmra.mxu0 %v2162
        %v2579 = vpop.f32.mrf.mxu0
        %v2580 = vadd.f32 %v2371, %v2579
        %2581 = vmatmul.f32.gmra.mxu0 %v2165
        %v2582 = vpop.f32.mrf.mxu0
        %v2583 = vadd.f32 %v2374, %v2582
        %2584 = vmatmul.f32.gmra.mxu0 %v2168
        %v2585 = vpop.f32.mrf.mxu0
        %v2586 = vadd.f32 %v2377, %v2585
        %2587 = vmatmul.f32.gmra.mxu0 %v2171
        %v2588 = vpop.f32.mrf.mxu0
        %v2589 = vadd.f32 %v2380, %v2588
        %2590 = vmatmul.f32.gmra.mxu0 %v2174
        %v2591 = vpop.f32.mrf.mxu0
        %v2592 = vadd.f32 %v2383, %v2591
        %2593 = vmatmul.f32.gmra.mxu0 %v2177
        %v2594 = vpop.f32.mrf.mxu0
        %v2595 = vadd.f32 %v2386, %v2594
        %2596 = vmatmul.f32.gmra.mxu0 %v2180
        %v2597 = vpop.f32.mrf.mxu0
        %v2598 = vadd.f32 %v2389, %v2597
        %2599 = vmatmul.f32.gmra.mxu0 %v2183
        %v2600 = vpop.f32.mrf.mxu0
        %v2601 = vadd.f32 %v2392, %v2600
        %2602 = vmatmul.f32.gmra.mxu0 %v2186
        %v2603 = vpop.f32.mrf.mxu0
        %v2604 = vadd.f32 %v2395, %v2603
        %2605 = vmatmul.f32.gmra.mxu0 %v2189
        %v2606 = vpop.f32.mrf.mxu0
        %v2607 = vadd.f32 %v2398, %v2606
        %2608 = vmatmul.f32.gmra.mxu0 %v2192
        %v2609 = vpop.f32.mrf.mxu0
        %v2610 = vadd.f32 %v2401, %v2609
        %2611 = vmatmul.f32.gmra.mxu0 %v2195
        %v2612 = vpop.f32.mrf.mxu0
        %v2613 = vadd.f32 %v2404, %v2612
        %2614 = vmatmul.f32.gmra.mxu0 %v2198
        %v2615 = vpop.f32.mrf.mxu0
        %v2616 = vadd.f32 %v2407, %v2615
        %2617 = vmatmul.f32.gmra.mxu0 %v2201
        %v2618 = vpop.f32.mrf.mxu0
        %v2619 = vadd.f32 %v2410, %v2618
        %2620 = vdwg.mxu0
        %s2621 = scalar_lea.vmem [#allocation2], 64
        %v2622 = vld [vmem:[%s2621] sm:$0xff]
        %v2623 = vld [vmem:[%s2621 + $0x8] sm:$0xff]
        %v2624 = vld [vmem:[%s2621 + $0x10] sm:$0xff]
        %v2625 = vld [vmem:[%s2621 + $0x18] sm:$0xff]
        %v2626 = vld [vmem:[%s2621 + $0x20] sm:$0xff]
        %v2627 = vld [vmem:[%s2621 + $0x28] sm:$0xff]
        %v2628 = vld [vmem:[%s2621 + $0x30] sm:$0xff]
        %v2629 = vld [vmem:[%s2621 + $0x38] sm:$0xff]
        %v2630 = vld [vmem:[%s2621 + $0x40] sm:$0xff]
        %v2631 = vld [vmem:[%s2621 + $0x48] sm:$0xff]
        %v2632 = vld [vmem:[%s2621 + $0x50] sm:$0xff]
        %v2633 = vld [vmem:[%s2621 + $0x58] sm:$0xff]
        %v2634 = vld [vmem:[%s2621 + $0x60] sm:$0xff]
        %v2635 = vld [vmem:[%s2621 + $0x68] sm:$0xff]
        %v2636 = vld [vmem:[%s2621 + $0x70] sm:$0xff]
        %v2637 = vld [vmem:[%s2621 + $0x78] sm:$0xff]
        %v2638 = vld [vmem:[%s2621 + $0x80] sm:$0xff]
        %v2639 = vld [vmem:[%s2621 + $0x88] sm:$0xff]
        %v2640 = vld [vmem:[%s2621 + $0x90] sm:$0xff]
        %v2641 = vld [vmem:[%s2621 + $0x98] sm:$0xff]
        %v2642 = vld [vmem:[%s2621 + $0xa0] sm:$0xff]
        %v2643 = vld [vmem:[%s2621 + $0xa8] sm:$0xff]
        %v2644 = vld [vmem:[%s2621 + $0xb0] sm:$0xff]
        %v2645 = vld [vmem:[%s2621 + $0xb8] sm:$0xff]
        %v2646 = vld [vmem:[%s2621 + $0xc0] sm:$0xff]
        %v2647 = vld [vmem:[%s2621 + $0xc8] sm:$0xff]
        %v2648 = vld [vmem:[%s2621 + $0xd0] sm:$0xff]
        %v2649 = vld [vmem:[%s2621 + $0xd8] sm:$0xff]
        %v2650 = vld [vmem:[%s2621 + $0xe0] sm:$0xff]
        %v2651 = vld [vmem:[%s2621 + $0xe8] sm:$0xff]
        %v2652 = vld [vmem:[%s2621 + $0xf0] sm:$0xff]
        %v2653 = vld [vmem:[%s2621 + $0xf8] sm:$0xff]
        %v2654 = vld [vmem:[%s2621 + $0x100] sm:$0xff]
        %v2655 = vld [vmem:[%s2621 + $0x108] sm:$0xff]
        %v2656 = vld [vmem:[%s2621 + $0x110] sm:$0xff]
        %v2657 = vld [vmem:[%s2621 + $0x118] sm:$0xff]
        %v2658 = vld [vmem:[%s2621 + $0x120] sm:$0xff]
        %v2659 = vld [vmem:[%s2621 + $0x128] sm:$0xff]
        %v2660 = vld [vmem:[%s2621 + $0x130] sm:$0xff]
        %v2661 = vld [vmem:[%s2621 + $0x138] sm:$0xff]
        %v2662 = vld [vmem:[%s2621 + $0x140] sm:$0xff]
        %v2663 = vld [vmem:[%s2621 + $0x148] sm:$0xff]
        %v2664 = vld [vmem:[%s2621 + $0x150] sm:$0xff]
        %v2665 = vld [vmem:[%s2621 + $0x158] sm:$0xff]
        %v2666 = vld [vmem:[%s2621 + $0x160] sm:$0xff]
        %v2667 = vld [vmem:[%s2621 + $0x168] sm:$0xff]
        %v2668 = vld [vmem:[%s2621 + $0x170] sm:$0xff]
        %v2669 = vld [vmem:[%s2621 + $0x178] sm:$0xff]
        %v2670 = vld [vmem:[%s2621 + $0x180] sm:$0xff]
        %v2671 = vld [vmem:[%s2621 + $0x188] sm:$0xff]
        %v2672 = vld [vmem:[%s2621 + $0x190] sm:$0xff]
        %v2673 = vld [vmem:[%s2621 + $0x198] sm:$0xff]
        %v2674 = vld [vmem:[%s2621 + $0x1a0] sm:$0xff]
        %v2675 = vld [vmem:[%s2621 + $0x1a8] sm:$0xff]
        %v2676 = vld [vmem:[%s2621 + $0x1b0] sm:$0xff]
        %v2677 = vld [vmem:[%s2621 + $0x1b8] sm:$0xff]
        %v2678 = vld [vmem:[%s2621 + $0x1c0] sm:$0xff]
        %v2679 = vld [vmem:[%s2621 + $0x1c8] sm:$0xff]
        %v2680 = vld [vmem:[%s2621 + $0x1d0] sm:$0xff]
        %v2681 = vld [vmem:[%s2621 + $0x1d8] sm:$0xff]
        %v2682 = vld [vmem:[%s2621 + $0x1e0] sm:$0xff]
        %v2683 = vld [vmem:[%s2621 + $0x1e8] sm:$0xff]
        %v2684 = vld [vmem:[%s2621 + $0x1f0] sm:$0xff]
        %v2685 = vld [vmem:[%s2621 + $0x1f8] sm:$0xff]
        %v2686 = vld [vmem:[%s2621 + $0x240] sm:$0xff]
        %v2687 = vld [vmem:[%s2621 + $0x248] sm:$0xff]
        %v2688 = vld [vmem:[%s2621 + $0x250] sm:$0xff]
        %v2689 = vld [vmem:[%s2621 + $0x258] sm:$0xff]
        %v2690 = vld [vmem:[%s2621 + $0x260] sm:$0xff]
        %v2691 = vld [vmem:[%s2621 + $0x268] sm:$0xff]
        %v2692 = vld [vmem:[%s2621 + $0x270] sm:$0xff]
        %v2693 = vld [vmem:[%s2621 + $0x278] sm:$0xff]
        %v2694 = vld [vmem:[%s2621 + $0x280] sm:$0xff]
        %v2695 = vld [vmem:[%s2621 + $0x288] sm:$0xff]
        %v2696 = vld [vmem:[%s2621 + $0x290] sm:$0xff]
        %v2697 = vld [vmem:[%s2621 + $0x298] sm:$0xff]
        %v2698 = vld [vmem:[%s2621 + $0x2a0] sm:$0xff]
        %v2699 = vld [vmem:[%s2621 + $0x2a8] sm:$0xff]
        %v2700 = vld [vmem:[%s2621 + $0x2b0] sm:$0xff]
        %v2701 = vld [vmem:[%s2621 + $0x2b8] sm:$0xff]
        %v2702 = vld [vmem:[%s2621 + $0x2c0] sm:$0xff]
        %v2703 = vld [vmem:[%s2621 + $0x2c8] sm:$0xff]
        %v2704 = vld [vmem:[%s2621 + $0x2d0] sm:$0xff]
        %v2705 = vld [vmem:[%s2621 + $0x2d8] sm:$0xff]
        %v2706 = vld [vmem:[%s2621 + $0x2e0] sm:$0xff]
        %v2707 = vld [vmem:[%s2621 + $0x2e8] sm:$0xff]
        %v2708 = vld [vmem:[%s2621 + $0x2f0] sm:$0xff]
        %v2709 = vld [vmem:[%s2621 + $0x2f8] sm:$0xff]
        %v2710 = vld [vmem:[%s2621 + $0x300] sm:$0xff]
        %v2711 = vld [vmem:[%s2621 + $0x308] sm:$0xff]
        %v2712 = vld [vmem:[%s2621 + $0x310] sm:$0xff]
        %v2713 = vld [vmem:[%s2621 + $0x318] sm:$0xff]
        %v2714 = vld [vmem:[%s2621 + $0x320] sm:$0xff]
        %v2715 = vld [vmem:[%s2621 + $0x328] sm:$0xff]
        %v2716 = vld [vmem:[%s2621 + $0x330] sm:$0xff]
        %v2717 = vld [vmem:[%s2621 + $0x338] sm:$0xff]
        %v2718 = vld [vmem:[%s2621 + $0x340] sm:$0xff]
        %v2719 = vld [vmem:[%s2621 + $0x348] sm:$0xff]
        %v2720 = vld [vmem:[%s2621 + $0x350] sm:$0xff]
        %v2721 = vld [vmem:[%s2621 + $0x358] sm:$0xff]
        %v2722 = vld [vmem:[%s2621 + $0x360] sm:$0xff]
        %v2723 = vld [vmem:[%s2621 + $0x368] sm:$0xff]
        %v2724 = vld [vmem:[%s2621 + $0x370] sm:$0xff]
        %v2725 = vld [vmem:[%s2621 + $0x378] sm:$0xff]
        %v2726 = vld [vmem:[%s2621 + $0x380] sm:$0xff]
        %v2727 = vld [vmem:[%s2621 + $0x388] sm:$0xff]
        %v2728 = vld [vmem:[%s2621 + $0x390] sm:$0xff]
        %v2729 = vld [vmem:[%s2621 + $0x398] sm:$0xff]
        %v2730 = vld [vmem:[%s2621 + $0x3a0] sm:$0xff]
        %v2731 = vld [vmem:[%s2621 + $0x3a8] sm:$0xff]
        %v2732 = vld [vmem:[%s2621 + $0x3b0] sm:$0xff]
        %v2733 = vld [vmem:[%s2621 + $0x3b8] sm:$0xff]
        %v2734 = vld [vmem:[%s2621 + $0x3c0] sm:$0xff]
        %v2735 = vld [vmem:[%s2621 + $0x3c8] sm:$0xff]
        %v2736 = vld [vmem:[%s2621 + $0x3d0] sm:$0xff]
        %v2737 = vld [vmem:[%s2621 + $0x3d8] sm:$0xff]
        %v2738 = vld [vmem:[%s2621 + $0x3e0] sm:$0xff]
        %v2739 = vld [vmem:[%s2621 + $0x3e8] sm:$0xff]
        %v2740 = vld [vmem:[%s2621 + $0x3f0] sm:$0xff]
        %v2741 = vld [vmem:[%s2621 + $0x3f8] sm:$0xff]
        %v2742 = vld [vmem:[%s2621 + $0x400] sm:$0xff]
        %v2743 = vld [vmem:[%s2621 + $0x408] sm:$0xff]
        %v2744 = vld [vmem:[%s2621 + $0x410] sm:$0xff]
        %v2745 = vld [vmem:[%s2621 + $0x418] sm:$0xff]
        %v2746 = vld [vmem:[%s2621 + $0x420] sm:$0xff]
        %v2747 = vld [vmem:[%s2621 + $0x428] sm:$0xff]
        %v2748 = vld [vmem:[%s2621 + $0x430] sm:$0xff]
        %v2749 = vld [vmem:[%s2621 + $0x438] sm:$0xff]
        %s2750 = scalar_lea.vmem %s1, 384
        %v2751 = vld [vmem:[%s2750] sm:$0xff]
        %v2752 = vld [vmem:[%s2750 + $0x8] sm:$0xff]
        %v2753 = vld [vmem:[%s2750 + $0x10] sm:$0xff]
        %v2754 = vld [vmem:[%s2750 + $0x18] sm:$0xff]
        %v2755 = vld [vmem:[%s2750 + $0x20] sm:$0xff]
        %v2756 = vld [vmem:[%s2750 + $0x28] sm:$0xff]
        %v2757 = vld [vmem:[%s2750 + $0x30] sm:$0xff]
        %v2758 = vld [vmem:[%s2750 + $0x38] sm:$0xff]
        %v2759 = vld [vmem:[%s2750 + $0x40] sm:$0xff]
        %v2760 = vld [vmem:[%s2750 + $0x48] sm:$0xff]
        %v2761 = vld [vmem:[%s2750 + $0x50] sm:$0xff]
        %v2762 = vld [vmem:[%s2750 + $0x58] sm:$0xff]
        %v2763 = vld [vmem:[%s2750 + $0x60] sm:$0xff]
        %v2764 = vld [vmem:[%s2750 + $0x68] sm:$0xff]
        %v2765 = vld [vmem:[%s2750 + $0x70] sm:$0xff]
        %v2766 = vld [vmem:[%s2750 + $0x78] sm:$0xff]
        %v2767 = vld [vmem:[%s2750 + $0x80] sm:$0xff]
        %v2768 = vld [vmem:[%s2750 + $0x88] sm:$0xff]
        %v2769 = vld [vmem:[%s2750 + $0x90] sm:$0xff]
        %v2770 = vld [vmem:[%s2750 + $0x98] sm:$0xff]
        %v2771 = vld [vmem:[%s2750 + $0xa0] sm:$0xff]
        %v2772 = vld [vmem:[%s2750 + $0xa8] sm:$0xff]
        %v2773 = vld [vmem:[%s2750 + $0xb0] sm:$0xff]
        %v2774 = vld [vmem:[%s2750 + $0xb8] sm:$0xff]
        %v2776 = vsel %vm240, %v2623, 0
        %v2779 = vsel %vm240, %v2625, 0
        %v2782 = vsel %vm240, %v2627, 0
        %v2785 = vsel %vm240, %v2629, 0
        %v2788 = vsel %vm240, %v2631, 0
        %v2791 = vsel %vm240, %v2633, 0
        %v2794 = vsel %vm240, %v2635, 0
        %v2797 = vsel %vm240, %v2637, 0
        %v2800 = vsel %vm240, %v2639, 0
        %v2803 = vsel %vm240, %v2641, 0
        %v2806 = vsel %vm240, %v2643, 0
        %v2809 = vsel %vm240, %v2645, 0
        %v2812 = vsel %vm240, %v2647, 0
        %v2815 = vsel %vm240, %v2649, 0
        %v2818 = vsel %vm240, %v2651, 0
        %v2821 = vsel %vm240, %v2653, 0
        %v2824 = vsel %vm240, %v2655, 0
        %v2827 = vsel %vm240, %v2657, 0
        %v2830 = vsel %vm240, %v2659, 0
        %v2833 = vsel %vm240, %v2661, 0
        %v2836 = vsel %vm240, %v2663, 0
        %v2839 = vsel %vm240, %v2665, 0
        %v2842 = vsel %vm240, %v2667, 0
        %v2845 = vsel %vm240, %v2669, 0
        %v2848 = vsel %vm240, %v2671, 0
        %v2851 = vsel %vm240, %v2673, 0
        %v2854 = vsel %vm240, %v2675, 0
        %v2857 = vsel %vm240, %v2677, 0
        %v2860 = vsel %vm240, %v2679, 0
        %v2863 = vsel %vm240, %v2681, 0
        %v2866 = vsel %vm240, %v2683, 0
        %v2869 = vsel %vm240, %v2685, 0
        %v2872 = vsel %vm240, %v2687, 0
        %v2875 = vsel %vm240, %v2689, 0
        %v2878 = vsel %vm240, %v2691, 0
        %v2881 = vsel %vm240, %v2693, 0
        %v2884 = vsel %vm240, %v2695, 0
        %v2887 = vsel %vm240, %v2697, 0
        %v2890 = vsel %vm240, %v2699, 0
        %v2893 = vsel %vm240, %v2701, 0
        %v2896 = vsel %vm240, %v2703, 0
        %v2899 = vsel %vm240, %v2705, 0
        %v2902 = vsel %vm240, %v2707, 0
        %v2905 = vsel %vm240, %v2709, 0
        %v2908 = vsel %vm240, %v2711, 0
        %v2911 = vsel %vm240, %v2713, 0
        %v2914 = vsel %vm240, %v2715, 0
        %v2917 = vsel %vm240, %v2717, 0
        %v2920 = vsel %vm240, %v2719, 0
        %v2923 = vsel %vm240, %v2721, 0
        %v2926 = vsel %vm240, %v2723, 0
        %v2929 = vsel %vm240, %v2725, 0
        %v2932 = vsel %vm240, %v2727, 0
        %v2935 = vsel %vm240, %v2729, 0
        %v2938 = vsel %vm240, %v2731, 0
        %v2941 = vsel %vm240, %v2733, 0
        %v2944 = vsel %vm240, %v2735, 0
        %v2947 = vsel %vm240, %v2737, 0
        %v2950 = vsel %vm240, %v2739, 0
        %v2953 = vsel %vm240, %v2741, 0
        %v2956 = vsel %vm240, %v2743, 0
        %v2959 = vsel %vm240, %v2745, 0
        %v2962 = vsel %vm240, %v2747, 0
        %v2965 = vsel %vm240, %v2749, 0
        %2967 = vmatpush.msra.mxu0 %v2766
        %2968 = vmatpush.msra.mxu0 %v2765
        %2969 = vmatpush.msra.mxu0 %v2764
        %2970 = vmatpush.msra.mxu0 %v2763
        %2971 = vmatpush.msra.mxu0 %v2762
        %2972 = vmatpush.msra.mxu0 %v2761
        %2973 = vmatpush.msra.mxu0 %v2760
        %2974 = vmatpush.msra.mxu0 %v2759
        %2975 = vmatpush.msra.mxu0 %v2758
        %2976 = vmatpush.msra.mxu0 %v2757
        %2977 = vmatpush.msra.mxu0 %v2756
        %2978 = vmatpush.msra.mxu0 %v2755
        %2979 = vmatpush.msra.mxu0 %v2754
        %2980 = vmatpush.msra.mxu0 %v2753
        %2981 = vmatpush.msra.mxu0 %v2752
        %2982 = vmatpush.msra.mxu0 %v2751
        %2983 = vmatmul.f32.gmra.mxu0 %v2622
        %v2984 = vpop.f32.mrf.mxu0
        %v2985 = vadd.f32 0.0, %v2984
        %2986 = vmatmul.f32.gmra.mxu0 %v2624
        %v2987 = vpop.f32.mrf.mxu0
        %v2988 = vadd.f32 0.0, %v2987
        %2989 = vmatmul.f32.gmra.mxu0 %v2626
        %v2990 = vpop.f32.mrf.mxu0
        %v2991 = vadd.f32 0.0, %v2990
        %2992 = vmatmul.f32.gmra.mxu0 %v2628
        %v2993 = vpop.f32.mrf.mxu0
        %v2994 = vadd.f32 0.0, %v2993
        %2995 = vmatmul.f32.gmra.mxu0 %v2630
        %v2996 = vpop.f32.mrf.mxu0
        %v2997 = vadd.f32 0.0, %v2996
        %2998 = vmatmul.f32.gmra.mxu0 %v2632
        %v2999 = vpop.f32.mrf.mxu0
        %v3000 = vadd.f32 0.0, %v2999
        %3001 = vmatmul.f32.gmra.mxu0 %v2634
        %v3002 = vpop.f32.mrf.mxu0
        %v3003 = vadd.f32 0.0, %v3002
        %3004 = vmatmul.f32.gmra.mxu0 %v2636
        %v3005 = vpop.f32.mrf.mxu0
        %v3006 = vadd.f32 0.0, %v3005
        %3007 = vmatmul.f32.gmra.mxu0 %v2638
        %v3008 = vpop.f32.mrf.mxu0
        %v3009 = vadd.f32 0.0, %v3008
        %3010 = vmatmul.f32.gmra.mxu0 %v2640
        %v3011 = vpop.f32.mrf.mxu0
        %v3012 = vadd.f32 0.0, %v3011
        %3013 = vmatmul.f32.gmra.mxu0 %v2642
        %v3014 = vpop.f32.mrf.mxu0
        %v3015 = vadd.f32 0.0, %v3014
        %3016 = vmatmul.f32.gmra.mxu0 %v2644
        %v3017 = vpop.f32.mrf.mxu0
        %v3018 = vadd.f32 0.0, %v3017
        %3019 = vmatmul.f32.gmra.mxu0 %v2646
        %v3020 = vpop.f32.mrf.mxu0
        %v3021 = vadd.f32 0.0, %v3020
        %3022 = vmatmul.f32.gmra.mxu0 %v2648
        %v3023 = vpop.f32.mrf.mxu0
        %v3024 = vadd.f32 0.0, %v3023
        %3025 = vmatmul.f32.gmra.mxu0 %v2650
        %v3026 = vpop.f32.mrf.mxu0
        %v3027 = vadd.f32 0.0, %v3026
        %3028 = vmatmul.f32.gmra.mxu0 %v2652
        %v3029 = vpop.f32.mrf.mxu0
        %v3030 = vadd.f32 0.0, %v3029
        %3031 = vmatmul.f32.gmra.mxu0 %v2654
        %v3032 = vpop.f32.mrf.mxu0
        %v3033 = vadd.f32 0.0, %v3032
        %3034 = vmatmul.f32.gmra.mxu0 %v2656
        %v3035 = vpop.f32.mrf.mxu0
        %v3036 = vadd.f32 0.0, %v3035
        %3037 = vmatmul.f32.gmra.mxu0 %v2658
        %v3038 = vpop.f32.mrf.mxu0
        %v3039 = vadd.f32 0.0, %v3038
        %3040 = vmatmul.f32.gmra.mxu0 %v2660
        %v3041 = vpop.f32.mrf.mxu0
        %v3042 = vadd.f32 0.0, %v3041
        %3043 = vmatmul.f32.gmra.mxu0 %v2662
        %v3044 = vpop.f32.mrf.mxu0
        %v3045 = vadd.f32 0.0, %v3044
        %3046 = vmatmul.f32.gmra.mxu0 %v2664
        %v3047 = vpop.f32.mrf.mxu0
        %v3048 = vadd.f32 0.0, %v3047
        %3049 = vmatmul.f32.gmra.mxu0 %v2666
        %v3050 = vpop.f32.mrf.mxu0
        %v3051 = vadd.f32 0.0, %v3050
        %3052 = vmatmul.f32.gmra.mxu0 %v2668
        %v3053 = vpop.f32.mrf.mxu0
        %v3054 = vadd.f32 0.0, %v3053
        %3055 = vmatmul.f32.gmra.mxu0 %v2670
        %v3056 = vpop.f32.mrf.mxu0
        %v3057 = vadd.f32 0.0, %v3056
        %3058 = vmatmul.f32.gmra.mxu0 %v2672
        %v3059 = vpop.f32.mrf.mxu0
        %v3060 = vadd.f32 0.0, %v3059
        %3061 = vmatmul.f32.gmra.mxu0 %v2674
        %v3062 = vpop.f32.mrf.mxu0
        %v3063 = vadd.f32 0.0, %v3062
        %3064 = vmatmul.f32.gmra.mxu0 %v2676
        %v3065 = vpop.f32.mrf.mxu0
        %v3066 = vadd.f32 0.0, %v3065
        %3067 = vmatmul.f32.gmra.mxu0 %v2678
        %v3068 = vpop.f32.mrf.mxu0
        %v3069 = vadd.f32 0.0, %v3068
        %3070 = vmatmul.f32.gmra.mxu0 %v2680
        %v3071 = vpop.f32.mrf.mxu0
        %v3072 = vadd.f32 0.0, %v3071
        %3073 = vmatmul.f32.gmra.mxu0 %v2682
        %v3074 = vpop.f32.mrf.mxu0
        %v3075 = vadd.f32 0.0, %v3074
        %3076 = vmatmul.f32.gmra.mxu0 %v2684
        %v3077 = vpop.f32.mrf.mxu0
        %v3078 = vadd.f32 0.0, %v3077
        %3079 = vmatmul.f32.gmra.mxu0 %v2686
        %v3080 = vpop.f32.mrf.mxu0
        %v3081 = vadd.f32 0.0, %v3080
        %3082 = vmatmul.f32.gmra.mxu0 %v2688
        %v3083 = vpop.f32.mrf.mxu0
        %v3084 = vadd.f32 0.0, %v3083
        %3085 = vmatmul.f32.gmra.mxu0 %v2690
        %v3086 = vpop.f32.mrf.mxu0
        %v3087 = vadd.f32 0.0, %v3086
        %3088 = vmatmul.f32.gmra.mxu0 %v2692
        %v3089 = vpop.f32.mrf.mxu0
        %v3090 = vadd.f32 0.0, %v3089
        %3091 = vmatmul.f32.gmra.mxu0 %v2694
        %v3092 = vpop.f32.mrf.mxu0
        %v3093 = vadd.f32 0.0, %v3092
        %3094 = vmatmul.f32.gmra.mxu0 %v2696
        %v3095 = vpop.f32.mrf.mxu0
        %v3096 = vadd.f32 0.0, %v3095
        %3097 = vmatmul.f32.gmra.mxu0 %v2698
        %v3098 = vpop.f32.mrf.mxu0
        %v3099 = vadd.f32 0.0, %v3098
        %3100 = vmatmul.f32.gmra.mxu0 %v2700
        %v3101 = vpop.f32.mrf.mxu0
        %v3102 = vadd.f32 0.0, %v3101
        %3103 = vmatmul.f32.gmra.mxu0 %v2702
        %v3104 = vpop.f32.mrf.mxu0
        %v3105 = vadd.f32 0.0, %v3104
        %3106 = vmatmul.f32.gmra.mxu0 %v2704
        %v3107 = vpop.f32.mrf.mxu0
        %v3108 = vadd.f32 0.0, %v3107
        %3109 = vmatmul.f32.gmra.mxu0 %v2706
        %v3110 = vpop.f32.mrf.mxu0
        %v3111 = vadd.f32 0.0, %v3110
        %3112 = vmatmul.f32.gmra.mxu0 %v2708
        %v3113 = vpop.f32.mrf.mxu0
        %v3114 = vadd.f32 0.0, %v3113
        %3115 = vmatmul.f32.gmra.mxu0 %v2710
        %v3116 = vpop.f32.mrf.mxu0
        %v3117 = vadd.f32 0.0, %v3116
        %3118 = vmatmul.f32.gmra.mxu0 %v2712
        %v3119 = vpop.f32.mrf.mxu0
        %v3120 = vadd.f32 0.0, %v3119
        %3121 = vmatmul.f32.gmra.mxu0 %v2714
        %v3122 = vpop.f32.mrf.mxu0
        %v3123 = vadd.f32 0.0, %v3122
        %3124 = vmatmul.f32.gmra.mxu0 %v2716
        %v3125 = vpop.f32.mrf.mxu0
        %v3126 = vadd.f32 0.0, %v3125
        %3127 = vmatmul.f32.gmra.mxu0 %v2718
        %v3128 = vpop.f32.mrf.mxu0
        %v3129 = vadd.f32 0.0, %v3128
        %3130 = vmatmul.f32.gmra.mxu0 %v2720
        %v3131 = vpop.f32.mrf.mxu0
        %v3132 = vadd.f32 0.0, %v3131
        %3133 = vmatmul.f32.gmra.mxu0 %v2722
        %v3134 = vpop.f32.mrf.mxu0
        %v3135 = vadd.f32 0.0, %v3134
        %3136 = vmatmul.f32.gmra.mxu0 %v2724
        %v3137 = vpop.f32.mrf.mxu0
        %v3138 = vadd.f32 0.0, %v3137
        %3139 = vmatmul.f32.gmra.mxu0 %v2726
        %v3140 = vpop.f32.mrf.mxu0
        %v3141 = vadd.f32 0.0, %v3140
        %3142 = vmatmul.f32.gmra.mxu0 %v2728
        %v3143 = vpop.f32.mrf.mxu0
        %v3144 = vadd.f32 0.0, %v3143
        %3145 = vmatmul.f32.gmra.mxu0 %v2730
        %v3146 = vpop.f32.mrf.mxu0
        %v3147 = vadd.f32 0.0, %v3146
        %3148 = vmatmul.f32.gmra.mxu0 %v2732
        %v3149 = vpop.f32.mrf.mxu0
        %v3150 = vadd.f32 0.0, %v3149
        %3151 = vmatmul.f32.gmra.mxu0 %v2734
        %v3152 = vpop.f32.mrf.mxu0
        %v3153 = vadd.f32 0.0, %v3152
        %3154 = vmatmul.f32.gmra.mxu0 %v2736
        %v3155 = vpop.f32.mrf.mxu0
        %v3156 = vadd.f32 0.0, %v3155
        %3157 = vmatmul.f32.gmra.mxu0 %v2738
        %v3158 = vpop.f32.mrf.mxu0
        %v3159 = vadd.f32 0.0, %v3158
        %3160 = vmatmul.f32.gmra.mxu0 %v2740
        %v3161 = vpop.f32.mrf.mxu0
        %v3162 = vadd.f32 0.0, %v3161
        %3163 = vmatmul.f32.gmra.mxu0 %v2742
        %v3164 = vpop.f32.mrf.mxu0
        %v3165 = vadd.f32 0.0, %v3164
        %3166 = vmatmul.f32.gmra.mxu0 %v2744
        %v3167 = vpop.f32.mrf.mxu0
        %v3168 = vadd.f32 0.0, %v3167
        %3169 = vmatmul.f32.gmra.mxu0 %v2746
        %v3170 = vpop.f32.mrf.mxu0
        %v3171 = vadd.f32 0.0, %v3170
        %3172 = vmatmul.f32.gmra.mxu0 %v2748
        %v3173 = vpop.f32.mrf.mxu0
        %v3174 = vadd.f32 0.0, %v3173
        %3175 = vdwg.mxu0
        %3176 = vmatpush.msra.mxu0 0.0
        %3177 = vmatpush.msra.mxu0 0.0
        %3178 = vmatpush.msra.mxu0 0.0
        %3179 = vmatpush.msra.mxu0 0.0
        %3180 = vmatpush.msra.mxu0 0.0
        %3181 = vmatpush.msra.mxu0 0.0
        %3182 = vmatpush.msra.mxu0 0.0
        %3183 = vmatpush.msra.mxu0 0.0
        %3184 = vmatpush.msra.mxu0 %v2774
        %3185 = vmatpush.msra.mxu0 %v2773
        %3186 = vmatpush.msra.mxu0 %v2772
        %3187 = vmatpush.msra.mxu0 %v2771
        %3188 = vmatpush.msra.mxu0 %v2770
        %3189 = vmatpush.msra.mxu0 %v2769
        %3190 = vmatpush.msra.mxu0 %v2768
        %3191 = vmatpush.msra.mxu0 %v2767
        %3192 = vmatmul.f32.gmra.mxu0 %v2776
        %v3193 = vpop.f32.mrf.mxu0
        %v3194 = vadd.f32 %v2985, %v3193
        %3195 = vmatmul.f32.gmra.mxu0 %v2779
        %v3196 = vpop.f32.mrf.mxu0
        %v3197 = vadd.f32 %v2988, %v3196
        %3198 = vmatmul.f32.gmra.mxu0 %v2782
        %v3199 = vpop.f32.mrf.mxu0
        %v3200 = vadd.f32 %v2991, %v3199
        %3201 = vmatmul.f32.gmra.mxu0 %v2785
        %v3202 = vpop.f32.mrf.mxu0
        %v3203 = vadd.f32 %v2994, %v3202
        %3204 = vmatmul.f32.gmra.mxu0 %v2788
        %v3205 = vpop.f32.mrf.mxu0
        %v3206 = vadd.f32 %v2997, %v3205
        %3207 = vmatmul.f32.gmra.mxu0 %v2791
        %v3208 = vpop.f32.mrf.mxu0
        %v3209 = vadd.f32 %v3000, %v3208
        %3210 = vmatmul.f32.gmra.mxu0 %v2794
        %v3211 = vpop.f32.mrf.mxu0
        %v3212 = vadd.f32 %v3003, %v3211
        %3213 = vmatmul.f32.gmra.mxu0 %v2797
        %v3214 = vpop.f32.mrf.mxu0
        %v3215 = vadd.f32 %v3006, %v3214
        %3216 = vmatmul.f32.gmra.mxu0 %v2800
        %v3217 = vpop.f32.mrf.mxu0
        %v3218 = vadd.f32 %v3009, %v3217
        %3219 = vmatmul.f32.gmra.mxu0 %v2803
        %v3220 = vpop.f32.mrf.mxu0
        %v3221 = vadd.f32 %v3012, %v3220
        %3222 = vmatmul.f32.gmra.mxu0 %v2806
        %v3223 = vpop.f32.mrf.mxu0
        %v3224 = vadd.f32 %v3015, %v3223
        %3225 = vmatmul.f32.gmra.mxu0 %v2809
        %v3226 = vpop.f32.mrf.mxu0
        %v3227 = vadd.f32 %v3018, %v3226
        %3228 = vmatmul.f32.gmra.mxu0 %v2812
        %v3229 = vpop.f32.mrf.mxu0
        %v3230 = vadd.f32 %v3021, %v3229
        %3231 = vmatmul.f32.gmra.mxu0 %v2815
        %v3232 = vpop.f32.mrf.mxu0
        %v3233 = vadd.f32 %v3024, %v3232
        %3234 = vmatmul.f32.gmra.mxu0 %v2818
        %v3235 = vpop.f32.mrf.mxu0
        %v3236 = vadd.f32 %v3027, %v3235
        %3237 = vmatmul.f32.gmra.mxu0 %v2821
        %v3238 = vpop.f32.mrf.mxu0
        %v3239 = vadd.f32 %v3030, %v3238
        %3240 = vmatmul.f32.gmra.mxu0 %v2824
        %v3241 = vpop.f32.mrf.mxu0
        %v3242 = vadd.f32 %v3033, %v3241
        %3243 = vmatmul.f32.gmra.mxu0 %v2827
        %v3244 = vpop.f32.mrf.mxu0
        %v3245 = vadd.f32 %v3036, %v3244
        %3246 = vmatmul.f32.gmra.mxu0 %v2830
        %v3247 = vpop.f32.mrf.mxu0
        %v3248 = vadd.f32 %v3039, %v3247
        %3249 = vmatmul.f32.gmra.mxu0 %v2833
        %v3250 = vpop.f32.mrf.mxu0
        %v3251 = vadd.f32 %v3042, %v3250
        %3252 = vmatmul.f32.gmra.mxu0 %v2836
        %v3253 = vpop.f32.mrf.mxu0
        %v3254 = vadd.f32 %v3045, %v3253
        %3255 = vmatmul.f32.gmra.mxu0 %v2839
        %v3256 = vpop.f32.mrf.mxu0
        %v3257 = vadd.f32 %v3048, %v3256
        %3258 = vmatmul.f32.gmra.mxu0 %v2842
        %v3259 = vpop.f32.mrf.mxu0
        %v3260 = vadd.f32 %v3051, %v3259
        %3261 = vmatmul.f32.gmra.mxu0 %v2845
        %v3262 = vpop.f32.mrf.mxu0
        %v3263 = vadd.f32 %v3054, %v3262
        %3264 = vmatmul.f32.gmra.mxu0 %v2848
        %v3265 = vpop.f32.mrf.mxu0
        %v3266 = vadd.f32 %v3057, %v3265
        %3267 = vmatmul.f32.gmra.mxu0 %v2851
        %v3268 = vpop.f32.mrf.mxu0
        %v3269 = vadd.f32 %v3060, %v3268
        %3270 = vmatmul.f32.gmra.mxu0 %v2854
        %v3271 = vpop.f32.mrf.mxu0
        %v3272 = vadd.f32 %v3063, %v3271
        %3273 = vmatmul.f32.gmra.mxu0 %v2857
        %v3274 = vpop.f32.mrf.mxu0
        %v3275 = vadd.f32 %v3066, %v3274
        %3276 = vmatmul.f32.gmra.mxu0 %v2860
        %v3277 = vpop.f32.mrf.mxu0
        %v3278 = vadd.f32 %v3069, %v3277
        %3279 = vmatmul.f32.gmra.mxu0 %v2863
        %v3280 = vpop.f32.mrf.mxu0
        %v3281 = vadd.f32 %v3072, %v3280
        %3282 = vmatmul.f32.gmra.mxu0 %v2866
        %v3283 = vpop.f32.mrf.mxu0
        %v3284 = vadd.f32 %v3075, %v3283
        %3285 = vmatmul.f32.gmra.mxu0 %v2869
        %v3286 = vpop.f32.mrf.mxu0
        %v3287 = vadd.f32 %v3078, %v3286
        %3288 = vmatmul.f32.gmra.mxu0 %v2872
        %v3289 = vpop.f32.mrf.mxu0
        %v3290 = vadd.f32 %v3081, %v3289
        %3291 = vmatmul.f32.gmra.mxu0 %v2875
        %v3292 = vpop.f32.mrf.mxu0
        %v3293 = vadd.f32 %v3084, %v3292
        %3294 = vmatmul.f32.gmra.mxu0 %v2878
        %v3295 = vpop.f32.mrf.mxu0
        %v3296 = vadd.f32 %v3087, %v3295
        %3297 = vmatmul.f32.gmra.mxu0 %v2881
        %v3298 = vpop.f32.mrf.mxu0
        %v3299 = vadd.f32 %v3090, %v3298
        %3300 = vmatmul.f32.gmra.mxu0 %v2884
        %v3301 = vpop.f32.mrf.mxu0
        %v3302 = vadd.f32 %v3093, %v3301
        %3303 = vmatmul.f32.gmra.mxu0 %v2887
        %v3304 = vpop.f32.mrf.mxu0
        %v3305 = vadd.f32 %v3096, %v3304
        %3306 = vmatmul.f32.gmra.mxu0 %v2890
        %v3307 = vpop.f32.mrf.mxu0
        %v3308 = vadd.f32 %v3099, %v3307
        %3309 = vmatmul.f32.gmra.mxu0 %v2893
        %v3310 = vpop.f32.mrf.mxu0
        %v3311 = vadd.f32 %v3102, %v3310
        %3312 = vmatmul.f32.gmra.mxu0 %v2896
        %v3313 = vpop.f32.mrf.mxu0
        %v3314 = vadd.f32 %v3105, %v3313
        %3315 = vmatmul.f32.gmra.mxu0 %v2899
        %v3316 = vpop.f32.mrf.mxu0
        %v3317 = vadd.f32 %v3108, %v3316
        %3318 = vmatmul.f32.gmra.mxu0 %v2902
        %v3319 = vpop.f32.mrf.mxu0
        %v3320 = vadd.f32 %v3111, %v3319
        %3321 = vmatmul.f32.gmra.mxu0 %v2905
        %v3322 = vpop.f32.mrf.mxu0
        %v3323 = vadd.f32 %v3114, %v3322
        %3324 = vmatmul.f32.gmra.mxu0 %v2908
        %v3325 = vpop.f32.mrf.mxu0
        %v3326 = vadd.f32 %v3117, %v3325
        %3327 = vmatmul.f32.gmra.mxu0 %v2911
        %v3328 = vpop.f32.mrf.mxu0
        %v3329 = vadd.f32 %v3120, %v3328
        %3330 = vmatmul.f32.gmra.mxu0 %v2914
        %v3331 = vpop.f32.mrf.mxu0
        %v3332 = vadd.f32 %v3123, %v3331
        %3333 = vmatmul.f32.gmra.mxu0 %v2917
        %v3334 = vpop.f32.mrf.mxu0
        %v3335 = vadd.f32 %v3126, %v3334
        %3336 = vmatmul.f32.gmra.mxu0 %v2920
        %v3337 = vpop.f32.mrf.mxu0
        %v3338 = vadd.f32 %v3129, %v3337
        %3339 = vmatmul.f32.gmra.mxu0 %v2923
        %v3340 = vpop.f32.mrf.mxu0
        %v3341 = vadd.f32 %v3132, %v3340
        %3342 = vmatmul.f32.gmra.mxu0 %v2926
        %v3343 = vpop.f32.mrf.mxu0
        %v3344 = vadd.f32 %v3135, %v3343
        %3345 = vmatmul.f32.gmra.mxu0 %v2929
        %v3346 = vpop.f32.mrf.mxu0
        %v3347 = vadd.f32 %v3138, %v3346
        %3348 = vmatmul.f32.gmra.mxu0 %v2932
        %v3349 = vpop.f32.mrf.mxu0
        %v3350 = vadd.f32 %v3141, %v3349
        %3351 = vmatmul.f32.gmra.mxu0 %v2935
        %v3352 = vpop.f32.mrf.mxu0
        %v3353 = vadd.f32 %v3144, %v3352
        %3354 = vmatmul.f32.gmra.mxu0 %v2938
        %v3355 = vpop.f32.mrf.mxu0
        %v3356 = vadd.f32 %v3147, %v3355
        %3357 = vmatmul.f32.gmra.mxu0 %v2941
        %v3358 = vpop.f32.mrf.mxu0
        %v3359 = vadd.f32 %v3150, %v3358
        %3360 = vmatmul.f32.gmra.mxu0 %v2944
        %v3361 = vpop.f32.mrf.mxu0
        %v3362 = vadd.f32 %v3153, %v3361
        %3363 = vmatmul.f32.gmra.mxu0 %v2947
        %v3364 = vpop.f32.mrf.mxu0
        %v3365 = vadd.f32 %v3156, %v3364
        %3366 = vmatmul.f32.gmra.mxu0 %v2950
        %v3367 = vpop.f32.mrf.mxu0
        %v3368 = vadd.f32 %v3159, %v3367
        %3369 = vmatmul.f32.gmra.mxu0 %v2953
        %v3370 = vpop.f32.mrf.mxu0
        %v3371 = vadd.f32 %v3162, %v3370
        %3372 = vmatmul.f32.gmra.mxu0 %v2956
        %v3373 = vpop.f32.mrf.mxu0
        %v3374 = vadd.f32 %v3165, %v3373
        %3375 = vmatmul.f32.gmra.mxu0 %v2959
        %v3376 = vpop.f32.mrf.mxu0
        %v3377 = vadd.f32 %v3168, %v3376
        %3378 = vmatmul.f32.gmra.mxu0 %v2962
        %v3379 = vpop.f32.mrf.mxu0
        %v3380 = vadd.f32 %v3171, %v3379
        %3381 = vmatmul.f32.gmra.mxu0 %v2965
        %v3382 = vpop.f32.mrf.mxu0
        %v3383 = vadd.f32 %v3174, %v3382
        %3384 = vdwg.mxu0
        %v3385 = vadd.f32 %v2430, %v3194
        %v3386 = vadd.f32 %v2433, %v3197
        %v3387 = vadd.f32 %v2436, %v3200
        %v3388 = vadd.f32 %v2439, %v3203
        %v3389 = vadd.f32 %v2442, %v3206
        %v3390 = vadd.f32 %v2445, %v3209
        %v3391 = vadd.f32 %v2448, %v3212
        %v3392 = vadd.f32 %v2451, %v3215
        %v3393 = vadd.f32 %v2454, %v3218
        %v3394 = vadd.f32 %v2457, %v3221
        %v3395 = vadd.f32 %v2460, %v3224
        %v3396 = vadd.f32 %v2463, %v3227
        %v3397 = vadd.f32 %v2466, %v3230
        %v3398 = vadd.f32 %v2469, %v3233
        %v3399 = vadd.f32 %v2472, %v3236
        %v3400 = vadd.f32 %v2475, %v3239
        %v3401 = vadd.f32 %v2478, %v3242
        %v3402 = vadd.f32 %v2481, %v3245
        %v3403 = vadd.f32 %v2484, %v3248
        %v3404 = vadd.f32 %v2487, %v3251
        %v3405 = vadd.f32 %v2490, %v3254
        %v3406 = vadd.f32 %v2493, %v3257
        %v3407 = vadd.f32 %v2496, %v3260
        %v3408 = vadd.f32 %v2499, %v3263
        %v3409 = vadd.f32 %v2502, %v3266
        %v3410 = vadd.f32 %v2505, %v3269
        %v3411 = vadd.f32 %v2508, %v3272
        %v3412 = vadd.f32 %v2511, %v3275
        %v3413 = vadd.f32 %v2514, %v3278
        %v3414 = vadd.f32 %v2517, %v3281
        %v3415 = vadd.f32 %v2520, %v3284
        %v3416 = vadd.f32 %v2523, %v3287
        %v3417 = vadd.f32 %v2526, %v3290
        %v3418 = vadd.f32 %v2529, %v3293
        %v3419 = vadd.f32 %v2532, %v3296
        %v3420 = vadd.f32 %v2535, %v3299
        %v3421 = vadd.f32 %v2538, %v3302
        %v3422 = vadd.f32 %v2541, %v3305
        %v3423 = vadd.f32 %v2544, %v3308
        %v3424 = vadd.f32 %v2547, %v3311
        %v3425 = vadd.f32 %v2550, %v3314
        %v3426 = vadd.f32 %v2553, %v3317
        %v3427 = vadd.f32 %v2556, %v3320
        %v3428 = vadd.f32 %v2559, %v3323
        %v3429 = vadd.f32 %v2562, %v3326
        %v3430 = vadd.f32 %v2565, %v3329
        %v3431 = vadd.f32 %v2568, %v3332
        %v3432 = vadd.f32 %v2571, %v3335
        %v3433 = vadd.f32 %v2574, %v3338
        %v3434 = vadd.f32 %v2577, %v3341
        %v3435 = vadd.f32 %v2580, %v3344
        %v3436 = vadd.f32 %v2583, %v3347
        %v3437 = vadd.f32 %v2586, %v3350
        %v3438 = vadd.f32 %v2589, %v3353
        %v3439 = vadd.f32 %v2592, %v3356
        %v3440 = vadd.f32 %v2595, %v3359
        %v3441 = vadd.f32 %v2598, %v3362
        %v3442 = vadd.f32 %v2601, %v3365
        %v3443 = vadd.f32 %v2604, %v3368
        %v3444 = vadd.f32 %v2607, %v3371
        %v3445 = vadd.f32 %v2610, %v3374
        %v3446 = vadd.f32 %v2613, %v3377
        %v3447 = vadd.f32 %v2616, %v3380
        %v3448 = vadd.f32 %v2619, %v3383
        %v3449 = vld [vmem:[%s2] sm:$0x1]
        %v3451 = vperm.slane %v3449, 0
        %v3453 = vadd.f32 %v3385, %v3451
        %v3454 = vadd.f32 %v3386, %v3451
        %v3455 = vadd.f32 %v3387, %v3451
        %v3456 = vadd.f32 %v3388, %v3451
        %v3457 = vadd.f32 %v3389, %v3451
        %v3458 = vadd.f32 %v3390, %v3451
        %v3459 = vadd.f32 %v3391, %v3451
        %v3460 = vadd.f32 %v3392, %v3451
        %v3461 = vadd.f32 %v3393, %v3451
        %v3462 = vadd.f32 %v3394, %v3451
        %v3463 = vadd.f32 %v3395, %v3451
        %v3464 = vadd.f32 %v3396, %v3451
        %v3465 = vadd.f32 %v3397, %v3451
        %v3466 = vadd.f32 %v3398, %v3451
        %v3467 = vadd.f32 %v3399, %v3451
        %v3468 = vadd.f32 %v3400, %v3451
        %v3469 = vadd.f32 %v3401, %v3451
        %v3470 = vadd.f32 %v3402, %v3451
        %v3471 = vadd.f32 %v3403, %v3451
        %v3472 = vadd.f32 %v3404, %v3451
        %v3473 = vadd.f32 %v3405, %v3451
        %v3474 = vadd.f32 %v3406, %v3451
        %v3475 = vadd.f32 %v3407, %v3451
        %v3476 = vadd.f32 %v3408, %v3451
        %v3477 = vadd.f32 %v3409, %v3451
        %v3478 = vadd.f32 %v3410, %v3451
        %v3479 = vadd.f32 %v3411, %v3451
        %v3480 = vadd.f32 %v3412, %v3451
        %v3481 = vadd.f32 %v3413, %v3451
        %v3482 = vadd.f32 %v3414, %v3451
        %v3483 = vadd.f32 %v3415, %v3451
        %v3484 = vadd.f32 %v3416, %v3451
        %v3485 = vadd.f32 %v3417, %v3451
        %v3486 = vadd.f32 %v3418, %v3451
        %v3487 = vadd.f32 %v3419, %v3451
        %v3488 = vadd.f32 %v3420, %v3451
        %v3489 = vadd.f32 %v3421, %v3451
        %v3490 = vadd.f32 %v3422, %v3451
        %v3491 = vadd.f32 %v3423, %v3451
        %v3492 = vadd.f32 %v3424, %v3451
        %v3493 = vadd.f32 %v3425, %v3451
        %v3494 = vadd.f32 %v3426, %v3451
        %v3495 = vadd.f32 %v3427, %v3451
        %v3496 = vadd.f32 %v3428, %v3451
        %v3497 = vadd.f32 %v3429, %v3451
        %v3498 = vadd.f32 %v3430, %v3451
        %v3499 = vadd.f32 %v3431, %v3451
        %v3500 = vadd.f32 %v3432, %v3451
        %v3501 = vadd.f32 %v3433, %v3451
        %v3502 = vadd.f32 %v3434, %v3451
        %v3503 = vadd.f32 %v3435, %v3451
        %v3504 = vadd.f32 %v3436, %v3451
        %v3505 = vadd.f32 %v3437, %v3451
        %v3506 = vadd.f32 %v3438, %v3451
        %v3507 = vadd.f32 %v3439, %v3451
        %v3508 = vadd.f32 %v3440, %v3451
        %v3509 = vadd.f32 %v3441, %v3451
        %v3510 = vadd.f32 %v3442, %v3451
        %v3511 = vadd.f32 %v3443, %v3451
        %v3512 = vadd.f32 %v3444, %v3451
        %v3513 = vadd.f32 %v3445, %v3451
        %v3514 = vadd.f32 %v3446, %v3451
        %v3515 = vadd.f32 %v3447, %v3451
        %v3516 = vadd.f32 %v3448, %v3451
        %v3517 = vmax.f32 %v3453, 0.0
        %v3518 = vmax.f32 %v3454, 0.0
        %v3519 = vmax.f32 %v3455, 0.0
        %v3520 = vmax.f32 %v3456, 0.0
        %v3521 = vmax.f32 %v3457, 0.0
        %v3522 = vmax.f32 %v3458, 0.0
        %v3523 = vmax.f32 %v3459, 0.0
        %v3524 = vmax.f32 %v3460, 0.0
        %v3525 = vmax.f32 %v3461, 0.0
        %v3526 = vmax.f32 %v3462, 0.0
        %v3527 = vmax.f32 %v3463, 0.0
        %v3528 = vmax.f32 %v3464, 0.0
        %v3529 = vmax.f32 %v3465, 0.0
        %v3530 = vmax.f32 %v3466, 0.0
        %v3531 = vmax.f32 %v3467, 0.0
        %v3532 = vmax.f32 %v3468, 0.0
        %v3533 = vmax.f32 %v3469, 0.0
        %v3534 = vmax.f32 %v3470, 0.0
        %v3535 = vmax.f32 %v3471, 0.0
        %v3536 = vmax.f32 %v3472, 0.0
        %v3537 = vmax.f32 %v3473, 0.0
        %v3538 = vmax.f32 %v3474, 0.0
        %v3539 = vmax.f32 %v3475, 0.0
        %v3540 = vmax.f32 %v3476, 0.0
        %v3541 = vmax.f32 %v3477, 0.0
        %v3542 = vmax.f32 %v3478, 0.0
        %v3543 = vmax.f32 %v3479, 0.0
        %v3544 = vmax.f32 %v3480, 0.0
        %v3545 = vmax.f32 %v3481, 0.0
        %v3546 = vmax.f32 %v3482, 0.0
        %v3547 = vmax.f32 %v3483, 0.0
        %v3548 = vmax.f32 %v3484, 0.0
        %v3549 = vmax.f32 %v3485, 0.0
        %v3550 = vmax.f32 %v3486, 0.0
        %v3551 = vmax.f32 %v3487, 0.0
        %v3552 = vmax.f32 %v3488, 0.0
        %v3553 = vmax.f32 %v3489, 0.0
        %v3554 = vmax.f32 %v3490, 0.0
        %v3555 = vmax.f32 %v3491, 0.0
        %v3556 = vmax.f32 %v3492, 0.0
        %v3557 = vmax.f32 %v3493, 0.0
        %v3558 = vmax.f32 %v3494, 0.0
        %v3559 = vmax.f32 %v3495, 0.0
        %v3560 = vmax.f32 %v3496, 0.0
        %v3561 = vmax.f32 %v3497, 0.0
        %v3562 = vmax.f32 %v3498, 0.0
        %v3563 = vmax.f32 %v3499, 0.0
        %v3564 = vmax.f32 %v3500, 0.0
        %v3565 = vmax.f32 %v3501, 0.0
        %v3566 = vmax.f32 %v3502, 0.0
        %v3567 = vmax.f32 %v3503, 0.0
        %v3568 = vmax.f32 %v3504, 0.0
        %v3569 = vmax.f32 %v3505, 0.0
        %v3570 = vmax.f32 %v3506, 0.0
        %v3571 = vmax.f32 %v3507, 0.0
        %v3572 = vmax.f32 %v3508, 0.0
        %v3573 = vmax.f32 %v3509, 0.0
        %v3574 = vmax.f32 %v3510, 0.0
        %v3575 = vmax.f32 %v3511, 0.0
        %v3576 = vmax.f32 %v3512, 0.0
        %v3577 = vmax.f32 %v3513, 0.0
        %v3578 = vmax.f32 %v3514, 0.0
        %v3579 = vmax.f32 %v3515, 0.0
        %v3580 = vmax.f32 %v3516, 0.0
        %3645 = vrot.lane.b32.xlu0 %v3517, 64
        %v3646 = vpop.permute.xlu0 %3645
        %3647 = vrot.lane.b32.xlu0 %v3518, 64
        %v3648 = vpop.permute.xlu0 %3647
        %3649 = vrot.lane.b32.xlu0 %v3519, 64
        %v3650 = vpop.permute.xlu0 %3649
        %3651 = vrot.lane.b32.xlu0 %v3520, 64
        %v3652 = vpop.permute.xlu0 %3651
        %3653 = vrot.lane.b32.xlu0 %v3521, 64
        %v3654 = vpop.permute.xlu0 %3653
        %3655 = vrot.lane.b32.xlu0 %v3522, 64
        %v3656 = vpop.permute.xlu0 %3655
        %3657 = vrot.lane.b32.xlu0 %v3523, 64
        %v3658 = vpop.permute.xlu0 %3657
        %3659 = vrot.lane.b32.xlu0 %v3524, 64
        %v3660 = vpop.permute.xlu0 %3659
        %3661 = vrot.lane.b32.xlu0 %v3525, 64
        %v3662 = vpop.permute.xlu0 %3661
        %3663 = vrot.lane.b32.xlu0 %v3526, 64
        %v3664 = vpop.permute.xlu0 %3663
        %3665 = vrot.lane.b32.xlu0 %v3527, 64
        %v3666 = vpop.permute.xlu0 %3665
        %3667 = vrot.lane.b32.xlu0 %v3528, 64
        %v3668 = vpop.permute.xlu0 %3667
        %3669 = vrot.lane.b32.xlu0 %v3529, 64
        %v3670 = vpop.permute.xlu0 %3669
        %3671 = vrot.lane.b32.xlu0 %v3530, 64
        %v3672 = vpop.permute.xlu0 %3671
        %3673 = vrot.lane.b32.xlu0 %v3531, 64
        %v3674 = vpop.permute.xlu0 %3673
        %3675 = vrot.lane.b32.xlu0 %v3532, 64
        %v3676 = vpop.permute.xlu0 %3675
        %3677 = vrot.lane.b32.xlu0 %v3533, 64
        %v3678 = vpop.permute.xlu0 %3677
        %3679 = vrot.lane.b32.xlu0 %v3534, 64
        %v3680 = vpop.permute.xlu0 %3679
        %3681 = vrot.lane.b32.xlu0 %v3535, 64
        %v3682 = vpop.permute.xlu0 %3681
        %3683 = vrot.lane.b32.xlu0 %v3536, 64
        %v3684 = vpop.permute.xlu0 %3683
        %3685 = vrot.lane.b32.xlu0 %v3537, 64
        %v3686 = vpop.permute.xlu0 %3685
        %3687 = vrot.lane.b32.xlu0 %v3538, 64
        %v3688 = vpop.permute.xlu0 %3687
        %3689 = vrot.lane.b32.xlu0 %v3539, 64
        %v3690 = vpop.permute.xlu0 %3689
        %3691 = vrot.lane.b32.xlu0 %v3540, 64
        %v3692 = vpop.permute.xlu0 %3691
        %3693 = vrot.lane.b32.xlu0 %v3541, 64
        %v3694 = vpop.permute.xlu0 %3693
        %3695 = vrot.lane.b32.xlu0 %v3542, 64
        %v3696 = vpop.permute.xlu0 %3695
        %3697 = vrot.lane.b32.xlu0 %v3543, 64
        %v3698 = vpop.permute.xlu0 %3697
        %3699 = vrot.lane.b32.xlu0 %v3544, 64
        %v3700 = vpop.permute.xlu0 %3699
        %3701 = vrot.lane.b32.xlu0 %v3545, 64
        %v3702 = vpop.permute.xlu0 %3701
        %3703 = vrot.lane.b32.xlu0 %v3546, 64
        %v3704 = vpop.permute.xlu0 %3703
        %3705 = vrot.lane.b32.xlu0 %v3547, 64
        %v3706 = vpop.permute.xlu0 %3705
        %3707 = vrot.lane.b32.xlu0 %v3548, 64
        %v3708 = vpop.permute.xlu0 %3707
        %3709 = vrot.lane.b32.xlu0 %v3549, 64
        %v3710 = vpop.permute.xlu0 %3709
        %3711 = vrot.lane.b32.xlu0 %v3550, 64
        %v3712 = vpop.permute.xlu0 %3711
        %3713 = vrot.lane.b32.xlu0 %v3551, 64
        %v3714 = vpop.permute.xlu0 %3713
        %3715 = vrot.lane.b32.xlu0 %v3552, 64
        %v3716 = vpop.permute.xlu0 %3715
        %3717 = vrot.lane.b32.xlu0 %v3553, 64
        %v3718 = vpop.permute.xlu0 %3717
        %3719 = vrot.lane.b32.xlu0 %v3554, 64
        %v3720 = vpop.permute.xlu0 %3719
        %3721 = vrot.lane.b32.xlu0 %v3555, 64
        %v3722 = vpop.permute.xlu0 %3721
        %3723 = vrot.lane.b32.xlu0 %v3556, 64
        %v3724 = vpop.permute.xlu0 %3723
        %3725 = vrot.lane.b32.xlu0 %v3557, 64
        %v3726 = vpop.permute.xlu0 %3725
        %3727 = vrot.lane.b32.xlu0 %v3558, 64
        %v3728 = vpop.permute.xlu0 %3727
        %3729 = vrot.lane.b32.xlu0 %v3559, 64
        %v3730 = vpop.permute.xlu0 %3729
        %3731 = vrot.lane.b32.xlu0 %v3560, 64
        %v3732 = vpop.permute.xlu0 %3731
        %3733 = vrot.lane.b32.xlu0 %v3561, 64
        %v3734 = vpop.permute.xlu0 %3733
        %3735 = vrot.lane.b32.xlu0 %v3562, 64
        %v3736 = vpop.permute.xlu0 %3735
        %3737 = vrot.lane.b32.xlu0 %v3563, 64
        %v3738 = vpop.permute.xlu0 %3737
        %3739 = vrot.lane.b32.xlu0 %v3564, 64
        %v3740 = vpop.permute.xlu0 %3739
        %3741 = vrot.lane.b32.xlu0 %v3565, 64
        %v3742 = vpop.permute.xlu0 %3741
        %3743 = vrot.lane.b32.xlu0 %v3566, 64
        %v3744 = vpop.permute.xlu0 %3743
        %3745 = vrot.lane.b32.xlu0 %v3567, 64
        %v3746 = vpop.permute.xlu0 %3745
        %3747 = vrot.lane.b32.xlu0 %v3568, 64
        %v3748 = vpop.permute.xlu0 %3747
        %3749 = vrot.lane.b32.xlu0 %v3569, 64
        %v3750 = vpop.permute.xlu0 %3749
        %3751 = vrot.lane.b32.xlu0 %v3570, 64
        %v3752 = vpop.permute.xlu0 %3751
        %3753 = vrot.lane.b32.xlu0 %v3571, 64
        %v3754 = vpop.permute.xlu0 %3753
        %3755 = vrot.lane.b32.xlu0 %v3572, 64
        %v3756 = vpop.permute.xlu0 %3755
        %3757 = vrot.lane.b32.xlu0 %v3573, 64
        %v3758 = vpop.permute.xlu0 %3757
        %3759 = vrot.lane.b32.xlu0 %v3574, 64
        %v3760 = vpop.permute.xlu0 %3759
        %3761 = vrot.lane.b32.xlu0 %v3575, 64
        %v3762 = vpop.permute.xlu0 %3761
        %3763 = vrot.lane.b32.xlu0 %v3576, 64
        %v3764 = vpop.permute.xlu0 %3763
        %3765 = vrot.lane.b32.xlu0 %v3577, 64
        %v3766 = vpop.permute.xlu0 %3765
        %3767 = vrot.lane.b32.xlu0 %v3578, 64
        %v3768 = vpop.permute.xlu0 %3767
        %3769 = vrot.lane.b32.xlu0 %v3579, 64
        %v3770 = vpop.permute.xlu0 %3769
        %3771 = vrot.lane.b32.xlu0 %v3580, 64
        %v3772 = vpop.permute.xlu0 %3771
        %3837 = vst.msk [vmem:[%s257] sm:$0xff] %vm579, %v3646
        %3838 = vst.msk [vmem:[%s257 + $0x10] sm:$0xff] %vm579, %v3648
        %3839 = vst.msk [vmem:[%s257 + $0x20] sm:$0xff] %vm579, %v3650
        %3840 = vst.msk [vmem:[%s257 + $0x30] sm:$0xff] %vm579, %v3652
        %3841 = vst.msk [vmem:[%s257 + $0x40] sm:$0xff] %vm579, %v3654
        %3842 = vst.msk [vmem:[%s257 + $0x50] sm:$0xff] %vm579, %v3656
        %3843 = vst.msk [vmem:[%s257 + $0x60] sm:$0xff] %vm579, %v3658
        %3844 = vst.msk [vmem:[%s257 + $0x70] sm:$0xff] %vm579, %v3660
        %3845 = vst.msk [vmem:[%s257 + $0x80] sm:$0xff] %vm579, %v3662
        %3846 = vst.msk [vmem:[%s257 + $0x90] sm:$0xff] %vm579, %v3664
        %3847 = vst.msk [vmem:[%s257 + $0xa0] sm:$0xff] %vm579, %v3666
        %3848 = vst.msk [vmem:[%s257 + $0xb0] sm:$0xff] %vm579, %v3668
        %3849 = vst.msk [vmem:[%s257 + $0xc0] sm:$0xff] %vm579, %v3670
        %3850 = vst.msk [vmem:[%s257 + $0xd0] sm:$0xff] %vm579, %v3672
        %3851 = vst.msk [vmem:[%s257 + $0xe0] sm:$0xff] %vm579, %v3674
        %3852 = vst.msk [vmem:[%s257 + $0xf0] sm:$0xff] %vm579, %v3676
        %3853 = vst.msk [vmem:[%s257 + $0x100] sm:$0xff] %vm579, %v3678
        %3854 = vst.msk [vmem:[%s257 + $0x110] sm:$0xff] %vm579, %v3680
        %3855 = vst.msk [vmem:[%s257 + $0x120] sm:$0xff] %vm579, %v3682
        %3856 = vst.msk [vmem:[%s257 + $0x130] sm:$0xff] %vm579, %v3684
        %3857 = vst.msk [vmem:[%s257 + $0x140] sm:$0xff] %vm579, %v3686
        %3858 = vst.msk [vmem:[%s257 + $0x150] sm:$0xff] %vm579, %v3688
        %3859 = vst.msk [vmem:[%s257 + $0x160] sm:$0xff] %vm579, %v3690
        %3860 = vst.msk [vmem:[%s257 + $0x170] sm:$0xff] %vm579, %v3692
        %3861 = vst.msk [vmem:[%s257 + $0x180] sm:$0xff] %vm579, %v3694
        %3862 = vst.msk [vmem:[%s257 + $0x190] sm:$0xff] %vm579, %v3696
        %3863 = vst.msk [vmem:[%s257 + $0x1a0] sm:$0xff] %vm579, %v3698
        %3864 = vst.msk [vmem:[%s257 + $0x1b0] sm:$0xff] %vm579, %v3700
        %3865 = vst.msk [vmem:[%s257 + $0x1c0] sm:$0xff] %vm579, %v3702
        %3866 = vst.msk [vmem:[%s257 + $0x1d0] sm:$0xff] %vm579, %v3704
        %3867 = vst.msk [vmem:[%s257 + $0x1e0] sm:$0xff] %vm579, %v3706
        %3868 = vst.msk [vmem:[%s257 + $0x1f0] sm:$0xff] %vm579, %v3708
        %3869 = vst.msk [vmem:[%s257 + $0x240] sm:$0xff] %vm579, %v3710
        %3870 = vst.msk [vmem:[%s257 + $0x250] sm:$0xff] %vm579, %v3712
        %3871 = vst.msk [vmem:[%s257 + $0x260] sm:$0xff] %vm579, %v3714
        %3872 = vst.msk [vmem:[%s257 + $0x270] sm:$0xff] %vm579, %v3716
        %3873 = vst.msk [vmem:[%s257 + $0x280] sm:$0xff] %vm579, %v3718
        %3874 = vst.msk [vmem:[%s257 + $0x290] sm:$0xff] %vm579, %v3720
        %3875 = vst.msk [vmem:[%s257 + $0x2a0] sm:$0xff] %vm579, %v3722
        %3876 = vst.msk [vmem:[%s257 + $0x2b0] sm:$0xff] %vm579, %v3724
        %3877 = vst.msk [vmem:[%s257 + $0x2c0] sm:$0xff] %vm579, %v3726
        %3878 = vst.msk [vmem:[%s257 + $0x2d0] sm:$0xff] %vm579, %v3728
        %3879 = vst.msk [vmem:[%s257 + $0x2e0] sm:$0xff] %vm579, %v3730
        %3880 = vst.msk [vmem:[%s257 + $0x2f0] sm:$0xff] %vm579, %v3732
        %3881 = vst.msk [vmem:[%s257 + $0x300] sm:$0xff] %vm579, %v3734
        %3882 = vst.msk [vmem:[%s257 + $0x310] sm:$0xff] %vm579, %v3736
        %3883 = vst.msk [vmem:[%s257 + $0x320] sm:$0xff] %vm579, %v3738
        %3884 = vst.msk [vmem:[%s257 + $0x330] sm:$0xff] %vm579, %v3740
        %3885 = vst.msk [vmem:[%s257 + $0x340] sm:$0xff] %vm579, %v3742
        %3886 = vst.msk [vmem:[%s257 + $0x350] sm:$0xff] %vm579, %v3744
        %3887 = vst.msk [vmem:[%s257 + $0x360] sm:$0xff] %vm579, %v3746
        %3888 = vst.msk [vmem:[%s257 + $0x370] sm:$0xff] %vm579, %v3748
        %3889 = vst.msk [vmem:[%s257 + $0x380] sm:$0xff] %vm579, %v3750
        %3890 = vst.msk [vmem:[%s257 + $0x390] sm:$0xff] %vm579, %v3752
        %3891 = vst.msk [vmem:[%s257 + $0x3a0] sm:$0xff] %vm579, %v3754
        %3892 = vst.msk [vmem:[%s257 + $0x3b0] sm:$0xff] %vm579, %v3756
        %3893 = vst.msk [vmem:[%s257 + $0x3c0] sm:$0xff] %vm579, %v3758
        %3894 = vst.msk [vmem:[%s257 + $0x3d0] sm:$0xff] %vm579, %v3760
        %3895 = vst.msk [vmem:[%s257 + $0x3e0] sm:$0xff] %vm579, %v3762
        %3896 = vst.msk [vmem:[%s257 + $0x3f0] sm:$0xff] %vm579, %v3764
        %3897 = vst.msk [vmem:[%s257 + $0x400] sm:$0xff] %vm579, %v3766
        %3898 = vst.msk [vmem:[%s257 + $0x410] sm:$0xff] %vm579, %v3768
        %3899 = vst.msk [vmem:[%s257 + $0x420] sm:$0xff] %vm579, %v3770
        %3900 = vst.msk [vmem:[%s257 + $0x430] sm:$0xff] %vm579, %v3772
        %v3901 = vrot.slane %v3517, 7
        %v3902 = vrot.slane %v3518, 7
        %v3903 = vsel %vm644, %v3901, %v3902
        %v3904 = vrot.slane %v3519, 7
        %v3905 = vrot.slane %v3520, 7
        %v3906 = vsel %vm644, %v3904, %v3905
        %v3907 = vrot.slane %v3521, 7
        %v3908 = vrot.slane %v3522, 7
        %v3909 = vsel %vm644, %v3907, %v3908
        %v3910 = vrot.slane %v3523, 7
        %v3911 = vrot.slane %v3524, 7
        %v3912 = vsel %vm644, %v3910, %v3911
        %v3913 = vrot.slane %v3525, 7
        %v3914 = vrot.slane %v3526, 7
        %v3915 = vsel %vm644, %v3913, %v3914
        %v3916 = vrot.slane %v3527, 7
        %v3917 = vrot.slane %v3528, 7
        %v3918 = vsel %vm644, %v3916, %v3917
        %v3919 = vrot.slane %v3529, 7
        %v3920 = vrot.slane %v3530, 7
        %v3921 = vsel %vm644, %v3919, %v3920
        %v3922 = vrot.slane %v3531, 7
        %v3923 = vrot.slane %v3532, 7
        %v3924 = vsel %vm644, %v3922, %v3923
        %v3925 = vrot.slane %v3533, 7
        %v3926 = vrot.slane %v3534, 7
        %v3927 = vsel %vm644, %v3925, %v3926
        %v3928 = vrot.slane %v3535, 7
        %v3929 = vrot.slane %v3536, 7
        %v3930 = vsel %vm644, %v3928, %v3929
        %v3931 = vrot.slane %v3537, 7
        %v3932 = vrot.slane %v3538, 7
        %v3933 = vsel %vm644, %v3931, %v3932
        %v3934 = vrot.slane %v3539, 7
        %v3935 = vrot.slane %v3540, 7
        %v3936 = vsel %vm644, %v3934, %v3935
        %v3937 = vrot.slane %v3541, 7
        %v3938 = vrot.slane %v3542, 7
        %v3939 = vsel %vm644, %v3937, %v3938
        %v3940 = vrot.slane %v3543, 7
        %v3941 = vrot.slane %v3544, 7
        %v3942 = vsel %vm644, %v3940, %v3941
        %v3943 = vrot.slane %v3545, 7
        %v3944 = vrot.slane %v3546, 7
        %v3945 = vsel %vm644, %v3943, %v3944
        %v3946 = vrot.slane %v3547, 7
        %v3947 = vrot.slane %v3548, 7
        %v3948 = vsel %vm644, %v3946, %v3947
        %v3949 = vrot.slane %v3549, 7
        %v3950 = vrot.slane %v3550, 7
        %v3951 = vsel %vm644, %v3949, %v3950
        %v3952 = vrot.slane %v3551, 7
        %v3953 = vrot.slane %v3552, 7
        %v3954 = vsel %vm644, %v3952, %v3953
        %v3955 = vrot.slane %v3553, 7
        %v3956 = vrot.slane %v3554, 7
        %v3957 = vsel %vm644, %v3955, %v3956
        %v3958 = vrot.slane %v3555, 7
        %v3959 = vrot.slane %v3556, 7
        %v3960 = vsel %vm644, %v3958, %v3959
        %v3961 = vrot.slane %v3557, 7
        %v3962 = vrot.slane %v3558, 7
        %v3963 = vsel %vm644, %v3961, %v3962
        %v3964 = vrot.slane %v3559, 7
        %v3965 = vrot.slane %v3560, 7
        %v3966 = vsel %vm644, %v3964, %v3965
        %v3967 = vrot.slane %v3561, 7
        %v3968 = vrot.slane %v3562, 7
        %v3969 = vsel %vm644, %v3967, %v3968
        %v3970 = vrot.slane %v3563, 7
        %v3971 = vrot.slane %v3564, 7
        %v3972 = vsel %vm644, %v3970, %v3971
        %v3973 = vrot.slane %v3565, 7
        %v3974 = vrot.slane %v3566, 7
        %v3975 = vsel %vm644, %v3973, %v3974
        %v3976 = vrot.slane %v3567, 7
        %v3977 = vrot.slane %v3568, 7
        %v3978 = vsel %vm644, %v3976, %v3977
        %v3979 = vrot.slane %v3569, 7
        %v3980 = vrot.slane %v3570, 7
        %v3981 = vsel %vm644, %v3979, %v3980
        %v3982 = vrot.slane %v3571, 7
        %v3983 = vrot.slane %v3572, 7
        %v3984 = vsel %vm644, %v3982, %v3983
        %v3985 = vrot.slane %v3573, 7
        %v3986 = vrot.slane %v3574, 7
        %v3987 = vsel %vm644, %v3985, %v3986
        %v3988 = vrot.slane %v3575, 7
        %v3989 = vrot.slane %v3576, 7
        %v3990 = vsel %vm644, %v3988, %v3989
        %v3991 = vrot.slane %v3577, 7
        %v3992 = vrot.slane %v3578, 7
        %v3993 = vsel %vm644, %v3991, %v3992
        %v3994 = vrot.slane %v3579, 7
        %v3995 = vrot.slane %v3580, 7
        %v3996 = vsel %vm644, %v3994, %v3995
        %4061 = vst.msk [vmem:[%s257] sm:$0xfe] %vm805, %v3901
        %4062 = vst.msk [vmem:[%s257 + $0x10] sm:$0xff] %vm240, %v3903
        %4063 = vst.msk [vmem:[%s257 + $0x20] sm:$0xfe] %vm805, %v3904
        %4064 = vst.msk [vmem:[%s257 + $0x30] sm:$0xff] %vm240, %v3906
        %4065 = vst.msk [vmem:[%s257 + $0x40] sm:$0xfe] %vm805, %v3907
        %4066 = vst.msk [vmem:[%s257 + $0x50] sm:$0xff] %vm240, %v3909
        %4067 = vst.msk [vmem:[%s257 + $0x60] sm:$0xfe] %vm805, %v3910
        %4068 = vst.msk [vmem:[%s257 + $0x70] sm:$0xff] %vm240, %v3912
        %4069 = vst.msk [vmem:[%s257 + $0x80] sm:$0xfe] %vm805, %v3913
        %4070 = vst.msk [vmem:[%s257 + $0x90] sm:$0xff] %vm240, %v3915
        %4071 = vst.msk [vmem:[%s257 + $0xa0] sm:$0xfe] %vm805, %v3916
        %4072 = vst.msk [vmem:[%s257 + $0xb0] sm:$0xff] %vm240, %v3918
        %4073 = vst.msk [vmem:[%s257 + $0xc0] sm:$0xfe] %vm805, %v3919
        %4074 = vst.msk [vmem:[%s257 + $0xd0] sm:$0xff] %vm240, %v3921
        %4075 = vst.msk [vmem:[%s257 + $0xe0] sm:$0xfe] %vm805, %v3922
        %4076 = vst.msk [vmem:[%s257 + $0xf0] sm:$0xff] %vm240, %v3924
        %4077 = vst.msk [vmem:[%s257 + $0x100] sm:$0xfe] %vm805, %v3925
        %4078 = vst.msk [vmem:[%s257 + $0x110] sm:$0xff] %vm240, %v3927
        %4079 = vst.msk [vmem:[%s257 + $0x120] sm:$0xfe] %vm805, %v3928
        %4080 = vst.msk [vmem:[%s257 + $0x130] sm:$0xff] %vm240, %v3930
        %4081 = vst.msk [vmem:[%s257 + $0x140] sm:$0xfe] %vm805, %v3931
        %4082 = vst.msk [vmem:[%s257 + $0x150] sm:$0xff] %vm240, %v3933
        %4083 = vst.msk [vmem:[%s257 + $0x160] sm:$0xfe] %vm805, %v3934
        %4084 = vst.msk [vmem:[%s257 + $0x170] sm:$0xff] %vm240, %v3936
        %4085 = vst.msk [vmem:[%s257 + $0x180] sm:$0xfe] %vm805, %v3937
        %4086 = vst.msk [vmem:[%s257 + $0x190] sm:$0xff] %vm240, %v3939
        %4087 = vst.msk [vmem:[%s257 + $0x1a0] sm:$0xfe] %vm805, %v3940
        %4088 = vst.msk [vmem:[%s257 + $0x1b0] sm:$0xff] %vm240, %v3942
        %4089 = vst.msk [vmem:[%s257 + $0x1c0] sm:$0xfe] %vm805, %v3943
        %4090 = vst.msk [vmem:[%s257 + $0x1d0] sm:$0xff] %vm240, %v3945
        %4091 = vst.msk [vmem:[%s257 + $0x1e0] sm:$0xfe] %vm805, %v3946
        %4092 = vst.msk [vmem:[%s257 + $0x1f0] sm:$0xff] %vm240, %v3948
        %4093 = vst.msk [vmem:[%s257 + $0x240] sm:$0xfe] %vm805, %v3949
        %4094 = vst.msk [vmem:[%s257 + $0x250] sm:$0xff] %vm240, %v3951
        %4095 = vst.msk [vmem:[%s257 + $0x260] sm:$0xfe] %vm805, %v3952
        %4096 = vst.msk [vmem:[%s257 + $0x270] sm:$0xff] %vm240, %v3954
        %4097 = vst.msk [vmem:[%s257 + $0x280] sm:$0xfe] %vm805, %v3955
        %4098 = vst.msk [vmem:[%s257 + $0x290] sm:$0xff] %vm240, %v3957
        %4099 = vst.msk [vmem:[%s257 + $0x2a0] sm:$0xfe] %vm805, %v3958
        %4100 = vst.msk [vmem:[%s257 + $0x2b0] sm:$0xff] %vm240, %v3960
        %4101 = vst.msk [vmem:[%s257 + $0x2c0] sm:$0xfe] %vm805, %v3961
        %4102 = vst.msk [vmem:[%s257 + $0x2d0] sm:$0xff] %vm240, %v3963
        %4103 = vst.msk [vmem:[%s257 + $0x2e0] sm:$0xfe] %vm805, %v3964
        %4104 = vst.msk [vmem:[%s257 + $0x2f0] sm:$0xff] %vm240, %v3966
        %4105 = vst.msk [vmem:[%s257 + $0x300] sm:$0xfe] %vm805, %v3967
        %4106 = vst.msk [vmem:[%s257 + $0x310] sm:$0xff] %vm240, %v3969
        %4107 = vst.msk [vmem:[%s257 + $0x320] sm:$0xfe] %vm805, %v3970
        %4108 = vst.msk [vmem:[%s257 + $0x330] sm:$0xff] %vm240, %v3972
        %4109 = vst.msk [vmem:[%s257 + $0x340] sm:$0xfe] %vm805, %v3973
        %4110 = vst.msk [vmem:[%s257 + $0x350] sm:$0xff] %vm240, %v3975
        %4111 = vst.msk [vmem:[%s257 + $0x360] sm:$0xfe] %vm805, %v3976
        %4112 = vst.msk [vmem:[%s257 + $0x370] sm:$0xff] %vm240, %v3978
        %4113 = vst.msk [vmem:[%s257 + $0x380] sm:$0xfe] %vm805, %v3979
        %4114 = vst.msk [vmem:[%s257 + $0x390] sm:$0xff] %vm240, %v3981
        %4115 = vst.msk [vmem:[%s257 + $0x3a0] sm:$0xfe] %vm805, %v3982
        %4116 = vst.msk [vmem:[%s257 + $0x3b0] sm:$0xff] %vm240, %v3984
        %4117 = vst.msk [vmem:[%s257 + $0x3c0] sm:$0xfe] %vm805, %v3985
        %4118 = vst.msk [vmem:[%s257 + $0x3d0] sm:$0xff] %vm240, %v3987
        %4119 = vst.msk [vmem:[%s257 + $0x3e0] sm:$0xfe] %vm805, %v3988
        %4120 = vst.msk [vmem:[%s257 + $0x3f0] sm:$0xff] %vm240, %v3990
        %4121 = vst.msk [vmem:[%s257 + $0x400] sm:$0xfe] %vm805, %v3991
        %4122 = vst.msk [vmem:[%s257 + $0x410] sm:$0xff] %vm240, %v3993
        %4123 = vst.msk [vmem:[%s257 + $0x420] sm:$0xfe] %vm805, %v3994
        %4124 = vst.msk [vmem:[%s257 + $0x430] sm:$0xff] %vm240, %v3996
        %v4125 = vrot.slane %v3517, 1
        %v4126 = vrot.slane %v3518, 1
        %v4127 = vsel %vm870, %v4125, %v4126
        %v4128 = vrot.slane %v3519, 1
        %v4129 = vrot.slane %v3520, 1
        %v4130 = vsel %vm870, %v4128, %v4129
        %v4131 = vrot.slane %v3521, 1
        %v4132 = vrot.slane %v3522, 1
        %v4133 = vsel %vm870, %v4131, %v4132
        %v4134 = vrot.slane %v3523, 1
        %v4135 = vrot.slane %v3524, 1
        %v4136 = vsel %vm870, %v4134, %v4135
        %v4137 = vrot.slane %v3525, 1
        %v4138 = vrot.slane %v3526, 1
        %v4139 = vsel %vm870, %v4137, %v4138
        %v4140 = vrot.slane %v3527, 1
        %v4141 = vrot.slane %v3528, 1
        %v4142 = vsel %vm870, %v4140, %v4141
        %v4143 = vrot.slane %v3529, 1
        %v4144 = vrot.slane %v3530, 1
        %v4145 = vsel %vm870, %v4143, %v4144
        %v4146 = vrot.slane %v3531, 1
        %v4147 = vrot.slane %v3532, 1
        %v4148 = vsel %vm870, %v4146, %v4147
        %v4149 = vrot.slane %v3533, 1
        %v4150 = vrot.slane %v3534, 1
        %v4151 = vsel %vm870, %v4149, %v4150
        %v4152 = vrot.slane %v3535, 1
        %v4153 = vrot.slane %v3536, 1
        %v4154 = vsel %vm870, %v4152, %v4153
        %v4155 = vrot.slane %v3537, 1
        %v4156 = vrot.slane %v3538, 1
        %v4157 = vsel %vm870, %v4155, %v4156
        %v4158 = vrot.slane %v3539, 1
        %v4159 = vrot.slane %v3540, 1
        %v4160 = vsel %vm870, %v4158, %v4159
        %v4161 = vrot.slane %v3541, 1
        %v4162 = vrot.slane %v3542, 1
        %v4163 = vsel %vm870, %v4161, %v4162
        %v4164 = vrot.slane %v3543, 1
        %v4165 = vrot.slane %v3544, 1
        %v4166 = vsel %vm870, %v4164, %v4165
        %v4167 = vrot.slane %v3545, 1
        %v4168 = vrot.slane %v3546, 1
        %v4169 = vsel %vm870, %v4167, %v4168
        %v4170 = vrot.slane %v3547, 1
        %v4171 = vrot.slane %v3548, 1
        %v4172 = vsel %vm870, %v4170, %v4171
        %v4173 = vrot.slane %v3549, 1
        %v4174 = vrot.slane %v3550, 1
        %v4175 = vsel %vm870, %v4173, %v4174
        %v4176 = vrot.slane %v3551, 1
        %v4177 = vrot.slane %v3552, 1
        %v4178 = vsel %vm870, %v4176, %v4177
        %v4179 = vrot.slane %v3553, 1
        %v4180 = vrot.slane %v3554, 1
        %v4181 = vsel %vm870, %v4179, %v4180
        %v4182 = vrot.slane %v3555, 1
        %v4183 = vrot.slane %v3556, 1
        %v4184 = vsel %vm870, %v4182, %v4183
        %v4185 = vrot.slane %v3557, 1
        %v4186 = vrot.slane %v3558, 1
        %v4187 = vsel %vm870, %v4185, %v4186
        %v4188 = vrot.slane %v3559, 1
        %v4189 = vrot.slane %v3560, 1
        %v4190 = vsel %vm870, %v4188, %v4189
        %v4191 = vrot.slane %v3561, 1
        %v4192 = vrot.slane %v3562, 1
        %v4193 = vsel %vm870, %v4191, %v4192
        %v4194 = vrot.slane %v3563, 1
        %v4195 = vrot.slane %v3564, 1
        %v4196 = vsel %vm870, %v4194, %v4195
        %v4197 = vrot.slane %v3565, 1
        %v4198 = vrot.slane %v3566, 1
        %v4199 = vsel %vm870, %v4197, %v4198
        %v4200 = vrot.slane %v3567, 1
        %v4201 = vrot.slane %v3568, 1
        %v4202 = vsel %vm870, %v4200, %v4201
        %v4203 = vrot.slane %v3569, 1
        %v4204 = vrot.slane %v3570, 1
        %v4205 = vsel %vm870, %v4203, %v4204
        %v4206 = vrot.slane %v3571, 1
        %v4207 = vrot.slane %v3572, 1
        %v4208 = vsel %vm870, %v4206, %v4207
        %v4209 = vrot.slane %v3573, 1
        %v4210 = vrot.slane %v3574, 1
        %v4211 = vsel %vm870, %v4209, %v4210
        %v4212 = vrot.slane %v3575, 1
        %v4213 = vrot.slane %v3576, 1
        %v4214 = vsel %vm870, %v4212, %v4213
        %v4215 = vrot.slane %v3577, 1
        %v4216 = vrot.slane %v3578, 1
        %v4217 = vsel %vm870, %v4215, %v4216
        %v4218 = vrot.slane %v3579, 1
        %v4219 = vrot.slane %v3580, 1
        %v4220 = vsel %vm870, %v4218, %v4219
        %4285 = vst.msk [vmem:[%s257 + $0x8] sm:$0xff] %vm240, %v4127
        %4286 = vst.msk [vmem:[%s257 + $0x18] sm:$0x7f] %vm1032, %v4126
        %4287 = vst.msk [vmem:[%s257 + $0x28] sm:$0xff] %vm240, %v4130
        %4288 = vst.msk [vmem:[%s257 + $0x38] sm:$0x7f] %vm1032, %v4129
        %4289 = vst.msk [vmem:[%s257 + $0x48] sm:$0xff] %vm240, %v4133
        %4290 = vst.msk [vmem:[%s257 + $0x58] sm:$0x7f] %vm1032, %v4132
        %4291 = vst.msk [vmem:[%s257 + $0x68] sm:$0xff] %vm240, %v4136
        %4292 = vst.msk [vmem:[%s257 + $0x78] sm:$0x7f] %vm1032, %v4135
        %4293 = vst.msk [vmem:[%s257 + $0x88] sm:$0xff] %vm240, %v4139
        %4294 = vst.msk [vmem:[%s257 + $0x98] sm:$0x7f] %vm1032, %v4138
        %4295 = vst.msk [vmem:[%s257 + $0xa8] sm:$0xff] %vm240, %v4142
        %4296 = vst.msk [vmem:[%s257 + $0xb8] sm:$0x7f] %vm1032, %v4141
        %4297 = vst.msk [vmem:[%s257 + $0xc8] sm:$0xff] %vm240, %v4145
        %4298 = vst.msk [vmem:[%s257 + $0xd8] sm:$0x7f] %vm1032, %v4144
        %4299 = vst.msk [vmem:[%s257 + $0xe8] sm:$0xff] %vm240, %v4148
        %4300 = vst.msk [vmem:[%s257 + $0xf8] sm:$0x7f] %vm1032, %v4147
        %4301 = vst.msk [vmem:[%s257 + $0x108] sm:$0xff] %vm240, %v4151
        %4302 = vst.msk [vmem:[%s257 + $0x118] sm:$0x7f] %vm1032, %v4150
        %4303 = vst.msk [vmem:[%s257 + $0x128] sm:$0xff] %vm240, %v4154
        %4304 = vst.msk [vmem:[%s257 + $0x138] sm:$0x7f] %vm1032, %v4153
        %4305 = vst.msk [vmem:[%s257 + $0x148] sm:$0xff] %vm240, %v4157
        %4306 = vst.msk [vmem:[%s257 + $0x158] sm:$0x7f] %vm1032, %v4156
        %4307 = vst.msk [vmem:[%s257 + $0x168] sm:$0xff] %vm240, %v4160
        %4308 = vst.msk [vmem:[%s257 + $0x178] sm:$0x7f] %vm1032, %v4159
        %4309 = vst.msk [vmem:[%s257 + $0x188] sm:$0xff] %vm240, %v4163
        %4310 = vst.msk [vmem:[%s257 + $0x198] sm:$0x7f] %vm1032, %v4162
        %4311 = vst.msk [vmem:[%s257 + $0x1a8] sm:$0xff] %vm240, %v4166
        %4312 = vst.msk [vmem:[%s257 + $0x1b8] sm:$0x7f] %vm1032, %v4165
        %4313 = vst.msk [vmem:[%s257 + $0x1c8] sm:$0xff] %vm240, %v4169
        %4314 = vst.msk [vmem:[%s257 + $0x1d8] sm:$0x7f] %vm1032, %v4168
        %4315 = vst.msk [vmem:[%s257 + $0x1e8] sm:$0xff] %vm240, %v4172
        %4316 = vst.msk [vmem:[%s257 + $0x1f8] sm:$0x7f] %vm1032, %v4171
        %4317 = vst.msk [vmem:[%s257 + $0x248] sm:$0xff] %vm240, %v4175
        %4318 = vst.msk [vmem:[%s257 + $0x258] sm:$0x7f] %vm1032, %v4174
        %4319 = vst.msk [vmem:[%s257 + $0x268] sm:$0xff] %vm240, %v4178
        %4320 = vst.msk [vmem:[%s257 + $0x278] sm:$0x7f] %vm1032, %v4177
        %4321 = vst.msk [vmem:[%s257 + $0x288] sm:$0xff] %vm240, %v4181
        %4322 = vst.msk [vmem:[%s257 + $0x298] sm:$0x7f] %vm1032, %v4180
        %4323 = vst.msk [vmem:[%s257 + $0x2a8] sm:$0xff] %vm240, %v4184
        %4324 = vst.msk [vmem:[%s257 + $0x2b8] sm:$0x7f] %vm1032, %v4183
        %4325 = vst.msk [vmem:[%s257 + $0x2c8] sm:$0xff] %vm240, %v4187
        %4326 = vst.msk [vmem:[%s257 + $0x2d8] sm:$0x7f] %vm1032, %v4186
        %4327 = vst.msk [vmem:[%s257 + $0x2e8] sm:$0xff] %vm240, %v4190
        %4328 = vst.msk [vmem:[%s257 + $0x2f8] sm:$0x7f] %vm1032, %v4189
        %4329 = vst.msk [vmem:[%s257 + $0x308] sm:$0xff] %vm240, %v4193
        %4330 = vst.msk [vmem:[%s257 + $0x318] sm:$0x7f] %vm1032, %v4192
        %4331 = vst.msk [vmem:[%s257 + $0x328] sm:$0xff] %vm240, %v4196
        %4332 = vst.msk [vmem:[%s257 + $0x338] sm:$0x7f] %vm1032, %v4195
        %4333 = vst.msk [vmem:[%s257 + $0x348] sm:$0xff] %vm240, %v4199
        %4334 = vst.msk [vmem:[%s257 + $0x358] sm:$0x7f] %vm1032, %v4198
        %4335 = vst.msk [vmem:[%s257 + $0x368] sm:$0xff] %vm240, %v4202
        %4336 = vst.msk [vmem:[%s257 + $0x378] sm:$0x7f] %vm1032, %v4201
        %4337 = vst.msk [vmem:[%s257 + $0x388] sm:$0xff] %vm240, %v4205
        %4338 = vst.msk [vmem:[%s257 + $0x398] sm:$0x7f] %vm1032, %v4204
        %4339 = vst.msk [vmem:[%s257 + $0x3a8] sm:$0xff] %vm240, %v4208
        %4340 = vst.msk [vmem:[%s257 + $0x3b8] sm:$0x7f] %vm1032, %v4207
        %4341 = vst.msk [vmem:[%s257 + $0x3c8] sm:$0xff] %vm240, %v4211
        %4342 = vst.msk [vmem:[%s257 + $0x3d8] sm:$0x7f] %vm1032, %v4210
        %4343 = vst.msk [vmem:[%s257 + $0x3e8] sm:$0xff] %vm240, %v4214
        %4344 = vst.msk [vmem:[%s257 + $0x3f8] sm:$0x7f] %vm1032, %v4213
        %4345 = vst.msk [vmem:[%s257 + $0x408] sm:$0xff] %vm240, %v4217
        %4346 = vst.msk [vmem:[%s257 + $0x418] sm:$0x7f] %vm1032, %v4216
        %4347 = vst.msk [vmem:[%s257 + $0x428] sm:$0xff] %vm240, %v4220
        %4348 = vst.msk [vmem:[%s257 + $0x438] sm:$0x7f] %vm1032, %v4219
        %v4349 = vld [vmem:[#allocation2] sm:$0xff]
        %v4350 = vld [vmem:[#allocation2 + $0x8] sm:$0xff]
        %v4351 = vld [vmem:[#allocation2 + $0x10] sm:$0xff]
        %v4352 = vld [vmem:[#allocation2 + $0x18] sm:$0xff]
        %v4353 = vld [vmem:[#allocation2 + $0x20] sm:$0xff]
        %v4354 = vld [vmem:[#allocation2 + $0x28] sm:$0xff]
        %v4355 = vld [vmem:[#allocation2 + $0x30] sm:$0xff]
        %v4356 = vld [vmem:[#allocation2 + $0x38] sm:$0xff]
        %v4357 = vld [vmem:[#allocation2 + $0x40] sm:$0xff]
        %v4358 = vld [vmem:[#allocation2 + $0x48] sm:$0xff]
        %v4359 = vld [vmem:[#allocation2 + $0x50] sm:$0xff]
        %v4360 = vld [vmem:[#allocation2 + $0x58] sm:$0xff]
        %v4361 = vld [vmem:[#allocation2 + $0x60] sm:$0xff]
        %v4362 = vld [vmem:[#allocation2 + $0x68] sm:$0xff]
        %v4363 = vld [vmem:[#allocation2 + $0x70] sm:$0xff]
        %v4364 = vld [vmem:[#allocation2 + $0x78] sm:$0xff]
        %v4365 = vld [vmem:[#allocation2 + $0x80] sm:$0xff]
        %v4366 = vld [vmem:[#allocation2 + $0x88] sm:$0xff]
        %v4367 = vld [vmem:[#allocation2 + $0x90] sm:$0xff]
        %v4368 = vld [vmem:[#allocation2 + $0x98] sm:$0xff]
        %v4369 = vld [vmem:[#allocation2 + $0xa0] sm:$0xff]
        %v4370 = vld [vmem:[#allocation2 + $0xa8] sm:$0xff]
        %v4371 = vld [vmem:[#allocation2 + $0xb0] sm:$0xff]
        %v4372 = vld [vmem:[#allocation2 + $0xb8] sm:$0xff]
        %v4373 = vld [vmem:[#allocation2 + $0xc0] sm:$0xff]
        %v4374 = vld [vmem:[#allocation2 + $0xc8] sm:$0xff]
        %v4375 = vld [vmem:[#allocation2 + $0xd0] sm:$0xff]
        %v4376 = vld [vmem:[#allocation2 + $0xd8] sm:$0xff]
        %v4377 = vld [vmem:[#allocation2 + $0xe0] sm:$0xff]
        %v4378 = vld [vmem:[#allocation2 + $0xe8] sm:$0xff]
        %v4379 = vld [vmem:[#allocation2 + $0xf0] sm:$0xff]
        %v4380 = vld [vmem:[#allocation2 + $0xf8] sm:$0xff]
        %v4381 = vld [vmem:[#allocation2 + $0x100] sm:$0xff]
        %v4382 = vld [vmem:[#allocation2 + $0x108] sm:$0xff]
        %v4383 = vld [vmem:[#allocation2 + $0x110] sm:$0xff]
        %v4384 = vld [vmem:[#allocation2 + $0x118] sm:$0xff]
        %v4385 = vld [vmem:[#allocation2 + $0x120] sm:$0xff]
        %v4386 = vld [vmem:[#allocation2 + $0x128] sm:$0xff]
        %v4387 = vld [vmem:[#allocation2 + $0x130] sm:$0xff]
        %v4388 = vld [vmem:[#allocation2 + $0x138] sm:$0xff]
        %v4389 = vld [vmem:[#allocation2 + $0x140] sm:$0xff]
        %v4390 = vld [vmem:[#allocation2 + $0x148] sm:$0xff]
        %v4391 = vld [vmem:[#allocation2 + $0x150] sm:$0xff]
        %v4392 = vld [vmem:[#allocation2 + $0x158] sm:$0xff]
        %v4393 = vld [vmem:[#allocation2 + $0x160] sm:$0xff]
        %v4394 = vld [vmem:[#allocation2 + $0x168] sm:$0xff]
        %v4395 = vld [vmem:[#allocation2 + $0x170] sm:$0xff]
        %v4396 = vld [vmem:[#allocation2 + $0x178] sm:$0xff]
        %v4397 = vld [vmem:[#allocation2 + $0x180] sm:$0xff]
        %v4398 = vld [vmem:[#allocation2 + $0x188] sm:$0xff]
        %v4399 = vld [vmem:[#allocation2 + $0x190] sm:$0xff]
        %v4400 = vld [vmem:[#allocation2 + $0x198] sm:$0xff]
        %v4401 = vld [vmem:[#allocation2 + $0x1a0] sm:$0xff]
        %v4402 = vld [vmem:[#allocation2 + $0x1a8] sm:$0xff]
        %v4403 = vld [vmem:[#allocation2 + $0x1b0] sm:$0xff]
        %v4404 = vld [vmem:[#allocation2 + $0x1b8] sm:$0xff]
        %v4405 = vld [vmem:[#allocation2 + $0x1c0] sm:$0xff]
        %v4406 = vld [vmem:[#allocation2 + $0x1c8] sm:$0xff]
        %v4407 = vld [vmem:[#allocation2 + $0x1d0] sm:$0xff]
        %v4408 = vld [vmem:[#allocation2 + $0x1d8] sm:$0xff]
        %v4409 = vld [vmem:[#allocation2 + $0x1e0] sm:$0xff]
        %v4410 = vld [vmem:[#allocation2 + $0x1e8] sm:$0xff]
        %v4411 = vld [vmem:[#allocation2 + $0x1f0] sm:$0xff]
        %v4412 = vld [vmem:[#allocation2 + $0x1f8] sm:$0xff]
        %v4413 = vld [vmem:[#allocation2 + $0x240] sm:$0xff]
        %v4414 = vld [vmem:[#allocation2 + $0x248] sm:$0xff]
        %v4415 = vld [vmem:[#allocation2 + $0x250] sm:$0xff]
        %v4416 = vld [vmem:[#allocation2 + $0x258] sm:$0xff]
        %v4417 = vld [vmem:[#allocation2 + $0x260] sm:$0xff]
        %v4418 = vld [vmem:[#allocation2 + $0x268] sm:$0xff]
        %v4419 = vld [vmem:[#allocation2 + $0x270] sm:$0xff]
        %v4420 = vld [vmem:[#allocation2 + $0x278] sm:$0xff]
        %v4421 = vld [vmem:[#allocation2 + $0x280] sm:$0xff]
        %v4422 = vld [vmem:[#allocation2 + $0x288] sm:$0xff]
        %v4423 = vld [vmem:[#allocation2 + $0x290] sm:$0xff]
        %v4424 = vld [vmem:[#allocation2 + $0x298] sm:$0xff]
        %v4425 = vld [vmem:[#allocation2 + $0x2a0] sm:$0xff]
        %v4426 = vld [vmem:[#allocation2 + $0x2a8] sm:$0xff]
        %v4427 = vld [vmem:[#allocation2 + $0x2b0] sm:$0xff]
        %v4428 = vld [vmem:[#allocation2 + $0x2b8] sm:$0xff]
        %v4429 = vld [vmem:[#allocation2 + $0x2c0] sm:$0xff]
        %v4430 = vld [vmem:[#allocation2 + $0x2c8] sm:$0xff]
        %v4431 = vld [vmem:[#allocation2 + $0x2d0] sm:$0xff]
        %v4432 = vld [vmem:[#allocation2 + $0x2d8] sm:$0xff]
        %v4433 = vld [vmem:[#allocation2 + $0x2e0] sm:$0xff]
        %v4434 = vld [vmem:[#allocation2 + $0x2e8] sm:$0xff]
        %v4435 = vld [vmem:[#allocation2 + $0x2f0] sm:$0xff]
        %v4436 = vld [vmem:[#allocation2 + $0x2f8] sm:$0xff]
        %v4437 = vld [vmem:[#allocation2 + $0x300] sm:$0xff]
        %v4438 = vld [vmem:[#allocation2 + $0x308] sm:$0xff]
        %v4439 = vld [vmem:[#allocation2 + $0x310] sm:$0xff]
        %v4440 = vld [vmem:[#allocation2 + $0x318] sm:$0xff]
        %v4441 = vld [vmem:[#allocation2 + $0x320] sm:$0xff]
        %v4442 = vld [vmem:[#allocation2 + $0x328] sm:$0xff]
        %v4443 = vld [vmem:[#allocation2 + $0x330] sm:$0xff]
        %v4444 = vld [vmem:[#allocation2 + $0x338] sm:$0xff]
        %v4445 = vld [vmem:[#allocation2 + $0x340] sm:$0xff]
        %v4446 = vld [vmem:[#allocation2 + $0x348] sm:$0xff]
        %v4447 = vld [vmem:[#allocation2 + $0x350] sm:$0xff]
        %v4448 = vld [vmem:[#allocation2 + $0x358] sm:$0xff]
        %v4449 = vld [vmem:[#allocation2 + $0x360] sm:$0xff]
        %v4450 = vld [vmem:[#allocation2 + $0x368] sm:$0xff]
        %v4451 = vld [vmem:[#allocation2 + $0x370] sm:$0xff]
        %v4452 = vld [vmem:[#allocation2 + $0x378] sm:$0xff]
        %v4453 = vld [vmem:[#allocation2 + $0x380] sm:$0xff]
        %v4454 = vld [vmem:[#allocation2 + $0x388] sm:$0xff]
        %v4455 = vld [vmem:[#allocation2 + $0x390] sm:$0xff]
        %v4456 = vld [vmem:[#allocation2 + $0x398] sm:$0xff]
        %v4457 = vld [vmem:[#allocation2 + $0x3a0] sm:$0xff]
        %v4458 = vld [vmem:[#allocation2 + $0x3a8] sm:$0xff]
        %v4459 = vld [vmem:[#allocation2 + $0x3b0] sm:$0xff]
        %v4460 = vld [vmem:[#allocation2 + $0x3b8] sm:$0xff]
        %v4461 = vld [vmem:[#allocation2 + $0x3c0] sm:$0xff]
        %v4462 = vld [vmem:[#allocation2 + $0x3c8] sm:$0xff]
        %v4463 = vld [vmem:[#allocation2 + $0x3d0] sm:$0xff]
        %v4464 = vld [vmem:[#allocation2 + $0x3d8] sm:$0xff]
        %v4465 = vld [vmem:[#allocation2 + $0x3e0] sm:$0xff]
        %v4466 = vld [vmem:[#allocation2 + $0x3e8] sm:$0xff]
        %v4467 = vld [vmem:[#allocation2 + $0x3f0] sm:$0xff]
        %v4468 = vld [vmem:[#allocation2 + $0x3f8] sm:$0xff]
        %v4469 = vld [vmem:[#allocation2 + $0x400] sm:$0xff]
        %v4470 = vld [vmem:[#allocation2 + $0x408] sm:$0xff]
        %v4471 = vld [vmem:[#allocation2 + $0x410] sm:$0xff]
        %v4472 = vld [vmem:[#allocation2 + $0x418] sm:$0xff]
        %v4473 = vld [vmem:[#allocation2 + $0x420] sm:$0xff]
        %v4474 = vld [vmem:[#allocation2 + $0x428] sm:$0xff]
        %v4475 = vld [vmem:[#allocation2 + $0x430] sm:$0xff]
        %v4476 = vld [vmem:[#allocation2 + $0x438] sm:$0xff]
        %s4477 = scalar_lea.vmem %s1, 576
        %v4478 = vld [vmem:[%s4477] sm:$0xff]
        %v4479 = vld [vmem:[%s4477 + $0x8] sm:$0xff]
        %v4480 = vld [vmem:[%s4477 + $0x10] sm:$0xff]
        %v4481 = vld [vmem:[%s4477 + $0x18] sm:$0xff]
        %v4482 = vld [vmem:[%s4477 + $0x20] sm:$0xff]
        %v4483 = vld [vmem:[%s4477 + $0x28] sm:$0xff]
        %v4484 = vld [vmem:[%s4477 + $0x30] sm:$0xff]
        %v4485 = vld [vmem:[%s4477 + $0x38] sm:$0xff]
        %v4486 = vld [vmem:[%s4477 + $0x40] sm:$0xff]
        %v4487 = vld [vmem:[%s4477 + $0x48] sm:$0xff]
        %v4488 = vld [vmem:[%s4477 + $0x50] sm:$0xff]
        %v4489 = vld [vmem:[%s4477 + $0x58] sm:$0xff]
        %v4490 = vld [vmem:[%s4477 + $0x60] sm:$0xff]
        %v4491 = vld [vmem:[%s4477 + $0x68] sm:$0xff]
        %v4492 = vld [vmem:[%s4477 + $0x70] sm:$0xff]
        %v4493 = vld [vmem:[%s4477 + $0x78] sm:$0xff]
        %v4494 = vld [vmem:[%s4477 + $0x80] sm:$0xff]
        %v4495 = vld [vmem:[%s4477 + $0x88] sm:$0xff]
        %v4496 = vld [vmem:[%s4477 + $0x90] sm:$0xff]
        %v4497 = vld [vmem:[%s4477 + $0x98] sm:$0xff]
        %v4498 = vld [vmem:[%s4477 + $0xa0] sm:$0xff]
        %v4499 = vld [vmem:[%s4477 + $0xa8] sm:$0xff]
        %v4500 = vld [vmem:[%s4477 + $0xb0] sm:$0xff]
        %v4501 = vld [vmem:[%s4477 + $0xb8] sm:$0xff]
        %v4502 = vld [vmem:[%s257] sm:$0xff]
        %v4503 = vld [vmem:[%s257 + $0x8] sm:$0xff]
        %v4504 = vld [vmem:[%s257 + $0x10] sm:$0xff]
        %v4505 = vld [vmem:[%s257 + $0x18] sm:$0xff]
        %v4506 = vld [vmem:[%s257 + $0x20] sm:$0xff]
        %v4507 = vld [vmem:[%s257 + $0x28] sm:$0xff]
        %v4508 = vld [vmem:[%s257 + $0x30] sm:$0xff]
        %v4509 = vld [vmem:[%s257 + $0x38] sm:$0xff]
        %v4510 = vld [vmem:[%s257 + $0x40] sm:$0xff]
        %v4511 = vld [vmem:[%s257 + $0x48] sm:$0xff]
        %v4512 = vld [vmem:[%s257 + $0x50] sm:$0xff]
        %v4513 = vld [vmem:[%s257 + $0x58] sm:$0xff]
        %v4514 = vld [vmem:[%s257 + $0x60] sm:$0xff]
        %v4515 = vld [vmem:[%s257 + $0x68] sm:$0xff]
        %v4516 = vld [vmem:[%s257 + $0x70] sm:$0xff]
        %v4517 = vld [vmem:[%s257 + $0x78] sm:$0xff]
        %v4518 = vld [vmem:[%s257 + $0x80] sm:$0xff]
        %v4519 = vld [vmem:[%s257 + $0x88] sm:$0xff]
        %v4520 = vld [vmem:[%s257 + $0x90] sm:$0xff]
        %v4521 = vld [vmem:[%s257 + $0x98] sm:$0xff]
        %v4522 = vld [vmem:[%s257 + $0xa0] sm:$0xff]
        %v4523 = vld [vmem:[%s257 + $0xa8] sm:$0xff]
        %v4524 = vld [vmem:[%s257 + $0xb0] sm:$0xff]
        %v4525 = vld [vmem:[%s257 + $0xb8] sm:$0xff]
        %v4526 = vld [vmem:[%s257 + $0xc0] sm:$0xff]
        %v4527 = vld [vmem:[%s257 + $0xc8] sm:$0xff]
        %v4528 = vld [vmem:[%s257 + $0xd0] sm:$0xff]
        %v4529 = vld [vmem:[%s257 + $0xd8] sm:$0xff]
        %v4530 = vld [vmem:[%s257 + $0xe0] sm:$0xff]
        %v4531 = vld [vmem:[%s257 + $0xe8] sm:$0xff]
        %v4532 = vld [vmem:[%s257 + $0xf0] sm:$0xff]
        %v4533 = vld [vmem:[%s257 + $0xf8] sm:$0xff]
        %v4534 = vld [vmem:[%s257 + $0x100] sm:$0xff]
        %v4535 = vld [vmem:[%s257 + $0x108] sm:$0xff]
        %v4536 = vld [vmem:[%s257 + $0x110] sm:$0xff]
        %v4537 = vld [vmem:[%s257 + $0x118] sm:$0xff]
        %v4538 = vld [vmem:[%s257 + $0x120] sm:$0xff]
        %v4539 = vld [vmem:[%s257 + $0x128] sm:$0xff]
        %v4540 = vld [vmem:[%s257 + $0x130] sm:$0xff]
        %v4541 = vld [vmem:[%s257 + $0x138] sm:$0xff]
        %v4542 = vld [vmem:[%s257 + $0x140] sm:$0xff]
        %v4543 = vld [vmem:[%s257 + $0x148] sm:$0xff]
        %v4544 = vld [vmem:[%s257 + $0x150] sm:$0xff]
        %v4545 = vld [vmem:[%s257 + $0x158] sm:$0xff]
        %v4546 = vld [vmem:[%s257 + $0x160] sm:$0xff]
        %v4547 = vld [vmem:[%s257 + $0x168] sm:$0xff]
        %v4548 = vld [vmem:[%s257 + $0x170] sm:$0xff]
        %v4549 = vld [vmem:[%s257 + $0x178] sm:$0xff]
        %v4550 = vld [vmem:[%s257 + $0x180] sm:$0xff]
        %v4551 = vld [vmem:[%s257 + $0x188] sm:$0xff]
        %v4552 = vld [vmem:[%s257 + $0x190] sm:$0xff]
        %v4553 = vld [vmem:[%s257 + $0x198] sm:$0xff]
        %v4554 = vld [vmem:[%s257 + $0x1a0] sm:$0xff]
        %v4555 = vld [vmem:[%s257 + $0x1a8] sm:$0xff]
        %v4556 = vld [vmem:[%s257 + $0x1b0] sm:$0xff]
        %v4557 = vld [vmem:[%s257 + $0x1b8] sm:$0xff]
        %v4558 = vld [vmem:[%s257 + $0x1c0] sm:$0xff]
        %v4559 = vld [vmem:[%s257 + $0x1c8] sm:$0xff]
        %v4560 = vld [vmem:[%s257 + $0x1d0] sm:$0xff]
        %v4561 = vld [vmem:[%s257 + $0x1d8] sm:$0xff]
        %v4562 = vld [vmem:[%s257 + $0x1e0] sm:$0xff]
        %v4563 = vld [vmem:[%s257 + $0x1e8] sm:$0xff]
        %v4564 = vld [vmem:[%s257 + $0x1f0] sm:$0xff]
        %v4565 = vld [vmem:[%s257 + $0x1f8] sm:$0xff]
        %v4566 = vld [vmem:[%s257 + $0x240] sm:$0xff]
        %v4567 = vld [vmem:[%s257 + $0x248] sm:$0xff]
        %v4568 = vld [vmem:[%s257 + $0x250] sm:$0xff]
        %v4569 = vld [vmem:[%s257 + $0x258] sm:$0xff]
        %v4570 = vld [vmem:[%s257 + $0x260] sm:$0xff]
        %v4571 = vld [vmem:[%s257 + $0x268] sm:$0xff]
        %v4572 = vld [vmem:[%s257 + $0x270] sm:$0xff]
        %v4573 = vld [vmem:[%s257 + $0x278] sm:$0xff]
        %v4574 = vld [vmem:[%s257 + $0x280] sm:$0xff]
        %v4575 = vld [vmem:[%s257 + $0x288] sm:$0xff]
        %v4576 = vld [vmem:[%s257 + $0x290] sm:$0xff]
        %v4577 = vld [vmem:[%s257 + $0x298] sm:$0xff]
        %v4578 = vld [vmem:[%s257 + $0x2a0] sm:$0xff]
        %v4579 = vld [vmem:[%s257 + $0x2a8] sm:$0xff]
        %v4580 = vld [vmem:[%s257 + $0x2b0] sm:$0xff]
        %v4581 = vld [vmem:[%s257 + $0x2b8] sm:$0xff]
        %v4582 = vld [vmem:[%s257 + $0x2c0] sm:$0xff]
        %v4583 = vld [vmem:[%s257 + $0x2c8] sm:$0xff]
        %v4584 = vld [vmem:[%s257 + $0x2d0] sm:$0xff]
        %v4585 = vld [vmem:[%s257 + $0x2d8] sm:$0xff]
        %v4586 = vld [vmem:[%s257 + $0x2e0] sm:$0xff]
        %v4587 = vld [vmem:[%s257 + $0x2e8] sm:$0xff]
        %v4588 = vld [vmem:[%s257 + $0x2f0] sm:$0xff]
        %v4589 = vld [vmem:[%s257 + $0x2f8] sm:$0xff]
        %v4590 = vld [vmem:[%s257 + $0x300] sm:$0xff]
        %v4591 = vld [vmem:[%s257 + $0x308] sm:$0xff]
        %v4592 = vld [vmem:[%s257 + $0x310] sm:$0xff]
        %v4593 = vld [vmem:[%s257 + $0x318] sm:$0xff]
        %v4594 = vld [vmem:[%s257 + $0x320] sm:$0xff]
        %v4595 = vld [vmem:[%s257 + $0x328] sm:$0xff]
        %v4596 = vld [vmem:[%s257 + $0x330] sm:$0xff]
        %v4597 = vld [vmem:[%s257 + $0x338] sm:$0xff]
        %v4598 = vld [vmem:[%s257 + $0x340] sm:$0xff]
        %v4599 = vld [vmem:[%s257 + $0x348] sm:$0xff]
        %v4600 = vld [vmem:[%s257 + $0x350] sm:$0xff]
        %v4601 = vld [vmem:[%s257 + $0x358] sm:$0xff]
        %v4602 = vld [vmem:[%s257 + $0x360] sm:$0xff]
        %v4603 = vld [vmem:[%s257 + $0x368] sm:$0xff]
        %v4604 = vld [vmem:[%s257 + $0x370] sm:$0xff]
        %v4605 = vld [vmem:[%s257 + $0x378] sm:$0xff]
        %v4606 = vld [vmem:[%s257 + $0x380] sm:$0xff]
        %v4607 = vld [vmem:[%s257 + $0x388] sm:$0xff]
        %v4608 = vld [vmem:[%s257 + $0x390] sm:$0xff]
        %v4609 = vld [vmem:[%s257 + $0x398] sm:$0xff]
        %v4610 = vld [vmem:[%s257 + $0x3a0] sm:$0xff]
        %v4611 = vld [vmem:[%s257 + $0x3a8] sm:$0xff]
        %v4612 = vld [vmem:[%s257 + $0x3b0] sm:$0xff]
        %v4613 = vld [vmem:[%s257 + $0x3b8] sm:$0xff]
        %v4614 = vld [vmem:[%s257 + $0x3c0] sm:$0xff]
        %v4615 = vld [vmem:[%s257 + $0x3c8] sm:$0xff]
        %v4616 = vld [vmem:[%s257 + $0x3d0] sm:$0xff]
        %v4617 = vld [vmem:[%s257 + $0x3d8] sm:$0xff]
        %v4618 = vld [vmem:[%s257 + $0x3e0] sm:$0xff]
        %v4619 = vld [vmem:[%s257 + $0x3e8] sm:$0xff]
        %v4620 = vld [vmem:[%s257 + $0x3f0] sm:$0xff]
        %v4621 = vld [vmem:[%s257 + $0x3f8] sm:$0xff]
        %v4622 = vld [vmem:[%s257 + $0x400] sm:$0xff]
        %v4623 = vld [vmem:[%s257 + $0x408] sm:$0xff]
        %v4624 = vld [vmem:[%s257 + $0x410] sm:$0xff]
        %v4625 = vld [vmem:[%s257 + $0x418] sm:$0xff]
        %v4626 = vld [vmem:[%s257 + $0x420] sm:$0xff]
        %v4627 = vld [vmem:[%s257 + $0x428] sm:$0xff]
        %v4628 = vld [vmem:[%s257 + $0x430] sm:$0xff]
        %v4629 = vld [vmem:[%s257 + $0x438] sm:$0xff]
        %s4630 = scalar_lea.vmem %s1, 768
        %v4631 = vld [vmem:[%s4630] sm:$0xff]
        %v4632 = vld [vmem:[%s4630 + $0x8] sm:$0xff]
        %v4633 = vld [vmem:[%s4630 + $0x10] sm:$0xff]
        %v4634 = vld [vmem:[%s4630 + $0x18] sm:$0xff]
        %v4635 = vld [vmem:[%s4630 + $0x20] sm:$0xff]
        %v4636 = vld [vmem:[%s4630 + $0x28] sm:$0xff]
        %v4637 = vld [vmem:[%s4630 + $0x30] sm:$0xff]
        %v4638 = vld [vmem:[%s4630 + $0x38] sm:$0xff]
        %v4639 = vld [vmem:[%s4630 + $0x40] sm:$0xff]
        %v4640 = vld [vmem:[%s4630 + $0x48] sm:$0xff]
        %v4641 = vld [vmem:[%s4630 + $0x50] sm:$0xff]
        %v4642 = vld [vmem:[%s4630 + $0x58] sm:$0xff]
        %v4643 = vld [vmem:[%s4630 + $0x60] sm:$0xff]
        %v4644 = vld [vmem:[%s4630 + $0x68] sm:$0xff]
        %v4645 = vld [vmem:[%s4630 + $0x70] sm:$0xff]
        %v4646 = vld [vmem:[%s4630 + $0x78] sm:$0xff]
        %v4647 = vld [vmem:[%s4630 + $0x80] sm:$0xff]
        %v4648 = vld [vmem:[%s4630 + $0x88] sm:$0xff]
        %v4649 = vld [vmem:[%s4630 + $0x90] sm:$0xff]
        %v4650 = vld [vmem:[%s4630 + $0x98] sm:$0xff]
        %v4651 = vld [vmem:[%s4630 + $0xa0] sm:$0xff]
        %v4652 = vld [vmem:[%s4630 + $0xa8] sm:$0xff]
        %v4653 = vld [vmem:[%s4630 + $0xb0] sm:$0xff]
        %v4654 = vld [vmem:[%s4630 + $0xb8] sm:$0xff]
        %v4656 = vsel %vm240, %v4503, 0
        %v4659 = vsel %vm240, %v4505, 0
        %v4662 = vsel %vm240, %v4507, 0
        %v4665 = vsel %vm240, %v4509, 0
        %v4668 = vsel %vm240, %v4511, 0
        %v4671 = vsel %vm240, %v4513, 0
        %v4674 = vsel %vm240, %v4515, 0
        %v4677 = vsel %vm240, %v4517, 0
        %v4680 = vsel %vm240, %v4519, 0
        %v4683 = vsel %vm240, %v4521, 0
        %v4686 = vsel %vm240, %v4523, 0
        %v4689 = vsel %vm240, %v4525, 0
        %v4692 = vsel %vm240, %v4527, 0
        %v4695 = vsel %vm240, %v4529, 0
        %v4698 = vsel %vm240, %v4531, 0
        %v4701 = vsel %vm240, %v4533, 0
        %v4704 = vsel %vm240, %v4535, 0
        %v4707 = vsel %vm240, %v4537, 0
        %v4710 = vsel %vm240, %v4539, 0
        %v4713 = vsel %vm240, %v4541, 0
        %v4716 = vsel %vm240, %v4543, 0
        %v4719 = vsel %vm240, %v4545, 0
        %v4722 = vsel %vm240, %v4547, 0
        %v4725 = vsel %vm240, %v4549, 0
        %v4728 = vsel %vm240, %v4551, 0
        %v4731 = vsel %vm240, %v4553, 0
        %v4734 = vsel %vm240, %v4555, 0
        %v4737 = vsel %vm240, %v4557, 0
        %v4740 = vsel %vm240, %v4559, 0
        %v4743 = vsel %vm240, %v4561, 0
        %v4746 = vsel %vm240, %v4563, 0
        %v4749 = vsel %vm240, %v4565, 0
        %v4752 = vsel %vm240, %v4567, 0
        %v4755 = vsel %vm240, %v4569, 0
        %v4758 = vsel %vm240, %v4571, 0
        %v4761 = vsel %vm240, %v4573, 0
        %v4764 = vsel %vm240, %v4575, 0
        %v4767 = vsel %vm240, %v4577, 0
        %v4770 = vsel %vm240, %v4579, 0
        %v4773 = vsel %vm240, %v4581, 0
        %v4776 = vsel %vm240, %v4583, 0
        %v4779 = vsel %vm240, %v4585, 0
        %v4782 = vsel %vm240, %v4587, 0
        %v4785 = vsel %vm240, %v4589, 0
        %v4788 = vsel %vm240, %v4591, 0
        %v4791 = vsel %vm240, %v4593, 0
        %v4794 = vsel %vm240, %v4595, 0
        %v4797 = vsel %vm240, %v4597, 0
        %v4800 = vsel %vm240, %v4599, 0
        %v4803 = vsel %vm240, %v4601, 0
        %v4806 = vsel %vm240, %v4603, 0
        %v4809 = vsel %vm240, %v4605, 0
        %v4812 = vsel %vm240, %v4607, 0
        %v4815 = vsel %vm240, %v4609, 0
        %v4818 = vsel %vm240, %v4611, 0
        %v4821 = vsel %vm240, %v4613, 0
        %v4824 = vsel %vm240, %v4615, 0
        %v4827 = vsel %vm240, %v4617, 0
        %v4830 = vsel %vm240, %v4619, 0
        %v4833 = vsel %vm240, %v4621, 0
        %v4836 = vsel %vm240, %v4623, 0
        %v4839 = vsel %vm240, %v4625, 0
        %v4842 = vsel %vm240, %v4627, 0
        %v4845 = vsel %vm240, %v4629, 0
        %4847 = vmatpush.msra.mxu0 %v4646
        %4848 = vmatpush.msra.mxu0 %v4645
        %4849 = vmatpush.msra.mxu0 %v4644
        %4850 = vmatpush.msra.mxu0 %v4643
        %4851 = vmatpush.msra.mxu0 %v4642
        %4852 = vmatpush.msra.mxu0 %v4641
        %4853 = vmatpush.msra.mxu0 %v4640
        %4854 = vmatpush.msra.mxu0 %v4639
        %4855 = vmatpush.msra.mxu0 %v4638
        %4856 = vmatpush.msra.mxu0 %v4637
        %4857 = vmatpush.msra.mxu0 %v4636
        %4858 = vmatpush.msra.mxu0 %v4635
        %4859 = vmatpush.msra.mxu0 %v4634
        %4860 = vmatpush.msra.mxu0 %v4633
        %4861 = vmatpush.msra.mxu0 %v4632
        %4862 = vmatpush.msra.mxu0 %v4631
        %4863 = vmatmul.f32.gmra.mxu0 %v4502
        %v4864 = vpop.f32.mrf.mxu0
        %v4865 = vadd.f32 0.0, %v4864
        %4866 = vmatmul.f32.gmra.mxu0 %v4504
        %v4867 = vpop.f32.mrf.mxu0
        %v4868 = vadd.f32 0.0, %v4867
        %4869 = vmatmul.f32.gmra.mxu0 %v4506
        %v4870 = vpop.f32.mrf.mxu0
        %v4871 = vadd.f32 0.0, %v4870
        %4872 = vmatmul.f32.gmra.mxu0 %v4508
        %v4873 = vpop.f32.mrf.mxu0
        %v4874 = vadd.f32 0.0, %v4873
        %4875 = vmatmul.f32.gmra.mxu0 %v4510
        %v4876 = vpop.f32.mrf.mxu0
        %v4877 = vadd.f32 0.0, %v4876
        %4878 = vmatmul.f32.gmra.mxu0 %v4512
        %v4879 = vpop.f32.mrf.mxu0
        %v4880 = vadd.f32 0.0, %v4879
        %4881 = vmatmul.f32.gmra.mxu0 %v4514
        %v4882 = vpop.f32.mrf.mxu0
        %v4883 = vadd.f32 0.0, %v4882
        %4884 = vmatmul.f32.gmra.mxu0 %v4516
        %v4885 = vpop.f32.mrf.mxu0
        %v4886 = vadd.f32 0.0, %v4885
        %4887 = vmatmul.f32.gmra.mxu0 %v4518
        %v4888 = vpop.f32.mrf.mxu0
        %v4889 = vadd.f32 0.0, %v4888
        %4890 = vmatmul.f32.gmra.mxu0 %v4520
        %v4891 = vpop.f32.mrf.mxu0
        %v4892 = vadd.f32 0.0, %v4891
        %4893 = vmatmul.f32.gmra.mxu0 %v4522
        %v4894 = vpop.f32.mrf.mxu0
        %v4895 = vadd.f32 0.0, %v4894
        %4896 = vmatmul.f32.gmra.mxu0 %v4524
        %v4897 = vpop.f32.mrf.mxu0
        %v4898 = vadd.f32 0.0, %v4897
        %4899 = vmatmul.f32.gmra.mxu0 %v4526
        %v4900 = vpop.f32.mrf.mxu0
        %v4901 = vadd.f32 0.0, %v4900
        %4902 = vmatmul.f32.gmra.mxu0 %v4528
        %v4903 = vpop.f32.mrf.mxu0
        %v4904 = vadd.f32 0.0, %v4903
        %4905 = vmatmul.f32.gmra.mxu0 %v4530
        %v4906 = vpop.f32.mrf.mxu0
        %v4907 = vadd.f32 0.0, %v4906
        %4908 = vmatmul.f32.gmra.mxu0 %v4532
        %v4909 = vpop.f32.mrf.mxu0
        %v4910 = vadd.f32 0.0, %v4909
        %4911 = vmatmul.f32.gmra.mxu0 %v4534
        %v4912 = vpop.f32.mrf.mxu0
        %v4913 = vadd.f32 0.0, %v4912
        %4914 = vmatmul.f32.gmra.mxu0 %v4536
        %v4915 = vpop.f32.mrf.mxu0
        %v4916 = vadd.f32 0.0, %v4915
        %4917 = vmatmul.f32.gmra.mxu0 %v4538
        %v4918 = vpop.f32.mrf.mxu0
        %v4919 = vadd.f32 0.0, %v4918
        %4920 = vmatmul.f32.gmra.mxu0 %v4540
        %v4921 = vpop.f32.mrf.mxu0
        %v4922 = vadd.f32 0.0, %v4921
        %4923 = vmatmul.f32.gmra.mxu0 %v4542
        %v4924 = vpop.f32.mrf.mxu0
        %v4925 = vadd.f32 0.0, %v4924
        %4926 = vmatmul.f32.gmra.mxu0 %v4544
        %v4927 = vpop.f32.mrf.mxu0
        %v4928 = vadd.f32 0.0, %v4927
        %4929 = vmatmul.f32.gmra.mxu0 %v4546
        %v4930 = vpop.f32.mrf.mxu0
        %v4931 = vadd.f32 0.0, %v4930
        %4932 = vmatmul.f32.gmra.mxu0 %v4548
        %v4933 = vpop.f32.mrf.mxu0
        %v4934 = vadd.f32 0.0, %v4933
        %4935 = vmatmul.f32.gmra.mxu0 %v4550
        %v4936 = vpop.f32.mrf.mxu0
        %v4937 = vadd.f32 0.0, %v4936
        %4938 = vmatmul.f32.gmra.mxu0 %v4552
        %v4939 = vpop.f32.mrf.mxu0
        %v4940 = vadd.f32 0.0, %v4939
        %4941 = vmatmul.f32.gmra.mxu0 %v4554
        %v4942 = vpop.f32.mrf.mxu0
        %v4943 = vadd.f32 0.0, %v4942
        %4944 = vmatmul.f32.gmra.mxu0 %v4556
        %v4945 = vpop.f32.mrf.mxu0
        %v4946 = vadd.f32 0.0, %v4945
        %4947 = vmatmul.f32.gmra.mxu0 %v4558
        %v4948 = vpop.f32.mrf.mxu0
        %v4949 = vadd.f32 0.0, %v4948
        %4950 = vmatmul.f32.gmra.mxu0 %v4560
        %v4951 = vpop.f32.mrf.mxu0
        %v4952 = vadd.f32 0.0, %v4951
        %4953 = vmatmul.f32.gmra.mxu0 %v4562
        %v4954 = vpop.f32.mrf.mxu0
        %v4955 = vadd.f32 0.0, %v4954
        %4956 = vmatmul.f32.gmra.mxu0 %v4564
        %v4957 = vpop.f32.mrf.mxu0
        %v4958 = vadd.f32 0.0, %v4957
        %4959 = vmatmul.f32.gmra.mxu0 %v4566
        %v4960 = vpop.f32.mrf.mxu0
        %v4961 = vadd.f32 0.0, %v4960
        %4962 = vmatmul.f32.gmra.mxu0 %v4568
        %v4963 = vpop.f32.mrf.mxu0
        %v4964 = vadd.f32 0.0, %v4963
        %4965 = vmatmul.f32.gmra.mxu0 %v4570
        %v4966 = vpop.f32.mrf.mxu0
        %v4967 = vadd.f32 0.0, %v4966
        %4968 = vmatmul.f32.gmra.mxu0 %v4572
        %v4969 = vpop.f32.mrf.mxu0
        %v4970 = vadd.f32 0.0, %v4969
        %4971 = vmatmul.f32.gmra.mxu0 %v4574
        %v4972 = vpop.f32.mrf.mxu0
        %v4973 = vadd.f32 0.0, %v4972
        %4974 = vmatmul.f32.gmra.mxu0 %v4576
        %v4975 = vpop.f32.mrf.mxu0
        %v4976 = vadd.f32 0.0, %v4975
        %4977 = vmatmul.f32.gmra.mxu0 %v4578
        %v4978 = vpop.f32.mrf.mxu0
        %v4979 = vadd.f32 0.0, %v4978
        %4980 = vmatmul.f32.gmra.mxu0 %v4580
        %v4981 = vpop.f32.mrf.mxu0
        %v4982 = vadd.f32 0.0, %v4981
        %4983 = vmatmul.f32.gmra.mxu0 %v4582
        %v4984 = vpop.f32.mrf.mxu0
        %v4985 = vadd.f32 0.0, %v4984
        %4986 = vmatmul.f32.gmra.mxu0 %v4584
        %v4987 = vpop.f32.mrf.mxu0
        %v4988 = vadd.f32 0.0, %v4987
        %4989 = vmatmul.f32.gmra.mxu0 %v4586
        %v4990 = vpop.f32.mrf.mxu0
        %v4991 = vadd.f32 0.0, %v4990
        %4992 = vmatmul.f32.gmra.mxu0 %v4588
        %v4993 = vpop.f32.mrf.mxu0
        %v4994 = vadd.f32 0.0, %v4993
        %4995 = vmatmul.f32.gmra.mxu0 %v4590
        %v4996 = vpop.f32.mrf.mxu0
        %v4997 = vadd.f32 0.0, %v4996
        %4998 = vmatmul.f32.gmra.mxu0 %v4592
        %v4999 = vpop.f32.mrf.mxu0
        %v5000 = vadd.f32 0.0, %v4999
        %5001 = vmatmul.f32.gmra.mxu0 %v4594
        %v5002 = vpop.f32.mrf.mxu0
        %v5003 = vadd.f32 0.0, %v5002
        %5004 = vmatmul.f32.gmra.mxu0 %v4596
        %v5005 = vpop.f32.mrf.mxu0
        %v5006 = vadd.f32 0.0, %v5005
        %5007 = vmatmul.f32.gmra.mxu0 %v4598
        %v5008 = vpop.f32.mrf.mxu0
        %v5009 = vadd.f32 0.0, %v5008
        %5010 = vmatmul.f32.gmra.mxu0 %v4600
        %v5011 = vpop.f32.mrf.mxu0
        %v5012 = vadd.f32 0.0, %v5011
        %5013 = vmatmul.f32.gmra.mxu0 %v4602
        %v5014 = vpop.f32.mrf.mxu0
        %v5015 = vadd.f32 0.0, %v5014
        %5016 = vmatmul.f32.gmra.mxu0 %v4604
        %v5017 = vpop.f32.mrf.mxu0
        %v5018 = vadd.f32 0.0, %v5017
        %5019 = vmatmul.f32.gmra.mxu0 %v4606
        %v5020 = vpop.f32.mrf.mxu0
        %v5021 = vadd.f32 0.0, %v5020
        %5022 = vmatmul.f32.gmra.mxu0 %v4608
        %v5023 = vpop.f32.mrf.mxu0
        %v5024 = vadd.f32 0.0, %v5023
        %5025 = vmatmul.f32.gmra.mxu0 %v4610
        %v5026 = vpop.f32.mrf.mxu0
        %v5027 = vadd.f32 0.0, %v5026
        %5028 = vmatmul.f32.gmra.mxu0 %v4612
        %v5029 = vpop.f32.mrf.mxu0
        %v5030 = vadd.f32 0.0, %v5029
        %5031 = vmatmul.f32.gmra.mxu0 %v4614
        %v5032 = vpop.f32.mrf.mxu0
        %v5033 = vadd.f32 0.0, %v5032
        %5034 = vmatmul.f32.gmra.mxu0 %v4616
        %v5035 = vpop.f32.mrf.mxu0
        %v5036 = vadd.f32 0.0, %v5035
        %5037 = vmatmul.f32.gmra.mxu0 %v4618
        %v5038 = vpop.f32.mrf.mxu0
        %v5039 = vadd.f32 0.0, %v5038
        %5040 = vmatmul.f32.gmra.mxu0 %v4620
        %v5041 = vpop.f32.mrf.mxu0
        %v5042 = vadd.f32 0.0, %v5041
        %5043 = vmatmul.f32.gmra.mxu0 %v4622
        %v5044 = vpop.f32.mrf.mxu0
        %v5045 = vadd.f32 0.0, %v5044
        %5046 = vmatmul.f32.gmra.mxu0 %v4624
        %v5047 = vpop.f32.mrf.mxu0
        %v5048 = vadd.f32 0.0, %v5047
        %5049 = vmatmul.f32.gmra.mxu0 %v4626
        %v5050 = vpop.f32.mrf.mxu0
        %v5051 = vadd.f32 0.0, %v5050
        %5052 = vmatmul.f32.gmra.mxu0 %v4628
        %v5053 = vpop.f32.mrf.mxu0
        %v5054 = vadd.f32 0.0, %v5053
        %5055 = vdwg.mxu0
        %5056 = vmatpush.msra.mxu0 0.0
        %5057 = vmatpush.msra.mxu0 0.0
        %5058 = vmatpush.msra.mxu0 0.0
        %5059 = vmatpush.msra.mxu0 0.0
        %5060 = vmatpush.msra.mxu0 0.0
        %5061 = vmatpush.msra.mxu0 0.0
        %5062 = vmatpush.msra.mxu0 0.0
        %5063 = vmatpush.msra.mxu0 0.0
        %5064 = vmatpush.msra.mxu0 %v4654
        %5065 = vmatpush.msra.mxu0 %v4653
        %5066 = vmatpush.msra.mxu0 %v4652
        %5067 = vmatpush.msra.mxu0 %v4651
        %5068 = vmatpush.msra.mxu0 %v4650
        %5069 = vmatpush.msra.mxu0 %v4649
        %5070 = vmatpush.msra.mxu0 %v4648
        %5071 = vmatpush.msra.mxu0 %v4647
        %5072 = vmatmul.f32.gmra.mxu0 %v4656
        %v5073 = vpop.f32.mrf.mxu0
        %v5074 = vadd.f32 %v4865, %v5073
        %5075 = vmatmul.f32.gmra.mxu0 %v4659
        %v5076 = vpop.f32.mrf.mxu0
        %v5077 = vadd.f32 %v4868, %v5076
        %5078 = vmatmul.f32.gmra.mxu0 %v4662
        %v5079 = vpop.f32.mrf.mxu0
        %v5080 = vadd.f32 %v4871, %v5079
        %5081 = vmatmul.f32.gmra.mxu0 %v4665
        %v5082 = vpop.f32.mrf.mxu0
        %v5083 = vadd.f32 %v4874, %v5082
        %5084 = vmatmul.f32.gmra.mxu0 %v4668
        %v5085 = vpop.f32.mrf.mxu0
        %v5086 = vadd.f32 %v4877, %v5085
        %5087 = vmatmul.f32.gmra.mxu0 %v4671
        %v5088 = vpop.f32.mrf.mxu0
        %v5089 = vadd.f32 %v4880, %v5088
        %5090 = vmatmul.f32.gmra.mxu0 %v4674
        %v5091 = vpop.f32.mrf.mxu0
        %v5092 = vadd.f32 %v4883, %v5091
        %5093 = vmatmul.f32.gmra.mxu0 %v4677
        %v5094 = vpop.f32.mrf.mxu0
        %v5095 = vadd.f32 %v4886, %v5094
        %5096 = vmatmul.f32.gmra.mxu0 %v4680
        %v5097 = vpop.f32.mrf.mxu0
        %v5098 = vadd.f32 %v4889, %v5097
        %5099 = vmatmul.f32.gmra.mxu0 %v4683
        %v5100 = vpop.f32.mrf.mxu0
        %v5101 = vadd.f32 %v4892, %v5100
        %5102 = vmatmul.f32.gmra.mxu0 %v4686
        %v5103 = vpop.f32.mrf.mxu0
        %v5104 = vadd.f32 %v4895, %v5103
        %5105 = vmatmul.f32.gmra.mxu0 %v4689
        %v5106 = vpop.f32.mrf.mxu0
        %v5107 = vadd.f32 %v4898, %v5106
        %5108 = vmatmul.f32.gmra.mxu0 %v4692
        %v5109 = vpop.f32.mrf.mxu0
        %v5110 = vadd.f32 %v4901, %v5109
        %5111 = vmatmul.f32.gmra.mxu0 %v4695
        %v5112 = vpop.f32.mrf.mxu0
        %v5113 = vadd.f32 %v4904, %v5112
        %5114 = vmatmul.f32.gmra.mxu0 %v4698
        %v5115 = vpop.f32.mrf.mxu0
        %v5116 = vadd.f32 %v4907, %v5115
        %5117 = vmatmul.f32.gmra.mxu0 %v4701
        %v5118 = vpop.f32.mrf.mxu0
        %v5119 = vadd.f32 %v4910, %v5118
        %5120 = vmatmul.f32.gmra.mxu0 %v4704
        %v5121 = vpop.f32.mrf.mxu0
        %v5122 = vadd.f32 %v4913, %v5121
        %5123 = vmatmul.f32.gmra.mxu0 %v4707
        %v5124 = vpop.f32.mrf.mxu0
        %v5125 = vadd.f32 %v4916, %v5124
        %5126 = vmatmul.f32.gmra.mxu0 %v4710
        %v5127 = vpop.f32.mrf.mxu0
        %v5128 = vadd.f32 %v4919, %v5127
        %5129 = vmatmul.f32.gmra.mxu0 %v4713
        %v5130 = vpop.f32.mrf.mxu0
        %v5131 = vadd.f32 %v4922, %v5130
        %5132 = vmatmul.f32.gmra.mxu0 %v4716
        %v5133 = vpop.f32.mrf.mxu0
        %v5134 = vadd.f32 %v4925, %v5133
        %5135 = vmatmul.f32.gmra.mxu0 %v4719
        %v5136 = vpop.f32.mrf.mxu0
        %v5137 = vadd.f32 %v4928, %v5136
        %5138 = vmatmul.f32.gmra.mxu0 %v4722
        %v5139 = vpop.f32.mrf.mxu0
        %v5140 = vadd.f32 %v4931, %v5139
        %5141 = vmatmul.f32.gmra.mxu0 %v4725
        %v5142 = vpop.f32.mrf.mxu0
        %v5143 = vadd.f32 %v4934, %v5142
        %5144 = vmatmul.f32.gmra.mxu0 %v4728
        %v5145 = vpop.f32.mrf.mxu0
        %v5146 = vadd.f32 %v4937, %v5145
        %5147 = vmatmul.f32.gmra.mxu0 %v4731
        %v5148 = vpop.f32.mrf.mxu0
        %v5149 = vadd.f32 %v4940, %v5148
        %5150 = vmatmul.f32.gmra.mxu0 %v4734
        %v5151 = vpop.f32.mrf.mxu0
        %v5152 = vadd.f32 %v4943, %v5151
        %5153 = vmatmul.f32.gmra.mxu0 %v4737
        %v5154 = vpop.f32.mrf.mxu0
        %v5155 = vadd.f32 %v4946, %v5154
        %5156 = vmatmul.f32.gmra.mxu0 %v4740
        %v5157 = vpop.f32.mrf.mxu0
        %v5158 = vadd.f32 %v4949, %v5157
        %5159 = vmatmul.f32.gmra.mxu0 %v4743
        %v5160 = vpop.f32.mrf.mxu0
        %v5161 = vadd.f32 %v4952, %v5160
        %5162 = vmatmul.f32.gmra.mxu0 %v4746
        %v5163 = vpop.f32.mrf.mxu0
        %v5164 = vadd.f32 %v4955, %v5163
        %5165 = vmatmul.f32.gmra.mxu0 %v4749
        %v5166 = vpop.f32.mrf.mxu0
        %v5167 = vadd.f32 %v4958, %v5166
        %5168 = vmatmul.f32.gmra.mxu0 %v4752
        %v5169 = vpop.f32.mrf.mxu0
        %v5170 = vadd.f32 %v4961, %v5169
        %5171 = vmatmul.f32.gmra.mxu0 %v4755
        %v5172 = vpop.f32.mrf.mxu0
        %v5173 = vadd.f32 %v4964, %v5172
        %5174 = vmatmul.f32.gmra.mxu0 %v4758
        %v5175 = vpop.f32.mrf.mxu0
        %v5176 = vadd.f32 %v4967, %v5175
        %5177 = vmatmul.f32.gmra.mxu0 %v4761
        %v5178 = vpop.f32.mrf.mxu0
        %v5179 = vadd.f32 %v4970, %v5178
        %5180 = vmatmul.f32.gmra.mxu0 %v4764
        %v5181 = vpop.f32.mrf.mxu0
        %v5182 = vadd.f32 %v4973, %v5181
        %5183 = vmatmul.f32.gmra.mxu0 %v4767
        %v5184 = vpop.f32.mrf.mxu0
        %v5185 = vadd.f32 %v4976, %v5184
        %5186 = vmatmul.f32.gmra.mxu0 %v4770
        %v5187 = vpop.f32.mrf.mxu0
        %v5188 = vadd.f32 %v4979, %v5187
        %5189 = vmatmul.f32.gmra.mxu0 %v4773
        %v5190 = vpop.f32.mrf.mxu0
        %v5191 = vadd.f32 %v4982, %v5190
        %5192 = vmatmul.f32.gmra.mxu0 %v4776
        %v5193 = vpop.f32.mrf.mxu0
        %v5194 = vadd.f32 %v4985, %v5193
        %5195 = vmatmul.f32.gmra.mxu0 %v4779
        %v5196 = vpop.f32.mrf.mxu0
        %v5197 = vadd.f32 %v4988, %v5196
        %5198 = vmatmul.f32.gmra.mxu0 %v4782
        %v5199 = vpop.f32.mrf.mxu0
        %v5200 = vadd.f32 %v4991, %v5199
        %5201 = vmatmul.f32.gmra.mxu0 %v4785
        %v5202 = vpop.f32.mrf.mxu0
        %v5203 = vadd.f32 %v4994, %v5202
        %5204 = vmatmul.f32.gmra.mxu0 %v4788
        %v5205 = vpop.f32.mrf.mxu0
        %v5206 = vadd.f32 %v4997, %v5205
        %5207 = vmatmul.f32.gmra.mxu0 %v4791
        %v5208 = vpop.f32.mrf.mxu0
        %v5209 = vadd.f32 %v5000, %v5208
        %5210 = vmatmul.f32.gmra.mxu0 %v4794
        %v5211 = vpop.f32.mrf.mxu0
        %v5212 = vadd.f32 %v5003, %v5211
        %5213 = vmatmul.f32.gmra.mxu0 %v4797
        %v5214 = vpop.f32.mrf.mxu0
        %v5215 = vadd.f32 %v5006, %v5214
        %5216 = vmatmul.f32.gmra.mxu0 %v4800
        %v5217 = vpop.f32.mrf.mxu0
        %v5218 = vadd.f32 %v5009, %v5217
        %5219 = vmatmul.f32.gmra.mxu0 %v4803
        %v5220 = vpop.f32.mrf.mxu0
        %v5221 = vadd.f32 %v5012, %v5220
        %5222 = vmatmul.f32.gmra.mxu0 %v4806
        %v5223 = vpop.f32.mrf.mxu0
        %v5224 = vadd.f32 %v5015, %v5223
        %5225 = vmatmul.f32.gmra.mxu0 %v4809
        %v5226 = vpop.f32.mrf.mxu0
        %v5227 = vadd.f32 %v5018, %v5226
        %5228 = vmatmul.f32.gmra.mxu0 %v4812
        %v5229 = vpop.f32.mrf.mxu0
        %v5230 = vadd.f32 %v5021, %v5229
        %5231 = vmatmul.f32.gmra.mxu0 %v4815
        %v5232 = vpop.f32.mrf.mxu0
        %v5233 = vadd.f32 %v5024, %v5232
        %5234 = vmatmul.f32.gmra.mxu0 %v4818
        %v5235 = vpop.f32.mrf.mxu0
        %v5236 = vadd.f32 %v5027, %v5235
        %5237 = vmatmul.f32.gmra.mxu0 %v4821
        %v5238 = vpop.f32.mrf.mxu0
        %v5239 = vadd.f32 %v5030, %v5238
        %5240 = vmatmul.f32.gmra.mxu0 %v4824
        %v5241 = vpop.f32.mrf.mxu0
        %v5242 = vadd.f32 %v5033, %v5241
        %5243 = vmatmul.f32.gmra.mxu0 %v4827
        %v5244 = vpop.f32.mrf.mxu0
        %v5245 = vadd.f32 %v5036, %v5244
        %5246 = vmatmul.f32.gmra.mxu0 %v4830
        %v5247 = vpop.f32.mrf.mxu0
        %v5248 = vadd.f32 %v5039, %v5247
        %5249 = vmatmul.f32.gmra.mxu0 %v4833
        %v5250 = vpop.f32.mrf.mxu0
        %v5251 = vadd.f32 %v5042, %v5250
        %5252 = vmatmul.f32.gmra.mxu0 %v4836
        %v5253 = vpop.f32.mrf.mxu0
        %v5254 = vadd.f32 %v5045, %v5253
        %5255 = vmatmul.f32.gmra.mxu0 %v4839
        %v5256 = vpop.f32.mrf.mxu0
        %v5257 = vadd.f32 %v5048, %v5256
        %5258 = vmatmul.f32.gmra.mxu0 %v4842
        %v5259 = vpop.f32.mrf.mxu0
        %v5260 = vadd.f32 %v5051, %v5259
        %5261 = vmatmul.f32.gmra.mxu0 %v4845
        %v5262 = vpop.f32.mrf.mxu0
        %v5263 = vadd.f32 %v5054, %v5262
        %5264 = vdwg.mxu0
        %v5266 = vsel %vm240, %v4350, 0
        %v5269 = vsel %vm240, %v4352, 0
        %v5272 = vsel %vm240, %v4354, 0
        %v5275 = vsel %vm240, %v4356, 0
        %v5278 = vsel %vm240, %v4358, 0
        %v5281 = vsel %vm240, %v4360, 0
        %v5284 = vsel %vm240, %v4362, 0
        %v5287 = vsel %vm240, %v4364, 0
        %v5290 = vsel %vm240, %v4366, 0
        %v5293 = vsel %vm240, %v4368, 0
        %v5296 = vsel %vm240, %v4370, 0
        %v5299 = vsel %vm240, %v4372, 0
        %v5302 = vsel %vm240, %v4374, 0
        %v5305 = vsel %vm240, %v4376, 0
        %v5308 = vsel %vm240, %v4378, 0
        %v5311 = vsel %vm240, %v4380, 0
        %v5314 = vsel %vm240, %v4382, 0
        %v5317 = vsel %vm240, %v4384, 0
        %v5320 = vsel %vm240, %v4386, 0
        %v5323 = vsel %vm240, %v4388, 0
        %v5326 = vsel %vm240, %v4390, 0
        %v5329 = vsel %vm240, %v4392, 0
        %v5332 = vsel %vm240, %v4394, 0
        %v5335 = vsel %vm240, %v4396, 0
        %v5338 = vsel %vm240, %v4398, 0
        %v5341 = vsel %vm240, %v4400, 0
        %v5344 = vsel %vm240, %v4402, 0
        %v5347 = vsel %vm240, %v4404, 0
        %v5350 = vsel %vm240, %v4406, 0
        %v5353 = vsel %vm240, %v4408, 0
        %v5356 = vsel %vm240, %v4410, 0
        %v5359 = vsel %vm240, %v4412, 0
        %v5362 = vsel %vm240, %v4414, 0
        %v5365 = vsel %vm240, %v4416, 0
        %v5368 = vsel %vm240, %v4418, 0
        %v5371 = vsel %vm240, %v4420, 0
        %v5374 = vsel %vm240, %v4422, 0
        %v5377 = vsel %vm240, %v4424, 0
        %v5380 = vsel %vm240, %v4426, 0
        %v5383 = vsel %vm240, %v4428, 0
        %v5386 = vsel %vm240, %v4430, 0
        %v5389 = vsel %vm240, %v4432, 0
        %v5392 = vsel %vm240, %v4434, 0
        %v5395 = vsel %vm240, %v4436, 0
        %v5398 = vsel %vm240, %v4438, 0
        %v5401 = vsel %vm240, %v4440, 0
        %v5404 = vsel %vm240, %v4442, 0
        %v5407 = vsel %vm240, %v4444, 0
        %v5410 = vsel %vm240, %v4446, 0
        %v5413 = vsel %vm240, %v4448, 0
        %v5416 = vsel %vm240, %v4450, 0
        %v5419 = vsel %vm240, %v4452, 0
        %v5422 = vsel %vm240, %v4454, 0
        %v5425 = vsel %vm240, %v4456, 0
        %v5428 = vsel %vm240, %v4458, 0
        %v5431 = vsel %vm240, %v4460, 0
        %v5434 = vsel %vm240, %v4462, 0
        %v5437 = vsel %vm240, %v4464, 0
        %v5440 = vsel %vm240, %v4466, 0
        %v5443 = vsel %vm240, %v4468, 0
        %v5446 = vsel %vm240, %v4470, 0
        %v5449 = vsel %vm240, %v4472, 0
        %v5452 = vsel %vm240, %v4474, 0
        %v5455 = vsel %vm240, %v4476, 0
        %5457 = vmatpush.msra.mxu0 %v4493
        %5458 = vmatpush.msra.mxu0 %v4492
        %5459 = vmatpush.msra.mxu0 %v4491
        %5460 = vmatpush.msra.mxu0 %v4490
        %5461 = vmatpush.msra.mxu0 %v4489
        %5462 = vmatpush.msra.mxu0 %v4488
        %5463 = vmatpush.msra.mxu0 %v4487
        %5464 = vmatpush.msra.mxu0 %v4486
        %5465 = vmatpush.msra.mxu0 %v4485
        %5466 = vmatpush.msra.mxu0 %v4484
        %5467 = vmatpush.msra.mxu0 %v4483
        %5468 = vmatpush.msra.mxu0 %v4482
        %5469 = vmatpush.msra.mxu0 %v4481
        %5470 = vmatpush.msra.mxu0 %v4480
        %5471 = vmatpush.msra.mxu0 %v4479
        %5472 = vmatpush.msra.mxu0 %v4478
        %5473 = vmatmul.f32.gmra.mxu0 %v4349
        %v5474 = vpop.f32.mrf.mxu0
        %v5475 = vadd.f32 %v5074, %v5474
        %5476 = vmatmul.f32.gmra.mxu0 %v4351
        %v5477 = vpop.f32.mrf.mxu0
        %v5478 = vadd.f32 %v5077, %v5477
        %5479 = vmatmul.f32.gmra.mxu0 %v4353
        %v5480 = vpop.f32.mrf.mxu0
        %v5481 = vadd.f32 %v5080, %v5480
        %5482 = vmatmul.f32.gmra.mxu0 %v4355
        %v5483 = vpop.f32.mrf.mxu0
        %v5484 = vadd.f32 %v5083, %v5483
        %5485 = vmatmul.f32.gmra.mxu0 %v4357
        %v5486 = vpop.f32.mrf.mxu0
        %v5487 = vadd.f32 %v5086, %v5486
        %5488 = vmatmul.f32.gmra.mxu0 %v4359
        %v5489 = vpop.f32.mrf.mxu0
        %v5490 = vadd.f32 %v5089, %v5489
        %5491 = vmatmul.f32.gmra.mxu0 %v4361
        %v5492 = vpop.f32.mrf.mxu0
        %v5493 = vadd.f32 %v5092, %v5492
        %5494 = vmatmul.f32.gmra.mxu0 %v4363
        %v5495 = vpop.f32.mrf.mxu0
        %v5496 = vadd.f32 %v5095, %v5495
        %5497 = vmatmul.f32.gmra.mxu0 %v4365
        %v5498 = vpop.f32.mrf.mxu0
        %v5499 = vadd.f32 %v5098, %v5498
        %5500 = vmatmul.f32.gmra.mxu0 %v4367
        %v5501 = vpop.f32.mrf.mxu0
        %v5502 = vadd.f32 %v5101, %v5501
        %5503 = vmatmul.f32.gmra.mxu0 %v4369
        %v5504 = vpop.f32.mrf.mxu0
        %v5505 = vadd.f32 %v5104, %v5504
        %5506 = vmatmul.f32.gmra.mxu0 %v4371
        %v5507 = vpop.f32.mrf.mxu0
        %v5508 = vadd.f32 %v5107, %v5507
        %5509 = vmatmul.f32.gmra.mxu0 %v4373
        %v5510 = vpop.f32.mrf.mxu0
        %v5511 = vadd.f32 %v5110, %v5510
        %5512 = vmatmul.f32.gmra.mxu0 %v4375
        %v5513 = vpop.f32.mrf.mxu0
        %v5514 = vadd.f32 %v5113, %v5513
        %5515 = vmatmul.f32.gmra.mxu0 %v4377
        %v5516 = vpop.f32.mrf.mxu0
        %v5517 = vadd.f32 %v5116, %v5516
        %5518 = vmatmul.f32.gmra.mxu0 %v4379
        %v5519 = vpop.f32.mrf.mxu0
        %v5520 = vadd.f32 %v5119, %v5519
        %5521 = vmatmul.f32.gmra.mxu0 %v4381
        %v5522 = vpop.f32.mrf.mxu0
        %v5523 = vadd.f32 %v5122, %v5522
        %5524 = vmatmul.f32.gmra.mxu0 %v4383
        %v5525 = vpop.f32.mrf.mxu0
        %v5526 = vadd.f32 %v5125, %v5525
        %5527 = vmatmul.f32.gmra.mxu0 %v4385
        %v5528 = vpop.f32.mrf.mxu0
        %v5529 = vadd.f32 %v5128, %v5528
        %5530 = vmatmul.f32.gmra.mxu0 %v4387
        %v5531 = vpop.f32.mrf.mxu0
        %v5532 = vadd.f32 %v5131, %v5531
        %5533 = vmatmul.f32.gmra.mxu0 %v4389
        %v5534 = vpop.f32.mrf.mxu0
        %v5535 = vadd.f32 %v5134, %v5534
        %5536 = vmatmul.f32.gmra.mxu0 %v4391
        %v5537 = vpop.f32.mrf.mxu0
        %v5538 = vadd.f32 %v5137, %v5537
        %5539 = vmatmul.f32.gmra.mxu0 %v4393
        %v5540 = vpop.f32.mrf.mxu0
        %v5541 = vadd.f32 %v5140, %v5540
        %5542 = vmatmul.f32.gmra.mxu0 %v4395
        %v5543 = vpop.f32.mrf.mxu0
        %v5544 = vadd.f32 %v5143, %v5543
        %5545 = vmatmul.f32.gmra.mxu0 %v4397
        %v5546 = vpop.f32.mrf.mxu0
        %v5547 = vadd.f32 %v5146, %v5546
        %5548 = vmatmul.f32.gmra.mxu0 %v4399
        %v5549 = vpop.f32.mrf.mxu0
        %v5550 = vadd.f32 %v5149, %v5549
        %5551 = vmatmul.f32.gmra.mxu0 %v4401
        %v5552 = vpop.f32.mrf.mxu0
        %v5553 = vadd.f32 %v5152, %v5552
        %5554 = vmatmul.f32.gmra.mxu0 %v4403
        %v5555 = vpop.f32.mrf.mxu0
        %v5556 = vadd.f32 %v5155, %v5555
        %5557 = vmatmul.f32.gmra.mxu0 %v4405
        %v5558 = vpop.f32.mrf.mxu0
        %v5559 = vadd.f32 %v5158, %v5558
        %5560 = vmatmul.f32.gmra.mxu0 %v4407
        %v5561 = vpop.f32.mrf.mxu0
        %v5562 = vadd.f32 %v5161, %v5561
        %5563 = vmatmul.f32.gmra.mxu0 %v4409
        %v5564 = vpop.f32.mrf.mxu0
        %v5565 = vadd.f32 %v5164, %v5564
        %5566 = vmatmul.f32.gmra.mxu0 %v4411
        %v5567 = vpop.f32.mrf.mxu0
        %v5568 = vadd.f32 %v5167, %v5567
        %5569 = vmatmul.f32.gmra.mxu0 %v4413
        %v5570 = vpop.f32.mrf.mxu0
        %v5571 = vadd.f32 %v5170, %v5570
        %5572 = vmatmul.f32.gmra.mxu0 %v4415
        %v5573 = vpop.f32.mrf.mxu0
        %v5574 = vadd.f32 %v5173, %v5573
        %5575 = vmatmul.f32.gmra.mxu0 %v4417
        %v5576 = vpop.f32.mrf.mxu0
        %v5577 = vadd.f32 %v5176, %v5576
        %5578 = vmatmul.f32.gmra.mxu0 %v4419
        %v5579 = vpop.f32.mrf.mxu0
        %v5580 = vadd.f32 %v5179, %v5579
        %5581 = vmatmul.f32.gmra.mxu0 %v4421
        %v5582 = vpop.f32.mrf.mxu0
        %v5583 = vadd.f32 %v5182, %v5582
        %5584 = vmatmul.f32.gmra.mxu0 %v4423
        %v5585 = vpop.f32.mrf.mxu0
        %v5586 = vadd.f32 %v5185, %v5585
        %5587 = vmatmul.f32.gmra.mxu0 %v4425
        %v5588 = vpop.f32.mrf.mxu0
        %v5589 = vadd.f32 %v5188, %v5588
        %5590 = vmatmul.f32.gmra.mxu0 %v4427
        %v5591 = vpop.f32.mrf.mxu0
        %v5592 = vadd.f32 %v5191, %v5591
        %5593 = vmatmul.f32.gmra.mxu0 %v4429
        %v5594 = vpop.f32.mrf.mxu0
        %v5595 = vadd.f32 %v5194, %v5594
        %5596 = vmatmul.f32.gmra.mxu0 %v4431
        %v5597 = vpop.f32.mrf.mxu0
        %v5598 = vadd.f32 %v5197, %v5597
        %5599 = vmatmul.f32.gmra.mxu0 %v4433
        %v5600 = vpop.f32.mrf.mxu0
        %v5601 = vadd.f32 %v5200, %v5600
        %5602 = vmatmul.f32.gmra.mxu0 %v4435
        %v5603 = vpop.f32.mrf.mxu0
        %v5604 = vadd.f32 %v5203, %v5603
        %5605 = vmatmul.f32.gmra.mxu0 %v4437
        %v5606 = vpop.f32.mrf.mxu0
        %v5607 = vadd.f32 %v5206, %v5606
        %5608 = vmatmul.f32.gmra.mxu0 %v4439
        %v5609 = vpop.f32.mrf.mxu0
        %v5610 = vadd.f32 %v5209, %v5609
        %5611 = vmatmul.f32.gmra.mxu0 %v4441
        %v5612 = vpop.f32.mrf.mxu0
        %v5613 = vadd.f32 %v5212, %v5612
        %5614 = vmatmul.f32.gmra.mxu0 %v4443
        %v5615 = vpop.f32.mrf.mxu0
        %v5616 = vadd.f32 %v5215, %v5615
        %5617 = vmatmul.f32.gmra.mxu0 %v4445
        %v5618 = vpop.f32.mrf.mxu0
        %v5619 = vadd.f32 %v5218, %v5618
        %5620 = vmatmul.f32.gmra.mxu0 %v4447
        %v5621 = vpop.f32.mrf.mxu0
        %v5622 = vadd.f32 %v5221, %v5621
        %5623 = vmatmul.f32.gmra.mxu0 %v4449
        %v5624 = vpop.f32.mrf.mxu0
        %v5625 = vadd.f32 %v5224, %v5624
        %5626 = vmatmul.f32.gmra.mxu0 %v4451
        %v5627 = vpop.f32.mrf.mxu0
        %v5628 = vadd.f32 %v5227, %v5627
        %5629 = vmatmul.f32.gmra.mxu0 %v4453
        %v5630 = vpop.f32.mrf.mxu0
        %v5631 = vadd.f32 %v5230, %v5630
        %5632 = vmatmul.f32.gmra.mxu0 %v4455
        %v5633 = vpop.f32.mrf.mxu0
        %v5634 = vadd.f32 %v5233, %v5633
        %5635 = vmatmul.f32.gmra.mxu0 %v4457
        %v5636 = vpop.f32.mrf.mxu0
        %v5637 = vadd.f32 %v5236, %v5636
        %5638 = vmatmul.f32.gmra.mxu0 %v4459
        %v5639 = vpop.f32.mrf.mxu0
        %v5640 = vadd.f32 %v5239, %v5639
        %5641 = vmatmul.f32.gmra.mxu0 %v4461
        %v5642 = vpop.f32.mrf.mxu0
        %v5643 = vadd.f32 %v5242, %v5642
        %5644 = vmatmul.f32.gmra.mxu0 %v4463
        %v5645 = vpop.f32.mrf.mxu0
        %v5646 = vadd.f32 %v5245, %v5645
        %5647 = vmatmul.f32.gmra.mxu0 %v4465
        %v5648 = vpop.f32.mrf.mxu0
        %v5649 = vadd.f32 %v5248, %v5648
        %5650 = vmatmul.f32.gmra.mxu0 %v4467
        %v5651 = vpop.f32.mrf.mxu0
        %v5652 = vadd.f32 %v5251, %v5651
        %5653 = vmatmul.f32.gmra.mxu0 %v4469
        %v5654 = vpop.f32.mrf.mxu0
        %v5655 = vadd.f32 %v5254, %v5654
        %5656 = vmatmul.f32.gmra.mxu0 %v4471
        %v5657 = vpop.f32.mrf.mxu0
        %v5658 = vadd.f32 %v5257, %v5657
        %5659 = vmatmul.f32.gmra.mxu0 %v4473
        %v5660 = vpop.f32.mrf.mxu0
        %v5661 = vadd.f32 %v5260, %v5660
        %5662 = vmatmul.f32.gmra.mxu0 %v4475
        %v5663 = vpop.f32.mrf.mxu0
        %v5664 = vadd.f32 %v5263, %v5663
        %5665 = vdwg.mxu0
        %5666 = vmatpush.msra.mxu0 0.0
        %5667 = vmatpush.msra.mxu0 0.0
        %5668 = vmatpush.msra.mxu0 0.0
        %5669 = vmatpush.msra.mxu0 0.0
        %5670 = vmatpush.msra.mxu0 0.0
        %5671 = vmatpush.msra.mxu0 0.0
        %5672 = vmatpush.msra.mxu0 0.0
        %5673 = vmatpush.msra.mxu0 0.0
        %5674 = vmatpush.msra.mxu0 %v4501
        %5675 = vmatpush.msra.mxu0 %v4500
        %5676 = vmatpush.msra.mxu0 %v4499
        %5677 = vmatpush.msra.mxu0 %v4498
        %5678 = vmatpush.msra.mxu0 %v4497
        %5679 = vmatpush.msra.mxu0 %v4496
        %5680 = vmatpush.msra.mxu0 %v4495
        %5681 = vmatpush.msra.mxu0 %v4494
        %5682 = vmatmul.f32.gmra.mxu0 %v5266
        %v5683 = vpop.f32.mrf.mxu0
        %v5684 = vadd.f32 %v5475, %v5683
        %5685 = vmatmul.f32.gmra.mxu0 %v5269
        %v5686 = vpop.f32.mrf.mxu0
        %v5687 = vadd.f32 %v5478, %v5686
        %5688 = vmatmul.f32.gmra.mxu0 %v5272
        %v5689 = vpop.f32.mrf.mxu0
        %v5690 = vadd.f32 %v5481, %v5689
        %5691 = vmatmul.f32.gmra.mxu0 %v5275
        %v5692 = vpop.f32.mrf.mxu0
        %v5693 = vadd.f32 %v5484, %v5692
        %5694 = vmatmul.f32.gmra.mxu0 %v5278
        %v5695 = vpop.f32.mrf.mxu0
        %v5696 = vadd.f32 %v5487, %v5695
        %5697 = vmatmul.f32.gmra.mxu0 %v5281
        %v5698 = vpop.f32.mrf.mxu0
        %v5699 = vadd.f32 %v5490, %v5698
        %5700 = vmatmul.f32.gmra.mxu0 %v5284
        %v5701 = vpop.f32.mrf.mxu0
        %v5702 = vadd.f32 %v5493, %v5701
        %5703 = vmatmul.f32.gmra.mxu0 %v5287
        %v5704 = vpop.f32.mrf.mxu0
        %v5705 = vadd.f32 %v5496, %v5704
        %5706 = vmatmul.f32.gmra.mxu0 %v5290
        %v5707 = vpop.f32.mrf.mxu0
        %v5708 = vadd.f32 %v5499, %v5707
        %5709 = vmatmul.f32.gmra.mxu0 %v5293
        %v5710 = vpop.f32.mrf.mxu0
        %v5711 = vadd.f32 %v5502, %v5710
        %5712 = vmatmul.f32.gmra.mxu0 %v5296
        %v5713 = vpop.f32.mrf.mxu0
        %v5714 = vadd.f32 %v5505, %v5713
        %5715 = vmatmul.f32.gmra.mxu0 %v5299
        %v5716 = vpop.f32.mrf.mxu0
        %v5717 = vadd.f32 %v5508, %v5716
        %5718 = vmatmul.f32.gmra.mxu0 %v5302
        %v5719 = vpop.f32.mrf.mxu0
        %v5720 = vadd.f32 %v5511, %v5719
        %5721 = vmatmul.f32.gmra.mxu0 %v5305
        %v5722 = vpop.f32.mrf.mxu0
        %v5723 = vadd.f32 %v5514, %v5722
        %5724 = vmatmul.f32.gmra.mxu0 %v5308
        %v5725 = vpop.f32.mrf.mxu0
        %v5726 = vadd.f32 %v5517, %v5725
        %5727 = vmatmul.f32.gmra.mxu0 %v5311
        %v5728 = vpop.f32.mrf.mxu0
        %v5729 = vadd.f32 %v5520, %v5728
        %5730 = vmatmul.f32.gmra.mxu0 %v5314
        %v5731 = vpop.f32.mrf.mxu0
        %v5732 = vadd.f32 %v5523, %v5731
        %5733 = vmatmul.f32.gmra.mxu0 %v5317
        %v5734 = vpop.f32.mrf.mxu0
        %v5735 = vadd.f32 %v5526, %v5734
        %5736 = vmatmul.f32.gmra.mxu0 %v5320
        %v5737 = vpop.f32.mrf.mxu0
        %v5738 = vadd.f32 %v5529, %v5737
        %5739 = vmatmul.f32.gmra.mxu0 %v5323
        %v5740 = vpop.f32.mrf.mxu0
        %v5741 = vadd.f32 %v5532, %v5740
        %5742 = vmatmul.f32.gmra.mxu0 %v5326
        %v5743 = vpop.f32.mrf.mxu0
        %v5744 = vadd.f32 %v5535, %v5743
        %5745 = vmatmul.f32.gmra.mxu0 %v5329
        %v5746 = vpop.f32.mrf.mxu0
        %v5747 = vadd.f32 %v5538, %v5746
        %5748 = vmatmul.f32.gmra.mxu0 %v5332
        %v5749 = vpop.f32.mrf.mxu0
        %v5750 = vadd.f32 %v5541, %v5749
        %5751 = vmatmul.f32.gmra.mxu0 %v5335
        %v5752 = vpop.f32.mrf.mxu0
        %v5753 = vadd.f32 %v5544, %v5752
        %5754 = vmatmul.f32.gmra.mxu0 %v5338
        %v5755 = vpop.f32.mrf.mxu0
        %v5756 = vadd.f32 %v5547, %v5755
        %5757 = vmatmul.f32.gmra.mxu0 %v5341
        %v5758 = vpop.f32.mrf.mxu0
        %v5759 = vadd.f32 %v5550, %v5758
        %5760 = vmatmul.f32.gmra.mxu0 %v5344
        %v5761 = vpop.f32.mrf.mxu0
        %v5762 = vadd.f32 %v5553, %v5761
        %5763 = vmatmul.f32.gmra.mxu0 %v5347
        %v5764 = vpop.f32.mrf.mxu0
        %v5765 = vadd.f32 %v5556, %v5764
        %5766 = vmatmul.f32.gmra.mxu0 %v5350
        %v5767 = vpop.f32.mrf.mxu0
        %v5768 = vadd.f32 %v5559, %v5767
        %5769 = vmatmul.f32.gmra.mxu0 %v5353
        %v5770 = vpop.f32.mrf.mxu0
        %v5771 = vadd.f32 %v5562, %v5770
        %5772 = vmatmul.f32.gmra.mxu0 %v5356
        %v5773 = vpop.f32.mrf.mxu0
        %v5774 = vadd.f32 %v5565, %v5773
        %5775 = vmatmul.f32.gmra.mxu0 %v5359
        %v5776 = vpop.f32.mrf.mxu0
        %v5777 = vadd.f32 %v5568, %v5776
        %5778 = vmatmul.f32.gmra.mxu0 %v5362
        %v5779 = vpop.f32.mrf.mxu0
        %v5780 = vadd.f32 %v5571, %v5779
        %5781 = vmatmul.f32.gmra.mxu0 %v5365
        %v5782 = vpop.f32.mrf.mxu0
        %v5783 = vadd.f32 %v5574, %v5782
        %5784 = vmatmul.f32.gmra.mxu0 %v5368
        %v5785 = vpop.f32.mrf.mxu0
        %v5786 = vadd.f32 %v5577, %v5785
        %5787 = vmatmul.f32.gmra.mxu0 %v5371
        %v5788 = vpop.f32.mrf.mxu0
        %v5789 = vadd.f32 %v5580, %v5788
        %5790 = vmatmul.f32.gmra.mxu0 %v5374
        %v5791 = vpop.f32.mrf.mxu0
        %v5792 = vadd.f32 %v5583, %v5791
        %5793 = vmatmul.f32.gmra.mxu0 %v5377
        %v5794 = vpop.f32.mrf.mxu0
        %v5795 = vadd.f32 %v5586, %v5794
        %5796 = vmatmul.f32.gmra.mxu0 %v5380
        %v5797 = vpop.f32.mrf.mxu0
        %v5798 = vadd.f32 %v5589, %v5797
        %5799 = vmatmul.f32.gmra.mxu0 %v5383
        %v5800 = vpop.f32.mrf.mxu0
        %v5801 = vadd.f32 %v5592, %v5800
        %5802 = vmatmul.f32.gmra.mxu0 %v5386
        %v5803 = vpop.f32.mrf.mxu0
        %v5804 = vadd.f32 %v5595, %v5803
        %5805 = vmatmul.f32.gmra.mxu0 %v5389
        %v5806 = vpop.f32.mrf.mxu0
        %v5807 = vadd.f32 %v5598, %v5806
        %5808 = vmatmul.f32.gmra.mxu0 %v5392
        %v5809 = vpop.f32.mrf.mxu0
        %v5810 = vadd.f32 %v5601, %v5809
        %5811 = vmatmul.f32.gmra.mxu0 %v5395
        %v5812 = vpop.f32.mrf.mxu0
        %v5813 = vadd.f32 %v5604, %v5812
        %5814 = vmatmul.f32.gmra.mxu0 %v5398
        %v5815 = vpop.f32.mrf.mxu0
        %v5816 = vadd.f32 %v5607, %v5815
        %5817 = vmatmul.f32.gmra.mxu0 %v5401
        %v5818 = vpop.f32.mrf.mxu0
        %v5819 = vadd.f32 %v5610, %v5818
        %5820 = vmatmul.f32.gmra.mxu0 %v5404
        %v5821 = vpop.f32.mrf.mxu0
        %v5822 = vadd.f32 %v5613, %v5821
        %5823 = vmatmul.f32.gmra.mxu0 %v5407
        %v5824 = vpop.f32.mrf.mxu0
        %v5825 = vadd.f32 %v5616, %v5824
        %5826 = vmatmul.f32.gmra.mxu0 %v5410
        %v5827 = vpop.f32.mrf.mxu0
        %v5828 = vadd.f32 %v5619, %v5827
        %5829 = vmatmul.f32.gmra.mxu0 %v5413
        %v5830 = vpop.f32.mrf.mxu0
        %v5831 = vadd.f32 %v5622, %v5830
        %5832 = vmatmul.f32.gmra.mxu0 %v5416
        %v5833 = vpop.f32.mrf.mxu0
        %v5834 = vadd.f32 %v5625, %v5833
        %5835 = vmatmul.f32.gmra.mxu0 %v5419
        %v5836 = vpop.f32.mrf.mxu0
        %v5837 = vadd.f32 %v5628, %v5836
        %5838 = vmatmul.f32.gmra.mxu0 %v5422
        %v5839 = vpop.f32.mrf.mxu0
        %v5840 = vadd.f32 %v5631, %v5839
        %5841 = vmatmul.f32.gmra.mxu0 %v5425
        %v5842 = vpop.f32.mrf.mxu0
        %v5843 = vadd.f32 %v5634, %v5842
        %5844 = vmatmul.f32.gmra.mxu0 %v5428
        %v5845 = vpop.f32.mrf.mxu0
        %v5846 = vadd.f32 %v5637, %v5845
        %5847 = vmatmul.f32.gmra.mxu0 %v5431
        %v5848 = vpop.f32.mrf.mxu0
        %v5849 = vadd.f32 %v5640, %v5848
        %5850 = vmatmul.f32.gmra.mxu0 %v5434
        %v5851 = vpop.f32.mrf.mxu0
        %v5852 = vadd.f32 %v5643, %v5851
        %5853 = vmatmul.f32.gmra.mxu0 %v5437
        %v5854 = vpop.f32.mrf.mxu0
        %v5855 = vadd.f32 %v5646, %v5854
        %5856 = vmatmul.f32.gmra.mxu0 %v5440
        %v5857 = vpop.f32.mrf.mxu0
        %v5858 = vadd.f32 %v5649, %v5857
        %5859 = vmatmul.f32.gmra.mxu0 %v5443
        %v5860 = vpop.f32.mrf.mxu0
        %v5861 = vadd.f32 %v5652, %v5860
        %5862 = vmatmul.f32.gmra.mxu0 %v5446
        %v5863 = vpop.f32.mrf.mxu0
        %v5864 = vadd.f32 %v5655, %v5863
        %5865 = vmatmul.f32.gmra.mxu0 %v5449
        %v5866 = vpop.f32.mrf.mxu0
        %v5867 = vadd.f32 %v5658, %v5866
        %5868 = vmatmul.f32.gmra.mxu0 %v5452
        %v5869 = vpop.f32.mrf.mxu0
        %v5870 = vadd.f32 %v5661, %v5869
        %5871 = vmatmul.f32.gmra.mxu0 %v5455
        %v5872 = vpop.f32.mrf.mxu0
        %v5873 = vadd.f32 %v5664, %v5872
        %5874 = vdwg.mxu0
        %v5875 = vld [vmem:[%s2621] sm:$0xff]
        %v5876 = vld [vmem:[%s2621 + $0x8] sm:$0xff]
        %v5877 = vld [vmem:[%s2621 + $0x10] sm:$0xff]
        %v5878 = vld [vmem:[%s2621 + $0x18] sm:$0xff]
        %v5879 = vld [vmem:[%s2621 + $0x20] sm:$0xff]
        %v5880 = vld [vmem:[%s2621 + $0x28] sm:$0xff]
        %v5881 = vld [vmem:[%s2621 + $0x30] sm:$0xff]
        %v5882 = vld [vmem:[%s2621 + $0x38] sm:$0xff]
        %v5883 = vld [vmem:[%s2621 + $0x40] sm:$0xff]
        %v5884 = vld [vmem:[%s2621 + $0x48] sm:$0xff]
        %v5885 = vld [vmem:[%s2621 + $0x50] sm:$0xff]
        %v5886 = vld [vmem:[%s2621 + $0x58] sm:$0xff]
        %v5887 = vld [vmem:[%s2621 + $0x60] sm:$0xff]
        %v5888 = vld [vmem:[%s2621 + $0x68] sm:$0xff]
        %v5889 = vld [vmem:[%s2621 + $0x70] sm:$0xff]
        %v5890 = vld [vmem:[%s2621 + $0x78] sm:$0xff]
        %v5891 = vld [vmem:[%s2621 + $0x80] sm:$0xff]
        %v5892 = vld [vmem:[%s2621 + $0x88] sm:$0xff]
        %v5893 = vld [vmem:[%s2621 + $0x90] sm:$0xff]
        %v5894 = vld [vmem:[%s2621 + $0x98] sm:$0xff]
        %v5895 = vld [vmem:[%s2621 + $0xa0] sm:$0xff]
        %v5896 = vld [vmem:[%s2621 + $0xa8] sm:$0xff]
        %v5897 = vld [vmem:[%s2621 + $0xb0] sm:$0xff]
        %v5898 = vld [vmem:[%s2621 + $0xb8] sm:$0xff]
        %v5899 = vld [vmem:[%s2621 + $0xc0] sm:$0xff]
        %v5900 = vld [vmem:[%s2621 + $0xc8] sm:$0xff]
        %v5901 = vld [vmem:[%s2621 + $0xd0] sm:$0xff]
        %v5902 = vld [vmem:[%s2621 + $0xd8] sm:$0xff]
        %v5903 = vld [vmem:[%s2621 + $0xe0] sm:$0xff]
        %v5904 = vld [vmem:[%s2621 + $0xe8] sm:$0xff]
        %v5905 = vld [vmem:[%s2621 + $0xf0] sm:$0xff]
        %v5906 = vld [vmem:[%s2621 + $0xf8] sm:$0xff]
        %v5907 = vld [vmem:[%s2621 + $0x100] sm:$0xff]
        %v5908 = vld [vmem:[%s2621 + $0x108] sm:$0xff]
        %v5909 = vld [vmem:[%s2621 + $0x110] sm:$0xff]
        %v5910 = vld [vmem:[%s2621 + $0x118] sm:$0xff]
        %v5911 = vld [vmem:[%s2621 + $0x120] sm:$0xff]
        %v5912 = vld [vmem:[%s2621 + $0x128] sm:$0xff]
        %v5913 = vld [vmem:[%s2621 + $0x130] sm:$0xff]
        %v5914 = vld [vmem:[%s2621 + $0x138] sm:$0xff]
        %v5915 = vld [vmem:[%s2621 + $0x140] sm:$0xff]
        %v5916 = vld [vmem:[%s2621 + $0x148] sm:$0xff]
        %v5917 = vld [vmem:[%s2621 + $0x150] sm:$0xff]
        %v5918 = vld [vmem:[%s2621 + $0x158] sm:$0xff]
        %v5919 = vld [vmem:[%s2621 + $0x160] sm:$0xff]
        %v5920 = vld [vmem:[%s2621 + $0x168] sm:$0xff]
        %v5921 = vld [vmem:[%s2621 + $0x170] sm:$0xff]
        %v5922 = vld [vmem:[%s2621 + $0x178] sm:$0xff]
        %v5923 = vld [vmem:[%s2621 + $0x180] sm:$0xff]
        %v5924 = vld [vmem:[%s2621 + $0x188] sm:$0xff]
        %v5925 = vld [vmem:[%s2621 + $0x190] sm:$0xff]
        %v5926 = vld [vmem:[%s2621 + $0x198] sm:$0xff]
        %v5927 = vld [vmem:[%s2621 + $0x1a0] sm:$0xff]
        %v5928 = vld [vmem:[%s2621 + $0x1a8] sm:$0xff]
        %v5929 = vld [vmem:[%s2621 + $0x1b0] sm:$0xff]
        %v5930 = vld [vmem:[%s2621 + $0x1b8] sm:$0xff]
        %v5931 = vld [vmem:[%s2621 + $0x1c0] sm:$0xff]
        %v5932 = vld [vmem:[%s2621 + $0x1c8] sm:$0xff]
        %v5933 = vld [vmem:[%s2621 + $0x1d0] sm:$0xff]
        %v5934 = vld [vmem:[%s2621 + $0x1d8] sm:$0xff]
        %v5935 = vld [vmem:[%s2621 + $0x1e0] sm:$0xff]
        %v5936 = vld [vmem:[%s2621 + $0x1e8] sm:$0xff]
        %v5937 = vld [vmem:[%s2621 + $0x1f0] sm:$0xff]
        %v5938 = vld [vmem:[%s2621 + $0x1f8] sm:$0xff]
        %v5939 = vld [vmem:[%s2621 + $0x240] sm:$0xff]
        %v5940 = vld [vmem:[%s2621 + $0x248] sm:$0xff]
        %v5941 = vld [vmem:[%s2621 + $0x250] sm:$0xff]
        %v5942 = vld [vmem:[%s2621 + $0x258] sm:$0xff]
        %v5943 = vld [vmem:[%s2621 + $0x260] sm:$0xff]
        %v5944 = vld [vmem:[%s2621 + $0x268] sm:$0xff]
        %v5945 = vld [vmem:[%s2621 + $0x270] sm:$0xff]
        %v5946 = vld [vmem:[%s2621 + $0x278] sm:$0xff]
        %v5947 = vld [vmem:[%s2621 + $0x280] sm:$0xff]
        %v5948 = vld [vmem:[%s2621 + $0x288] sm:$0xff]
        %v5949 = vld [vmem:[%s2621 + $0x290] sm:$0xff]
        %v5950 = vld [vmem:[%s2621 + $0x298] sm:$0xff]
        %v5951 = vld [vmem:[%s2621 + $0x2a0] sm:$0xff]
        %v5952 = vld [vmem:[%s2621 + $0x2a8] sm:$0xff]
        %v5953 = vld [vmem:[%s2621 + $0x2b0] sm:$0xff]
        %v5954 = vld [vmem:[%s2621 + $0x2b8] sm:$0xff]
        %v5955 = vld [vmem:[%s2621 + $0x2c0] sm:$0xff]
        %v5956 = vld [vmem:[%s2621 + $0x2c8] sm:$0xff]
        %v5957 = vld [vmem:[%s2621 + $0x2d0] sm:$0xff]
        %v5958 = vld [vmem:[%s2621 + $0x2d8] sm:$0xff]
        %v5959 = vld [vmem:[%s2621 + $0x2e0] sm:$0xff]
        %v5960 = vld [vmem:[%s2621 + $0x2e8] sm:$0xff]
        %v5961 = vld [vmem:[%s2621 + $0x2f0] sm:$0xff]
        %v5962 = vld [vmem:[%s2621 + $0x2f8] sm:$0xff]
        %v5963 = vld [vmem:[%s2621 + $0x300] sm:$0xff]
        %v5964 = vld [vmem:[%s2621 + $0x308] sm:$0xff]
        %v5965 = vld [vmem:[%s2621 + $0x310] sm:$0xff]
        %v5966 = vld [vmem:[%s2621 + $0x318] sm:$0xff]
        %v5967 = vld [vmem:[%s2621 + $0x320] sm:$0xff]
        %v5968 = vld [vmem:[%s2621 + $0x328] sm:$0xff]
        %v5969 = vld [vmem:[%s2621 + $0x330] sm:$0xff]
        %v5970 = vld [vmem:[%s2621 + $0x338] sm:$0xff]
        %v5971 = vld [vmem:[%s2621 + $0x340] sm:$0xff]
        %v5972 = vld [vmem:[%s2621 + $0x348] sm:$0xff]
        %v5973 = vld [vmem:[%s2621 + $0x350] sm:$0xff]
        %v5974 = vld [vmem:[%s2621 + $0x358] sm:$0xff]
        %v5975 = vld [vmem:[%s2621 + $0x360] sm:$0xff]
        %v5976 = vld [vmem:[%s2621 + $0x368] sm:$0xff]
        %v5977 = vld [vmem:[%s2621 + $0x370] sm:$0xff]
        %v5978 = vld [vmem:[%s2621 + $0x378] sm:$0xff]
        %v5979 = vld [vmem:[%s2621 + $0x380] sm:$0xff]
        %v5980 = vld [vmem:[%s2621 + $0x388] sm:$0xff]
        %v5981 = vld [vmem:[%s2621 + $0x390] sm:$0xff]
        %v5982 = vld [vmem:[%s2621 + $0x398] sm:$0xff]
        %v5983 = vld [vmem:[%s2621 + $0x3a0] sm:$0xff]
        %v5984 = vld [vmem:[%s2621 + $0x3a8] sm:$0xff]
        %v5985 = vld [vmem:[%s2621 + $0x3b0] sm:$0xff]
        %v5986 = vld [vmem:[%s2621 + $0x3b8] sm:$0xff]
        %v5987 = vld [vmem:[%s2621 + $0x3c0] sm:$0xff]
        %v5988 = vld [vmem:[%s2621 + $0x3c8] sm:$0xff]
        %v5989 = vld [vmem:[%s2621 + $0x3d0] sm:$0xff]
        %v5990 = vld [vmem:[%s2621 + $0x3d8] sm:$0xff]
        %v5991 = vld [vmem:[%s2621 + $0x3e0] sm:$0xff]
        %v5992 = vld [vmem:[%s2621 + $0x3e8] sm:$0xff]
        %v5993 = vld [vmem:[%s2621 + $0x3f0] sm:$0xff]
        %v5994 = vld [vmem:[%s2621 + $0x3f8] sm:$0xff]
        %v5995 = vld [vmem:[%s2621 + $0x400] sm:$0xff]
        %v5996 = vld [vmem:[%s2621 + $0x408] sm:$0xff]
        %v5997 = vld [vmem:[%s2621 + $0x410] sm:$0xff]
        %v5998 = vld [vmem:[%s2621 + $0x418] sm:$0xff]
        %v5999 = vld [vmem:[%s2621 + $0x420] sm:$0xff]
        %v6000 = vld [vmem:[%s2621 + $0x428] sm:$0xff]
        %v6001 = vld [vmem:[%s2621 + $0x430] sm:$0xff]
        %v6002 = vld [vmem:[%s2621 + $0x438] sm:$0xff]
        %s6003 = scalar_lea.vmem %s1, 960
        %v6004 = vld [vmem:[%s6003] sm:$0xff]
        %v6005 = vld [vmem:[%s6003 + $0x8] sm:$0xff]
        %v6006 = vld [vmem:[%s6003 + $0x10] sm:$0xff]
        %v6007 = vld [vmem:[%s6003 + $0x18] sm:$0xff]
        %v6008 = vld [vmem:[%s6003 + $0x20] sm:$0xff]
        %v6009 = vld [vmem:[%s6003 + $0x28] sm:$0xff]
        %v6010 = vld [vmem:[%s6003 + $0x30] sm:$0xff]
        %v6011 = vld [vmem:[%s6003 + $0x38] sm:$0xff]
        %v6012 = vld [vmem:[%s6003 + $0x40] sm:$0xff]
        %v6013 = vld [vmem:[%s6003 + $0x48] sm:$0xff]
        %v6014 = vld [vmem:[%s6003 + $0x50] sm:$0xff]
        %v6015 = vld [vmem:[%s6003 + $0x58] sm:$0xff]
        %v6016 = vld [vmem:[%s6003 + $0x60] sm:$0xff]
        %v6017 = vld [vmem:[%s6003 + $0x68] sm:$0xff]
        %v6018 = vld [vmem:[%s6003 + $0x70] sm:$0xff]
        %v6019 = vld [vmem:[%s6003 + $0x78] sm:$0xff]
        %v6020 = vld [vmem:[%s6003 + $0x80] sm:$0xff]
        %v6021 = vld [vmem:[%s6003 + $0x88] sm:$0xff]
        %v6022 = vld [vmem:[%s6003 + $0x90] sm:$0xff]
        %v6023 = vld [vmem:[%s6003 + $0x98] sm:$0xff]
        %v6024 = vld [vmem:[%s6003 + $0xa0] sm:$0xff]
        %v6025 = vld [vmem:[%s6003 + $0xa8] sm:$0xff]
        %v6026 = vld [vmem:[%s6003 + $0xb0] sm:$0xff]
        %v6027 = vld [vmem:[%s6003 + $0xb8] sm:$0xff]
        %v6029 = vsel %vm240, %v5876, 0
        %v6032 = vsel %vm240, %v5878, 0
        %v6035 = vsel %vm240, %v5880, 0
        %v6038 = vsel %vm240, %v5882, 0
        %v6041 = vsel %vm240, %v5884, 0
        %v6044 = vsel %vm240, %v5886, 0
        %v6047 = vsel %vm240, %v5888, 0
        %v6050 = vsel %vm240, %v5890, 0
        %v6053 = vsel %vm240, %v5892, 0
        %v6056 = vsel %vm240, %v5894, 0
        %v6059 = vsel %vm240, %v5896, 0
        %v6062 = vsel %vm240, %v5898, 0
        %v6065 = vsel %vm240, %v5900, 0
        %v6068 = vsel %vm240, %v5902, 0
        %v6071 = vsel %vm240, %v5904, 0
        %v6074 = vsel %vm240, %v5906, 0
        %v6077 = vsel %vm240, %v5908, 0
        %v6080 = vsel %vm240, %v5910, 0
        %v6083 = vsel %vm240, %v5912, 0
        %v6086 = vsel %vm240, %v5914, 0
        %v6089 = vsel %vm240, %v5916, 0
        %v6092 = vsel %vm240, %v5918, 0
        %v6095 = vsel %vm240, %v5920, 0
        %v6098 = vsel %vm240, %v5922, 0
        %v6101 = vsel %vm240, %v5924, 0
        %v6104 = vsel %vm240, %v5926, 0
        %v6107 = vsel %vm240, %v5928, 0
        %v6110 = vsel %vm240, %v5930, 0
        %v6113 = vsel %vm240, %v5932, 0
        %v6116 = vsel %vm240, %v5934, 0
        %v6119 = vsel %vm240, %v5936, 0
        %v6122 = vsel %vm240, %v5938, 0
        %v6125 = vsel %vm240, %v5940, 0
        %v6128 = vsel %vm240, %v5942, 0
        %v6131 = vsel %vm240, %v5944, 0
        %v6134 = vsel %vm240, %v5946, 0
        %v6137 = vsel %vm240, %v5948, 0
        %v6140 = vsel %vm240, %v5950, 0
        %v6143 = vsel %vm240, %v5952, 0
        %v6146 = vsel %vm240, %v5954, 0
        %v6149 = vsel %vm240, %v5956, 0
        %v6152 = vsel %vm240, %v5958, 0
        %v6155 = vsel %vm240, %v5960, 0
        %v6158 = vsel %vm240, %v5962, 0
        %v6161 = vsel %vm240, %v5964, 0
        %v6164 = vsel %vm240, %v5966, 0
        %v6167 = vsel %vm240, %v5968, 0
        %v6170 = vsel %vm240, %v5970, 0
        %v6173 = vsel %vm240, %v5972, 0
        %v6176 = vsel %vm240, %v5974, 0
        %v6179 = vsel %vm240, %v5976, 0
        %v6182 = vsel %vm240, %v5978, 0
        %v6185 = vsel %vm240, %v5980, 0
        %v6188 = vsel %vm240, %v5982, 0
        %v6191 = vsel %vm240, %v5984, 0
        %v6194 = vsel %vm240, %v5986, 0
        %v6197 = vsel %vm240, %v5988, 0
        %v6200 = vsel %vm240, %v5990, 0
        %v6203 = vsel %vm240, %v5992, 0
        %v6206 = vsel %vm240, %v5994, 0
        %v6209 = vsel %vm240, %v5996, 0
        %v6212 = vsel %vm240, %v5998, 0
        %v6215 = vsel %vm240, %v6000, 0
        %v6218 = vsel %vm240, %v6002, 0
        %6220 = vmatpush.msra.mxu0 %v6019
        %6221 = vmatpush.msra.mxu0 %v6018
        %6222 = vmatpush.msra.mxu0 %v6017
        %6223 = vmatpush.msra.mxu0 %v6016
        %6224 = vmatpush.msra.mxu0 %v6015
        %6225 = vmatpush.msra.mxu0 %v6014
        %6226 = vmatpush.msra.mxu0 %v6013
        %6227 = vmatpush.msra.mxu0 %v6012
        %6228 = vmatpush.msra.mxu0 %v6011
        %6229 = vmatpush.msra.mxu0 %v6010
        %6230 = vmatpush.msra.mxu0 %v6009
        %6231 = vmatpush.msra.mxu0 %v6008
        %6232 = vmatpush.msra.mxu0 %v6007
        %6233 = vmatpush.msra.mxu0 %v6006
        %6234 = vmatpush.msra.mxu0 %v6005
        %6235 = vmatpush.msra.mxu0 %v6004
        %6236 = vmatmul.f32.gmra.mxu0 %v5875
        %v6237 = vpop.f32.mrf.mxu0
        %v6238 = vadd.f32 0.0, %v6237
        %6239 = vmatmul.f32.gmra.mxu0 %v5877
        %v6240 = vpop.f32.mrf.mxu0
        %v6241 = vadd.f32 0.0, %v6240
        %6242 = vmatmul.f32.gmra.mxu0 %v5879
        %v6243 = vpop.f32.mrf.mxu0
        %v6244 = vadd.f32 0.0, %v6243
        %6245 = vmatmul.f32.gmra.mxu0 %v5881
        %v6246 = vpop.f32.mrf.mxu0
        %v6247 = vadd.f32 0.0, %v6246
        %6248 = vmatmul.f32.gmra.mxu0 %v5883
        %v6249 = vpop.f32.mrf.mxu0
        %v6250 = vadd.f32 0.0, %v6249
        %6251 = vmatmul.f32.gmra.mxu0 %v5885
        %v6252 = vpop.f32.mrf.mxu0
        %v6253 = vadd.f32 0.0, %v6252
        %6254 = vmatmul.f32.gmra.mxu0 %v5887
        %v6255 = vpop.f32.mrf.mxu0
        %v6256 = vadd.f32 0.0, %v6255
        %6257 = vmatmul.f32.gmra.mxu0 %v5889
        %v6258 = vpop.f32.mrf.mxu0
        %v6259 = vadd.f32 0.0, %v6258
        %6260 = vmatmul.f32.gmra.mxu0 %v5891
        %v6261 = vpop.f32.mrf.mxu0
        %v6262 = vadd.f32 0.0, %v6261
        %6263 = vmatmul.f32.gmra.mxu0 %v5893
        %v6264 = vpop.f32.mrf.mxu0
        %v6265 = vadd.f32 0.0, %v6264
        %6266 = vmatmul.f32.gmra.mxu0 %v5895
        %v6267 = vpop.f32.mrf.mxu0
        %v6268 = vadd.f32 0.0, %v6267
        %6269 = vmatmul.f32.gmra.mxu0 %v5897
        %v6270 = vpop.f32.mrf.mxu0
        %v6271 = vadd.f32 0.0, %v6270
        %6272 = vmatmul.f32.gmra.mxu0 %v5899
        %v6273 = vpop.f32.mrf.mxu0
        %v6274 = vadd.f32 0.0, %v6273
        %6275 = vmatmul.f32.gmra.mxu0 %v5901
        %v6276 = vpop.f32.mrf.mxu0
        %v6277 = vadd.f32 0.0, %v6276
        %6278 = vmatmul.f32.gmra.mxu0 %v5903
        %v6279 = vpop.f32.mrf.mxu0
        %v6280 = vadd.f32 0.0, %v6279
        %6281 = vmatmul.f32.gmra.mxu0 %v5905
        %v6282 = vpop.f32.mrf.mxu0
        %v6283 = vadd.f32 0.0, %v6282
        %6284 = vmatmul.f32.gmra.mxu0 %v5907
        %v6285 = vpop.f32.mrf.mxu0
        %v6286 = vadd.f32 0.0, %v6285
        %6287 = vmatmul.f32.gmra.mxu0 %v5909
        %v6288 = vpop.f32.mrf.mxu0
        %v6289 = vadd.f32 0.0, %v6288
        %6290 = vmatmul.f32.gmra.mxu0 %v5911
        %v6291 = vpop.f32.mrf.mxu0
        %v6292 = vadd.f32 0.0, %v6291
        %6293 = vmatmul.f32.gmra.mxu0 %v5913
        %v6294 = vpop.f32.mrf.mxu0
        %v6295 = vadd.f32 0.0, %v6294
        %6296 = vmatmul.f32.gmra.mxu0 %v5915
        %v6297 = vpop.f32.mrf.mxu0
        %v6298 = vadd.f32 0.0, %v6297
        %6299 = vmatmul.f32.gmra.mxu0 %v5917
        %v6300 = vpop.f32.mrf.mxu0
        %v6301 = vadd.f32 0.0, %v6300
        %6302 = vmatmul.f32.gmra.mxu0 %v5919
        %v6303 = vpop.f32.mrf.mxu0
        %v6304 = vadd.f32 0.0, %v6303
        %6305 = vmatmul.f32.gmra.mxu0 %v5921
        %v6306 = vpop.f32.mrf.mxu0
        %v6307 = vadd.f32 0.0, %v6306
        %6308 = vmatmul.f32.gmra.mxu0 %v5923
        %v6309 = vpop.f32.mrf.mxu0
        %v6310 = vadd.f32 0.0, %v6309
        %6311 = vmatmul.f32.gmra.mxu0 %v5925
        %v6312 = vpop.f32.mrf.mxu0
        %v6313 = vadd.f32 0.0, %v6312
        %6314 = vmatmul.f32.gmra.mxu0 %v5927
        %v6315 = vpop.f32.mrf.mxu0
        %v6316 = vadd.f32 0.0, %v6315
        %6317 = vmatmul.f32.gmra.mxu0 %v5929
        %v6318 = vpop.f32.mrf.mxu0
        %v6319 = vadd.f32 0.0, %v6318
        %6320 = vmatmul.f32.gmra.mxu0 %v5931
        %v6321 = vpop.f32.mrf.mxu0
        %v6322 = vadd.f32 0.0, %v6321
        %6323 = vmatmul.f32.gmra.mxu0 %v5933
        %v6324 = vpop.f32.mrf.mxu0
        %v6325 = vadd.f32 0.0, %v6324
        %6326 = vmatmul.f32.gmra.mxu0 %v5935
        %v6327 = vpop.f32.mrf.mxu0
        %v6328 = vadd.f32 0.0, %v6327
        %6329 = vmatmul.f32.gmra.mxu0 %v5937
        %v6330 = vpop.f32.mrf.mxu0
        %v6331 = vadd.f32 0.0, %v6330
        %6332 = vmatmul.f32.gmra.mxu0 %v5939
        %v6333 = vpop.f32.mrf.mxu0
        %v6334 = vadd.f32 0.0, %v6333
        %6335 = vmatmul.f32.gmra.mxu0 %v5941
        %v6336 = vpop.f32.mrf.mxu0
        %v6337 = vadd.f32 0.0, %v6336
        %6338 = vmatmul.f32.gmra.mxu0 %v5943
        %v6339 = vpop.f32.mrf.mxu0
        %v6340 = vadd.f32 0.0, %v6339
        %6341 = vmatmul.f32.gmra.mxu0 %v5945
        %v6342 = vpop.f32.mrf.mxu0
        %v6343 = vadd.f32 0.0, %v6342
        %6344 = vmatmul.f32.gmra.mxu0 %v5947
        %v6345 = vpop.f32.mrf.mxu0
        %v6346 = vadd.f32 0.0, %v6345
        %6347 = vmatmul.f32.gmra.mxu0 %v5949
        %v6348 = vpop.f32.mrf.mxu0
        %v6349 = vadd.f32 0.0, %v6348
        %6350 = vmatmul.f32.gmra.mxu0 %v5951
        %v6351 = vpop.f32.mrf.mxu0
        %v6352 = vadd.f32 0.0, %v6351
        %6353 = vmatmul.f32.gmra.mxu0 %v5953
        %v6354 = vpop.f32.mrf.mxu0
        %v6355 = vadd.f32 0.0, %v6354
        %6356 = vmatmul.f32.gmra.mxu0 %v5955
        %v6357 = vpop.f32.mrf.mxu0
        %v6358 = vadd.f32 0.0, %v6357
        %6359 = vmatmul.f32.gmra.mxu0 %v5957
        %v6360 = vpop.f32.mrf.mxu0
        %v6361 = vadd.f32 0.0, %v6360
        %6362 = vmatmul.f32.gmra.mxu0 %v5959
        %v6363 = vpop.f32.mrf.mxu0
        %v6364 = vadd.f32 0.0, %v6363
        %6365 = vmatmul.f32.gmra.mxu0 %v5961
        %v6366 = vpop.f32.mrf.mxu0
        %v6367 = vadd.f32 0.0, %v6366
        %6368 = vmatmul.f32.gmra.mxu0 %v5963
        %v6369 = vpop.f32.mrf.mxu0
        %v6370 = vadd.f32 0.0, %v6369
        %6371 = vmatmul.f32.gmra.mxu0 %v5965
        %v6372 = vpop.f32.mrf.mxu0
        %v6373 = vadd.f32 0.0, %v6372
        %6374 = vmatmul.f32.gmra.mxu0 %v5967
        %v6375 = vpop.f32.mrf.mxu0
        %v6376 = vadd.f32 0.0, %v6375
        %6377 = vmatmul.f32.gmra.mxu0 %v5969
        %v6378 = vpop.f32.mrf.mxu0
        %v6379 = vadd.f32 0.0, %v6378
        %6380 = vmatmul.f32.gmra.mxu0 %v5971
        %v6381 = vpop.f32.mrf.mxu0
        %v6382 = vadd.f32 0.0, %v6381
        %6383 = vmatmul.f32.gmra.mxu0 %v5973
        %v6384 = vpop.f32.mrf.mxu0
        %v6385 = vadd.f32 0.0, %v6384
        %6386 = vmatmul.f32.gmra.mxu0 %v5975
        %v6387 = vpop.f32.mrf.mxu0
        %v6388 = vadd.f32 0.0, %v6387
        %6389 = vmatmul.f32.gmra.mxu0 %v5977
        %v6390 = vpop.f32.mrf.mxu0
        %v6391 = vadd.f32 0.0, %v6390
        %6392 = vmatmul.f32.gmra.mxu0 %v5979
        %v6393 = vpop.f32.mrf.mxu0
        %v6394 = vadd.f32 0.0, %v6393
        %6395 = vmatmul.f32.gmra.mxu0 %v5981
        %v6396 = vpop.f32.mrf.mxu0
        %v6397 = vadd.f32 0.0, %v6396
        %6398 = vmatmul.f32.gmra.mxu0 %v5983
        %v6399 = vpop.f32.mrf.mxu0
        %v6400 = vadd.f32 0.0, %v6399
        %6401 = vmatmul.f32.gmra.mxu0 %v5985
        %v6402 = vpop.f32.mrf.mxu0
        %v6403 = vadd.f32 0.0, %v6402
        %6404 = vmatmul.f32.gmra.mxu0 %v5987
        %v6405 = vpop.f32.mrf.mxu0
        %v6406 = vadd.f32 0.0, %v6405
        %6407 = vmatmul.f32.gmra.mxu0 %v5989
        %v6408 = vpop.f32.mrf.mxu0
        %v6409 = vadd.f32 0.0, %v6408
        %6410 = vmatmul.f32.gmra.mxu0 %v5991
        %v6411 = vpop.f32.mrf.mxu0
        %v6412 = vadd.f32 0.0, %v6411
        %6413 = vmatmul.f32.gmra.mxu0 %v5993
        %v6414 = vpop.f32.mrf.mxu0
        %v6415 = vadd.f32 0.0, %v6414
        %6416 = vmatmul.f32.gmra.mxu0 %v5995
        %v6417 = vpop.f32.mrf.mxu0
        %v6418 = vadd.f32 0.0, %v6417
        %6419 = vmatmul.f32.gmra.mxu0 %v5997
        %v6420 = vpop.f32.mrf.mxu0
        %v6421 = vadd.f32 0.0, %v6420
        %6422 = vmatmul.f32.gmra.mxu0 %v5999
        %v6423 = vpop.f32.mrf.mxu0
        %v6424 = vadd.f32 0.0, %v6423
        %6425 = vmatmul.f32.gmra.mxu0 %v6001
        %v6426 = vpop.f32.mrf.mxu0
        %v6427 = vadd.f32 0.0, %v6426
        %6428 = vdwg.mxu0
        %6429 = vmatpush.msra.mxu0 0.0
        %6430 = vmatpush.msra.mxu0 0.0
        %6431 = vmatpush.msra.mxu0 0.0
        %6432 = vmatpush.msra.mxu0 0.0
        %6433 = vmatpush.msra.mxu0 0.0
        %6434 = vmatpush.msra.mxu0 0.0
        %6435 = vmatpush.msra.mxu0 0.0
        %6436 = vmatpush.msra.mxu0 0.0
        %6437 = vmatpush.msra.mxu0 %v6027
        %6438 = vmatpush.msra.mxu0 %v6026
        %6439 = vmatpush.msra.mxu0 %v6025
        %6440 = vmatpush.msra.mxu0 %v6024
        %6441 = vmatpush.msra.mxu0 %v6023
        %6442 = vmatpush.msra.mxu0 %v6022
        %6443 = vmatpush.msra.mxu0 %v6021
        %6444 = vmatpush.msra.mxu0 %v6020
        %6445 = vmatmul.f32.gmra.mxu0 %v6029
        %v6446 = vpop.f32.mrf.mxu0
        %v6447 = vadd.f32 %v6238, %v6446
        %6448 = vmatmul.f32.gmra.mxu0 %v6032
        %v6449 = vpop.f32.mrf.mxu0
        %v6450 = vadd.f32 %v6241, %v6449
        %6451 = vmatmul.f32.gmra.mxu0 %v6035
        %v6452 = vpop.f32.mrf.mxu0
        %v6453 = vadd.f32 %v6244, %v6452
        %6454 = vmatmul.f32.gmra.mxu0 %v6038
        %v6455 = vpop.f32.mrf.mxu0
        %v6456 = vadd.f32 %v6247, %v6455
        %6457 = vmatmul.f32.gmra.mxu0 %v6041
        %v6458 = vpop.f32.mrf.mxu0
        %v6459 = vadd.f32 %v6250, %v6458
        %6460 = vmatmul.f32.gmra.mxu0 %v6044
        %v6461 = vpop.f32.mrf.mxu0
        %v6462 = vadd.f32 %v6253, %v6461
        %6463 = vmatmul.f32.gmra.mxu0 %v6047
        %v6464 = vpop.f32.mrf.mxu0
        %v6465 = vadd.f32 %v6256, %v6464
        %6466 = vmatmul.f32.gmra.mxu0 %v6050
        %v6467 = vpop.f32.mrf.mxu0
        %v6468 = vadd.f32 %v6259, %v6467
        %6469 = vmatmul.f32.gmra.mxu0 %v6053
        %v6470 = vpop.f32.mrf.mxu0
        %v6471 = vadd.f32 %v6262, %v6470
        %6472 = vmatmul.f32.gmra.mxu0 %v6056
        %v6473 = vpop.f32.mrf.mxu0
        %v6474 = vadd.f32 %v6265, %v6473
        %6475 = vmatmul.f32.gmra.mxu0 %v6059
        %v6476 = vpop.f32.mrf.mxu0
        %v6477 = vadd.f32 %v6268, %v6476
        %6478 = vmatmul.f32.gmra.mxu0 %v6062
        %v6479 = vpop.f32.mrf.mxu0
        %v6480 = vadd.f32 %v6271, %v6479
        %6481 = vmatmul.f32.gmra.mxu0 %v6065
        %v6482 = vpop.f32.mrf.mxu0
        %v6483 = vadd.f32 %v6274, %v6482
        %6484 = vmatmul.f32.gmra.mxu0 %v6068
        %v6485 = vpop.f32.mrf.mxu0
        %v6486 = vadd.f32 %v6277, %v6485
        %6487 = vmatmul.f32.gmra.mxu0 %v6071
        %v6488 = vpop.f32.mrf.mxu0
        %v6489 = vadd.f32 %v6280, %v6488
        %6490 = vmatmul.f32.gmra.mxu0 %v6074
        %v6491 = vpop.f32.mrf.mxu0
        %v6492 = vadd.f32 %v6283, %v6491
        %6493 = vmatmul.f32.gmra.mxu0 %v6077
        %v6494 = vpop.f32.mrf.mxu0
        %v6495 = vadd.f32 %v6286, %v6494
        %6496 = vmatmul.f32.gmra.mxu0 %v6080
        %v6497 = vpop.f32.mrf.mxu0
        %v6498 = vadd.f32 %v6289, %v6497
        %6499 = vmatmul.f32.gmra.mxu0 %v6083
        %v6500 = vpop.f32.mrf.mxu0
        %v6501 = vadd.f32 %v6292, %v6500
        %6502 = vmatmul.f32.gmra.mxu0 %v6086
        %v6503 = vpop.f32.mrf.mxu0
        %v6504 = vadd.f32 %v6295, %v6503
        %6505 = vmatmul.f32.gmra.mxu0 %v6089
        %v6506 = vpop.f32.mrf.mxu0
        %v6507 = vadd.f32 %v6298, %v6506
        %6508 = vmatmul.f32.gmra.mxu0 %v6092
        %v6509 = vpop.f32.mrf.mxu0
        %v6510 = vadd.f32 %v6301, %v6509
        %6511 = vmatmul.f32.gmra.mxu0 %v6095
        %v6512 = vpop.f32.mrf.mxu0
        %v6513 = vadd.f32 %v6304, %v6512
        %6514 = vmatmul.f32.gmra.mxu0 %v6098
        %v6515 = vpop.f32.mrf.mxu0
        %v6516 = vadd.f32 %v6307, %v6515
        %6517 = vmatmul.f32.gmra.mxu0 %v6101
        %v6518 = vpop.f32.mrf.mxu0
        %v6519 = vadd.f32 %v6310, %v6518
        %6520 = vmatmul.f32.gmra.mxu0 %v6104
        %v6521 = vpop.f32.mrf.mxu0
        %v6522 = vadd.f32 %v6313, %v6521
        %6523 = vmatmul.f32.gmra.mxu0 %v6107
        %v6524 = vpop.f32.mrf.mxu0
        %v6525 = vadd.f32 %v6316, %v6524
        %6526 = vmatmul.f32.gmra.mxu0 %v6110
        %v6527 = vpop.f32.mrf.mxu0
        %v6528 = vadd.f32 %v6319, %v6527
        %6529 = vmatmul.f32.gmra.mxu0 %v6113
        %v6530 = vpop.f32.mrf.mxu0
        %v6531 = vadd.f32 %v6322, %v6530
        %6532 = vmatmul.f32.gmra.mxu0 %v6116
        %v6533 = vpop.f32.mrf.mxu0
        %v6534 = vadd.f32 %v6325, %v6533
        %6535 = vmatmul.f32.gmra.mxu0 %v6119
        %v6536 = vpop.f32.mrf.mxu0
        %v6537 = vadd.f32 %v6328, %v6536
        %6538 = vmatmul.f32.gmra.mxu0 %v6122
        %v6539 = vpop.f32.mrf.mxu0
        %v6540 = vadd.f32 %v6331, %v6539
        %6541 = vmatmul.f32.gmra.mxu0 %v6125
        %v6542 = vpop.f32.mrf.mxu0
        %v6543 = vadd.f32 %v6334, %v6542
        %6544 = vmatmul.f32.gmra.mxu0 %v6128
        %v6545 = vpop.f32.mrf.mxu0
        %v6546 = vadd.f32 %v6337, %v6545
        %6547 = vmatmul.f32.gmra.mxu0 %v6131
        %v6548 = vpop.f32.mrf.mxu0
        %v6549 = vadd.f32 %v6340, %v6548
        %6550 = vmatmul.f32.gmra.mxu0 %v6134
        %v6551 = vpop.f32.mrf.mxu0
        %v6552 = vadd.f32 %v6343, %v6551
        %6553 = vmatmul.f32.gmra.mxu0 %v6137
        %v6554 = vpop.f32.mrf.mxu0
        %v6555 = vadd.f32 %v6346, %v6554
        %6556 = vmatmul.f32.gmra.mxu0 %v6140
        %v6557 = vpop.f32.mrf.mxu0
        %v6558 = vadd.f32 %v6349, %v6557
        %6559 = vmatmul.f32.gmra.mxu0 %v6143
        %v6560 = vpop.f32.mrf.mxu0
        %v6561 = vadd.f32 %v6352, %v6560
        %6562 = vmatmul.f32.gmra.mxu0 %v6146
        %v6563 = vpop.f32.mrf.mxu0
        %v6564 = vadd.f32 %v6355, %v6563
        %6565 = vmatmul.f32.gmra.mxu0 %v6149
        %v6566 = vpop.f32.mrf.mxu0
        %v6567 = vadd.f32 %v6358, %v6566
        %6568 = vmatmul.f32.gmra.mxu0 %v6152
        %v6569 = vpop.f32.mrf.mxu0
        %v6570 = vadd.f32 %v6361, %v6569
        %6571 = vmatmul.f32.gmra.mxu0 %v6155
        %v6572 = vpop.f32.mrf.mxu0
        %v6573 = vadd.f32 %v6364, %v6572
        %6574 = vmatmul.f32.gmra.mxu0 %v6158
        %v6575 = vpop.f32.mrf.mxu0
        %v6576 = vadd.f32 %v6367, %v6575
        %6577 = vmatmul.f32.gmra.mxu0 %v6161
        %v6578 = vpop.f32.mrf.mxu0
        %v6579 = vadd.f32 %v6370, %v6578
        %6580 = vmatmul.f32.gmra.mxu0 %v6164
        %v6581 = vpop.f32.mrf.mxu0
        %v6582 = vadd.f32 %v6373, %v6581
        %6583 = vmatmul.f32.gmra.mxu0 %v6167
        %v6584 = vpop.f32.mrf.mxu0
        %v6585 = vadd.f32 %v6376, %v6584
        %6586 = vmatmul.f32.gmra.mxu0 %v6170
        %v6587 = vpop.f32.mrf.mxu0
        %v6588 = vadd.f32 %v6379, %v6587
        %6589 = vmatmul.f32.gmra.mxu0 %v6173
        %v6590 = vpop.f32.mrf.mxu0
        %v6591 = vadd.f32 %v6382, %v6590
        %6592 = vmatmul.f32.gmra.mxu0 %v6176
        %v6593 = vpop.f32.mrf.mxu0
        %v6594 = vadd.f32 %v6385, %v6593
        %6595 = vmatmul.f32.gmra.mxu0 %v6179
        %v6596 = vpop.f32.mrf.mxu0
        %v6597 = vadd.f32 %v6388, %v6596
        %6598 = vmatmul.f32.gmra.mxu0 %v6182
        %v6599 = vpop.f32.mrf.mxu0
        %v6600 = vadd.f32 %v6391, %v6599
        %6601 = vmatmul.f32.gmra.mxu0 %v6185
        %v6602 = vpop.f32.mrf.mxu0
        %v6603 = vadd.f32 %v6394, %v6602
        %6604 = vmatmul.f32.gmra.mxu0 %v6188
        %v6605 = vpop.f32.mrf.mxu0
        %v6606 = vadd.f32 %v6397, %v6605
        %6607 = vmatmul.f32.gmra.mxu0 %v6191
        %v6608 = vpop.f32.mrf.mxu0
        %v6609 = vadd.f32 %v6400, %v6608
        %6610 = vmatmul.f32.gmra.mxu0 %v6194
        %v6611 = vpop.f32.mrf.mxu0
        %v6612 = vadd.f32 %v6403, %v6611
        %6613 = vmatmul.f32.gmra.mxu0 %v6197
        %v6614 = vpop.f32.mrf.mxu0
        %v6615 = vadd.f32 %v6406, %v6614
        %6616 = vmatmul.f32.gmra.mxu0 %v6200
        %v6617 = vpop.f32.mrf.mxu0
        %v6618 = vadd.f32 %v6409, %v6617
        %6619 = vmatmul.f32.gmra.mxu0 %v6203
        %v6620 = vpop.f32.mrf.mxu0
        %v6621 = vadd.f32 %v6412, %v6620
        %6622 = vmatmul.f32.gmra.mxu0 %v6206
        %v6623 = vpop.f32.mrf.mxu0
        %v6624 = vadd.f32 %v6415, %v6623
        %6625 = vmatmul.f32.gmra.mxu0 %v6209
        %v6626 = vpop.f32.mrf.mxu0
        %v6627 = vadd.f32 %v6418, %v6626
        %6628 = vmatmul.f32.gmra.mxu0 %v6212
        %v6629 = vpop.f32.mrf.mxu0
        %v6630 = vadd.f32 %v6421, %v6629
        %6631 = vmatmul.f32.gmra.mxu0 %v6215
        %v6632 = vpop.f32.mrf.mxu0
        %v6633 = vadd.f32 %v6424, %v6632
        %6634 = vmatmul.f32.gmra.mxu0 %v6218
        %v6635 = vpop.f32.mrf.mxu0
        %v6636 = vadd.f32 %v6427, %v6635
        %6637 = vdwg.mxu0
        %v6638 = vadd.f32 %v5684, %v6447
        %v6639 = vadd.f32 %v5687, %v6450
        %v6640 = vadd.f32 %v5690, %v6453
        %v6641 = vadd.f32 %v5693, %v6456
        %v6642 = vadd.f32 %v5696, %v6459
        %v6643 = vadd.f32 %v5699, %v6462
        %v6644 = vadd.f32 %v5702, %v6465
        %v6645 = vadd.f32 %v5705, %v6468
        %v6646 = vadd.f32 %v5708, %v6471
        %v6647 = vadd.f32 %v5711, %v6474
        %v6648 = vadd.f32 %v5714, %v6477
        %v6649 = vadd.f32 %v5717, %v6480
        %v6650 = vadd.f32 %v5720, %v6483
        %v6651 = vadd.f32 %v5723, %v6486
        %v6652 = vadd.f32 %v5726, %v6489
        %v6653 = vadd.f32 %v5729, %v6492
        %v6654 = vadd.f32 %v5732, %v6495
        %v6655 = vadd.f32 %v5735, %v6498
        %v6656 = vadd.f32 %v5738, %v6501
        %v6657 = vadd.f32 %v5741, %v6504
        %v6658 = vadd.f32 %v5744, %v6507
        %v6659 = vadd.f32 %v5747, %v6510
        %v6660 = vadd.f32 %v5750, %v6513
        %v6661 = vadd.f32 %v5753, %v6516
        %v6662 = vadd.f32 %v5756, %v6519
        %v6663 = vadd.f32 %v5759, %v6522
        %v6664 = vadd.f32 %v5762, %v6525
        %v6665 = vadd.f32 %v5765, %v6528
        %v6666 = vadd.f32 %v5768, %v6531
        %v6667 = vadd.f32 %v5771, %v6534
        %v6668 = vadd.f32 %v5774, %v6537
        %v6669 = vadd.f32 %v5777, %v6540
        %v6670 = vadd.f32 %v5780, %v6543
        %v6671 = vadd.f32 %v5783, %v6546
        %v6672 = vadd.f32 %v5786, %v6549
        %v6673 = vadd.f32 %v5789, %v6552
        %v6674 = vadd.f32 %v5792, %v6555
        %v6675 = vadd.f32 %v5795, %v6558
        %v6676 = vadd.f32 %v5798, %v6561
        %v6677 = vadd.f32 %v5801, %v6564
        %v6678 = vadd.f32 %v5804, %v6567
        %v6679 = vadd.f32 %v5807, %v6570
        %v6680 = vadd.f32 %v5810, %v6573
        %v6681 = vadd.f32 %v5813, %v6576
        %v6682 = vadd.f32 %v5816, %v6579
        %v6683 = vadd.f32 %v5819, %v6582
        %v6684 = vadd.f32 %v5822, %v6585
        %v6685 = vadd.f32 %v5825, %v6588
        %v6686 = vadd.f32 %v5828, %v6591
        %v6687 = vadd.f32 %v5831, %v6594
        %v6688 = vadd.f32 %v5834, %v6597
        %v6689 = vadd.f32 %v5837, %v6600
        %v6690 = vadd.f32 %v5840, %v6603
        %v6691 = vadd.f32 %v5843, %v6606
        %v6692 = vadd.f32 %v5846, %v6609
        %v6693 = vadd.f32 %v5849, %v6612
        %v6694 = vadd.f32 %v5852, %v6615
        %v6695 = vadd.f32 %v5855, %v6618
        %v6696 = vadd.f32 %v5858, %v6621
        %v6697 = vadd.f32 %v5861, %v6624
        %v6698 = vadd.f32 %v5864, %v6627
        %v6699 = vadd.f32 %v5867, %v6630
        %v6700 = vadd.f32 %v5870, %v6633
        %v6701 = vadd.f32 %v5873, %v6636
        %s6702 = scalar_lea.vmem %s2, 1
        %v6703 = vld [vmem:[%s6702] sm:$0x1]
        %v6705 = vperm.slane %v6703, 0
        %v6707 = vadd.f32 %v6638, %v6705
        %v6708 = vadd.f32 %v6639, %v6705
        %v6709 = vadd.f32 %v6640, %v6705
        %v6710 = vadd.f32 %v6641, %v6705
        %v6711 = vadd.f32 %v6642, %v6705
        %v6712 = vadd.f32 %v6643, %v6705
        %v6713 = vadd.f32 %v6644, %v6705
        %v6714 = vadd.f32 %v6645, %v6705
        %v6715 = vadd.f32 %v6646, %v6705
        %v6716 = vadd.f32 %v6647, %v6705
        %v6717 = vadd.f32 %v6648, %v6705
        %v6718 = vadd.f32 %v6649, %v6705
        %v6719 = vadd.f32 %v6650, %v6705
        %v6720 = vadd.f32 %v6651, %v6705
        %v6721 = vadd.f32 %v6652, %v6705
        %v6722 = vadd.f32 %v6653, %v6705
        %v6723 = vadd.f32 %v6654, %v6705
        %v6724 = vadd.f32 %v6655, %v6705
        %v6725 = vadd.f32 %v6656, %v6705
        %v6726 = vadd.f32 %v6657, %v6705
        %v6727 = vadd.f32 %v6658, %v6705
        %v6728 = vadd.f32 %v6659, %v6705
        %v6729 = vadd.f32 %v6660, %v6705
        %v6730 = vadd.f32 %v6661, %v6705
        %v6731 = vadd.f32 %v6662, %v6705
        %v6732 = vadd.f32 %v6663, %v6705
        %v6733 = vadd.f32 %v6664, %v6705
        %v6734 = vadd.f32 %v6665, %v6705
        %v6735 = vadd.f32 %v6666, %v6705
        %v6736 = vadd.f32 %v6667, %v6705
        %v6737 = vadd.f32 %v6668, %v6705
        %v6738 = vadd.f32 %v6669, %v6705
        %v6739 = vadd.f32 %v6670, %v6705
        %v6740 = vadd.f32 %v6671, %v6705
        %v6741 = vadd.f32 %v6672, %v6705
        %v6742 = vadd.f32 %v6673, %v6705
        %v6743 = vadd.f32 %v6674, %v6705
        %v6744 = vadd.f32 %v6675, %v6705
        %v6745 = vadd.f32 %v6676, %v6705
        %v6746 = vadd.f32 %v6677, %v6705
        %v6747 = vadd.f32 %v6678, %v6705
        %v6748 = vadd.f32 %v6679, %v6705
        %v6749 = vadd.f32 %v6680, %v6705
        %v6750 = vadd.f32 %v6681, %v6705
        %v6751 = vadd.f32 %v6682, %v6705
        %v6752 = vadd.f32 %v6683, %v6705
        %v6753 = vadd.f32 %v6684, %v6705
        %v6754 = vadd.f32 %v6685, %v6705
        %v6755 = vadd.f32 %v6686, %v6705
        %v6756 = vadd.f32 %v6687, %v6705
        %v6757 = vadd.f32 %v6688, %v6705
        %v6758 = vadd.f32 %v6689, %v6705
        %v6759 = vadd.f32 %v6690, %v6705
        %v6760 = vadd.f32 %v6691, %v6705
        %v6761 = vadd.f32 %v6692, %v6705
        %v6762 = vadd.f32 %v6693, %v6705
        %v6763 = vadd.f32 %v6694, %v6705
        %v6764 = vadd.f32 %v6695, %v6705
        %v6765 = vadd.f32 %v6696, %v6705
        %v6766 = vadd.f32 %v6697, %v6705
        %v6767 = vadd.f32 %v6698, %v6705
        %v6768 = vadd.f32 %v6699, %v6705
        %v6769 = vadd.f32 %v6700, %v6705
        %v6770 = vadd.f32 %v6701, %v6705
        %v6771 = vadd.f32 %v175, %v6707
        %v6772 = vadd.f32 %v176, %v6708
        %v6773 = vadd.f32 %v177, %v6709
        %v6774 = vadd.f32 %v178, %v6710
        %v6775 = vadd.f32 %v179, %v6711
        %v6776 = vadd.f32 %v180, %v6712
        %v6777 = vadd.f32 %v181, %v6713
        %v6778 = vadd.f32 %v182, %v6714
        %v6779 = vadd.f32 %v183, %v6715
        %v6780 = vadd.f32 %v184, %v6716
        %v6781 = vadd.f32 %v185, %v6717
        %v6782 = vadd.f32 %v186, %v6718
        %v6783 = vadd.f32 %v187, %v6719
        %v6784 = vadd.f32 %v188, %v6720
        %v6785 = vadd.f32 %v189, %v6721
        %v6786 = vadd.f32 %v190, %v6722
        %v6787 = vadd.f32 %v191, %v6723
        %v6788 = vadd.f32 %v192, %v6724
        %v6789 = vadd.f32 %v193, %v6725
        %v6790 = vadd.f32 %v194, %v6726
        %v6791 = vadd.f32 %v195, %v6727
        %v6792 = vadd.f32 %v196, %v6728
        %v6793 = vadd.f32 %v197, %v6729
        %v6794 = vadd.f32 %v198, %v6730
        %v6795 = vadd.f32 %v199, %v6731
        %v6796 = vadd.f32 %v200, %v6732
        %v6797 = vadd.f32 %v201, %v6733
        %v6798 = vadd.f32 %v202, %v6734
        %v6799 = vadd.f32 %v203, %v6735
        %v6800 = vadd.f32 %v204, %v6736
        %v6801 = vadd.f32 %v205, %v6737
        %v6802 = vadd.f32 %v206, %v6738
        %v6803 = vadd.f32 %v207, %v6739
        %v6804 = vadd.f32 %v208, %v6740
        %v6805 = vadd.f32 %v209, %v6741
        %v6806 = vadd.f32 %v210, %v6742
        %v6807 = vadd.f32 %v211, %v6743
        %v6808 = vadd.f32 %v212, %v6744
        %v6809 = vadd.f32 %v213, %v6745
        %v6810 = vadd.f32 %v214, %v6746
        %v6811 = vadd.f32 %v215, %v6747
        %v6812 = vadd.f32 %v216, %v6748
        %v6813 = vadd.f32 %v217, %v6749
        %v6814 = vadd.f32 %v218, %v6750
        %v6815 = vadd.f32 %v219, %v6751
        %v6816 = vadd.f32 %v220, %v6752
        %v6817 = vadd.f32 %v221, %v6753
        %v6818 = vadd.f32 %v222, %v6754
        %v6819 = vadd.f32 %v223, %v6755
        %v6820 = vadd.f32 %v224, %v6756
        %v6821 = vadd.f32 %v225, %v6757
        %v6822 = vadd.f32 %v226, %v6758
        %v6823 = vadd.f32 %v227, %v6759
        %v6824 = vadd.f32 %v228, %v6760
        %v6825 = vadd.f32 %v229, %v6761
        %v6826 = vadd.f32 %v230, %v6762
        %v6827 = vadd.f32 %v231, %v6763
        %v6828 = vadd.f32 %v232, %v6764
        %v6829 = vadd.f32 %v233, %v6765
        %v6830 = vadd.f32 %v234, %v6766
        %v6831 = vadd.f32 %v235, %v6767
        %v6832 = vadd.f32 %v236, %v6768
        %v6833 = vadd.f32 %v237, %v6769
        %v6834 = vadd.f32 %v238, %v6770
        %6835 = vst.msk [vmem:[%s166] sm:$0xff] %vm240, %v6771
        %6836 = vst.msk [vmem:[%s166 + $0x8] sm:$0xff] %vm240, %v6772
        %6837 = vst.msk [vmem:[%s166 + $0x10] sm:$0xff] %vm240, %v6773
        %6838 = vst.msk [vmem:[%s166 + $0x18] sm:$0xff] %vm240, %v6774
        %6839 = vst.msk [vmem:[%s166 + $0x20] sm:$0xff] %vm240, %v6775
        %6840 = vst.msk [vmem:[%s166 + $0x28] sm:$0xff] %vm240, %v6776
        %6841 = vst.msk [vmem:[%s166 + $0x30] sm:$0xff] %vm240, %v6777
        %6842 = vst.msk [vmem:[%s166 + $0x38] sm:$0xff] %vm240, %v6778
        %6843 = vst.msk [vmem:[%s166 + $0x40] sm:$0xff] %vm240, %v6779
        %6844 = vst.msk [vmem:[%s166 + $0x48] sm:$0xff] %vm240, %v6780
        %6845 = vst.msk [vmem:[%s166 + $0x50] sm:$0xff] %vm240, %v6781
        %6846 = vst.msk [vmem:[%s166 + $0x58] sm:$0xff] %vm240, %v6782
        %6847 = vst.msk [vmem:[%s166 + $0x60] sm:$0xff] %vm240, %v6783
        %6848 = vst.msk [vmem:[%s166 + $0x68] sm:$0xff] %vm240, %v6784
        %6849 = vst.msk [vmem:[%s166 + $0x70] sm:$0xff] %vm240, %v6785
        %6850 = vst.msk [vmem:[%s166 + $0x78] sm:$0xff] %vm240, %v6786
        %6851 = vst.msk [vmem:[%s166 + $0x80] sm:$0xff] %vm240, %v6787
        %6852 = vst.msk [vmem:[%s166 + $0x88] sm:$0xff] %vm240, %v6788
        %6853 = vst.msk [vmem:[%s166 + $0x90] sm:$0xff] %vm240, %v6789
        %6854 = vst.msk [vmem:[%s166 + $0x98] sm:$0xff] %vm240, %v6790
        %6855 = vst.msk [vmem:[%s166 + $0xa0] sm:$0xff] %vm240, %v6791
        %6856 = vst.msk [vmem:[%s166 + $0xa8] sm:$0xff] %vm240, %v6792
        %6857 = vst.msk [vmem:[%s166 + $0xb0] sm:$0xff] %vm240, %v6793
        %6858 = vst.msk [vmem:[%s166 + $0xb8] sm:$0xff] %vm240, %v6794
        %6859 = vst.msk [vmem:[%s166 + $0xc0] sm:$0xff] %vm240, %v6795
        %6860 = vst.msk [vmem:[%s166 + $0xc8] sm:$0xff] %vm240, %v6796
        %6861 = vst.msk [vmem:[%s166 + $0xd0] sm:$0xff] %vm240, %v6797
        %6862 = vst.msk [vmem:[%s166 + $0xd8] sm:$0xff] %vm240, %v6798
        %6863 = vst.msk [vmem:[%s166 + $0xe0] sm:$0xff] %vm240, %v6799
        %6864 = vst.msk [vmem:[%s166 + $0xe8] sm:$0xff] %vm240, %v6800
        %6865 = vst.msk [vmem:[%s166 + $0xf0] sm:$0xff] %vm240, %v6801
        %6866 = vst.msk [vmem:[%s166 + $0xf8] sm:$0xff] %vm240, %v6802
        %6867 = vst.msk [vmem:[%s166 + $0x100] sm:$0xff] %vm240, %v6803
        %6868 = vst.msk [vmem:[%s166 + $0x108] sm:$0xff] %vm240, %v6804
        %6869 = vst.msk [vmem:[%s166 + $0x110] sm:$0xff] %vm240, %v6805
        %6870 = vst.msk [vmem:[%s166 + $0x118] sm:$0xff] %vm240, %v6806
        %6871 = vst.msk [vmem:[%s166 + $0x120] sm:$0xff] %vm240, %v6807
        %6872 = vst.msk [vmem:[%s166 + $0x128] sm:$0xff] %vm240, %v6808
        %6873 = vst.msk [vmem:[%s166 + $0x130] sm:$0xff] %vm240, %v6809
        %6874 = vst.msk [vmem:[%s166 + $0x138] sm:$0xff] %vm240, %v6810
        %6875 = vst.msk [vmem:[%s166 + $0x140] sm:$0xff] %vm240, %v6811
        %6876 = vst.msk [vmem:[%s166 + $0x148] sm:$0xff] %vm240, %v6812
        %6877 = vst.msk [vmem:[%s166 + $0x150] sm:$0xff] %vm240, %v6813
        %6878 = vst.msk [vmem:[%s166 + $0x158] sm:$0xff] %vm240, %v6814
        %6879 = vst.msk [vmem:[%s166 + $0x160] sm:$0xff] %vm240, %v6815
        %6880 = vst.msk [vmem:[%s166 + $0x168] sm:$0xff] %vm240, %v6816
        %6881 = vst.msk [vmem:[%s166 + $0x170] sm:$0xff] %vm240, %v6817
        %6882 = vst.msk [vmem:[%s166 + $0x178] sm:$0xff] %vm240, %v6818
        %6883 = vst.msk [vmem:[%s166 + $0x180] sm:$0xff] %vm240, %v6819
        %6884 = vst.msk [vmem:[%s166 + $0x188] sm:$0xff] %vm240, %v6820
        %6885 = vst.msk [vmem:[%s166 + $0x190] sm:$0xff] %vm240, %v6821
        %6886 = vst.msk [vmem:[%s166 + $0x198] sm:$0xff] %vm240, %v6822
        %6887 = vst.msk [vmem:[%s166 + $0x1a0] sm:$0xff] %vm240, %v6823
        %6888 = vst.msk [vmem:[%s166 + $0x1a8] sm:$0xff] %vm240, %v6824
        %6889 = vst.msk [vmem:[%s166 + $0x1b0] sm:$0xff] %vm240, %v6825
        %6890 = vst.msk [vmem:[%s166 + $0x1b8] sm:$0xff] %vm240, %v6826
        %6891 = vst.msk [vmem:[%s166 + $0x1c0] sm:$0xff] %vm240, %v6827
        %6892 = vst.msk [vmem:[%s166 + $0x1c8] sm:$0xff] %vm240, %v6828
        %6893 = vst.msk [vmem:[%s166 + $0x1d0] sm:$0xff] %vm240, %v6829
        %6894 = vst.msk [vmem:[%s166 + $0x1d8] sm:$0xff] %vm240, %v6830
        %6895 = vst.msk [vmem:[%s166 + $0x1e0] sm:$0xff] %vm240, %v6831
        %6896 = vst.msk [vmem:[%s166 + $0x1e8] sm:$0xff] %vm240, %v6832
        %6897 = vst.msk [vmem:[%s166 + $0x1f0] sm:$0xff] %vm240, %v6833
        %6898 = vst.msk [vmem:[%s166 + $0x1f8] sm:$0xff] %vm240, %v6834
        %s6899 = sand.u32 %s93, 1
        %s6900 = scalar_lea.sflag [#allocation4], %s6899
        %s6901 = sand.u32 %s93, 1
        %s6902 = smul.addr %s6901, 512
        %s6903 = scalar_lea.vmem [#allocation3], %s6902
        // Predicated region
        $region33: #{tpu_custom_call.1} parent=31 // pred_check
          %p6904 = pneg %p103
        $region34: #{tpu_custom_call.1} parent=31 // pred_check_branch
          %6906 = sbr.rel (%p6904) target = $region36
        $region35: #{tpu_custom_call.1} parent=31 // pred_region
          %s6907 = smul.u32 2, %s17
          %6909 = vsyncadd %s6900, 0
          %s6910 = smul.addr %s6907, 32
          %s6911 = smul.addr %s6910, 8
          %s6912 = scalar_lea.hbm %s3, %s6911
          %s6913 = sshll.u32 %s6903, 4
          %s6914 = int_to_ptr.vmem [resolvable:$true] %s6913
          %s6915 = sshll.u32 %s6912, 4
          %s6916 = int_to_ptr.hbm [resolvable:$true] %s6915
          %6921 = dma.vmem_to_hbm [thread:$0]  %s6914, 8192, %s6916, %s6900, 128, 128, 8
        $region36: #{tpu_custom_call.1} parent=31 // pred_fallthru
          _
      $region32: #{tpu_custom_call.1} parent=5 // pred_fallthru
        _
      %p6922 = scmp.le.s32.totalorder 2, %s12
      // Predicated region
      $region37: #{tpu_custom_call.1} parent=5 // pred_check
        %p6923 = pneg %p6922
      $region38: #{tpu_custom_call.1} parent=5 // pred_check_branch
        %6925 = sbr.rel (%p6923) target = $region40
      $region39: #{tpu_custom_call.1} parent=5 // pred_region
        %s6926 = ssub.s32 %s12, 2
        // Predicated region
        $region41: #{tpu_custom_call.1} parent=39 // pred_check
          %p6927 = pneg %p109
        $region42: #{tpu_custom_call.1} parent=39 // pred_check_branch
          %6929 = sbr.rel (%p6927) target = $region44
        $region43: #{tpu_custom_call.1} parent=39 // pred_region
          %s6930 = sand.u32 %s94, 1
          %s6931 = scalar_lea.sflag [#allocation4], %s6930
          %s6932 = sand.u32 %s94, 1
          %s6933 = smul.addr %s6932, 512
          %s6934 = scalar_lea.vmem [#allocation3], %s6933
          %6936 = dma.done %s6931, 8192
        $region44: #{tpu_custom_call.1} parent=39 // pred_fallthru
          _
      $region40: #{tpu_custom_call.1} parent=5 // pred_fallthru
        _
    $region6: #{tpu_custom_call.1} parent=1 // loop_footer
      %s16 = sadd.s32 1, %s12
    $region7: #{tpu_custom_call.1} parent=1 // loop_footer_branch
      %11 = sbr.rel target = $region3
    $region8: #{tpu_custom_call.1} parent=1 // loop_exit
      _
    %6937 = vsyncpa [#allocation4], 1
    %s6938 = scalar_lea.sflag [#allocation4], 1
    %6939 = vsyncpa %s6938, 1

</llo_original>
